<compile_context>
chip_gen: v7x
topology: tpu7x:2x2x1
jax: 0.10.0
libtpu: 0.0.40
codegen_flags: <defaults>
</compile_context>

<pallas_src>
import jax
import jax.numpy as jnp
from jax import lax
from jax.experimental import pallas as pl
from jax.experimental.pallas import tpu as pltpu


def _round_up(x, m):
    return ((x + m - 1) // m) * m


# ----------------------------------------------------------------------------
# Fused kernel: 3x3 spatial conv + BN + ReLU + folded k=5 temporal conv
# ----------------------------------------------------------------------------
def _make_fused_kernel(Cout, Wp, Fp, Tt):
    """Per-(batch, T-tile) kernel.

    Shapes seen by the kernel (channels-first, spatial flattened, frame
    stride Fp = multiple of 128):
      xw_ref : (1, 1, Cin, WIN)   window = Tt+4 frames (2-frame halo each side)
                                  + 128 zero tail columns, bf16
      wsp_ref: (9, Cout, Cin)     spatial weights, tap index k = kh*3 + kw, bf16
      sc_ref : (Cout, 1)          folded BN scale, f32
      bi_ref : (Cout, 1)          folded BN bias, f32
      wt_ref : (5, Cout, Cout)    folded temporal weights (branch 1+3+5), bf16
      bt_ref : (Cout, 1)          folded temporal bias, f32
      o_ref  : (1, Cout, Tt*Fp)   output tile (f32), lane-dense
      ybuf   : VMEM (Cout, (Tt+4)*Fp) bf16 scratch for the intermediate y
    """
    NC = (Tt + 4) * Fp          # window columns (incl. temporal halo frames)
    NO = Tt * Fp                # output columns per grid step

    def kernel(xw_ref, wsp_ref, sc_ref, bi_ref, wt_ref, bt_ref, o_ref, ybuf):
        tt = pl.program_id(1)
        xw = xw_ref[0, 0]                                   # (Cin, NC+128) bf16

        # ---- stage 1: 3x3 spatial conv as 9 accumulated per-tap matmuls
        # (no im2col concatenate copies); taps are static lane shifts of the
        # padded frame, accumulation in f32 on the MXU.
        acc = None
        for kh in range(3):
            for kw in range(3):
                off = kh * Wp + kw                          # static shift
                part = jnp.dot(wsp_ref[kh * 3 + kw],
                               xw[:, off:off + NC],
                               preferred_element_type=jnp.float32)
                acc = part if acc is None else acc + part

        # folded BatchNorm + ReLU epilogue in f32, stored as bf16 for stage 2.
        y = jnp.maximum(acc * sc_ref[...] + bi_ref[...], 0.0)
        ybuf[...] = y.astype(ybuf.dtype)

        # ---- temporal zero padding: halo frames that fall outside [0, T)
        # must contribute ZERO y (ReLU(BN(conv(0))) != 0, so overwrite).
        @pl.when(tt == 0)
        def _():
            ybuf[:, 0:2 * Fp] = jnp.zeros((Cout, 2 * Fp), ybuf.dtype)

        @pl.when(tt == pl.num_programs(1) - 1)
        def _():
            ybuf[:, (Tt + 2) * Fp:(Tt + 4) * Fp] = jnp.zeros(
                (Cout, 2 * Fp), ybuf.dtype)

        # ---- stage 2: folded k=5 temporal conv (branch 1+3+5) as 5
        # accumulated matmuls on lane-ALIGNED views (offsets d*Fp are
        # multiples of 128), f32 accumulation, bias in the epilogue.
        out = None
        for d in range(5):
            part = jnp.dot(wt_ref[d], ybuf[:, d * Fp:d * Fp + NO],
                           preferred_element_type=jnp.float32)
            out = part if out is None else out + part
        o_ref[0] = out + bt_ref[...]

    return kernel


# ----------------------------------------------------------------------------
# Wrapper
# ----------------------------------------------------------------------------
def conv2plus1d_temporal_enhanced(x, params, *, padding=1, t_tile=4,
                                  compute_dtype=jnp.bfloat16):
    """x: (B, Cin, T, S1, S2) float32 -> (B, Cout, T, S1o, S2o) float32."""
    B, Cin, T, S1, S2 = x.shape
    w_sp = params["w_spatial"]                       # (Cout, Cin, 1, 3, 3)
    Cout = int(w_sp.shape[0])
    assert tuple(w_sp.shape[1:]) == (Cin, 1, 3, 3), "expects a (1,3,3) spatial kernel"
    # TODO(synk): stride != 1 not implemented (module default stride=1 path).
    eps = 1e-5

    Hp, Wp = S1 + 2 * padding, S2 + 2 * padding      # padded spatial grid
    H, W = Hp - 2, Wp - 2                            # valid conv output (stride 1)
    F = Hp * Wp                                      # valid columns per frame
    # lane-aligned frame stride: large enough that every 3x3 tap shift
    # (<= 2*Wp + 2) stays within the frame, rounded up to a multiple of 128 so
    # temporal tap offsets (d*Fp) and output stores are unmasked.
    Fp = _round_up(F + 2 * Wp + 2, 128)
    TAIL = 128                                       # zero tail for last-frame taps

    # ---- temporal tile: the 2-frame halo must stay within one neighbour tile
    Tt = max(1, min(t_tile, T))
    while T % Tt:
        Tt -= 1
    if Tt < 2 and T >= 2:
        Tt = T
    nT = T // Tt
    NC = (Tt + 4) * Fp                               # per-step window columns
    WIN = NC + TAIL
    NO = Tt * Fp                                     # per-step output columns

    # ---- fold eval-mode BatchNorm3d into scale / bias ----------------------
    scale = params["bn_gamma"] / jnp.sqrt(params["bn_var"] + eps)
    bias = params["bn_beta"] - params["bn_mean"] * scale

    # ---- per-tap weight matrices (channels-first) ---------------------------
    # spatial: (9, Cout, Cin), tap index k = kh*3 + kw
    wsp = jnp.transpose(w_sp[:, :, 0, :, :], (2, 3, 0, 1)).reshape(9, Cout, Cin)
    # temporal: fold branch1 + branch3 + branch5 into one k=5 conv, (5, Cout, Cin)
    w5, w3, w1 = params["w5"], params["w3"], params["w1"]     # (O, I, K)
    wt = jnp.transpose(w5, (2, 0, 1))
    wt = wt.at[1:4].add(jnp.transpose(w3, (2, 0, 1)))
    wt = wt.at[2].add(w1[:, :, 0])
    bt = (params["b1"] + params["b3"] + params["b5"]).reshape(Cout, 1)

    # ---- build lane-aligned, temporally-haloed input windows ---------------
    # spatial halo (padding) + 2 zero frames per temporal side, per-frame
    # columns padded to Fp, then per-tile windows of Tt+4 frames (+128 tail).
    xp = jnp.pad(x, ((0, 0), (0, 0), (2, 2),
                     (padding, padding), (padding, padding)))
    xp = xp.reshape(B, Cin, T + 4, F)
    xp = jnp.pad(xp, ((0, 0), (0, 0), (0, 0), (0, Fp - F)))
    wins = jnp.stack([xp[:, :, s * Tt: s * Tt + Tt + 4, :] for s in range(nT)],
                     axis=1)                                   # (B,nT,Cin,Tt+4,Fp)
    wins = wins.reshape(B, nT, Cin, NC)
    wins = jnp.pad(wins, ((0, 0), (0, 0), (0, 0), (0, TAIL))).astype(compute_dtype)

    kernel = _make_fused_kernel(Cout, Wp, Fp, Tt)

    # ---- scoped VMEM budget: per-step working set (double-buffered I/O,
    # bf16 scratch, f32 accumulators) with generous headroom.
    itemsz = jnp.dtype(compute_dtype).itemsize
    est = (2 * Cin * WIN * itemsz                    # x window, double buffer
           + 2 * Cout * NO * 4                       # output tile, double buffer
           + Cout * NC * itemsz                      # ybuf scratch
           + Cout * NC * 4 + Cout * NO * 4           # f32 accumulators
           + (9 * Cout * Cin + 5 * Cout * Cout) * itemsz + 3 * Cout * 4)
    vmem_limit = int(min(64 * 1024 * 1024, max(16 * 1024 * 1024, 2 * est)))

    out_flat = pl.pallas_call(
        kernel,
        out_shape=jax.ShapeDtypeStruct((B, Cout, T * Fp), jnp.float32),
        grid_spec=pltpu.PrefetchScalarGridSpec(
            num_scalar_prefetch=0,
            grid=(B, nT),
            in_specs=[
                pl.BlockSpec((1, 1, Cin, WIN), lambda b, t: (b, t, 0, 0)),
                pl.BlockSpec((9, Cout, Cin), lambda b, t: (0, 0, 0)),
                pl.BlockSpec((Cout, 1), lambda b, t: (0, 0)),
                pl.BlockSpec((Cout, 1), lambda b, t: (0, 0)),
                pl.BlockSpec((5, Cout, Cout), lambda b, t: (0, 0, 0)),
                pl.BlockSpec((Cout, 1), lambda b, t: (0, 0)),
            ],
            out_specs=pl.BlockSpec((1, Cout, NO), lambda b, t: (b, 0, t)),
            scratch_shapes=[pltpu.VMEM((Cout, NC), compute_dtype)],
        ),
        compiler_params=pltpu.CompilerParams(
            dimension_semantics=("parallel", "parallel"),
            vmem_limit_bytes=vmem_limit),
    )(wins,
      wsp.astype(compute_dtype),
      scale.reshape(Cout, 1).astype(jnp.float32),
      bias.reshape(Cout, 1).astype(jnp.float32),
      wt.astype(compute_dtype),
      bt.astype(jnp.float32))

    # Drop the per-frame lane padding and the padded-grid border: pure slices,
    # the kernel already wrote channel-first PyTorch order.
    # TODO(synk): border/lane-pad columns (~(Fp - H*W)/Fp) are computed and
    # stored then discarded; shrinking stage-2 to the valid columns is a
    # further optimization left out to keep the layout copy-free.
    out = out_flat.reshape(B, Cout, T, Fp)[:, :, :, :F]
    out = out.reshape(B, Cout, T, Hp, Wp)[:, :, :, :H, :W]
    return out


# ----------------------------------------------------------------------------
# Pure-JAX reference (mirrors the PyTorch forward, eval-mode BN)
# ----------------------------------------------------------------------------
def reference_forward(x, params, *, padding=1):
    eps = 1e-5
    y = lax.conv_general_dilated(
        x, params["w_spatial"], window_strides=(1, 1, 1),
        padding=[(0, 0), (padding, padding), (padding, padding)],
        dimension_numbers=('NCDHW', 'OIDHW', 'NCDHW'))
    scale = params["bn_gamma"] / jnp.sqrt(params["bn_var"] + eps)
    bias = params["bn_beta"] - params["bn_mean"] * scale
    y = y * scale[None, :, None, None, None] + bias[None, :, None, None, None]
    y = jnp.maximum(y, 0.0)
    b, c, t, w, h = y.shape
    z = jnp.transpose(y, (0, 3, 4, 1, 2)).reshape(-1, c, t)

    def conv1d(v, wgt, bia, pad):
        o = lax.conv_general_dilated(v, wgt, (1,), [(pad, pad)],
                                     dimension_numbers=('NCT', 'OIT', 'NCT'))
        return o + bia[None, :, None]

    x5 = conv1d(z, params["w5"], params["b5"], 2)
    x3 = conv1d(z, params["w3"], params["b3"], 1) + x5
    x1 = conv1d(z, params["w1"], params["b1"], 0) + x3
    o = x1.reshape(b, w, h, c, -1)
    return jnp.transpose(o, (0, 3, 4, 1, 2))


# ----------------------------------------------------------------------------
# Deterministic synthetic parameters
# ----------------------------------------------------------------------------
def init_params(key, in_planes, out_planes):
    ks = jax.random.split(key, 12)

    def nrm(k, shape, s=0.1):
        return s * jax.random.normal(k, shape, jnp.float32)

    return dict(
        w_spatial=nrm(ks[0], (out_planes, in_planes, 1, 3, 3)),
        bn_gamma=1.0 + nrm(ks[1], (out_planes,)),
        bn_beta=nrm(ks[2], (out_planes,)),
        bn_mean=nrm(ks[3], (out_planes,)),
        bn_var=0.5 + jnp.abs(nrm(ks[4], (out_planes,), 0.5)),
        w1=nrm(ks[5], (out_planes, out_planes, 1)),
        b1=nrm(ks[6], (out_planes,)),
        w3=nrm(ks[7], (out_planes, out_planes, 3)),
        b3=nrm(ks[8], (out_planes,)),
        w5=nrm(ks[9], (out_planes, out_planes, 5)),
        b5=nrm(ks[10], (out_planes,)),
        # TODO(synk): train-mode BatchNorm (batch statistics) not implemented;
        # this kernel folds running stats (eval-mode BN).
    )


if __name__ == "__main__":
    key = jax.random.PRNGKey(0)
    kx, kp = jax.random.split(key)

    B, Cin, T, S1, S2 = 2, 4, 8, 16, 16
    Cout = 8

    x = jax.random.normal(kx, (B, Cin, T, S1, S2), jnp.float32)
    params = init_params(kp, Cin, Cout)

    out = jax.jit(conv2plus1d_temporal_enhanced)(x, params)
    out = jax.block_until_ready(out)

    ref = reference_forward(x, params)
    assert out.shape == (B, Cout, T, S1, S2), out.shape
    err = float(jnp.max(jnp.abs(out - ref)))
    tol = 5e-2 * max(1.0, float(jnp.max(jnp.abs(ref))))   # bf16 MXU operands
    assert err < tol, f"mismatch vs reference: {err} (tol {tol})"

    print("KERNEL_OK")
</pallas_src>

<mosaic_0001>
module attributes {stable_mosaic.version = 11 : i64} {
  func.func @kernel(%arg0: i32, %arg1: i32, %arg2: memref<1x1x4x3200xbf16, #tpu.memory_space<vmem>>, %arg3: memref<9x8x4xbf16, #tpu.memory_space<vmem>>, %arg4: memref<8x1xf32, #tpu.memory_space<vmem>>, %arg5: memref<8x1xf32, #tpu.memory_space<vmem>>, %arg6: memref<5x8x8xbf16, #tpu.memory_space<vmem>>, %arg7: memref<8x1xf32, #tpu.memory_space<vmem>>, %arg8: memref<1x8x1536xf32, #tpu.memory_space<vmem>>, %arg9: memref<8x3072xbf16, #tpu.memory_space<vmem>>) attributes {dimension_semantics = [#tpu.dimension_semantics<parallel>, #tpu.dimension_semantics<parallel>], iteration_bounds = array<i64: 2, 2>, scalar_prefetch = 0 : i64, scratch_operands = 1 : i64, tpu.core_type = #tpu.core_type<tc>, window_params = [{transform_indices = @transform_0, window_bounds = array<i64: 1, 1, 4, 3200>}, {pipeline_mode = #tpu.pipeline_mode<synchronous>, transform_indices = @transform_1, window_bounds = array<i64: 9, 8, 4>}, {pipeline_mode = #tpu.pipeline_mode<synchronous>, transform_indices = @transform_2, window_bounds = array<i64: 8, 1>}, {pipeline_mode = #tpu.pipeline_mode<synchronous>, transform_indices = @transform_3, window_bounds = array<i64: 8, 1>}, {pipeline_mode = #tpu.pipeline_mode<synchronous>, transform_indices = @transform_4, window_bounds = array<i64: 5, 8, 8>}, {pipeline_mode = #tpu.pipeline_mode<synchronous>, transform_indices = @transform_5, window_bounds = array<i64: 8, 1>}, {transform_indices = @transform_6, window_bounds = array<i64: 1, 8, 1536>}]} {
    %c0 = arith.constant 0 : index
    %c0_0 = arith.constant 0 : index
    %c0_1 = arith.constant 0 : index
    %c0_2 = arith.constant 0 : index
    %0 = vector.load %arg2[%c0, %c0_0, %c0_1, %c0_2] : memref<1x1x4x3200xbf16, #tpu.memory_space<vmem>>, vector<1x1x4x3200xbf16>
    %1 = vector.shape_cast %0 : vector<1x1x4x3200xbf16> to vector<4x3200xbf16>
    %c0_3 = arith.constant 0 : index
    %c0_4 = arith.constant 0 : index
    %c0_5 = arith.constant 0 : index
    %2 = vector.load %arg3[%c0_3, %c0_4, %c0_5] : memref<9x8x4xbf16, #tpu.memory_space<vmem>>, vector<1x8x4xbf16>
    %3 = vector.shape_cast %2 : vector<1x8x4xbf16> to vector<8x4xbf16>
    %4 = vector.extract_strided_slice %1 {offsets = [0, 0], sizes = [4, 3072], strides = [1, 1]} : vector<4x3200xbf16> to vector<4x3072xbf16>
    %cst = arith.constant dense<0.000000e+00> : vector<8x3072xf32>
    %5 = tpu.matmul %3, %4, %cst {dimension_numbers = #tpu.dot_dimension_numbers<[1], [0], [0], [1], [0, 0, 1, 1], [], []>} : vector<8x4xbf16>, vector<4x3072xbf16>, vector<8x3072xf32> -> vector<8x3072xf32>
    %c1 = arith.constant 1 : index
    %c0_6 = arith.constant 0 : index
    %c0_7 = arith.constant 0 : index
    %6 = vector.load %arg3[%c1, %c0_6, %c0_7] : memref<9x8x4xbf16, #tpu.memory_space<vmem>>, vector<1x8x4xbf16>
    %7 = vector.shape_cast %6 : vector<1x8x4xbf16> to vector<8x4xbf16>
    %8 = vector.extract_strided_slice %1 {offsets = [0, 1], sizes = [4, 3072], strides = [1, 1]} : vector<4x3200xbf16> to vector<4x3072xbf16>
    %cst_8 = arith.constant dense<0.000000e+00> : vector<8x3072xf32>
    %9 = tpu.matmul %7, %8, %cst_8 {dimension_numbers = #tpu.dot_dimension_numbers<[1], [0], [0], [1], [0, 0, 1, 1], [], []>} : vector<8x4xbf16>, vector<4x3072xbf16>, vector<8x3072xf32> -> vector<8x3072xf32>
    %10 = arith.addf %5, %9 : vector<8x3072xf32>
    %c2 = arith.constant 2 : index
    %c0_9 = arith.constant 0 : index
    %c0_10 = arith.constant 0 : index
    %11 = vector.load %arg3[%c2, %c0_9, %c0_10] : memref<9x8x4xbf16, #tpu.memory_space<vmem>>, vector<1x8x4xbf16>
    %12 = vector.shape_cast %11 : vector<1x8x4xbf16> to vector<8x4xbf16>
    %13 = vector.extract_strided_slice %1 {offsets = [0, 2], sizes = [4, 3072], strides = [1, 1]} : vector<4x3200xbf16> to vector<4x3072xbf16>
    %cst_11 = arith.constant dense<0.000000e+00> : vector<8x3072xf32>
    %14 = tpu.matmul %12, %13, %cst_11 {dimension_numbers = #tpu.dot_dimension_numbers<[1], [0], [0], [1], [0, 0, 1, 1], [], []>} : vector<8x4xbf16>, vector<4x3072xbf16>, vector<8x3072xf32> -> vector<8x3072xf32>
    %15 = arith.addf %10, %14 : vector<8x3072xf32>
    %c3 = arith.constant 3 : index
    %c0_12 = arith.constant 0 : index
    %c0_13 = arith.constant 0 : index
    %16 = vector.load %arg3[%c3, %c0_12, %c0_13] : memref<9x8x4xbf16, #tpu.memory_space<vmem>>, vector<1x8x4xbf16>
    %17 = vector.shape_cast %16 : vector<1x8x4xbf16> to vector<8x4xbf16>
    %18 = vector.extract_strided_slice %1 {offsets = [0, 18], sizes = [4, 3072], strides = [1, 1]} : vector<4x3200xbf16> to vector<4x3072xbf16>
    %cst_14 = arith.constant dense<0.000000e+00> : vector<8x3072xf32>
    %19 = tpu.matmul %17, %18, %cst_14 {dimension_numbers = #tpu.dot_dimension_numbers<[1], [0], [0], [1], [0, 0, 1, 1], [], []>} : vector<8x4xbf16>, vector<4x3072xbf16>, vector<8x3072xf32> -> vector<8x3072xf32>
    %20 = arith.addf %15, %19 : vector<8x3072xf32>
    %c4 = arith.constant 4 : index
    %c0_15 = arith.constant 0 : index
    %c0_16 = arith.constant 0 : index
    %21 = vector.load %arg3[%c4, %c0_15, %c0_16] : memref<9x8x4xbf16, #tpu.memory_space<vmem>>, vector<1x8x4xbf16>
    %22 = vector.shape_cast %21 : vector<1x8x4xbf16> to vector<8x4xbf16>
    %23 = vector.extract_strided_slice %1 {offsets = [0, 19], sizes = [4, 3072], strides = [1, 1]} : vector<4x3200xbf16> to vector<4x3072xbf16>
    %cst_17 = arith.constant dense<0.000000e+00> : vector<8x3072xf32>
    %24 = tpu.matmul %22, %23, %cst_17 {dimension_numbers = #tpu.dot_dimension_numbers<[1], [0], [0], [1], [0, 0, 1, 1], [], []>} : vector<8x4xbf16>, vector<4x3072xbf16>, vector<8x3072xf32> -> vector<8x3072xf32>
    %25 = arith.addf %20, %24 : vector<8x3072xf32>
    %c5 = arith.constant 5 : index
    %c0_18 = arith.constant 0 : index
    %c0_19 = arith.constant 0 : index
    %26 = vector.load %arg3[%c5, %c0_18, %c0_19] : memref<9x8x4xbf16, #tpu.memory_space<vmem>>, vector<1x8x4xbf16>
    %27 = vector.shape_cast %26 : vector<1x8x4xbf16> to vector<8x4xbf16>
    %28 = vector.extract_strided_slice %1 {offsets = [0, 20], sizes = [4, 3072], strides = [1, 1]} : vector<4x3200xbf16> to vector<4x3072xbf16>
    %cst_20 = arith.constant dense<0.000000e+00> : vector<8x3072xf32>
    %29 = tpu.matmul %27, %28, %cst_20 {dimension_numbers = #tpu.dot_dimension_numbers<[1], [0], [0], [1], [0, 0, 1, 1], [], []>} : vector<8x4xbf16>, vector<4x3072xbf16>, vector<8x3072xf32> -> vector<8x3072xf32>
    %30 = arith.addf %25, %29 : vector<8x3072xf32>
    %c6 = arith.constant 6 : index
    %c0_21 = arith.constant 0 : index
    %c0_22 = arith.constant 0 : index
    %31 = vector.load %arg3[%c6, %c0_21, %c0_22] : memref<9x8x4xbf16, #tpu.memory_space<vmem>>, vector<1x8x4xbf16>
    %32 = vector.shape_cast %31 : vector<1x8x4xbf16> to vector<8x4xbf16>
    %33 = vector.extract_strided_slice %1 {offsets = [0, 36], sizes = [4, 3072], strides = [1, 1]} : vector<4x3200xbf16> to vector<4x3072xbf16>
    %cst_23 = arith.constant dense<0.000000e+00> : vector<8x3072xf32>
    %34 = tpu.matmul %32, %33, %cst_23 {dimension_numbers = #tpu.dot_dimension_numbers<[1], [0], [0], [1], [0, 0, 1, 1], [], []>} : vector<8x4xbf16>, vector<4x3072xbf16>, vector<8x3072xf32> -> vector<8x3072xf32>
    %35 = arith.addf %30, %34 : vector<8x3072xf32>
    %c7 = arith.constant 7 : index
    %c0_24 = arith.constant 0 : index
    %c0_25 = arith.constant 0 : index
    %36 = vector.load %arg3[%c7, %c0_24, %c0_25] : memref<9x8x4xbf16, #tpu.memory_space<vmem>>, vector<1x8x4xbf16>
    %37 = vector.shape_cast %36 : vector<1x8x4xbf16> to vector<8x4xbf16>
    %38 = vector.extract_strided_slice %1 {offsets = [0, 37], sizes = [4, 3072], strides = [1, 1]} : vector<4x3200xbf16> to vector<4x3072xbf16>
    %cst_26 = arith.constant dense<0.000000e+00> : vector<8x3072xf32>
    %39 = tpu.matmul %37, %38, %cst_26 {dimension_numbers = #tpu.dot_dimension_numbers<[1], [0], [0], [1], [0, 0, 1, 1], [], []>} : vector<8x4xbf16>, vector<4x3072xbf16>, vector<8x3072xf32> -> vector<8x3072xf32>
    %40 = arith.addf %35, %39 : vector<8x3072xf32>
    %c8 = arith.constant 8 : index
    %c0_27 = arith.constant 0 : index
    %c0_28 = arith.constant 0 : index
    %41 = vector.load %arg3[%c8, %c0_27, %c0_28] : memref<9x8x4xbf16, #tpu.memory_space<vmem>>, vector<1x8x4xbf16>
    %42 = vector.shape_cast %41 : vector<1x8x4xbf16> to vector<8x4xbf16>
    %43 = vector.extract_strided_slice %1 {offsets = [0, 38], sizes = [4, 3072], strides = [1, 1]} : vector<4x3200xbf16> to vector<4x3072xbf16>
    %cst_29 = arith.constant dense<0.000000e+00> : vector<8x3072xf32>
    %44 = tpu.matmul %42, %43, %cst_29 {dimension_numbers = #tpu.dot_dimension_numbers<[1], [0], [0], [1], [0, 0, 1, 1], [], []>} : vector<8x4xbf16>, vector<4x3072xbf16>, vector<8x3072xf32> -> vector<8x3072xf32>
    %45 = arith.addf %40, %44 : vector<8x3072xf32>
    %c0_30 = arith.constant 0 : index
    %c0_31 = arith.constant 0 : index
    %46 = vector.load %arg4[%c0_30, %c0_31] : memref<8x1xf32, #tpu.memory_space<vmem>>, vector<8x1xf32>
    %47 = vector.broadcast %46 : vector<8x1xf32> to vector<8x3072xf32>
    %48 = arith.mulf %45, %47 : vector<8x3072xf32>
    %c0_32 = arith.constant 0 : index
    %c0_33 = arith.constant 0 : index
    %49 = vector.load %arg5[%c0_32, %c0_33] : memref<8x1xf32, #tpu.memory_space<vmem>>, vector<8x1xf32>
    %50 = vector.broadcast %49 : vector<8x1xf32> to vector<8x3072xf32>
    %51 = arith.addf %48, %50 : vector<8x3072xf32>
    %cst_34 = arith.constant 0.000000e+00 : f32
    %52 = vector.broadcast %cst_34 : f32 to vector<8x3072xf32>
    %53 = arith.maximumf %51, %52 : vector<8x3072xf32>
    %54 = arith.truncf %53 : vector<8x3072xf32> to vector<8x3072xbf16>
    %c0_35 = arith.constant 0 : index
    %c0_36 = arith.constant 0 : index
    %55 = vector.load %arg9[%c0_35, %c0_36] : memref<8x3072xbf16, #tpu.memory_space<vmem>>, vector<8x3072xbf16>
    tpu.vector_store %arg9[%c0_35, %c0_36], %54 {strides = array<i32>} : memref<8x3072xbf16, #tpu.memory_space<vmem>>, vector<8x3072xbf16>,
    %c0_i32 = arith.constant 0 : i32
    %56 = arith.cmpi eq, %arg1, %c0_i32 : i32
    %57 = arith.extui %56 : i1 to i32
    %c0_i32_37 = arith.constant 0 : i32
    %58 = arith.cmpi ne, %57, %c0_i32_37 : i32
    scf.if %58 {
      %cst_70 = arith.constant 0.000000e+00 : bf16
      %92 = vector.broadcast %cst_70 : bf16 to vector<8x768xbf16>
      %c0_71 = arith.constant 0 : index
      %c0_72 = arith.constant 0 : index
      %93 = vector.load %arg9[%c0_71, %c0_72] : memref<8x3072xbf16, #tpu.memory_space<vmem>>, vector<8x768xbf16>
      tpu.vector_store %arg9[%c0_71, %c0_72], %92 {strides = array<i32>} : memref<8x3072xbf16, #tpu.memory_space<vmem>>, vector<8x768xbf16>,
    } else {
    }
    %c1_i32 = arith.constant 1 : i32
    %59 = arith.cmpi eq, %arg1, %c1_i32 : i32
    %60 = arith.extui %59 : i1 to i32
    %c0_i32_38 = arith.constant 0 : i32
    %61 = arith.cmpi ne, %60, %c0_i32_38 : i32
    scf.if %61 {
      %cst_70 = arith.constant 0.000000e+00 : bf16
      %92 = vector.broadcast %cst_70 : bf16 to vector<8x768xbf16>
      %c0_71 = arith.constant 0 : index
      %c2304 = arith.constant 2304 : index
      %93 = vector.load %arg9[%c0_71, %c2304] : memref<8x3072xbf16, #tpu.memory_space<vmem>>, vector<8x768xbf16>
      tpu.vector_store %arg9[%c0_71, %c2304], %92 {strides = array<i32>} : memref<8x3072xbf16, #tpu.memory_space<vmem>>, vector<8x768xbf16>,
    } else {
    }
    %c0_39 = arith.constant 0 : index
    %c0_40 = arith.constant 0 : index
    %c0_41 = arith.constant 0 : index
    %62 = vector.load %arg6[%c0_39, %c0_40, %c0_41] : memref<5x8x8xbf16, #tpu.memory_space<vmem>>, vector<1x8x8xbf16>
    %63 = vector.shape_cast %62 : vector<1x8x8xbf16> to vector<8x8xbf16>
    %c0_42 = arith.constant 0 : index
    %c0_43 = arith.constant 0 : index
    %64 = vector.load %arg9[%c0_42, %c0_43] : memref<8x3072xbf16, #tpu.memory_space<vmem>>, vector<8x1536xbf16>
    %cst_44 = arith.constant dense<0.000000e+00> : vector<8x1536xf32>
    %65 = tpu.matmul %63, %64, %cst_44 {dimension_numbers = #tpu.dot_dimension_numbers<[1], [0], [0], [1], [0, 0, 1, 1], [], []>} : vector<8x8xbf16>, vector<8x1536xbf16>, vector<8x1536xf32> -> vector<8x1536xf32>
    %c1_45 = arith.constant 1 : index
    %c0_46 = arith.constant 0 : index
    %c0_47 = arith.constant 0 : index
    %66 = vector.load %arg6[%c1_45, %c0_46, %c0_47] : memref<5x8x8xbf16, #tpu.memory_space<vmem>>, vector<1x8x8xbf16>
    %67 = vector.shape_cast %66 : vector<1x8x8xbf16> to vector<8x8xbf16>
    %c0_48 = arith.constant 0 : index
    %c384 = arith.constant 384 : index
    %68 = vector.load %arg9[%c0_48, %c384] : memref<8x3072xbf16, #tpu.memory_space<vmem>>, vector<8x1536xbf16>
    %cst_49 = arith.constant dense<0.000000e+00> : vector<8x1536xf32>
    %69 = tpu.matmul %67, %68, %cst_49 {dimension_numbers = #tpu.dot_dimension_numbers<[1], [0], [0], [1], [0, 0, 1, 1], [], []>} : vector<8x8xbf16>, vector<8x1536xbf16>, vector<8x1536xf32> -> vector<8x1536xf32>
    %70 = arith.addf %65, %69 : vector<8x1536xf32>
    %c2_50 = arith.constant 2 : index
    %c0_51 = arith.constant 0 : index
    %c0_52 = arith.constant 0 : index
    %71 = vector.load %arg6[%c2_50, %c0_51, %c0_52] : memref<5x8x8xbf16, #tpu.memory_space<vmem>>, vector<1x8x8xbf16>
    %72 = vector.shape_cast %71 : vector<1x8x8xbf16> to vector<8x8xbf16>
    %c0_53 = arith.constant 0 : index
    %c768 = arith.constant 768 : index
    %73 = vector.load %arg9[%c0_53, %c768] : memref<8x3072xbf16, #tpu.memory_space<vmem>>, vector<8x1536xbf16>
    %cst_54 = arith.constant dense<0.000000e+00> : vector<8x1536xf32>
    %74 = tpu.matmul %72, %73, %cst_54 {dimension_numbers = #tpu.dot_dimension_numbers<[1], [0], [0], [1], [0, 0, 1, 1], [], []>} : vector<8x8xbf16>, vector<8x1536xbf16>, vector<8x1536xf32> -> vector<8x1536xf32>
    %75 = arith.addf %70, %74 : vector<8x1536xf32>
    %c3_55 = arith.constant 3 : index
    %c0_56 = arith.constant 0 : index
    %c0_57 = arith.constant 0 : index
    %76 = vector.load %arg6[%c3_55, %c0_56, %c0_57] : memref<5x8x8xbf16, #tpu.memory_space<vmem>>, vector<1x8x8xbf16>
    %77 = vector.shape_cast %76 : vector<1x8x8xbf16> to vector<8x8xbf16>
    %c0_58 = arith.constant 0 : index
    %c1152 = arith.constant 1152 : index
    %78 = vector.load %arg9[%c0_58, %c1152] : memref<8x3072xbf16, #tpu.memory_space<vmem>>, vector<8x1536xbf16>
    %cst_59 = arith.constant dense<0.000000e+00> : vector<8x1536xf32>
    %79 = tpu.matmul %77, %78, %cst_59 {dimension_numbers = #tpu.dot_dimension_numbers<[1], [0], [0], [1], [0, 0, 1, 1], [], []>} : vector<8x8xbf16>, vector<8x1536xbf16>, vector<8x1536xf32> -> vector<8x1536xf32>
    %80 = arith.addf %75, %79 : vector<8x1536xf32>
    %c4_60 = arith.constant 4 : index
    %c0_61 = arith.constant 0 : index
    %c0_62 = arith.constant 0 : index
    %81 = vector.load %arg6[%c4_60, %c0_61, %c0_62] : memref<5x8x8xbf16, #tpu.memory_space<vmem>>, vector<1x8x8xbf16>
    %82 = vector.shape_cast %81 : vector<1x8x8xbf16> to vector<8x8xbf16>
    %c0_63 = arith.constant 0 : index
    %c1536 = arith.constant 1536 : index
    %83 = vector.load %arg9[%c0_63, %c1536] : memref<8x3072xbf16, #tpu.memory_space<vmem>>, vector<8x1536xbf16>
    %cst_64 = arith.constant dense<0.000000e+00> : vector<8x1536xf32>
    %84 = tpu.matmul %82, %83, %cst_64 {dimension_numbers = #tpu.dot_dimension_numbers<[1], [0], [0], [1], [0, 0, 1, 1], [], []>} : vector<8x8xbf16>, vector<8x1536xbf16>, vector<8x1536xf32> -> vector<8x1536xf32>
    %85 = arith.addf %80, %84 : vector<8x1536xf32>
    %c0_65 = arith.constant 0 : index
    %c0_66 = arith.constant 0 : index
    %86 = vector.load %arg7[%c0_65, %c0_66] : memref<8x1xf32, #tpu.memory_space<vmem>>, vector<8x1xf32>
    %87 = vector.broadcast %86 : vector<8x1xf32> to vector<8x1536xf32>
    %88 = arith.addf %85, %87 : vector<8x1536xf32>
    %c0_67 = arith.constant 0 : index
    %c0_68 = arith.constant 0 : index
    %c0_69 = arith.constant 0 : index
    %89 = vector.load %arg8[%c0_67, %c0_68, %c0_69] : memref<1x8x1536xf32, #tpu.memory_space<vmem>>, vector<1x8x1536xf32>
    %90 = vector.shape_cast %89 : vector<1x8x1536xf32> to vector<8x1536xf32>
    %91 = vector.shape_cast %88 : vector<8x1536xf32> to vector<1x8x1536xf32>
    tpu.vector_store %arg8[%c0_67, %c0_68, %c0_69], %91 {strides = array<i32>} : memref<1x8x1536xf32, #tpu.memory_space<vmem>>, vector<1x8x1536xf32>,
    return
  }
  func.func @transform_0(%arg0: i32, %arg1: i32) -> (i32, i32, i32, i32) {
    %c0_i32 = arith.constant 0 : i32
    %c0_i32_0 = arith.constant 0 : i32
    %c0_i32_1 = arith.constant 0 : i32
    return %arg0, %arg1, %c0_i32, %c0_i32_0 : i32, i32, i32, i32
  }
  func.func @transform_1(%arg0: i32, %arg1: i32) -> (i32, i32, i32) {
    %c0_i32 = arith.constant 0 : i32
    %c0_i32_0 = arith.constant 0 : i32
    %c0_i32_1 = arith.constant 0 : i32
    %c0_i32_2 = arith.constant 0 : i32
    return %c0_i32, %c0_i32_0, %c0_i32_1 : i32, i32, i32
  }
  func.func @transform_2(%arg0: i32, %arg1: i32) -> (i32, i32) {
    %c0_i32 = arith.constant 0 : i32
    %c0_i32_0 = arith.constant 0 : i32
    %c0_i32_1 = arith.constant 0 : i32
    return %c0_i32, %c0_i32_0 : i32, i32
  }
  func.func @transform_3(%arg0: i32, %arg1: i32) -> (i32, i32) {
    %c0_i32 = arith.constant 0 : i32
    %c0_i32_0 = arith.constant 0 : i32
    %c0_i32_1 = arith.constant 0 : i32
    return %c0_i32, %c0_i32_0 : i32, i32
  }
  func.func @transform_4(%arg0: i32, %arg1: i32) -> (i32, i32, i32) {
    %c0_i32 = arith.constant 0 : i32
    %c0_i32_0 = arith.constant 0 : i32
    %c0_i32_1 = arith.constant 0 : i32
    %c0_i32_2 = arith.constant 0 : i32
    return %c0_i32, %c0_i32_0, %c0_i32_1 : i32, i32, i32
  }
  func.func @transform_5(%arg0: i32, %arg1: i32) -> (i32, i32) {
    %c0_i32 = arith.constant 0 : i32
    %c0_i32_0 = arith.constant 0 : i32
    %c0_i32_1 = arith.constant 0 : i32
    return %c0_i32, %c0_i32_0 : i32, i32
  }
  func.func @transform_6(%arg0: i32, %arg1: i32) -> (i32, i32, i32) {
    %c0_i32 = arith.constant 0 : i32
    %c0_i32_0 = arith.constant 0 : i32
    return %arg0, %c0_i32, %arg1 : i32, i32, i32
  }
}

</mosaic_0001>

<llo_original>
// kernel: conv2plus1d_temporal_enhanced.1
$region0: #{conv2plus1d_temporal_enhanced.1}
  #allocation0 [shape = 'u32[]', space=smem, size = 0x4, offset = 0x4, fixed_abs, tag = 'smem constant byte address 0x4 - core index']
  #allocation1 [shape = 'u32[144,128]{1,0:T(1,128)}', space=vmem, size = 0x12000, scoped, tag = 'internal scratch']
  #allocation2 [shape = 'bf16[8,3072]{1,0:T(8,128)(2,1)}', space=vmem, size = 0xc000, scoped, tag = 'scratch operand']
  %s0 = inlined_call_operand.vmem [shape: bf16[2,2,4,3200], index: 0, kind: input, shape index: {}]
  %s1 = inlined_call_operand.vmem [shape: bf16[9,8,4], index: 1, kind: input, shape index: {}]
  %s2 = inlined_call_operand.vmem [shape: f32[8,1], index: 2, kind: input, shape index: {}]
  %s3 = inlined_call_operand.vmem [shape: f32[8,1], index: 3, kind: input, shape index: {}]
  %s4 = inlined_call_operand.vmem [shape: bf16[5,8,8], index: 4, kind: input, shape index: {}]
  %s5 = inlined_call_operand.vmem [shape: f32[8,1], index: 5, kind: input, shape index: {}]
  %s6 = inlined_call_operand.vmem [shape: f32[2,8,3072], index: 6, kind: output, shape index: {}]
  %s7 = sld [smem:[#allocation0]]
  $region65: #{conv2plus1d_temporal_enhanced.1} parent=0
    _
  %s9 = ssub.s32 1, %s7
  %s10 = scalar_select 0, %s9, %s7
  loop: start=0, step=1, limit=6
  $region2: #{conv2plus1d_temporal_enhanced.1} parent=0 // loop_pre_header
    _
  $region3: #{conv2plus1d_temporal_enhanced.1} parent=0 // loop_header
    %s12 = sphi 0, %s16
    %p13 = scmp.ge.s32.totalorder %s12, 6
    %s19 = sphi 0, %s31
    %s20 = sphi 0, %s27
    %s21 = sphi 0, %s19
    %s22 = sphi 0, %s20
    %s23 = sphi 0, %s21
    %s24 = sphi 0, %s22
    %s36 = sphi 0, %s38
    %s39 = sphi 0, %s36
    %s40 = sphi 0, %s39
    %s56 = sphi 0, %s40
    %s60 = sphi 0, %s60
    %s62 = sphi 0, %s60
    %s63 = sphi 0, %s62
    %s77 = sphi 0, %s63
    %s81 = sphi 0, %s81
    %s83 = sphi 0, %s81
    %s84 = sphi 0, %s83
    %s98 = sphi 0, %s84
    %s102 = sphi 0, %s102
    %s104 = sphi 0, %s102
    %s105 = sphi 0, %s104
    %s119 = sphi 0, %s105
    %s123 = sphi 0, %s123
    %s125 = sphi 0, %s123
    %s126 = sphi 0, %s125
    %s140 = sphi 0, %s126
    %s144 = sphi 0, %s144
    %s146 = sphi 0, %s144
    %s147 = sphi 0, %s146
    %s161 = sphi 0, %s147
    %s169 = sphi 0, %s171
    %s172 = sphi 0, %s169
    %s173 = sphi 0, %s172
    %s189 = sphi 0, %s173
  $region4: #{conv2plus1d_temporal_enhanced.1} parent=0 // loop_header_branch
    %15 = sbr.rel (%p13) target = $region8
  $region5: #{conv2plus1d_temporal_enhanced.1} parent=0 // loop_body
    %s17 = ssub.s32 %s12, 1
    %s18 = ssub.s32 %s12, 2
    %s25 = sadd.s32 1, %s20
    %p26 = scmp.ge.s32.totalorder %s25, 2
    %s27 = scalar_select %p26, 0, %s25
    %s28 = sadd.s32 1, %s19
    %s29 = scalar_select %p26, %s28, %s19
    %p30 = scmp.ge.s32.totalorder %s29, 2
    %s31 = scalar_select %p30, 0, %s29
    %s32 = ssub.s32 %s19, %s31
    %s33 = ssub.s32 %s20, %s27
    %s34 = sor.u32 %s32, %s33
    %p35 = scmp.eq.s32.totalorder %s34, 0
    %s37 = sadd.s32 %s36, 1
    %s38 = scalar_select %p35, %s36, %s37
    %p41 = pneg %p35
    %p42 = scmp.eq.s32.totalorder %s12, 3
    %p43 = por %p41, %p42
    %p44 = scmp.ne.s32.totalorder %s36, %s39
    %p45 = scmp.eq.s32.totalorder %s12, 0
    %p46 = por %p44, %p45
    %p47 = scmp.ne.s32.totalorder %s36, %s39
    %p48 = scmp.eq.s32.totalorder %s17, 3
    %p49 = por %p47, %p48
    %p50 = scmp.ne.s32.totalorder %s39, %s40
    %p51 = scmp.eq.s32.totalorder %s17, 0
    %p52 = por %p50, %p51
    %p53 = scmp.ne.s32.totalorder %s39, %s40
    %p54 = scmp.eq.s32.totalorder %s18, 3
    %p55 = por %p53, %p54
    %p57 = scmp.ne.s32.totalorder %s40, %s56
    %p58 = scmp.eq.s32.totalorder %s18, 0
    %p59 = por %p57, %p58
    %s61 = sadd.s32 %s60, 1
    %p64 = scmp.eq.s32.totalorder %s12, 3
    %p65 = scmp.ne.s32.totalorder %s60, %s62
    %p66 = scmp.eq.s32.totalorder %s12, 0
    %p67 = por %p65, %p66
    %p68 = scmp.ne.s32.totalorder %s60, %s62
    %p69 = scmp.eq.s32.totalorder %s17, 3
    %p70 = por %p68, %p69
    %p71 = scmp.ne.s32.totalorder %s62, %s63
    %p72 = scmp.eq.s32.totalorder %s17, 0
    %p73 = por %p71, %p72
    %p74 = scmp.ne.s32.totalorder %s62, %s63
    %p75 = scmp.eq.s32.totalorder %s18, 3
    %p76 = por %p74, %p75
    %p78 = scmp.ne.s32.totalorder %s63, %s77
    %p79 = scmp.eq.s32.totalorder %s18, 0
    %p80 = por %p78, %p79
    %s82 = sadd.s32 %s81, 1
    %p85 = scmp.eq.s32.totalorder %s12, 3
    %p86 = scmp.ne.s32.totalorder %s81, %s83
    %p87 = scmp.eq.s32.totalorder %s12, 0
    %p88 = por %p86, %p87
    %p89 = scmp.ne.s32.totalorder %s81, %s83
    %p90 = scmp.eq.s32.totalorder %s17, 3
    %p91 = por %p89, %p90
    %p92 = scmp.ne.s32.totalorder %s83, %s84
    %p93 = scmp.eq.s32.totalorder %s17, 0
    %p94 = por %p92, %p93
    %p95 = scmp.ne.s32.totalorder %s83, %s84
    %p96 = scmp.eq.s32.totalorder %s18, 3
    %p97 = por %p95, %p96
    %p99 = scmp.ne.s32.totalorder %s84, %s98
    %p100 = scmp.eq.s32.totalorder %s18, 0
    %p101 = por %p99, %p100
    %s103 = sadd.s32 %s102, 1
    %p106 = scmp.eq.s32.totalorder %s12, 3
    %p107 = scmp.ne.s32.totalorder %s102, %s104
    %p108 = scmp.eq.s32.totalorder %s12, 0
    %p109 = por %p107, %p108
    %p110 = scmp.ne.s32.totalorder %s102, %s104
    %p111 = scmp.eq.s32.totalorder %s17, 3
    %p112 = por %p110, %p111
    %p113 = scmp.ne.s32.totalorder %s104, %s105
    %p114 = scmp.eq.s32.totalorder %s17, 0
    %p115 = por %p113, %p114
    %p116 = scmp.ne.s32.totalorder %s104, %s105
    %p117 = scmp.eq.s32.totalorder %s18, 3
    %p118 = por %p116, %p117
    %p120 = scmp.ne.s32.totalorder %s105, %s119
    %p121 = scmp.eq.s32.totalorder %s18, 0
    %p122 = por %p120, %p121
    %s124 = sadd.s32 %s123, 1
    %p127 = scmp.eq.s32.totalorder %s12, 3
    %p128 = scmp.ne.s32.totalorder %s123, %s125
    %p129 = scmp.eq.s32.totalorder %s12, 0
    %p130 = por %p128, %p129
    %p131 = scmp.ne.s32.totalorder %s123, %s125
    %p132 = scmp.eq.s32.totalorder %s17, 3
    %p133 = por %p131, %p132
    %p134 = scmp.ne.s32.totalorder %s125, %s126
    %p135 = scmp.eq.s32.totalorder %s17, 0
    %p136 = por %p134, %p135
    %p137 = scmp.ne.s32.totalorder %s125, %s126
    %p138 = scmp.eq.s32.totalorder %s18, 3
    %p139 = por %p137, %p138
    %p141 = scmp.ne.s32.totalorder %s126, %s140
    %p142 = scmp.eq.s32.totalorder %s18, 0
    %p143 = por %p141, %p142
    %s145 = sadd.s32 %s144, 1
    %p148 = scmp.eq.s32.totalorder %s12, 3
    %p149 = scmp.ne.s32.totalorder %s144, %s146
    %p150 = scmp.eq.s32.totalorder %s12, 0
    %p151 = por %p149, %p150
    %p152 = scmp.ne.s32.totalorder %s144, %s146
    %p153 = scmp.eq.s32.totalorder %s17, 3
    %p154 = por %p152, %p153
    %p155 = scmp.ne.s32.totalorder %s146, %s147
    %p156 = scmp.eq.s32.totalorder %s17, 0
    %p157 = por %p155, %p156
    %p158 = scmp.ne.s32.totalorder %s146, %s147
    %p159 = scmp.eq.s32.totalorder %s18, 3
    %p160 = por %p158, %p159
    %p162 = scmp.ne.s32.totalorder %s147, %s161
    %p163 = scmp.eq.s32.totalorder %s18, 0
    %p164 = por %p162, %p163
    %s165 = ssub.s32 %s19, %s31
    %s166 = ssub.s32 %s20, %s27
    %s167 = sor.u32 %s165, %s166
    %p168 = scmp.eq.s32.totalorder %s167, 0
    %s170 = sadd.s32 %s169, 1
    %s171 = scalar_select %p168, %s169, %s170
    %p174 = pneg %p168
    %p175 = scmp.eq.s32.totalorder %s12, 3
    %p176 = por %p174, %p175
    %p177 = scmp.ne.s32.totalorder %s169, %s172
    %p178 = scmp.eq.s32.totalorder %s12, 0
    %p179 = por %p177, %p178
    %p180 = scmp.ne.s32.totalorder %s169, %s172
    %p181 = scmp.eq.s32.totalorder %s17, 3
    %p182 = por %p180, %p181
    %p183 = scmp.ne.s32.totalorder %s172, %s173
    %p184 = scmp.eq.s32.totalorder %s17, 0
    %p185 = por %p183, %p184
    %p186 = scmp.ne.s32.totalorder %s172, %s173
    %p187 = scmp.eq.s32.totalorder %s18, 3
    %p188 = por %p186, %p187
    %p190 = scmp.ne.s32.totalorder %s173, %s189
    %p191 = scmp.eq.s32.totalorder %s18, 0
    %p192 = por %p190, %p191
    %p193 = scmp.le.s32.totalorder 1, %s12
    %p194 = scmp.lt.s32.totalorder %s12, 5
    %p195 = pnand %p193, %p194
    %p196 = pneg %p195
    // Predicated region
    $region9: #{conv2plus1d_temporal_enhanced.1} parent=5 // pred_check
      _
    $region10: #{conv2plus1d_temporal_enhanced.1} parent=5 // pred_check_branch
      %198 = sbr.rel (%p195) target = $region12
    $region11: #{conv2plus1d_temporal_enhanced.1} parent=5 // pred_region
      %s199 = ssub.s32 %s12, 1
      // Predicated region
      $region13: #{conv2plus1d_temporal_enhanced.1} parent=11 // pred_check
        %p200 = pneg %p73
      $region14: #{conv2plus1d_temporal_enhanced.1} parent=11 // pred_check_branch
        %202 = sbr.rel (%p200) target = $region16
      $region15: #{conv2plus1d_temporal_enhanced.1} parent=11 // pred_region
        _
      $region16: #{conv2plus1d_temporal_enhanced.1} parent=11 // pred_fallthru
        _
      // Predicated region
      $region17: #{conv2plus1d_temporal_enhanced.1} parent=11 // pred_check
        %p203 = pneg %p94
      $region18: #{conv2plus1d_temporal_enhanced.1} parent=11 // pred_check_branch
        %205 = sbr.rel (%p203) target = $region20
      $region19: #{conv2plus1d_temporal_enhanced.1} parent=11 // pred_region
        _
      $region20: #{conv2plus1d_temporal_enhanced.1} parent=11 // pred_fallthru
        _
      // Predicated region
      $region21: #{conv2plus1d_temporal_enhanced.1} parent=11 // pred_check
        %p206 = pneg %p115
      $region22: #{conv2plus1d_temporal_enhanced.1} parent=11 // pred_check_branch
        %208 = sbr.rel (%p206) target = $region24
      $region23: #{conv2plus1d_temporal_enhanced.1} parent=11 // pred_region
        _
      $region24: #{conv2plus1d_temporal_enhanced.1} parent=11 // pred_fallthru
        _
      // Predicated region
      $region25: #{conv2plus1d_temporal_enhanced.1} parent=11 // pred_check
        %p209 = pneg %p136
      $region26: #{conv2plus1d_temporal_enhanced.1} parent=11 // pred_check_branch
        %211 = sbr.rel (%p209) target = $region28
      $region27: #{conv2plus1d_temporal_enhanced.1} parent=11 // pred_region
        _
      $region28: #{conv2plus1d_temporal_enhanced.1} parent=11 // pred_fallthru
        _
      // Predicated region
      $region29: #{conv2plus1d_temporal_enhanced.1} parent=11 // pred_check
        %p212 = pneg %p157
      $region30: #{conv2plus1d_temporal_enhanced.1} parent=11 // pred_check_branch
        %214 = sbr.rel (%p212) target = $region32
      $region31: #{conv2plus1d_temporal_enhanced.1} parent=11 // pred_region
        _
      $region32: #{conv2plus1d_temporal_enhanced.1} parent=11 // pred_fallthru
        _
    $region12: #{conv2plus1d_temporal_enhanced.1} parent=5 // pred_fallthru
      _
    %p215 = scmp.lt.s32.totalorder %s12, 4
    // Predicated region
    $region33: #{conv2plus1d_temporal_enhanced.1} parent=5 // pred_check
      %p216 = pneg %p215
    $region34: #{conv2plus1d_temporal_enhanced.1} parent=5 // pred_check_branch
      %218 = sbr.rel (%p216) target = $region36
    $region35: #{conv2plus1d_temporal_enhanced.1} parent=5 // pred_region
      // Predicated region
      $region37: #{conv2plus1d_temporal_enhanced.1} parent=35 // pred_check
        %p219 = pneg %p46
      $region38: #{conv2plus1d_temporal_enhanced.1} parent=35 // pred_check_branch
        %221 = sbr.rel (%p219) target = $region40
      $region39: #{conv2plus1d_temporal_enhanced.1} parent=35 // pred_region
        %p222 = scmp.lt.s32.totalorder %s19, 1
        %s223 = scalar_select %p222, %s19, 1
        %p224 = scmp.lt.s32.totalorder %s20, 1
        %s225 = scalar_select %p224, %s20, 1
        %s226 = smul.addr %s225, 25
        %s227 = smul.addr %s223, 50
        %s228 = sadd.s32 %s226, %s227
        %s229 = smul.addr %s228, 2
        %s230 = scalar_lea.vmem %s0, %s229
      $region40: #{conv2plus1d_temporal_enhanced.1} parent=35 // pred_fallthru
        _
    $region36: #{conv2plus1d_temporal_enhanced.1} parent=5 // pred_fallthru
      _
    %p231 = scmp.le.s32.totalorder 1, %s12
    %p232 = scmp.lt.s32.totalorder %s12, 5
    %p233 = pnand %p231, %p232
    %p234 = pneg %p233
    // Predicated region
    $region41: #{conv2plus1d_temporal_enhanced.1} parent=5 // pred_check
      _
    $region42: #{conv2plus1d_temporal_enhanced.1} parent=5 // pred_check_branch
      %236 = sbr.rel (%p233) target = $region44
    $region43: #{conv2plus1d_temporal_enhanced.1} parent=5 // pred_region
      %s237 = ssub.s32 %s12, 1
      %p238 = scmp.lt.s32.totalorder %s21, 1
      %s239 = scalar_select %p238, %s21, 1
      %p240 = scmp.lt.s32.totalorder %s22, 1
      %s241 = scalar_select %p240, %s22, 1
      %s242 = smul.addr %s241, 25
      %s243 = smul.addr %s239, 50
      %s244 = sadd.s32 %s242, %s243
      %s245 = smul.addr %s244, 2
      %s246 = scalar_lea.vmem %s0, %s245
      %p247 = pneg %p52
      %p248 = pneg %p49
      %p249 = pneg %p73
      %p250 = pneg %p70
      %p251 = pneg %p94
      %p252 = pneg %p91
      %p253 = pneg %p115
      %p254 = pneg %p112
      %p255 = pneg %p136
      %p256 = pneg %p133
      %p257 = pneg %p157
      %p258 = pneg %p154
      %p259 = pneg %p185
      %p260 = pneg %p182
      %s261 = smul.u32 12, %s22
      %p262 = scmp.lt.s32.totalorder %s21, 1
      %s263 = scalar_select %p262, %s21, 1
      %p264 = scmp.lt.s32.totalorder %s261, 23
      %s265 = scalar_select %p264, %s261, 23
      %s266 = smul.addr %s263, 24
      %s267 = sadd.s32 %s265, %s266
      %s268 = smul.addr %s267, 8
      %s269 = scalar_lea.vmem %s6, %s268
      %p270 = scmp.lt.s32.totalorder %s21, 1
      %s271 = scalar_select %p270, %s21, 1
      %p272 = scmp.lt.s32.totalorder %s22, 1
      %s273 = scalar_select %p272, %s22, 1
      %s274 = smul.addr %s273, 25
      %s275 = smul.addr %s271, 50
      %s276 = sadd.s32 %s274, %s275
      %s277 = smul.addr %s276, 2
      %s278 = scalar_lea.vmem %s0, %s277
      %s279 = smul.u32 12, %s22
      %p280 = scmp.lt.s32.totalorder %s21, 1
      %s281 = scalar_select %p280, %s21, 1
      %p282 = scmp.lt.s32.totalorder %s279, 23
      %s283 = scalar_select %p282, %s279, 23
      %s284 = smul.addr %s281, 24
      %s285 = sadd.s32 %s283, %s284
      %s286 = smul.addr %s285, 8
      %s287 = scalar_lea.vmem %s6, %s286
      %s288 = smul.u32 12, %s22
      %v290 = vld [vmem:[%s278] sm:$0xff]
      %v291 = vld [vmem:[%s278 + $0x8] sm:$0xff]
      %v292 = vld [vmem:[%s278 + $0x10] sm:$0xff]
      %v293 = vld [vmem:[%s278 + $0x18] sm:$0xff]
      %v294 = vld [vmem:[%s278 + $0x20] sm:$0xff]
      %v295 = vld [vmem:[%s278 + $0x28] sm:$0xff]
      %v296 = vld [vmem:[%s278 + $0x30] sm:$0x3]
      %v297 = vld [vmem:[%s1] sm:$0xf]
      %s298 = scalar_lea.vmem %s1, 4
      %v299 = vld [vmem:[%s298] sm:$0xf]
      %v307 = vcombine.high %v290, %v290
      %v309 = vunpack.c.l.s4 1983009808
      %v310 = vunpack.c.0.s8 %v309
      %v311 = vlaneseq
      %v312 = vshrl.u32 %v311, 7
      %v313 = vsub.s32 %v310, %v312
      %v314 = vrot.slane %v290, %v313
      %v316 = vunpack.c.l.s4 1983009808
      %v317 = vunpack.c.0.s8 %v316
      %v318 = vlaneseq
      %v319 = vshrl.u32 %v318, 7
      %v320 = vsub.s32 %v317, %v319
      %v321 = vrot.slane %v307, %v320
      %v322 = vcombine.high %v314, %v314
      %v323 = vcombine.high %v321, %v321
      %v324 = vcombine.high %v291, %v291
      %v326 = vunpack.c.l.s4 1983009808
      %v327 = vunpack.c.0.s8 %v326
      %v328 = vlaneseq
      %v329 = vshrl.u32 %v328, 7
      %v330 = vsub.s32 %v327, %v329
      %v331 = vrot.slane %v291, %v330
      %v333 = vunpack.c.l.s4 1983009808
      %v334 = vunpack.c.0.s8 %v333
      %v335 = vlaneseq
      %v336 = vshrl.u32 %v335, 7
      %v337 = vsub.s32 %v334, %v336
      %v338 = vrot.slane %v324, %v337
      %v339 = vcombine.high %v331, %v331
      %v340 = vcombine.high %v338, %v338
      %v341 = vcombine.high %v292, %v292
      %v343 = vunpack.c.l.s4 1983009808
      %v344 = vunpack.c.0.s8 %v343
      %v345 = vlaneseq
      %v346 = vshrl.u32 %v345, 7
      %v347 = vsub.s32 %v344, %v346
      %v348 = vrot.slane %v292, %v347
      %v350 = vunpack.c.l.s4 1983009808
      %v351 = vunpack.c.0.s8 %v350
      %v352 = vlaneseq
      %v353 = vshrl.u32 %v352, 7
      %v354 = vsub.s32 %v351, %v353
      %v355 = vrot.slane %v341, %v354
      %v356 = vcombine.high %v348, %v348
      %v357 = vcombine.high %v355, %v355
      %v358 = vcombine.high %v293, %v293
      %v360 = vunpack.c.l.s4 1983009808
      %v361 = vunpack.c.0.s8 %v360
      %v362 = vlaneseq
      %v363 = vshrl.u32 %v362, 7
      %v364 = vsub.s32 %v361, %v363
      %v365 = vrot.slane %v293, %v364
      %v367 = vunpack.c.l.s4 1983009808
      %v368 = vunpack.c.0.s8 %v367
      %v369 = vlaneseq
      %v370 = vshrl.u32 %v369, 7
      %v371 = vsub.s32 %v368, %v370
      %v372 = vrot.slane %v358, %v371
      %v373 = vcombine.high %v365, %v365
      %v374 = vcombine.high %v372, %v372
      %v375 = vcombine.high %v294, %v294
      %v377 = vunpack.c.l.s4 1983009808
      %v378 = vunpack.c.0.s8 %v377
      %v379 = vlaneseq
      %v380 = vshrl.u32 %v379, 7
      %v381 = vsub.s32 %v378, %v380
      %v382 = vrot.slane %v294, %v381
      %v384 = vunpack.c.l.s4 1983009808
      %v385 = vunpack.c.0.s8 %v384
      %v386 = vlaneseq
      %v387 = vshrl.u32 %v386, 7
      %v388 = vsub.s32 %v385, %v387
      %v389 = vrot.slane %v375, %v388
      %v390 = vcombine.high %v382, %v382
      %v391 = vcombine.high %v389, %v389
      %v392 = vcombine.high %v295, %v295
      %v394 = vunpack.c.l.s4 1983009808
      %v395 = vunpack.c.0.s8 %v394
      %v396 = vlaneseq
      %v397 = vshrl.u32 %v396, 7
      %v398 = vsub.s32 %v395, %v397
      %v399 = vrot.slane %v295, %v398
      %v401 = vunpack.c.l.s4 1983009808
      %v402 = vunpack.c.0.s8 %v401
      %v403 = vlaneseq
      %v404 = vshrl.u32 %v403, 7
      %v405 = vsub.s32 %v402, %v404
      %v406 = vrot.slane %v392, %v405
      %v407 = vcombine.high %v399, %v399
      %v408 = vcombine.high %v406, %v406
      %v410 = vunpack.c.l.s4 1983009808
      %v411 = vunpack.c.0.s8 %v410
      %v412 = vlaneseq
      %v413 = vshrl.u32 %v412, 7
      %v414 = vsub.s32 %v411, %v413
      %v415 = vrot.slane %v296, %v414
      %416 = vrot.lane.b32.xlu0 %v314, 127
      %v417 = vpop.permute.xlu0 %416
      %418 = vrot.lane.b32.xlu0 %v322, 127
      %v419 = vpop.permute.xlu0 %418
      %420 = vrot.lane.b32.xlu0 %v321, 127
      %v421 = vpop.permute.xlu0 %420
      %422 = vrot.lane.b32.xlu0 %v323, 127
      %v423 = vpop.permute.xlu0 %422
      %424 = vrot.lane.b32.xlu0 %v331, 127
      %v425 = vpop.permute.xlu0 %424
      %426 = vrot.lane.b32.xlu0 %v339, 127
      %v427 = vpop.permute.xlu0 %426
      %428 = vrot.lane.b32.xlu0 %v338, 127
      %v429 = vpop.permute.xlu0 %428
      %430 = vrot.lane.b32.xlu0 %v340, 127
      %v431 = vpop.permute.xlu0 %430
      %432 = vrot.lane.b32.xlu0 %v348, 127
      %v433 = vpop.permute.xlu0 %432
      %434 = vrot.lane.b32.xlu0 %v356, 127
      %v435 = vpop.permute.xlu0 %434
      %436 = vrot.lane.b32.xlu0 %v355, 127
      %v437 = vpop.permute.xlu0 %436
      %438 = vrot.lane.b32.xlu0 %v357, 127
      %v439 = vpop.permute.xlu0 %438
      %440 = vrot.lane.b32.xlu0 %v365, 127
      %v441 = vpop.permute.xlu0 %440
      %442 = vrot.lane.b32.xlu0 %v373, 127
      %v443 = vpop.permute.xlu0 %442
      %444 = vrot.lane.b32.xlu0 %v372, 127
      %v445 = vpop.permute.xlu0 %444
      %446 = vrot.lane.b32.xlu0 %v374, 127
      %v447 = vpop.permute.xlu0 %446
      %448 = vrot.lane.b32.xlu0 %v382, 127
      %v449 = vpop.permute.xlu0 %448
      %450 = vrot.lane.b32.xlu0 %v390, 127
      %v451 = vpop.permute.xlu0 %450
      %452 = vrot.lane.b32.xlu0 %v389, 127
      %v453 = vpop.permute.xlu0 %452
      %454 = vrot.lane.b32.xlu0 %v391, 127
      %v455 = vpop.permute.xlu0 %454
      %456 = vrot.lane.b32.xlu0 %v399, 127
      %v457 = vpop.permute.xlu0 %456
      %458 = vrot.lane.b32.xlu0 %v407, 127
      %v459 = vpop.permute.xlu0 %458
      %460 = vrot.lane.b32.xlu0 %v406, 127
      %v461 = vpop.permute.xlu0 %460
      %462 = vrot.lane.b32.xlu0 %v408, 127
      %v463 = vpop.permute.xlu0 %462
      %464 = vrot.lane.b32.xlu0 %v415, 127
      %v465 = vpop.permute.xlu0 %464
      %vm466 = vcmask 1039360
      %v467 = vsel %vm466, %v417, %v419
      %v468 = vsel %vm466, %v419, %v421
      %v469 = vsel %vm466, %v421, %v423
      %v470 = vsel %vm466, %v423, %v425
      %v471 = vsel %vm466, %v425, %v427
      %v472 = vsel %vm466, %v427, %v429
      %v473 = vsel %vm466, %v429, %v431
      %v474 = vsel %vm466, %v431, %v433
      %v475 = vsel %vm466, %v433, %v435
      %v476 = vsel %vm466, %v435, %v437
      %v477 = vsel %vm466, %v437, %v439
      %v478 = vsel %vm466, %v439, %v441
      %v479 = vsel %vm466, %v441, %v443
      %v480 = vsel %vm466, %v443, %v445
      %v481 = vsel %vm466, %v445, %v447
      %v482 = vsel %vm466, %v447, %v449
      %v483 = vsel %vm466, %v449, %v451
      %v484 = vsel %vm466, %v451, %v453
      %v485 = vsel %vm466, %v453, %v455
      %v486 = vsel %vm466, %v455, %v457
      %v487 = vsel %vm466, %v457, %v459
      %v488 = vsel %vm466, %v459, %v461
      %v489 = vsel %vm466, %v461, %v463
      %v490 = vsel %vm466, %v463, %v465
      %vm491 = vcmask 31744
      %v493 = vsel %vm491, %v299, 0
      %vm495 = vcmask 1041408
      %v497 = vsel %vm495, %v467, 0
      %v500 = vsel %vm495, %v468, 0
      %v503 = vsel %vm495, %v469, 0
      %v506 = vsel %vm495, %v470, 0
      %v509 = vsel %vm495, %v471, 0
      %v512 = vsel %vm495, %v472, 0
      %v515 = vsel %vm495, %v473, 0
      %v518 = vsel %vm495, %v474, 0
      %v521 = vsel %vm495, %v475, 0
      %v524 = vsel %vm495, %v476, 0
      %v527 = vsel %vm495, %v477, 0
      %v530 = vsel %vm495, %v478, 0
      %v533 = vsel %vm495, %v479, 0
      %v536 = vsel %vm495, %v480, 0
      %v539 = vsel %vm495, %v481, 0
      %v542 = vsel %vm495, %v482, 0
      %v545 = vsel %vm495, %v483, 0
      %v548 = vsel %vm495, %v484, 0
      %v551 = vsel %vm495, %v485, 0
      %v554 = vsel %vm495, %v486, 0
      %v557 = vsel %vm495, %v487, 0
      %v560 = vsel %vm495, %v488, 0
      %v563 = vsel %vm495, %v489, 0
      %v566 = vsel %vm495, %v490, 0
      %568 = vmatprep.subr.bf16.mxu0 %v500
      %569 = vmatpush1.bf16.msra.mxu0 %v497
      %570 = vmatprep.subr.bf16.mxu0 0
      %571 = vmatpush1.bf16.msra.mxu0 0
      %572 = vmatprep.subr.bf16.mxu0 0
      %573 = vmatpush1.bf16.msra.mxu0 0
      %574 = vmatprep.subr.bf16.mxu0 0
      %575 = vmatpush1.bf16.msra.mxu0 0
      %576 = vmatprep.subr.bf16.mxu0 0
      %577 = vmatpush1.bf16.msra.mxu0 0
      %578 = vmatprep.subr.bf16.mxu0 0
      %579 = vmatpush1.bf16.msra.mxu0 0
      %580 = vmatprep.subr.bf16.mxu0 0
      %581 = vmatpush1.bf16.msra.mxu0 0
      %582 = vmatprep.subr.bf16.mxu0 0
      %583 = vmatpush1.bf16.msra.mxu0 0
      %584 = vmatprep.subr.bf16.mxu0 0
      %585 = vmatpush1.bf16.msra.mxu0 0
      %586 = vmatprep.subr.bf16.mxu0 0
      %587 = vmatpush1.bf16.msra.mxu0 0
      %588 = vmatprep.subr.bf16.mxu0 0
      %589 = vmatpush1.bf16.msra.mxu0 0
      %590 = vmatprep.subr.bf16.mxu0 0
      %591 = vmatpush1.bf16.msra.mxu0 0
      %592 = vmatprep.subr.bf16.mxu0 0
      %593 = vmatpush1.bf16.msra.mxu0 0
      %594 = vmatprep.subr.bf16.mxu0 0
      %595 = vmatpush1.bf16.msra.mxu0 0
      %596 = vmatprep.subr.bf16.mxu0 0
      %597 = vmatpush1.bf16.msra.mxu0 0
      %598 = vmatprep.subr.bf16.mxu0 0
      %599 = vmatpush1.bf16.msra.mxu0 0
      %600 = vmatprep.mubr.bf16.mxu0 0
      %601 = vmatmul.mubr.bf16.gmra.mrb[0].mxu0 %v493
      %v602 = vpop.f32.mrb[0].mxu0
      %v603 = vadd.f32 0.0, %v602
      %v604 = vpop.f32.mrb[0].mxu0
      %v605 = vadd.f32 0.0, %v604
      %v606 = vpop.f32.mrb[0].mxu0
      %v607 = vpop.f32.mrb[0].mxu0
      %608 = vdwg.mxu0
      %609 = vmatprep.subr.bf16.mxu0 %v506
      %610 = vmatpush1.bf16.msra.mxu0 %v503
      %611 = vmatprep.subr.bf16.mxu0 0
      %612 = vmatpush1.bf16.msra.mxu0 0
      %613 = vmatprep.subr.bf16.mxu0 0
      %614 = vmatpush1.bf16.msra.mxu0 0
      %615 = vmatprep.subr.bf16.mxu0 0
      %616 = vmatpush1.bf16.msra.mxu0 0
      %617 = vmatprep.subr.bf16.mxu0 0
      %618 = vmatpush1.bf16.msra.mxu0 0
      %619 = vmatprep.subr.bf16.mxu0 0
      %620 = vmatpush1.bf16.msra.mxu0 0
      %621 = vmatprep.subr.bf16.mxu0 0
      %622 = vmatpush1.bf16.msra.mxu0 0
      %623 = vmatprep.subr.bf16.mxu0 0
      %624 = vmatpush1.bf16.msra.mxu0 0
      %625 = vmatprep.subr.bf16.mxu0 0
      %626 = vmatpush1.bf16.msra.mxu0 0
      %627 = vmatprep.subr.bf16.mxu0 0
      %628 = vmatpush1.bf16.msra.mxu0 0
      %629 = vmatprep.subr.bf16.mxu0 0
      %630 = vmatpush1.bf16.msra.mxu0 0
      %631 = vmatprep.subr.bf16.mxu0 0
      %632 = vmatpush1.bf16.msra.mxu0 0
      %633 = vmatprep.subr.bf16.mxu0 0
      %634 = vmatpush1.bf16.msra.mxu0 0
      %635 = vmatprep.subr.bf16.mxu0 0
      %636 = vmatpush1.bf16.msra.mxu0 0
      %637 = vmatprep.subr.bf16.mxu0 0
      %638 = vmatpush1.bf16.msra.mxu0 0
      %639 = vmatprep.subr.bf16.mxu0 0
      %640 = vmatpush1.bf16.msra.mxu0 0
      %641 = vmatprep.mubr.bf16.mxu0 0
      %642 = vmatmul.mubr.bf16.gmra.mrb[0].mxu0 %v493
      %v643 = vpop.f32.mrb[0].mxu0
      %v644 = vadd.f32 0.0, %v643
      %v645 = vpop.f32.mrb[0].mxu0
      %v646 = vadd.f32 0.0, %v645
      %v647 = vpop.f32.mrb[0].mxu0
      %v648 = vpop.f32.mrb[0].mxu0
      %649 = vdwg.mxu0
      %650 = vmatprep.subr.bf16.mxu0 %v512
      %651 = vmatpush1.bf16.msra.mxu0 %v509
      %652 = vmatprep.subr.bf16.mxu0 0
      %653 = vmatpush1.bf16.msra.mxu0 0
      %654 = vmatprep.subr.bf16.mxu0 0
      %655 = vmatpush1.bf16.msra.mxu0 0
      %656 = vmatprep.subr.bf16.mxu0 0
      %657 = vmatpush1.bf16.msra.mxu0 0
      %658 = vmatprep.subr.bf16.mxu0 0
      %659 = vmatpush1.bf16.msra.mxu0 0
      %660 = vmatprep.subr.bf16.mxu0 0
      %661 = vmatpush1.bf16.msra.mxu0 0
      %662 = vmatprep.subr.bf16.mxu0 0
      %663 = vmatpush1.bf16.msra.mxu0 0
      %664 = vmatprep.subr.bf16.mxu0 0
      %665 = vmatpush1.bf16.msra.mxu0 0
      %666 = vmatprep.subr.bf16.mxu0 0
      %667 = vmatpush1.bf16.msra.mxu0 0
      %668 = vmatprep.subr.bf16.mxu0 0
      %669 = vmatpush1.bf16.msra.mxu0 0
      %670 = vmatprep.subr.bf16.mxu0 0
      %671 = vmatpush1.bf16.msra.mxu0 0
      %672 = vmatprep.subr.bf16.mxu0 0
      %673 = vmatpush1.bf16.msra.mxu0 0
      %674 = vmatprep.subr.bf16.mxu0 0
      %675 = vmatpush1.bf16.msra.mxu0 0
      %676 = vmatprep.subr.bf16.mxu0 0
      %677 = vmatpush1.bf16.msra.mxu0 0
      %678 = vmatprep.subr.bf16.mxu0 0
      %679 = vmatpush1.bf16.msra.mxu0 0
      %680 = vmatprep.subr.bf16.mxu0 0
      %681 = vmatpush1.bf16.msra.mxu0 0
      %682 = vmatprep.mubr.bf16.mxu0 0
      %683 = vmatmul.mubr.bf16.gmra.mrb[0].mxu0 %v493
      %v684 = vpop.f32.mrb[0].mxu0
      %v685 = vadd.f32 0.0, %v684
      %v686 = vpop.f32.mrb[0].mxu0
      %v687 = vadd.f32 0.0, %v686
      %v688 = vpop.f32.mrb[0].mxu0
      %v689 = vpop.f32.mrb[0].mxu0
      %690 = vdwg.mxu0
      %691 = vmatprep.subr.bf16.mxu0 %v518
      %692 = vmatpush1.bf16.msra.mxu0 %v515
      %693 = vmatprep.subr.bf16.mxu0 0
      %694 = vmatpush1.bf16.msra.mxu0 0
      %695 = vmatprep.subr.bf16.mxu0 0
      %696 = vmatpush1.bf16.msra.mxu0 0
      %697 = vmatprep.subr.bf16.mxu0 0
      %698 = vmatpush1.bf16.msra.mxu0 0
      %699 = vmatprep.subr.bf16.mxu0 0
      %700 = vmatpush1.bf16.msra.mxu0 0
      %701 = vmatprep.subr.bf16.mxu0 0
      %702 = vmatpush1.bf16.msra.mxu0 0
      %703 = vmatprep.subr.bf16.mxu0 0
      %704 = vmatpush1.bf16.msra.mxu0 0
      %705 = vmatprep.subr.bf16.mxu0 0
      %706 = vmatpush1.bf16.msra.mxu0 0
      %707 = vmatprep.subr.bf16.mxu0 0
      %708 = vmatpush1.bf16.msra.mxu0 0
      %709 = vmatprep.subr.bf16.mxu0 0
      %710 = vmatpush1.bf16.msra.mxu0 0
      %711 = vmatprep.subr.bf16.mxu0 0
      %712 = vmatpush1.bf16.msra.mxu0 0
      %713 = vmatprep.subr.bf16.mxu0 0
      %714 = vmatpush1.bf16.msra.mxu0 0
      %715 = vmatprep.subr.bf16.mxu0 0
      %716 = vmatpush1.bf16.msra.mxu0 0
      %717 = vmatprep.subr.bf16.mxu0 0
      %718 = vmatpush1.bf16.msra.mxu0 0
      %719 = vmatprep.subr.bf16.mxu0 0
      %720 = vmatpush1.bf16.msra.mxu0 0
      %721 = vmatprep.subr.bf16.mxu0 0
      %722 = vmatpush1.bf16.msra.mxu0 0
      %723 = vmatprep.mubr.bf16.mxu0 0
      %724 = vmatmul.mubr.bf16.gmra.mrb[0].mxu0 %v493
      %v725 = vpop.f32.mrb[0].mxu0
      %v726 = vadd.f32 0.0, %v725
      %v727 = vpop.f32.mrb[0].mxu0
      %v728 = vadd.f32 0.0, %v727
      %v729 = vpop.f32.mrb[0].mxu0
      %v730 = vpop.f32.mrb[0].mxu0
      %731 = vdwg.mxu0
      %732 = vmatprep.subr.bf16.mxu0 %v524
      %733 = vmatpush1.bf16.msra.mxu0 %v521
      %734 = vmatprep.subr.bf16.mxu0 0
      %735 = vmatpush1.bf16.msra.mxu0 0
      %736 = vmatprep.subr.bf16.mxu0 0
      %737 = vmatpush1.bf16.msra.mxu0 0
      %738 = vmatprep.subr.bf16.mxu0 0
      %739 = vmatpush1.bf16.msra.mxu0 0
      %740 = vmatprep.subr.bf16.mxu0 0
      %741 = vmatpush1.bf16.msra.mxu0 0
      %742 = vmatprep.subr.bf16.mxu0 0
      %743 = vmatpush1.bf16.msra.mxu0 0
      %744 = vmatprep.subr.bf16.mxu0 0
      %745 = vmatpush1.bf16.msra.mxu0 0
      %746 = vmatprep.subr.bf16.mxu0 0
      %747 = vmatpush1.bf16.msra.mxu0 0
      %748 = vmatprep.subr.bf16.mxu0 0
      %749 = vmatpush1.bf16.msra.mxu0 0
      %750 = vmatprep.subr.bf16.mxu0 0
      %751 = vmatpush1.bf16.msra.mxu0 0
      %752 = vmatprep.subr.bf16.mxu0 0
      %753 = vmatpush1.bf16.msra.mxu0 0
      %754 = vmatprep.subr.bf16.mxu0 0
      %755 = vmatpush1.bf16.msra.mxu0 0
      %756 = vmatprep.subr.bf16.mxu0 0
      %757 = vmatpush1.bf16.msra.mxu0 0
      %758 = vmatprep.subr.bf16.mxu0 0
      %759 = vmatpush1.bf16.msra.mxu0 0
      %760 = vmatprep.subr.bf16.mxu0 0
      %761 = vmatpush1.bf16.msra.mxu0 0
      %762 = vmatprep.subr.bf16.mxu0 0
      %763 = vmatpush1.bf16.msra.mxu0 0
      %764 = vmatprep.mubr.bf16.mxu0 0
      %765 = vmatmul.mubr.bf16.gmra.mrb[0].mxu0 %v493
      %v766 = vpop.f32.mrb[0].mxu0
      %v767 = vadd.f32 0.0, %v766
      %v768 = vpop.f32.mrb[0].mxu0
      %v769 = vadd.f32 0.0, %v768
      %v770 = vpop.f32.mrb[0].mxu0
      %v771 = vpop.f32.mrb[0].mxu0
      %772 = vdwg.mxu0
      %773 = vmatprep.subr.bf16.mxu0 %v530
      %774 = vmatpush1.bf16.msra.mxu0 %v527
      %775 = vmatprep.subr.bf16.mxu0 0
      %776 = vmatpush1.bf16.msra.mxu0 0
      %777 = vmatprep.subr.bf16.mxu0 0
      %778 = vmatpush1.bf16.msra.mxu0 0
      %779 = vmatprep.subr.bf16.mxu0 0
      %780 = vmatpush1.bf16.msra.mxu0 0
      %781 = vmatprep.subr.bf16.mxu0 0
      %782 = vmatpush1.bf16.msra.mxu0 0
      %783 = vmatprep.subr.bf16.mxu0 0
      %784 = vmatpush1.bf16.msra.mxu0 0
      %785 = vmatprep.subr.bf16.mxu0 0
      %786 = vmatpush1.bf16.msra.mxu0 0
      %787 = vmatprep.subr.bf16.mxu0 0
      %788 = vmatpush1.bf16.msra.mxu0 0
      %789 = vmatprep.subr.bf16.mxu0 0
      %790 = vmatpush1.bf16.msra.mxu0 0
      %791 = vmatprep.subr.bf16.mxu0 0
      %792 = vmatpush1.bf16.msra.mxu0 0
      %793 = vmatprep.subr.bf16.mxu0 0
      %794 = vmatpush1.bf16.msra.mxu0 0
      %795 = vmatprep.subr.bf16.mxu0 0
      %796 = vmatpush1.bf16.msra.mxu0 0
      %797 = vmatprep.subr.bf16.mxu0 0
      %798 = vmatpush1.bf16.msra.mxu0 0
      %799 = vmatprep.subr.bf16.mxu0 0
      %800 = vmatpush1.bf16.msra.mxu0 0
      %801 = vmatprep.subr.bf16.mxu0 0
      %802 = vmatpush1.bf16.msra.mxu0 0
      %803 = vmatprep.subr.bf16.mxu0 0
      %804 = vmatpush1.bf16.msra.mxu0 0
      %805 = vmatprep.mubr.bf16.mxu0 0
      %806 = vmatmul.mubr.bf16.gmra.mrb[0].mxu0 %v493
      %v807 = vpop.f32.mrb[0].mxu0
      %v808 = vadd.f32 0.0, %v807
      %v809 = vpop.f32.mrb[0].mxu0
      %v810 = vadd.f32 0.0, %v809
      %v811 = vpop.f32.mrb[0].mxu0
      %v812 = vpop.f32.mrb[0].mxu0
      %813 = vdwg.mxu0
      %814 = vmatprep.subr.bf16.mxu0 %v536
      %815 = vmatpush1.bf16.msra.mxu0 %v533
      %816 = vmatprep.subr.bf16.mxu0 0
      %817 = vmatpush1.bf16.msra.mxu0 0
      %818 = vmatprep.subr.bf16.mxu0 0
      %819 = vmatpush1.bf16.msra.mxu0 0
      %820 = vmatprep.subr.bf16.mxu0 0
      %821 = vmatpush1.bf16.msra.mxu0 0
      %822 = vmatprep.subr.bf16.mxu0 0
      %823 = vmatpush1.bf16.msra.mxu0 0
      %824 = vmatprep.subr.bf16.mxu0 0
      %825 = vmatpush1.bf16.msra.mxu0 0
      %826 = vmatprep.subr.bf16.mxu0 0
      %827 = vmatpush1.bf16.msra.mxu0 0
      %828 = vmatprep.subr.bf16.mxu0 0
      %829 = vmatpush1.bf16.msra.mxu0 0
      %830 = vmatprep.subr.bf16.mxu0 0
      %831 = vmatpush1.bf16.msra.mxu0 0
      %832 = vmatprep.subr.bf16.mxu0 0
      %833 = vmatpush1.bf16.msra.mxu0 0
      %834 = vmatprep.subr.bf16.mxu0 0
      %835 = vmatpush1.bf16.msra.mxu0 0
      %836 = vmatprep.subr.bf16.mxu0 0
      %837 = vmatpush1.bf16.msra.mxu0 0
      %838 = vmatprep.subr.bf16.mxu0 0
      %839 = vmatpush1.bf16.msra.mxu0 0
      %840 = vmatprep.subr.bf16.mxu0 0
      %841 = vmatpush1.bf16.msra.mxu0 0
      %842 = vmatprep.subr.bf16.mxu0 0
      %843 = vmatpush1.bf16.msra.mxu0 0
      %844 = vmatprep.subr.bf16.mxu0 0
      %845 = vmatpush1.bf16.msra.mxu0 0
      %846 = vmatprep.mubr.bf16.mxu0 0
      %847 = vmatmul.mubr.bf16.gmra.mrb[0].mxu0 %v493
      %v848 = vpop.f32.mrb[0].mxu0
      %v849 = vadd.f32 0.0, %v848
      %v850 = vpop.f32.mrb[0].mxu0
      %v851 = vadd.f32 0.0, %v850
      %v852 = vpop.f32.mrb[0].mxu0
      %v853 = vpop.f32.mrb[0].mxu0
      %854 = vdwg.mxu0
      %855 = vmatprep.subr.bf16.mxu0 %v542
      %856 = vmatpush1.bf16.msra.mxu0 %v539
      %857 = vmatprep.subr.bf16.mxu0 0
      %858 = vmatpush1.bf16.msra.mxu0 0
      %859 = vmatprep.subr.bf16.mxu0 0
      %860 = vmatpush1.bf16.msra.mxu0 0
      %861 = vmatprep.subr.bf16.mxu0 0
      %862 = vmatpush1.bf16.msra.mxu0 0
      %863 = vmatprep.subr.bf16.mxu0 0
      %864 = vmatpush1.bf16.msra.mxu0 0
      %865 = vmatprep.subr.bf16.mxu0 0
      %866 = vmatpush1.bf16.msra.mxu0 0
      %867 = vmatprep.subr.bf16.mxu0 0
      %868 = vmatpush1.bf16.msra.mxu0 0
      %869 = vmatprep.subr.bf16.mxu0 0
      %870 = vmatpush1.bf16.msra.mxu0 0
      %871 = vmatprep.subr.bf16.mxu0 0
      %872 = vmatpush1.bf16.msra.mxu0 0
      %873 = vmatprep.subr.bf16.mxu0 0
      %874 = vmatpush1.bf16.msra.mxu0 0
      %875 = vmatprep.subr.bf16.mxu0 0
      %876 = vmatpush1.bf16.msra.mxu0 0
      %877 = vmatprep.subr.bf16.mxu0 0
      %878 = vmatpush1.bf16.msra.mxu0 0
      %879 = vmatprep.subr.bf16.mxu0 0
      %880 = vmatpush1.bf16.msra.mxu0 0
      %881 = vmatprep.subr.bf16.mxu0 0
      %882 = vmatpush1.bf16.msra.mxu0 0
      %883 = vmatprep.subr.bf16.mxu0 0
      %884 = vmatpush1.bf16.msra.mxu0 0
      %885 = vmatprep.subr.bf16.mxu0 0
      %886 = vmatpush1.bf16.msra.mxu0 0
      %887 = vmatprep.mubr.bf16.mxu0 0
      %888 = vmatmul.mubr.bf16.gmra.mrb[0].mxu0 %v493
      %v889 = vpop.f32.mrb[0].mxu0
      %v890 = vadd.f32 0.0, %v889
      %v891 = vpop.f32.mrb[0].mxu0
      %v892 = vadd.f32 0.0, %v891
      %v893 = vpop.f32.mrb[0].mxu0
      %v894 = vpop.f32.mrb[0].mxu0
      %895 = vdwg.mxu0
      %896 = vmatprep.subr.bf16.mxu0 %v548
      %897 = vmatpush1.bf16.msra.mxu0 %v545
      %898 = vmatprep.subr.bf16.mxu0 0
      %899 = vmatpush1.bf16.msra.mxu0 0
      %900 = vmatprep.subr.bf16.mxu0 0
      %901 = vmatpush1.bf16.msra.mxu0 0
      %902 = vmatprep.subr.bf16.mxu0 0
      %903 = vmatpush1.bf16.msra.mxu0 0
      %904 = vmatprep.subr.bf16.mxu0 0
      %905 = vmatpush1.bf16.msra.mxu0 0
      %906 = vmatprep.subr.bf16.mxu0 0
      %907 = vmatpush1.bf16.msra.mxu0 0
      %908 = vmatprep.subr.bf16.mxu0 0
      %909 = vmatpush1.bf16.msra.mxu0 0
      %910 = vmatprep.subr.bf16.mxu0 0
      %911 = vmatpush1.bf16.msra.mxu0 0
      %912 = vmatprep.subr.bf16.mxu0 0
      %913 = vmatpush1.bf16.msra.mxu0 0
      %914 = vmatprep.subr.bf16.mxu0 0
      %915 = vmatpush1.bf16.msra.mxu0 0
      %916 = vmatprep.subr.bf16.mxu0 0
      %917 = vmatpush1.bf16.msra.mxu0 0
      %918 = vmatprep.subr.bf16.mxu0 0
      %919 = vmatpush1.bf16.msra.mxu0 0
      %920 = vmatprep.subr.bf16.mxu0 0
      %921 = vmatpush1.bf16.msra.mxu0 0
      %922 = vmatprep.subr.bf16.mxu0 0
      %923 = vmatpush1.bf16.msra.mxu0 0
      %924 = vmatprep.subr.bf16.mxu0 0
      %925 = vmatpush1.bf16.msra.mxu0 0
      %926 = vmatprep.subr.bf16.mxu0 0
      %927 = vmatpush1.bf16.msra.mxu0 0
      %928 = vmatprep.mubr.bf16.mxu0 0
      %929 = vmatmul.mubr.bf16.gmra.mrb[0].mxu0 %v493
      %v930 = vpop.f32.mrb[0].mxu0
      %v931 = vadd.f32 0.0, %v930
      %v932 = vpop.f32.mrb[0].mxu0
      %v933 = vadd.f32 0.0, %v932
      %v934 = vpop.f32.mrb[0].mxu0
      %v935 = vpop.f32.mrb[0].mxu0
      %936 = vdwg.mxu0
      %937 = vmatprep.subr.bf16.mxu0 %v554
      %938 = vmatpush1.bf16.msra.mxu0 %v551
      %939 = vmatprep.subr.bf16.mxu0 0
      %940 = vmatpush1.bf16.msra.mxu0 0
      %941 = vmatprep.subr.bf16.mxu0 0
      %942 = vmatpush1.bf16.msra.mxu0 0
      %943 = vmatprep.subr.bf16.mxu0 0
      %944 = vmatpush1.bf16.msra.mxu0 0
      %945 = vmatprep.subr.bf16.mxu0 0
      %946 = vmatpush1.bf16.msra.mxu0 0
      %947 = vmatprep.subr.bf16.mxu0 0
      %948 = vmatpush1.bf16.msra.mxu0 0
      %949 = vmatprep.subr.bf16.mxu0 0
      %950 = vmatpush1.bf16.msra.mxu0 0
      %951 = vmatprep.subr.bf16.mxu0 0
      %952 = vmatpush1.bf16.msra.mxu0 0
      %953 = vmatprep.subr.bf16.mxu0 0
      %954 = vmatpush1.bf16.msra.mxu0 0
      %955 = vmatprep.subr.bf16.mxu0 0
      %956 = vmatpush1.bf16.msra.mxu0 0
      %957 = vmatprep.subr.bf16.mxu0 0
      %958 = vmatpush1.bf16.msra.mxu0 0
      %959 = vmatprep.subr.bf16.mxu0 0
      %960 = vmatpush1.bf16.msra.mxu0 0
      %961 = vmatprep.subr.bf16.mxu0 0
      %962 = vmatpush1.bf16.msra.mxu0 0
      %963 = vmatprep.subr.bf16.mxu0 0
      %964 = vmatpush1.bf16.msra.mxu0 0
      %965 = vmatprep.subr.bf16.mxu0 0
      %966 = vmatpush1.bf16.msra.mxu0 0
      %967 = vmatprep.subr.bf16.mxu0 0
      %968 = vmatpush1.bf16.msra.mxu0 0
      %969 = vmatprep.mubr.bf16.mxu0 0
      %970 = vmatmul.mubr.bf16.gmra.mrb[0].mxu0 %v493
      %v971 = vpop.f32.mrb[0].mxu0
      %v972 = vadd.f32 0.0, %v971
      %v973 = vpop.f32.mrb[0].mxu0
      %v974 = vadd.f32 0.0, %v973
      %v975 = vpop.f32.mrb[0].mxu0
      %v976 = vpop.f32.mrb[0].mxu0
      %977 = vdwg.mxu0
      %978 = vmatprep.subr.bf16.mxu0 %v560
      %979 = vmatpush1.bf16.msra.mxu0 %v557
      %980 = vmatprep.subr.bf16.mxu0 0
      %981 = vmatpush1.bf16.msra.mxu0 0
      %982 = vmatprep.subr.bf16.mxu0 0
      %983 = vmatpush1.bf16.msra.mxu0 0
      %984 = vmatprep.subr.bf16.mxu0 0
      %985 = vmatpush1.bf16.msra.mxu0 0
      %986 = vmatprep.subr.bf16.mxu0 0
      %987 = vmatpush1.bf16.msra.mxu0 0
      %988 = vmatprep.subr.bf16.mxu0 0
      %989 = vmatpush1.bf16.msra.mxu0 0
      %990 = vmatprep.subr.bf16.mxu0 0
      %991 = vmatpush1.bf16.msra.mxu0 0
      %992 = vmatprep.subr.bf16.mxu0 0
      %993 = vmatpush1.bf16.msra.mxu0 0
      %994 = vmatprep.subr.bf16.mxu0 0
      %995 = vmatpush1.bf16.msra.mxu0 0
      %996 = vmatprep.subr.bf16.mxu0 0
      %997 = vmatpush1.bf16.msra.mxu0 0
      %998 = vmatprep.subr.bf16.mxu0 0
      %999 = vmatpush1.bf16.msra.mxu0 0
      %1000 = vmatprep.subr.bf16.mxu0 0
      %1001 = vmatpush1.bf16.msra.mxu0 0
      %1002 = vmatprep.subr.bf16.mxu0 0
      %1003 = vmatpush1.bf16.msra.mxu0 0
      %1004 = vmatprep.subr.bf16.mxu0 0
      %1005 = vmatpush1.bf16.msra.mxu0 0
      %1006 = vmatprep.subr.bf16.mxu0 0
      %1007 = vmatpush1.bf16.msra.mxu0 0
      %1008 = vmatprep.subr.bf16.mxu0 0
      %1009 = vmatpush1.bf16.msra.mxu0 0
      %1010 = vmatprep.mubr.bf16.mxu0 0
      %1011 = vmatmul.mubr.bf16.gmra.mrb[0].mxu0 %v493
      %v1012 = vpop.f32.mrb[0].mxu0
      %v1013 = vadd.f32 0.0, %v1012
      %v1014 = vpop.f32.mrb[0].mxu0
      %v1015 = vadd.f32 0.0, %v1014
      %v1016 = vpop.f32.mrb[0].mxu0
      %v1017 = vpop.f32.mrb[0].mxu0
      %1018 = vdwg.mxu0
      %1019 = vmatprep.subr.bf16.mxu0 %v566
      %1020 = vmatpush1.bf16.msra.mxu0 %v563
      %1021 = vmatprep.subr.bf16.mxu0 0
      %1022 = vmatpush1.bf16.msra.mxu0 0
      %1023 = vmatprep.subr.bf16.mxu0 0
      %1024 = vmatpush1.bf16.msra.mxu0 0
      %1025 = vmatprep.subr.bf16.mxu0 0
      %1026 = vmatpush1.bf16.msra.mxu0 0
      %1027 = vmatprep.subr.bf16.mxu0 0
      %1028 = vmatpush1.bf16.msra.mxu0 0
      %1029 = vmatprep.subr.bf16.mxu0 0
      %1030 = vmatpush1.bf16.msra.mxu0 0
      %1031 = vmatprep.subr.bf16.mxu0 0
      %1032 = vmatpush1.bf16.msra.mxu0 0
      %1033 = vmatprep.subr.bf16.mxu0 0
      %1034 = vmatpush1.bf16.msra.mxu0 0
      %1035 = vmatprep.subr.bf16.mxu0 0
      %1036 = vmatpush1.bf16.msra.mxu0 0
      %1037 = vmatprep.subr.bf16.mxu0 0
      %1038 = vmatpush1.bf16.msra.mxu0 0
      %1039 = vmatprep.subr.bf16.mxu0 0
      %1040 = vmatpush1.bf16.msra.mxu0 0
      %1041 = vmatprep.subr.bf16.mxu0 0
      %1042 = vmatpush1.bf16.msra.mxu0 0
      %1043 = vmatprep.subr.bf16.mxu0 0
      %1044 = vmatpush1.bf16.msra.mxu0 0
      %1045 = vmatprep.subr.bf16.mxu0 0
      %1046 = vmatpush1.bf16.msra.mxu0 0
      %1047 = vmatprep.subr.bf16.mxu0 0
      %1048 = vmatpush1.bf16.msra.mxu0 0
      %1049 = vmatprep.subr.bf16.mxu0 0
      %1050 = vmatpush1.bf16.msra.mxu0 0
      %1051 = vmatprep.mubr.bf16.mxu0 0
      %1052 = vmatmul.mubr.bf16.gmra.mrb[0].mxu0 %v493
      %v1053 = vpop.f32.mrb[0].mxu0
      %v1054 = vadd.f32 0.0, %v1053
      %v1055 = vpop.f32.mrb[0].mxu0
      %v1056 = vadd.f32 0.0, %v1055
      %v1057 = vpop.f32.mrb[0].mxu0
      %v1058 = vpop.f32.mrb[0].mxu0
      %1059 = vdwg.mxu0
      %v1061 = vsel %vm491, %v297, 0
      %v1064 = vsel %vm495, %v314, 0
      %v1067 = vsel %vm495, %v322, 0
      %v1070 = vsel %vm495, %v321, 0
      %v1073 = vsel %vm495, %v323, 0
      %v1076 = vsel %vm495, %v331, 0
      %v1079 = vsel %vm495, %v339, 0
      %v1082 = vsel %vm495, %v338, 0
      %v1085 = vsel %vm495, %v340, 0
      %v1088 = vsel %vm495, %v348, 0
      %v1091 = vsel %vm495, %v356, 0
      %v1094 = vsel %vm495, %v355, 0
      %v1097 = vsel %vm495, %v357, 0
      %v1100 = vsel %vm495, %v365, 0
      %v1103 = vsel %vm495, %v373, 0
      %v1106 = vsel %vm495, %v372, 0
      %v1109 = vsel %vm495, %v374, 0
      %v1112 = vsel %vm495, %v382, 0
      %v1115 = vsel %vm495, %v390, 0
      %v1118 = vsel %vm495, %v389, 0
      %v1121 = vsel %vm495, %v391, 0
      %v1124 = vsel %vm495, %v399, 0
      %v1127 = vsel %vm495, %v407, 0
      %v1130 = vsel %vm495, %v406, 0
      %v1133 = vsel %vm495, %v408, 0
      %1135 = vmatprep.subr.bf16.mxu0 %v1067
      %1136 = vmatpush1.bf16.msra.mxu0 %v1064
      %1137 = vmatprep.subr.bf16.mxu0 0
      %1138 = vmatpush1.bf16.msra.mxu0 0
      %1139 = vmatprep.subr.bf16.mxu0 0
      %1140 = vmatpush1.bf16.msra.mxu0 0
      %1141 = vmatprep.subr.bf16.mxu0 0
      %1142 = vmatpush1.bf16.msra.mxu0 0
      %1143 = vmatprep.subr.bf16.mxu0 0
      %1144 = vmatpush1.bf16.msra.mxu0 0
      %1145 = vmatprep.subr.bf16.mxu0 0
      %1146 = vmatpush1.bf16.msra.mxu0 0
      %1147 = vmatprep.subr.bf16.mxu0 0
      %1148 = vmatpush1.bf16.msra.mxu0 0
      %1149 = vmatprep.subr.bf16.mxu0 0
      %1150 = vmatpush1.bf16.msra.mxu0 0
      %1151 = vmatprep.subr.bf16.mxu0 0
      %1152 = vmatpush1.bf16.msra.mxu0 0
      %1153 = vmatprep.subr.bf16.mxu0 0
      %1154 = vmatpush1.bf16.msra.mxu0 0
      %1155 = vmatprep.subr.bf16.mxu0 0
      %1156 = vmatpush1.bf16.msra.mxu0 0
      %1157 = vmatprep.subr.bf16.mxu0 0
      %1158 = vmatpush1.bf16.msra.mxu0 0
      %1159 = vmatprep.subr.bf16.mxu0 0
      %1160 = vmatpush1.bf16.msra.mxu0 0
      %1161 = vmatprep.subr.bf16.mxu0 0
      %1162 = vmatpush1.bf16.msra.mxu0 0
      %1163 = vmatprep.subr.bf16.mxu0 0
      %1164 = vmatpush1.bf16.msra.mxu0 0
      %1165 = vmatprep.subr.bf16.mxu0 0
      %1166 = vmatpush1.bf16.msra.mxu0 0
      %1167 = vmatprep.mubr.bf16.mxu0 0
      %1168 = vmatmul.mubr.bf16.gmra.mrb[0].mxu0 %v1061
      %v1169 = vpop.f32.mrb[0].mxu0
      %v1170 = vadd.f32 %v603, %v1169
      %v1171 = vpop.f32.mrb[0].mxu0
      %v1172 = vadd.f32 %v605, %v1171
      %v1173 = vpop.f32.mrb[0].mxu0
      %v1174 = vpop.f32.mrb[0].mxu0
      %1175 = vdwg.mxu0
      %1176 = vmatprep.subr.bf16.mxu0 %v1073
      %1177 = vmatpush1.bf16.msra.mxu0 %v1070
      %1178 = vmatprep.subr.bf16.mxu0 0
      %1179 = vmatpush1.bf16.msra.mxu0 0
      %1180 = vmatprep.subr.bf16.mxu0 0
      %1181 = vmatpush1.bf16.msra.mxu0 0
      %1182 = vmatprep.subr.bf16.mxu0 0
      %1183 = vmatpush1.bf16.msra.mxu0 0
      %1184 = vmatprep.subr.bf16.mxu0 0
      %1185 = vmatpush1.bf16.msra.mxu0 0
      %1186 = vmatprep.subr.bf16.mxu0 0
      %1187 = vmatpush1.bf16.msra.mxu0 0
      %1188 = vmatprep.subr.bf16.mxu0 0
      %1189 = vmatpush1.bf16.msra.mxu0 0
      %1190 = vmatprep.subr.bf16.mxu0 0
      %1191 = vmatpush1.bf16.msra.mxu0 0
      %1192 = vmatprep.subr.bf16.mxu0 0
      %1193 = vmatpush1.bf16.msra.mxu0 0
      %1194 = vmatprep.subr.bf16.mxu0 0
      %1195 = vmatpush1.bf16.msra.mxu0 0
      %1196 = vmatprep.subr.bf16.mxu0 0
      %1197 = vmatpush1.bf16.msra.mxu0 0
      %1198 = vmatprep.subr.bf16.mxu0 0
      %1199 = vmatpush1.bf16.msra.mxu0 0
      %1200 = vmatprep.subr.bf16.mxu0 0
      %1201 = vmatpush1.bf16.msra.mxu0 0
      %1202 = vmatprep.subr.bf16.mxu0 0
      %1203 = vmatpush1.bf16.msra.mxu0 0
      %1204 = vmatprep.subr.bf16.mxu0 0
      %1205 = vmatpush1.bf16.msra.mxu0 0
      %1206 = vmatprep.subr.bf16.mxu0 0
      %1207 = vmatpush1.bf16.msra.mxu0 0
      %1208 = vmatprep.mubr.bf16.mxu0 0
      %1209 = vmatmul.mubr.bf16.gmra.mrb[0].mxu0 %v1061
      %v1210 = vpop.f32.mrb[0].mxu0
      %v1211 = vadd.f32 %v644, %v1210
      %v1212 = vpop.f32.mrb[0].mxu0
      %v1213 = vadd.f32 %v646, %v1212
      %v1214 = vpop.f32.mrb[0].mxu0
      %v1215 = vpop.f32.mrb[0].mxu0
      %1216 = vdwg.mxu0
      %1217 = vmatprep.subr.bf16.mxu0 %v1079
      %1218 = vmatpush1.bf16.msra.mxu0 %v1076
      %1219 = vmatprep.subr.bf16.mxu0 0
      %1220 = vmatpush1.bf16.msra.mxu0 0
      %1221 = vmatprep.subr.bf16.mxu0 0
      %1222 = vmatpush1.bf16.msra.mxu0 0
      %1223 = vmatprep.subr.bf16.mxu0 0
      %1224 = vmatpush1.bf16.msra.mxu0 0
      %1225 = vmatprep.subr.bf16.mxu0 0
      %1226 = vmatpush1.bf16.msra.mxu0 0
      %1227 = vmatprep.subr.bf16.mxu0 0
      %1228 = vmatpush1.bf16.msra.mxu0 0
      %1229 = vmatprep.subr.bf16.mxu0 0
      %1230 = vmatpush1.bf16.msra.mxu0 0
      %1231 = vmatprep.subr.bf16.mxu0 0
      %1232 = vmatpush1.bf16.msra.mxu0 0
      %1233 = vmatprep.subr.bf16.mxu0 0
      %1234 = vmatpush1.bf16.msra.mxu0 0
      %1235 = vmatprep.subr.bf16.mxu0 0
      %1236 = vmatpush1.bf16.msra.mxu0 0
      %1237 = vmatprep.subr.bf16.mxu0 0
      %1238 = vmatpush1.bf16.msra.mxu0 0
      %1239 = vmatprep.subr.bf16.mxu0 0
      %1240 = vmatpush1.bf16.msra.mxu0 0
      %1241 = vmatprep.subr.bf16.mxu0 0
      %1242 = vmatpush1.bf16.msra.mxu0 0
      %1243 = vmatprep.subr.bf16.mxu0 0
      %1244 = vmatpush1.bf16.msra.mxu0 0
      %1245 = vmatprep.subr.bf16.mxu0 0
      %1246 = vmatpush1.bf16.msra.mxu0 0
      %1247 = vmatprep.subr.bf16.mxu0 0
      %1248 = vmatpush1.bf16.msra.mxu0 0
      %1249 = vmatprep.mubr.bf16.mxu0 0
      %1250 = vmatmul.mubr.bf16.gmra.mrb[0].mxu0 %v1061
      %v1251 = vpop.f32.mrb[0].mxu0
      %v1252 = vadd.f32 %v685, %v1251
      %v1253 = vpop.f32.mrb[0].mxu0
      %v1254 = vadd.f32 %v687, %v1253
      %v1255 = vpop.f32.mrb[0].mxu0
      %v1256 = vpop.f32.mrb[0].mxu0
      %1257 = vdwg.mxu0
      %1258 = vmatprep.subr.bf16.mxu0 %v1085
      %1259 = vmatpush1.bf16.msra.mxu0 %v1082
      %1260 = vmatprep.subr.bf16.mxu0 0
      %1261 = vmatpush1.bf16.msra.mxu0 0
      %1262 = vmatprep.subr.bf16.mxu0 0
      %1263 = vmatpush1.bf16.msra.mxu0 0
      %1264 = vmatprep.subr.bf16.mxu0 0
      %1265 = vmatpush1.bf16.msra.mxu0 0
      %1266 = vmatprep.subr.bf16.mxu0 0
      %1267 = vmatpush1.bf16.msra.mxu0 0
      %1268 = vmatprep.subr.bf16.mxu0 0
      %1269 = vmatpush1.bf16.msra.mxu0 0
      %1270 = vmatprep.subr.bf16.mxu0 0
      %1271 = vmatpush1.bf16.msra.mxu0 0
      %1272 = vmatprep.subr.bf16.mxu0 0
      %1273 = vmatpush1.bf16.msra.mxu0 0
      %1274 = vmatprep.subr.bf16.mxu0 0
      %1275 = vmatpush1.bf16.msra.mxu0 0
      %1276 = vmatprep.subr.bf16.mxu0 0
      %1277 = vmatpush1.bf16.msra.mxu0 0
      %1278 = vmatprep.subr.bf16.mxu0 0
      %1279 = vmatpush1.bf16.msra.mxu0 0
      %1280 = vmatprep.subr.bf16.mxu0 0
      %1281 = vmatpush1.bf16.msra.mxu0 0
      %1282 = vmatprep.subr.bf16.mxu0 0
      %1283 = vmatpush1.bf16.msra.mxu0 0
      %1284 = vmatprep.subr.bf16.mxu0 0
      %1285 = vmatpush1.bf16.msra.mxu0 0
      %1286 = vmatprep.subr.bf16.mxu0 0
      %1287 = vmatpush1.bf16.msra.mxu0 0
      %1288 = vmatprep.subr.bf16.mxu0 0
      %1289 = vmatpush1.bf16.msra.mxu0 0
      %1290 = vmatprep.mubr.bf16.mxu0 0
      %1291 = vmatmul.mubr.bf16.gmra.mrb[0].mxu0 %v1061
      %v1292 = vpop.f32.mrb[0].mxu0
      %v1293 = vadd.f32 %v726, %v1292
      %v1294 = vpop.f32.mrb[0].mxu0
      %v1295 = vadd.f32 %v728, %v1294
      %v1296 = vpop.f32.mrb[0].mxu0
      %v1297 = vpop.f32.mrb[0].mxu0
      %1298 = vdwg.mxu0
      %1299 = vmatprep.subr.bf16.mxu0 %v1091
      %1300 = vmatpush1.bf16.msra.mxu0 %v1088
      %1301 = vmatprep.subr.bf16.mxu0 0
      %1302 = vmatpush1.bf16.msra.mxu0 0
      %1303 = vmatprep.subr.bf16.mxu0 0
      %1304 = vmatpush1.bf16.msra.mxu0 0
      %1305 = vmatprep.subr.bf16.mxu0 0
      %1306 = vmatpush1.bf16.msra.mxu0 0
      %1307 = vmatprep.subr.bf16.mxu0 0
      %1308 = vmatpush1.bf16.msra.mxu0 0
      %1309 = vmatprep.subr.bf16.mxu0 0
      %1310 = vmatpush1.bf16.msra.mxu0 0
      %1311 = vmatprep.subr.bf16.mxu0 0
      %1312 = vmatpush1.bf16.msra.mxu0 0
      %1313 = vmatprep.subr.bf16.mxu0 0
      %1314 = vmatpush1.bf16.msra.mxu0 0
      %1315 = vmatprep.subr.bf16.mxu0 0
      %1316 = vmatpush1.bf16.msra.mxu0 0
      %1317 = vmatprep.subr.bf16.mxu0 0
      %1318 = vmatpush1.bf16.msra.mxu0 0
      %1319 = vmatprep.subr.bf16.mxu0 0
      %1320 = vmatpush1.bf16.msra.mxu0 0
      %1321 = vmatprep.subr.bf16.mxu0 0
      %1322 = vmatpush1.bf16.msra.mxu0 0
      %1323 = vmatprep.subr.bf16.mxu0 0
      %1324 = vmatpush1.bf16.msra.mxu0 0
      %1325 = vmatprep.subr.bf16.mxu0 0
      %1326 = vmatpush1.bf16.msra.mxu0 0
      %1327 = vmatprep.subr.bf16.mxu0 0
      %1328 = vmatpush1.bf16.msra.mxu0 0
      %1329 = vmatprep.subr.bf16.mxu0 0
      %1330 = vmatpush1.bf16.msra.mxu0 0
      %1331 = vmatprep.mubr.bf16.mxu0 0
      %1332 = vmatmul.mubr.bf16.gmra.mrb[0].mxu0 %v1061
      %v1333 = vpop.f32.mrb[0].mxu0
      %v1334 = vadd.f32 %v767, %v1333
      %v1335 = vpop.f32.mrb[0].mxu0
      %v1336 = vadd.f32 %v769, %v1335
      %v1337 = vpop.f32.mrb[0].mxu0
      %v1338 = vpop.f32.mrb[0].mxu0
      %1339 = vdwg.mxu0
      %1340 = vmatprep.subr.bf16.mxu0 %v1097
      %1341 = vmatpush1.bf16.msra.mxu0 %v1094
      %1342 = vmatprep.subr.bf16.mxu0 0
      %1343 = vmatpush1.bf16.msra.mxu0 0
      %1344 = vmatprep.subr.bf16.mxu0 0
      %1345 = vmatpush1.bf16.msra.mxu0 0
      %1346 = vmatprep.subr.bf16.mxu0 0
      %1347 = vmatpush1.bf16.msra.mxu0 0
      %1348 = vmatprep.subr.bf16.mxu0 0
      %1349 = vmatpush1.bf16.msra.mxu0 0
      %1350 = vmatprep.subr.bf16.mxu0 0
      %1351 = vmatpush1.bf16.msra.mxu0 0
      %1352 = vmatprep.subr.bf16.mxu0 0
      %1353 = vmatpush1.bf16.msra.mxu0 0
      %1354 = vmatprep.subr.bf16.mxu0 0
      %1355 = vmatpush1.bf16.msra.mxu0 0
      %1356 = vmatprep.subr.bf16.mxu0 0
      %1357 = vmatpush1.bf16.msra.mxu0 0
      %1358 = vmatprep.subr.bf16.mxu0 0
      %1359 = vmatpush1.bf16.msra.mxu0 0
      %1360 = vmatprep.subr.bf16.mxu0 0
      %1361 = vmatpush1.bf16.msra.mxu0 0
      %1362 = vmatprep.subr.bf16.mxu0 0
      %1363 = vmatpush1.bf16.msra.mxu0 0
      %1364 = vmatprep.subr.bf16.mxu0 0
      %1365 = vmatpush1.bf16.msra.mxu0 0
      %1366 = vmatprep.subr.bf16.mxu0 0
      %1367 = vmatpush1.bf16.msra.mxu0 0
      %1368 = vmatprep.subr.bf16.mxu0 0
      %1369 = vmatpush1.bf16.msra.mxu0 0
      %1370 = vmatprep.subr.bf16.mxu0 0
      %1371 = vmatpush1.bf16.msra.mxu0 0
      %1372 = vmatprep.mubr.bf16.mxu0 0
      %1373 = vmatmul.mubr.bf16.gmra.mrb[0].mxu0 %v1061
      %v1374 = vpop.f32.mrb[0].mxu0
      %v1375 = vadd.f32 %v808, %v1374
      %v1376 = vpop.f32.mrb[0].mxu0
      %v1377 = vadd.f32 %v810, %v1376
      %v1378 = vpop.f32.mrb[0].mxu0
      %v1379 = vpop.f32.mrb[0].mxu0
      %1380 = vdwg.mxu0
      %1381 = vmatprep.subr.bf16.mxu0 %v1103
      %1382 = vmatpush1.bf16.msra.mxu0 %v1100
      %1383 = vmatprep.subr.bf16.mxu0 0
      %1384 = vmatpush1.bf16.msra.mxu0 0
      %1385 = vmatprep.subr.bf16.mxu0 0
      %1386 = vmatpush1.bf16.msra.mxu0 0
      %1387 = vmatprep.subr.bf16.mxu0 0
      %1388 = vmatpush1.bf16.msra.mxu0 0
      %1389 = vmatprep.subr.bf16.mxu0 0
      %1390 = vmatpush1.bf16.msra.mxu0 0
      %1391 = vmatprep.subr.bf16.mxu0 0
      %1392 = vmatpush1.bf16.msra.mxu0 0
      %1393 = vmatprep.subr.bf16.mxu0 0
      %1394 = vmatpush1.bf16.msra.mxu0 0
      %1395 = vmatprep.subr.bf16.mxu0 0
      %1396 = vmatpush1.bf16.msra.mxu0 0
      %1397 = vmatprep.subr.bf16.mxu0 0
      %1398 = vmatpush1.bf16.msra.mxu0 0
      %1399 = vmatprep.subr.bf16.mxu0 0
      %1400 = vmatpush1.bf16.msra.mxu0 0
      %1401 = vmatprep.subr.bf16.mxu0 0
      %1402 = vmatpush1.bf16.msra.mxu0 0
      %1403 = vmatprep.subr.bf16.mxu0 0
      %1404 = vmatpush1.bf16.msra.mxu0 0
      %1405 = vmatprep.subr.bf16.mxu0 0
      %1406 = vmatpush1.bf16.msra.mxu0 0
      %1407 = vmatprep.subr.bf16.mxu0 0
      %1408 = vmatpush1.bf16.msra.mxu0 0
      %1409 = vmatprep.subr.bf16.mxu0 0
      %1410 = vmatpush1.bf16.msra.mxu0 0
      %1411 = vmatprep.subr.bf16.mxu0 0
      %1412 = vmatpush1.bf16.msra.mxu0 0
      %1413 = vmatprep.mubr.bf16.mxu0 0
      %1414 = vmatmul.mubr.bf16.gmra.mrb[0].mxu0 %v1061
      %v1415 = vpop.f32.mrb[0].mxu0
      %v1416 = vadd.f32 %v849, %v1415
      %v1417 = vpop.f32.mrb[0].mxu0
      %v1418 = vadd.f32 %v851, %v1417
      %v1419 = vpop.f32.mrb[0].mxu0
      %v1420 = vpop.f32.mrb[0].mxu0
      %1421 = vdwg.mxu0
      %1422 = vmatprep.subr.bf16.mxu0 %v1109
      %1423 = vmatpush1.bf16.msra.mxu0 %v1106
      %1424 = vmatprep.subr.bf16.mxu0 0
      %1425 = vmatpush1.bf16.msra.mxu0 0
      %1426 = vmatprep.subr.bf16.mxu0 0
      %1427 = vmatpush1.bf16.msra.mxu0 0
      %1428 = vmatprep.subr.bf16.mxu0 0
      %1429 = vmatpush1.bf16.msra.mxu0 0
      %1430 = vmatprep.subr.bf16.mxu0 0
      %1431 = vmatpush1.bf16.msra.mxu0 0
      %1432 = vmatprep.subr.bf16.mxu0 0
      %1433 = vmatpush1.bf16.msra.mxu0 0
      %1434 = vmatprep.subr.bf16.mxu0 0
      %1435 = vmatpush1.bf16.msra.mxu0 0
      %1436 = vmatprep.subr.bf16.mxu0 0
      %1437 = vmatpush1.bf16.msra.mxu0 0
      %1438 = vmatprep.subr.bf16.mxu0 0
      %1439 = vmatpush1.bf16.msra.mxu0 0
      %1440 = vmatprep.subr.bf16.mxu0 0
      %1441 = vmatpush1.bf16.msra.mxu0 0
      %1442 = vmatprep.subr.bf16.mxu0 0
      %1443 = vmatpush1.bf16.msra.mxu0 0
      %1444 = vmatprep.subr.bf16.mxu0 0
      %1445 = vmatpush1.bf16.msra.mxu0 0
      %1446 = vmatprep.subr.bf16.mxu0 0
      %1447 = vmatpush1.bf16.msra.mxu0 0
      %1448 = vmatprep.subr.bf16.mxu0 0
      %1449 = vmatpush1.bf16.msra.mxu0 0
      %1450 = vmatprep.subr.bf16.mxu0 0
      %1451 = vmatpush1.bf16.msra.mxu0 0
      %1452 = vmatprep.subr.bf16.mxu0 0
      %1453 = vmatpush1.bf16.msra.mxu0 0
      %1454 = vmatprep.mubr.bf16.mxu0 0
      %1455 = vmatmul.mubr.bf16.gmra.mrb[0].mxu0 %v1061
      %v1456 = vpop.f32.mrb[0].mxu0
      %v1457 = vadd.f32 %v890, %v1456
      %v1458 = vpop.f32.mrb[0].mxu0
      %v1459 = vadd.f32 %v892, %v1458
      %v1460 = vpop.f32.mrb[0].mxu0
      %v1461 = vpop.f32.mrb[0].mxu0
      %1462 = vdwg.mxu0
      %1463 = vmatprep.subr.bf16.mxu0 %v1115
      %1464 = vmatpush1.bf16.msra.mxu0 %v1112
      %1465 = vmatprep.subr.bf16.mxu0 0
      %1466 = vmatpush1.bf16.msra.mxu0 0
      %1467 = vmatprep.subr.bf16.mxu0 0
      %1468 = vmatpush1.bf16.msra.mxu0 0
      %1469 = vmatprep.subr.bf16.mxu0 0
      %1470 = vmatpush1.bf16.msra.mxu0 0
      %1471 = vmatprep.subr.bf16.mxu0 0
      %1472 = vmatpush1.bf16.msra.mxu0 0
      %1473 = vmatprep.subr.bf16.mxu0 0
      %1474 = vmatpush1.bf16.msra.mxu0 0
      %1475 = vmatprep.subr.bf16.mxu0 0
      %1476 = vmatpush1.bf16.msra.mxu0 0
      %1477 = vmatprep.subr.bf16.mxu0 0
      %1478 = vmatpush1.bf16.msra.mxu0 0
      %1479 = vmatprep.subr.bf16.mxu0 0
      %1480 = vmatpush1.bf16.msra.mxu0 0
      %1481 = vmatprep.subr.bf16.mxu0 0
      %1482 = vmatpush1.bf16.msra.mxu0 0
      %1483 = vmatprep.subr.bf16.mxu0 0
      %1484 = vmatpush1.bf16.msra.mxu0 0
      %1485 = vmatprep.subr.bf16.mxu0 0
      %1486 = vmatpush1.bf16.msra.mxu0 0
      %1487 = vmatprep.subr.bf16.mxu0 0
      %1488 = vmatpush1.bf16.msra.mxu0 0
      %1489 = vmatprep.subr.bf16.mxu0 0
      %1490 = vmatpush1.bf16.msra.mxu0 0
      %1491 = vmatprep.subr.bf16.mxu0 0
      %1492 = vmatpush1.bf16.msra.mxu0 0
      %1493 = vmatprep.subr.bf16.mxu0 0
      %1494 = vmatpush1.bf16.msra.mxu0 0
      %1495 = vmatprep.mubr.bf16.mxu0 0
      %1496 = vmatmul.mubr.bf16.gmra.mrb[0].mxu0 %v1061
      %v1497 = vpop.f32.mrb[0].mxu0
      %v1498 = vadd.f32 %v931, %v1497
      %v1499 = vpop.f32.mrb[0].mxu0
      %v1500 = vadd.f32 %v933, %v1499
      %v1501 = vpop.f32.mrb[0].mxu0
      %v1502 = vpop.f32.mrb[0].mxu0
      %1503 = vdwg.mxu0
      %1504 = vmatprep.subr.bf16.mxu0 %v1121
      %1505 = vmatpush1.bf16.msra.mxu0 %v1118
      %1506 = vmatprep.subr.bf16.mxu0 0
      %1507 = vmatpush1.bf16.msra.mxu0 0
      %1508 = vmatprep.subr.bf16.mxu0 0
      %1509 = vmatpush1.bf16.msra.mxu0 0
      %1510 = vmatprep.subr.bf16.mxu0 0
      %1511 = vmatpush1.bf16.msra.mxu0 0
      %1512 = vmatprep.subr.bf16.mxu0 0
      %1513 = vmatpush1.bf16.msra.mxu0 0
      %1514 = vmatprep.subr.bf16.mxu0 0
      %1515 = vmatpush1.bf16.msra.mxu0 0
      %1516 = vmatprep.subr.bf16.mxu0 0
      %1517 = vmatpush1.bf16.msra.mxu0 0
      %1518 = vmatprep.subr.bf16.mxu0 0
      %1519 = vmatpush1.bf16.msra.mxu0 0
      %1520 = vmatprep.subr.bf16.mxu0 0
      %1521 = vmatpush1.bf16.msra.mxu0 0
      %1522 = vmatprep.subr.bf16.mxu0 0
      %1523 = vmatpush1.bf16.msra.mxu0 0
      %1524 = vmatprep.subr.bf16.mxu0 0
      %1525 = vmatpush1.bf16.msra.mxu0 0
      %1526 = vmatprep.subr.bf16.mxu0 0
      %1527 = vmatpush1.bf16.msra.mxu0 0
      %1528 = vmatprep.subr.bf16.mxu0 0
      %1529 = vmatpush1.bf16.msra.mxu0 0
      %1530 = vmatprep.subr.bf16.mxu0 0
      %1531 = vmatpush1.bf16.msra.mxu0 0
      %1532 = vmatprep.subr.bf16.mxu0 0
      %1533 = vmatpush1.bf16.msra.mxu0 0
      %1534 = vmatprep.subr.bf16.mxu0 0
      %1535 = vmatpush1.bf16.msra.mxu0 0
      %1536 = vmatprep.mubr.bf16.mxu0 0
      %1537 = vmatmul.mubr.bf16.gmra.mrb[0].mxu0 %v1061
      %v1538 = vpop.f32.mrb[0].mxu0
      %v1539 = vadd.f32 %v972, %v1538
      %v1540 = vpop.f32.mrb[0].mxu0
      %v1541 = vadd.f32 %v974, %v1540
      %v1542 = vpop.f32.mrb[0].mxu0
      %v1543 = vpop.f32.mrb[0].mxu0
      %1544 = vdwg.mxu0
      %1545 = vmatprep.subr.bf16.mxu0 %v1127
      %1546 = vmatpush1.bf16.msra.mxu0 %v1124
      %1547 = vmatprep.subr.bf16.mxu0 0
      %1548 = vmatpush1.bf16.msra.mxu0 0
      %1549 = vmatprep.subr.bf16.mxu0 0
      %1550 = vmatpush1.bf16.msra.mxu0 0
      %1551 = vmatprep.subr.bf16.mxu0 0
      %1552 = vmatpush1.bf16.msra.mxu0 0
      %1553 = vmatprep.subr.bf16.mxu0 0
      %1554 = vmatpush1.bf16.msra.mxu0 0
      %1555 = vmatprep.subr.bf16.mxu0 0
      %1556 = vmatpush1.bf16.msra.mxu0 0
      %1557 = vmatprep.subr.bf16.mxu0 0
      %1558 = vmatpush1.bf16.msra.mxu0 0
      %1559 = vmatprep.subr.bf16.mxu0 0
      %1560 = vmatpush1.bf16.msra.mxu0 0
      %1561 = vmatprep.subr.bf16.mxu0 0
      %1562 = vmatpush1.bf16.msra.mxu0 0
      %1563 = vmatprep.subr.bf16.mxu0 0
      %1564 = vmatpush1.bf16.msra.mxu0 0
      %1565 = vmatprep.subr.bf16.mxu0 0
      %1566 = vmatpush1.bf16.msra.mxu0 0
      %1567 = vmatprep.subr.bf16.mxu0 0
      %1568 = vmatpush1.bf16.msra.mxu0 0
      %1569 = vmatprep.subr.bf16.mxu0 0
      %1570 = vmatpush1.bf16.msra.mxu0 0
      %1571 = vmatprep.subr.bf16.mxu0 0
      %1572 = vmatpush1.bf16.msra.mxu0 0
      %1573 = vmatprep.subr.bf16.mxu0 0
      %1574 = vmatpush1.bf16.msra.mxu0 0
      %1575 = vmatprep.subr.bf16.mxu0 0
      %1576 = vmatpush1.bf16.msra.mxu0 0
      %1577 = vmatprep.mubr.bf16.mxu0 0
      %1578 = vmatmul.mubr.bf16.gmra.mrb[0].mxu0 %v1061
      %v1579 = vpop.f32.mrb[0].mxu0
      %v1580 = vadd.f32 %v1013, %v1579
      %v1581 = vpop.f32.mrb[0].mxu0
      %v1582 = vadd.f32 %v1015, %v1581
      %v1583 = vpop.f32.mrb[0].mxu0
      %v1584 = vpop.f32.mrb[0].mxu0
      %1585 = vdwg.mxu0
      %1586 = vmatprep.subr.bf16.mxu0 %v1133
      %1587 = vmatpush1.bf16.msra.mxu0 %v1130
      %1588 = vmatprep.subr.bf16.mxu0 0
      %1589 = vmatpush1.bf16.msra.mxu0 0
      %1590 = vmatprep.subr.bf16.mxu0 0
      %1591 = vmatpush1.bf16.msra.mxu0 0
      %1592 = vmatprep.subr.bf16.mxu0 0
      %1593 = vmatpush1.bf16.msra.mxu0 0
      %1594 = vmatprep.subr.bf16.mxu0 0
      %1595 = vmatpush1.bf16.msra.mxu0 0
      %1596 = vmatprep.subr.bf16.mxu0 0
      %1597 = vmatpush1.bf16.msra.mxu0 0
      %1598 = vmatprep.subr.bf16.mxu0 0
      %1599 = vmatpush1.bf16.msra.mxu0 0
      %1600 = vmatprep.subr.bf16.mxu0 0
      %1601 = vmatpush1.bf16.msra.mxu0 0
      %1602 = vmatprep.subr.bf16.mxu0 0
      %1603 = vmatpush1.bf16.msra.mxu0 0
      %1604 = vmatprep.subr.bf16.mxu0 0
      %1605 = vmatpush1.bf16.msra.mxu0 0
      %1606 = vmatprep.subr.bf16.mxu0 0
      %1607 = vmatpush1.bf16.msra.mxu0 0
      %1608 = vmatprep.subr.bf16.mxu0 0
      %1609 = vmatpush1.bf16.msra.mxu0 0
      %1610 = vmatprep.subr.bf16.mxu0 0
      %1611 = vmatpush1.bf16.msra.mxu0 0
      %1612 = vmatprep.subr.bf16.mxu0 0
      %1613 = vmatpush1.bf16.msra.mxu0 0
      %1614 = vmatprep.subr.bf16.mxu0 0
      %1615 = vmatpush1.bf16.msra.mxu0 0
      %1616 = vmatprep.subr.bf16.mxu0 0
      %1617 = vmatpush1.bf16.msra.mxu0 0
      %1618 = vmatprep.mubr.bf16.mxu0 0
      %1619 = vmatmul.mubr.bf16.gmra.mrb[0].mxu0 %v1061
      %v1620 = vpop.f32.mrb[0].mxu0
      %v1621 = vadd.f32 %v1054, %v1620
      %v1622 = vpop.f32.mrb[0].mxu0
      %v1623 = vadd.f32 %v1056, %v1622
      %v1624 = vpop.f32.mrb[0].mxu0
      %v1625 = vpop.f32.mrb[0].mxu0
      %1626 = vdwg.mxu0
      %s1627 = scalar_lea.vmem %s1, 8
      %v1628 = vld [vmem:[%s1627] sm:$0xf]
      %1629 = vrot.lane.b32.xlu0 %v314, 126
      %v1630 = vpop.permute.xlu0 %1629
      %1631 = vrot.lane.b32.xlu0 %v322, 126
      %v1632 = vpop.permute.xlu0 %1631
      %1633 = vrot.lane.b32.xlu0 %v321, 126
      %v1634 = vpop.permute.xlu0 %1633
      %1635 = vrot.lane.b32.xlu0 %v323, 126
      %v1636 = vpop.permute.xlu0 %1635
      %1637 = vrot.lane.b32.xlu0 %v331, 126
      %v1638 = vpop.permute.xlu0 %1637
      %1639 = vrot.lane.b32.xlu0 %v339, 126
      %v1640 = vpop.permute.xlu0 %1639
      %1641 = vrot.lane.b32.xlu0 %v338, 126
      %v1642 = vpop.permute.xlu0 %1641
      %1643 = vrot.lane.b32.xlu0 %v340, 126
      %v1644 = vpop.permute.xlu0 %1643
      %1645 = vrot.lane.b32.xlu0 %v348, 126
      %v1646 = vpop.permute.xlu0 %1645
      %1647 = vrot.lane.b32.xlu0 %v356, 126
      %v1648 = vpop.permute.xlu0 %1647
      %1649 = vrot.lane.b32.xlu0 %v355, 126
      %v1650 = vpop.permute.xlu0 %1649
      %1651 = vrot.lane.b32.xlu0 %v357, 126
      %v1652 = vpop.permute.xlu0 %1651
      %1653 = vrot.lane.b32.xlu0 %v365, 126
      %v1654 = vpop.permute.xlu0 %1653
      %1655 = vrot.lane.b32.xlu0 %v373, 126
      %v1656 = vpop.permute.xlu0 %1655
      %1657 = vrot.lane.b32.xlu0 %v372, 126
      %v1658 = vpop.permute.xlu0 %1657
      %1659 = vrot.lane.b32.xlu0 %v374, 126
      %v1660 = vpop.permute.xlu0 %1659
      %1661 = vrot.lane.b32.xlu0 %v382, 126
      %v1662 = vpop.permute.xlu0 %1661
      %1663 = vrot.lane.b32.xlu0 %v390, 126
      %v1664 = vpop.permute.xlu0 %1663
      %1665 = vrot.lane.b32.xlu0 %v389, 126
      %v1666 = vpop.permute.xlu0 %1665
      %1667 = vrot.lane.b32.xlu0 %v391, 126
      %v1668 = vpop.permute.xlu0 %1667
      %1669 = vrot.lane.b32.xlu0 %v399, 126
      %v1670 = vpop.permute.xlu0 %1669
      %1671 = vrot.lane.b32.xlu0 %v407, 126
      %v1672 = vpop.permute.xlu0 %1671
      %1673 = vrot.lane.b32.xlu0 %v406, 126
      %v1674 = vpop.permute.xlu0 %1673
      %1675 = vrot.lane.b32.xlu0 %v408, 126
      %v1676 = vpop.permute.xlu0 %1675
      %1677 = vrot.lane.b32.xlu0 %v415, 126
      %v1678 = vpop.permute.xlu0 %1677
      %vm1679 = vcmask 1031168
      %v1680 = vsel %vm1679, %v1630, %v1632
      %v1681 = vsel %vm1679, %v1632, %v1634
      %v1682 = vsel %vm1679, %v1634, %v1636
      %v1683 = vsel %vm1679, %v1636, %v1638
      %v1684 = vsel %vm1679, %v1638, %v1640
      %v1685 = vsel %vm1679, %v1640, %v1642
      %v1686 = vsel %vm1679, %v1642, %v1644
      %v1687 = vsel %vm1679, %v1644, %v1646
      %v1688 = vsel %vm1679, %v1646, %v1648
      %v1689 = vsel %vm1679, %v1648, %v1650
      %v1690 = vsel %vm1679, %v1650, %v1652
      %v1691 = vsel %vm1679, %v1652, %v1654
      %v1692 = vsel %vm1679, %v1654, %v1656
      %v1693 = vsel %vm1679, %v1656, %v1658
      %v1694 = vsel %vm1679, %v1658, %v1660
      %v1695 = vsel %vm1679, %v1660, %v1662
      %v1696 = vsel %vm1679, %v1662, %v1664
      %v1697 = vsel %vm1679, %v1664, %v1666
      %v1698 = vsel %vm1679, %v1666, %v1668
      %v1699 = vsel %vm1679, %v1668, %v1670
      %v1700 = vsel %vm1679, %v1670, %v1672
      %v1701 = vsel %vm1679, %v1672, %v1674
      %v1702 = vsel %vm1679, %v1674, %v1676
      %v1703 = vsel %vm1679, %v1676, %v1678
      %v1705 = vsel %vm491, %v1628, 0
      %v1708 = vsel %vm495, %v1680, 0
      %v1711 = vsel %vm495, %v1681, 0
      %v1714 = vsel %vm495, %v1682, 0
      %v1717 = vsel %vm495, %v1683, 0
      %v1720 = vsel %vm495, %v1684, 0
      %v1723 = vsel %vm495, %v1685, 0
      %v1726 = vsel %vm495, %v1686, 0
      %v1729 = vsel %vm495, %v1687, 0
      %v1732 = vsel %vm495, %v1688, 0
      %v1735 = vsel %vm495, %v1689, 0
      %v1738 = vsel %vm495, %v1690, 0
      %v1741 = vsel %vm495, %v1691, 0
      %v1744 = vsel %vm495, %v1692, 0
      %v1747 = vsel %vm495, %v1693, 0
      %v1750 = vsel %vm495, %v1694, 0
      %v1753 = vsel %vm495, %v1695, 0
      %v1756 = vsel %vm495, %v1696, 0
      %v1759 = vsel %vm495, %v1697, 0
      %v1762 = vsel %vm495, %v1698, 0
      %v1765 = vsel %vm495, %v1699, 0
      %v1768 = vsel %vm495, %v1700, 0
      %v1771 = vsel %vm495, %v1701, 0
      %v1774 = vsel %vm495, %v1702, 0
      %v1777 = vsel %vm495, %v1703, 0
      %1779 = vmatprep.subr.bf16.mxu0 %v1711
      %1780 = vmatpush1.bf16.msra.mxu0 %v1708
      %1781 = vmatprep.subr.bf16.mxu0 0
      %1782 = vmatpush1.bf16.msra.mxu0 0
      %1783 = vmatprep.subr.bf16.mxu0 0
      %1784 = vmatpush1.bf16.msra.mxu0 0
      %1785 = vmatprep.subr.bf16.mxu0 0
      %1786 = vmatpush1.bf16.msra.mxu0 0
      %1787 = vmatprep.subr.bf16.mxu0 0
      %1788 = vmatpush1.bf16.msra.mxu0 0
      %1789 = vmatprep.subr.bf16.mxu0 0
      %1790 = vmatpush1.bf16.msra.mxu0 0
      %1791 = vmatprep.subr.bf16.mxu0 0
      %1792 = vmatpush1.bf16.msra.mxu0 0
      %1793 = vmatprep.subr.bf16.mxu0 0
      %1794 = vmatpush1.bf16.msra.mxu0 0
      %1795 = vmatprep.subr.bf16.mxu0 0
      %1796 = vmatpush1.bf16.msra.mxu0 0
      %1797 = vmatprep.subr.bf16.mxu0 0
      %1798 = vmatpush1.bf16.msra.mxu0 0
      %1799 = vmatprep.subr.bf16.mxu0 0
      %1800 = vmatpush1.bf16.msra.mxu0 0
      %1801 = vmatprep.subr.bf16.mxu0 0
      %1802 = vmatpush1.bf16.msra.mxu0 0
      %1803 = vmatprep.subr.bf16.mxu0 0
      %1804 = vmatpush1.bf16.msra.mxu0 0
      %1805 = vmatprep.subr.bf16.mxu0 0
      %1806 = vmatpush1.bf16.msra.mxu0 0
      %1807 = vmatprep.subr.bf16.mxu0 0
      %1808 = vmatpush1.bf16.msra.mxu0 0
      %1809 = vmatprep.subr.bf16.mxu0 0
      %1810 = vmatpush1.bf16.msra.mxu0 0
      %1811 = vmatprep.mubr.bf16.mxu0 0
      %1812 = vmatmul.mubr.bf16.gmra.mrb[0].mxu0 %v1705
      %v1813 = vpop.f32.mrb[0].mxu0
      %v1814 = vadd.f32 0.0, %v1813
      %v1815 = vpop.f32.mrb[0].mxu0
      %v1816 = vadd.f32 0.0, %v1815
      %v1817 = vpop.f32.mrb[0].mxu0
      %v1818 = vpop.f32.mrb[0].mxu0
      %1819 = vdwg.mxu0
      %1820 = vmatprep.subr.bf16.mxu0 %v1717
      %1821 = vmatpush1.bf16.msra.mxu0 %v1714
      %1822 = vmatprep.subr.bf16.mxu0 0
      %1823 = vmatpush1.bf16.msra.mxu0 0
      %1824 = vmatprep.subr.bf16.mxu0 0
      %1825 = vmatpush1.bf16.msra.mxu0 0
      %1826 = vmatprep.subr.bf16.mxu0 0
      %1827 = vmatpush1.bf16.msra.mxu0 0
      %1828 = vmatprep.subr.bf16.mxu0 0
      %1829 = vmatpush1.bf16.msra.mxu0 0
      %1830 = vmatprep.subr.bf16.mxu0 0
      %1831 = vmatpush1.bf16.msra.mxu0 0
      %1832 = vmatprep.subr.bf16.mxu0 0
      %1833 = vmatpush1.bf16.msra.mxu0 0
      %1834 = vmatprep.subr.bf16.mxu0 0
      %1835 = vmatpush1.bf16.msra.mxu0 0
      %1836 = vmatprep.subr.bf16.mxu0 0
      %1837 = vmatpush1.bf16.msra.mxu0 0
      %1838 = vmatprep.subr.bf16.mxu0 0
      %1839 = vmatpush1.bf16.msra.mxu0 0
      %1840 = vmatprep.subr.bf16.mxu0 0
      %1841 = vmatpush1.bf16.msra.mxu0 0
      %1842 = vmatprep.subr.bf16.mxu0 0
      %1843 = vmatpush1.bf16.msra.mxu0 0
      %1844 = vmatprep.subr.bf16.mxu0 0
      %1845 = vmatpush1.bf16.msra.mxu0 0
      %1846 = vmatprep.subr.bf16.mxu0 0
      %1847 = vmatpush1.bf16.msra.mxu0 0
      %1848 = vmatprep.subr.bf16.mxu0 0
      %1849 = vmatpush1.bf16.msra.mxu0 0
      %1850 = vmatprep.subr.bf16.mxu0 0
      %1851 = vmatpush1.bf16.msra.mxu0 0
      %1852 = vmatprep.mubr.bf16.mxu0 0
      %1853 = vmatmul.mubr.bf16.gmra.mrb[0].mxu0 %v1705
      %v1854 = vpop.f32.mrb[0].mxu0
      %v1855 = vadd.f32 0.0, %v1854
      %v1856 = vpop.f32.mrb[0].mxu0
      %v1857 = vadd.f32 0.0, %v1856
      %v1858 = vpop.f32.mrb[0].mxu0
      %v1859 = vpop.f32.mrb[0].mxu0
      %1860 = vdwg.mxu0
      %1861 = vmatprep.subr.bf16.mxu0 %v1723
      %1862 = vmatpush1.bf16.msra.mxu0 %v1720
      %1863 = vmatprep.subr.bf16.mxu0 0
      %1864 = vmatpush1.bf16.msra.mxu0 0
      %1865 = vmatprep.subr.bf16.mxu0 0
      %1866 = vmatpush1.bf16.msra.mxu0 0
      %1867 = vmatprep.subr.bf16.mxu0 0
      %1868 = vmatpush1.bf16.msra.mxu0 0
      %1869 = vmatprep.subr.bf16.mxu0 0
      %1870 = vmatpush1.bf16.msra.mxu0 0
      %1871 = vmatprep.subr.bf16.mxu0 0
      %1872 = vmatpush1.bf16.msra.mxu0 0
      %1873 = vmatprep.subr.bf16.mxu0 0
      %1874 = vmatpush1.bf16.msra.mxu0 0
      %1875 = vmatprep.subr.bf16.mxu0 0
      %1876 = vmatpush1.bf16.msra.mxu0 0
      %1877 = vmatprep.subr.bf16.mxu0 0
      %1878 = vmatpush1.bf16.msra.mxu0 0
      %1879 = vmatprep.subr.bf16.mxu0 0
      %1880 = vmatpush1.bf16.msra.mxu0 0
      %1881 = vmatprep.subr.bf16.mxu0 0
      %1882 = vmatpush1.bf16.msra.mxu0 0
      %1883 = vmatprep.subr.bf16.mxu0 0
      %1884 = vmatpush1.bf16.msra.mxu0 0
      %1885 = vmatprep.subr.bf16.mxu0 0
      %1886 = vmatpush1.bf16.msra.mxu0 0
      %1887 = vmatprep.subr.bf16.mxu0 0
      %1888 = vmatpush1.bf16.msra.mxu0 0
      %1889 = vmatprep.subr.bf16.mxu0 0
      %1890 = vmatpush1.bf16.msra.mxu0 0
      %1891 = vmatprep.subr.bf16.mxu0 0
      %1892 = vmatpush1.bf16.msra.mxu0 0
      %1893 = vmatprep.mubr.bf16.mxu0 0
      %1894 = vmatmul.mubr.bf16.gmra.mrb[0].mxu0 %v1705
      %v1895 = vpop.f32.mrb[0].mxu0
      %v1896 = vadd.f32 0.0, %v1895
      %v1897 = vpop.f32.mrb[0].mxu0
      %v1898 = vadd.f32 0.0, %v1897
      %v1899 = vpop.f32.mrb[0].mxu0
      %v1900 = vpop.f32.mrb[0].mxu0
      %1901 = vdwg.mxu0
      %1902 = vmatprep.subr.bf16.mxu0 %v1729
      %1903 = vmatpush1.bf16.msra.mxu0 %v1726
      %1904 = vmatprep.subr.bf16.mxu0 0
      %1905 = vmatpush1.bf16.msra.mxu0 0
      %1906 = vmatprep.subr.bf16.mxu0 0
      %1907 = vmatpush1.bf16.msra.mxu0 0
      %1908 = vmatprep.subr.bf16.mxu0 0
      %1909 = vmatpush1.bf16.msra.mxu0 0
      %1910 = vmatprep.subr.bf16.mxu0 0
      %1911 = vmatpush1.bf16.msra.mxu0 0
      %1912 = vmatprep.subr.bf16.mxu0 0
      %1913 = vmatpush1.bf16.msra.mxu0 0
      %1914 = vmatprep.subr.bf16.mxu0 0
      %1915 = vmatpush1.bf16.msra.mxu0 0
      %1916 = vmatprep.subr.bf16.mxu0 0
      %1917 = vmatpush1.bf16.msra.mxu0 0
      %1918 = vmatprep.subr.bf16.mxu0 0
      %1919 = vmatpush1.bf16.msra.mxu0 0
      %1920 = vmatprep.subr.bf16.mxu0 0
      %1921 = vmatpush1.bf16.msra.mxu0 0
      %1922 = vmatprep.subr.bf16.mxu0 0
      %1923 = vmatpush1.bf16.msra.mxu0 0
      %1924 = vmatprep.subr.bf16.mxu0 0
      %1925 = vmatpush1.bf16.msra.mxu0 0
      %1926 = vmatprep.subr.bf16.mxu0 0
      %1927 = vmatpush1.bf16.msra.mxu0 0
      %1928 = vmatprep.subr.bf16.mxu0 0
      %1929 = vmatpush1.bf16.msra.mxu0 0
      %1930 = vmatprep.subr.bf16.mxu0 0
      %1931 = vmatpush1.bf16.msra.mxu0 0
      %1932 = vmatprep.subr.bf16.mxu0 0
      %1933 = vmatpush1.bf16.msra.mxu0 0
      %1934 = vmatprep.mubr.bf16.mxu0 0
      %1935 = vmatmul.mubr.bf16.gmra.mrb[0].mxu0 %v1705
      %v1936 = vpop.f32.mrb[0].mxu0
      %v1937 = vadd.f32 0.0, %v1936
      %v1938 = vpop.f32.mrb[0].mxu0
      %v1939 = vadd.f32 0.0, %v1938
      %v1940 = vpop.f32.mrb[0].mxu0
      %v1941 = vpop.f32.mrb[0].mxu0
      %1942 = vdwg.mxu0
      %1943 = vmatprep.subr.bf16.mxu0 %v1735
      %1944 = vmatpush1.bf16.msra.mxu0 %v1732
      %1945 = vmatprep.subr.bf16.mxu0 0
      %1946 = vmatpush1.bf16.msra.mxu0 0
      %1947 = vmatprep.subr.bf16.mxu0 0
      %1948 = vmatpush1.bf16.msra.mxu0 0
      %1949 = vmatprep.subr.bf16.mxu0 0
      %1950 = vmatpush1.bf16.msra.mxu0 0
      %1951 = vmatprep.subr.bf16.mxu0 0
      %1952 = vmatpush1.bf16.msra.mxu0 0
      %1953 = vmatprep.subr.bf16.mxu0 0
      %1954 = vmatpush1.bf16.msra.mxu0 0
      %1955 = vmatprep.subr.bf16.mxu0 0
      %1956 = vmatpush1.bf16.msra.mxu0 0
      %1957 = vmatprep.subr.bf16.mxu0 0
      %1958 = vmatpush1.bf16.msra.mxu0 0
      %1959 = vmatprep.subr.bf16.mxu0 0
      %1960 = vmatpush1.bf16.msra.mxu0 0
      %1961 = vmatprep.subr.bf16.mxu0 0
      %1962 = vmatpush1.bf16.msra.mxu0 0
      %1963 = vmatprep.subr.bf16.mxu0 0
      %1964 = vmatpush1.bf16.msra.mxu0 0
      %1965 = vmatprep.subr.bf16.mxu0 0
      %1966 = vmatpush1.bf16.msra.mxu0 0
      %1967 = vmatprep.subr.bf16.mxu0 0
      %1968 = vmatpush1.bf16.msra.mxu0 0
      %1969 = vmatprep.subr.bf16.mxu0 0
      %1970 = vmatpush1.bf16.msra.mxu0 0
      %1971 = vmatprep.subr.bf16.mxu0 0
      %1972 = vmatpush1.bf16.msra.mxu0 0
      %1973 = vmatprep.subr.bf16.mxu0 0
      %1974 = vmatpush1.bf16.msra.mxu0 0
      %1975 = vmatprep.mubr.bf16.mxu0 0
      %1976 = vmatmul.mubr.bf16.gmra.mrb[0].mxu0 %v1705
      %v1977 = vpop.f32.mrb[0].mxu0
      %v1978 = vadd.f32 0.0, %v1977
      %v1979 = vpop.f32.mrb[0].mxu0
      %v1980 = vadd.f32 0.0, %v1979
      %v1981 = vpop.f32.mrb[0].mxu0
      %v1982 = vpop.f32.mrb[0].mxu0
      %1983 = vdwg.mxu0
      %1984 = vmatprep.subr.bf16.mxu0 %v1741
      %1985 = vmatpush1.bf16.msra.mxu0 %v1738
      %1986 = vmatprep.subr.bf16.mxu0 0
      %1987 = vmatpush1.bf16.msra.mxu0 0
      %1988 = vmatprep.subr.bf16.mxu0 0
      %1989 = vmatpush1.bf16.msra.mxu0 0
      %1990 = vmatprep.subr.bf16.mxu0 0
      %1991 = vmatpush1.bf16.msra.mxu0 0
      %1992 = vmatprep.subr.bf16.mxu0 0
      %1993 = vmatpush1.bf16.msra.mxu0 0
      %1994 = vmatprep.subr.bf16.mxu0 0
      %1995 = vmatpush1.bf16.msra.mxu0 0
      %1996 = vmatprep.subr.bf16.mxu0 0
      %1997 = vmatpush1.bf16.msra.mxu0 0
      %1998 = vmatprep.subr.bf16.mxu0 0
      %1999 = vmatpush1.bf16.msra.mxu0 0
      %2000 = vmatprep.subr.bf16.mxu0 0
      %2001 = vmatpush1.bf16.msra.mxu0 0
      %2002 = vmatprep.subr.bf16.mxu0 0
      %2003 = vmatpush1.bf16.msra.mxu0 0
      %2004 = vmatprep.subr.bf16.mxu0 0
      %2005 = vmatpush1.bf16.msra.mxu0 0
      %2006 = vmatprep.subr.bf16.mxu0 0
      %2007 = vmatpush1.bf16.msra.mxu0 0
      %2008 = vmatprep.subr.bf16.mxu0 0
      %2009 = vmatpush1.bf16.msra.mxu0 0
      %2010 = vmatprep.subr.bf16.mxu0 0
      %2011 = vmatpush1.bf16.msra.mxu0 0
      %2012 = vmatprep.subr.bf16.mxu0 0
      %2013 = vmatpush1.bf16.msra.mxu0 0
      %2014 = vmatprep.subr.bf16.mxu0 0
      %2015 = vmatpush1.bf16.msra.mxu0 0
      %2016 = vmatprep.mubr.bf16.mxu0 0
      %2017 = vmatmul.mubr.bf16.gmra.mrb[0].mxu0 %v1705
      %v2018 = vpop.f32.mrb[0].mxu0
      %v2019 = vadd.f32 0.0, %v2018
      %v2020 = vpop.f32.mrb[0].mxu0
      %v2021 = vadd.f32 0.0, %v2020
      %v2022 = vpop.f32.mrb[0].mxu0
      %v2023 = vpop.f32.mrb[0].mxu0
      %2024 = vdwg.mxu0
      %2025 = vmatprep.subr.bf16.mxu0 %v1747
      %2026 = vmatpush1.bf16.msra.mxu0 %v1744
      %2027 = vmatprep.subr.bf16.mxu0 0
      %2028 = vmatpush1.bf16.msra.mxu0 0
      %2029 = vmatprep.subr.bf16.mxu0 0
      %2030 = vmatpush1.bf16.msra.mxu0 0
      %2031 = vmatprep.subr.bf16.mxu0 0
      %2032 = vmatpush1.bf16.msra.mxu0 0
      %2033 = vmatprep.subr.bf16.mxu0 0
      %2034 = vmatpush1.bf16.msra.mxu0 0
      %2035 = vmatprep.subr.bf16.mxu0 0
      %2036 = vmatpush1.bf16.msra.mxu0 0
      %2037 = vmatprep.subr.bf16.mxu0 0
      %2038 = vmatpush1.bf16.msra.mxu0 0
      %2039 = vmatprep.subr.bf16.mxu0 0
      %2040 = vmatpush1.bf16.msra.mxu0 0
      %2041 = vmatprep.subr.bf16.mxu0 0
      %2042 = vmatpush1.bf16.msra.mxu0 0
      %2043 = vmatprep.subr.bf16.mxu0 0
      %2044 = vmatpush1.bf16.msra.mxu0 0
      %2045 = vmatprep.subr.bf16.mxu0 0
      %2046 = vmatpush1.bf16.msra.mxu0 0
      %2047 = vmatprep.subr.bf16.mxu0 0
      %2048 = vmatpush1.bf16.msra.mxu0 0
      %2049 = vmatprep.subr.bf16.mxu0 0
      %2050 = vmatpush1.bf16.msra.mxu0 0
      %2051 = vmatprep.subr.bf16.mxu0 0
      %2052 = vmatpush1.bf16.msra.mxu0 0
      %2053 = vmatprep.subr.bf16.mxu0 0
      %2054 = vmatpush1.bf16.msra.mxu0 0
      %2055 = vmatprep.subr.bf16.mxu0 0
      %2056 = vmatpush1.bf16.msra.mxu0 0
      %2057 = vmatprep.mubr.bf16.mxu0 0
      %2058 = vmatmul.mubr.bf16.gmra.mrb[0].mxu0 %v1705
      %v2059 = vpop.f32.mrb[0].mxu0
      %v2060 = vadd.f32 0.0, %v2059
      %v2061 = vpop.f32.mrb[0].mxu0
      %v2062 = vadd.f32 0.0, %v2061
      %v2063 = vpop.f32.mrb[0].mxu0
      %v2064 = vpop.f32.mrb[0].mxu0
      %2065 = vdwg.mxu0
      %2066 = vmatprep.subr.bf16.mxu0 %v1753
      %2067 = vmatpush1.bf16.msra.mxu0 %v1750
      %2068 = vmatprep.subr.bf16.mxu0 0
      %2069 = vmatpush1.bf16.msra.mxu0 0
      %2070 = vmatprep.subr.bf16.mxu0 0
      %2071 = vmatpush1.bf16.msra.mxu0 0
      %2072 = vmatprep.subr.bf16.mxu0 0
      %2073 = vmatpush1.bf16.msra.mxu0 0
      %2074 = vmatprep.subr.bf16.mxu0 0
      %2075 = vmatpush1.bf16.msra.mxu0 0
      %2076 = vmatprep.subr.bf16.mxu0 0
      %2077 = vmatpush1.bf16.msra.mxu0 0
      %2078 = vmatprep.subr.bf16.mxu0 0
      %2079 = vmatpush1.bf16.msra.mxu0 0
      %2080 = vmatprep.subr.bf16.mxu0 0
      %2081 = vmatpush1.bf16.msra.mxu0 0
      %2082 = vmatprep.subr.bf16.mxu0 0
      %2083 = vmatpush1.bf16.msra.mxu0 0
      %2084 = vmatprep.subr.bf16.mxu0 0
      %2085 = vmatpush1.bf16.msra.mxu0 0
      %2086 = vmatprep.subr.bf16.mxu0 0
      %2087 = vmatpush1.bf16.msra.mxu0 0
      %2088 = vmatprep.subr.bf16.mxu0 0
      %2089 = vmatpush1.bf16.msra.mxu0 0
      %2090 = vmatprep.subr.bf16.mxu0 0
      %2091 = vmatpush1.bf16.msra.mxu0 0
      %2092 = vmatprep.subr.bf16.mxu0 0
      %2093 = vmatpush1.bf16.msra.mxu0 0
      %2094 = vmatprep.subr.bf16.mxu0 0
      %2095 = vmatpush1.bf16.msra.mxu0 0
      %2096 = vmatprep.subr.bf16.mxu0 0
      %2097 = vmatpush1.bf16.msra.mxu0 0
      %2098 = vmatprep.mubr.bf16.mxu0 0
      %2099 = vmatmul.mubr.bf16.gmra.mrb[0].mxu0 %v1705
      %v2100 = vpop.f32.mrb[0].mxu0
      %v2101 = vadd.f32 0.0, %v2100
      %v2102 = vpop.f32.mrb[0].mxu0
      %v2103 = vadd.f32 0.0, %v2102
      %v2104 = vpop.f32.mrb[0].mxu0
      %v2105 = vpop.f32.mrb[0].mxu0
      %2106 = vdwg.mxu0
      %2107 = vmatprep.subr.bf16.mxu0 %v1759
      %2108 = vmatpush1.bf16.msra.mxu0 %v1756
      %2109 = vmatprep.subr.bf16.mxu0 0
      %2110 = vmatpush1.bf16.msra.mxu0 0
      %2111 = vmatprep.subr.bf16.mxu0 0
      %2112 = vmatpush1.bf16.msra.mxu0 0
      %2113 = vmatprep.subr.bf16.mxu0 0
      %2114 = vmatpush1.bf16.msra.mxu0 0
      %2115 = vmatprep.subr.bf16.mxu0 0
      %2116 = vmatpush1.bf16.msra.mxu0 0
      %2117 = vmatprep.subr.bf16.mxu0 0
      %2118 = vmatpush1.bf16.msra.mxu0 0
      %2119 = vmatprep.subr.bf16.mxu0 0
      %2120 = vmatpush1.bf16.msra.mxu0 0
      %2121 = vmatprep.subr.bf16.mxu0 0
      %2122 = vmatpush1.bf16.msra.mxu0 0
      %2123 = vmatprep.subr.bf16.mxu0 0
      %2124 = vmatpush1.bf16.msra.mxu0 0
      %2125 = vmatprep.subr.bf16.mxu0 0
      %2126 = vmatpush1.bf16.msra.mxu0 0
      %2127 = vmatprep.subr.bf16.mxu0 0
      %2128 = vmatpush1.bf16.msra.mxu0 0
      %2129 = vmatprep.subr.bf16.mxu0 0
      %2130 = vmatpush1.bf16.msra.mxu0 0
      %2131 = vmatprep.subr.bf16.mxu0 0
      %2132 = vmatpush1.bf16.msra.mxu0 0
      %2133 = vmatprep.subr.bf16.mxu0 0
      %2134 = vmatpush1.bf16.msra.mxu0 0
      %2135 = vmatprep.subr.bf16.mxu0 0
      %2136 = vmatpush1.bf16.msra.mxu0 0
      %2137 = vmatprep.subr.bf16.mxu0 0
      %2138 = vmatpush1.bf16.msra.mxu0 0
      %2139 = vmatprep.mubr.bf16.mxu0 0
      %2140 = vmatmul.mubr.bf16.gmra.mrb[0].mxu0 %v1705
      %v2141 = vpop.f32.mrb[0].mxu0
      %v2142 = vadd.f32 0.0, %v2141
      %v2143 = vpop.f32.mrb[0].mxu0
      %v2144 = vadd.f32 0.0, %v2143
      %v2145 = vpop.f32.mrb[0].mxu0
      %v2146 = vpop.f32.mrb[0].mxu0
      %2147 = vdwg.mxu0
      %2148 = vmatprep.subr.bf16.mxu0 %v1765
      %2149 = vmatpush1.bf16.msra.mxu0 %v1762
      %2150 = vmatprep.subr.bf16.mxu0 0
      %2151 = vmatpush1.bf16.msra.mxu0 0
      %2152 = vmatprep.subr.bf16.mxu0 0
      %2153 = vmatpush1.bf16.msra.mxu0 0
      %2154 = vmatprep.subr.bf16.mxu0 0
      %2155 = vmatpush1.bf16.msra.mxu0 0
      %2156 = vmatprep.subr.bf16.mxu0 0
      %2157 = vmatpush1.bf16.msra.mxu0 0
      %2158 = vmatprep.subr.bf16.mxu0 0
      %2159 = vmatpush1.bf16.msra.mxu0 0
      %2160 = vmatprep.subr.bf16.mxu0 0
      %2161 = vmatpush1.bf16.msra.mxu0 0
      %2162 = vmatprep.subr.bf16.mxu0 0
      %2163 = vmatpush1.bf16.msra.mxu0 0
      %2164 = vmatprep.subr.bf16.mxu0 0
      %2165 = vmatpush1.bf16.msra.mxu0 0
      %2166 = vmatprep.subr.bf16.mxu0 0
      %2167 = vmatpush1.bf16.msra.mxu0 0
      %2168 = vmatprep.subr.bf16.mxu0 0
      %2169 = vmatpush1.bf16.msra.mxu0 0
      %2170 = vmatprep.subr.bf16.mxu0 0
      %2171 = vmatpush1.bf16.msra.mxu0 0
      %2172 = vmatprep.subr.bf16.mxu0 0
      %2173 = vmatpush1.bf16.msra.mxu0 0
      %2174 = vmatprep.subr.bf16.mxu0 0
      %2175 = vmatpush1.bf16.msra.mxu0 0
      %2176 = vmatprep.subr.bf16.mxu0 0
      %2177 = vmatpush1.bf16.msra.mxu0 0
      %2178 = vmatprep.subr.bf16.mxu0 0
      %2179 = vmatpush1.bf16.msra.mxu0 0
      %2180 = vmatprep.mubr.bf16.mxu0 0
      %2181 = vmatmul.mubr.bf16.gmra.mrb[0].mxu0 %v1705
      %v2182 = vpop.f32.mrb[0].mxu0
      %v2183 = vadd.f32 0.0, %v2182
      %v2184 = vpop.f32.mrb[0].mxu0
      %v2185 = vadd.f32 0.0, %v2184
      %v2186 = vpop.f32.mrb[0].mxu0
      %v2187 = vpop.f32.mrb[0].mxu0
      %2188 = vdwg.mxu0
      %2189 = vmatprep.subr.bf16.mxu0 %v1771
      %2190 = vmatpush1.bf16.msra.mxu0 %v1768
      %2191 = vmatprep.subr.bf16.mxu0 0
      %2192 = vmatpush1.bf16.msra.mxu0 0
      %2193 = vmatprep.subr.bf16.mxu0 0
      %2194 = vmatpush1.bf16.msra.mxu0 0
      %2195 = vmatprep.subr.bf16.mxu0 0
      %2196 = vmatpush1.bf16.msra.mxu0 0
      %2197 = vmatprep.subr.bf16.mxu0 0
      %2198 = vmatpush1.bf16.msra.mxu0 0
      %2199 = vmatprep.subr.bf16.mxu0 0
      %2200 = vmatpush1.bf16.msra.mxu0 0
      %2201 = vmatprep.subr.bf16.mxu0 0
      %2202 = vmatpush1.bf16.msra.mxu0 0
      %2203 = vmatprep.subr.bf16.mxu0 0
      %2204 = vmatpush1.bf16.msra.mxu0 0
      %2205 = vmatprep.subr.bf16.mxu0 0
      %2206 = vmatpush1.bf16.msra.mxu0 0
      %2207 = vmatprep.subr.bf16.mxu0 0
      %2208 = vmatpush1.bf16.msra.mxu0 0
      %2209 = vmatprep.subr.bf16.mxu0 0
      %2210 = vmatpush1.bf16.msra.mxu0 0
      %2211 = vmatprep.subr.bf16.mxu0 0
      %2212 = vmatpush1.bf16.msra.mxu0 0
      %2213 = vmatprep.subr.bf16.mxu0 0
      %2214 = vmatpush1.bf16.msra.mxu0 0
      %2215 = vmatprep.subr.bf16.mxu0 0
      %2216 = vmatpush1.bf16.msra.mxu0 0
      %2217 = vmatprep.subr.bf16.mxu0 0
      %2218 = vmatpush1.bf16.msra.mxu0 0
      %2219 = vmatprep.subr.bf16.mxu0 0
      %2220 = vmatpush1.bf16.msra.mxu0 0
      %2221 = vmatprep.mubr.bf16.mxu0 0
      %2222 = vmatmul.mubr.bf16.gmra.mrb[0].mxu0 %v1705
      %v2223 = vpop.f32.mrb[0].mxu0
      %v2224 = vadd.f32 0.0, %v2223
      %v2225 = vpop.f32.mrb[0].mxu0
      %v2226 = vadd.f32 0.0, %v2225
      %v2227 = vpop.f32.mrb[0].mxu0
      %v2228 = vpop.f32.mrb[0].mxu0
      %2229 = vdwg.mxu0
      %2230 = vmatprep.subr.bf16.mxu0 %v1777
      %2231 = vmatpush1.bf16.msra.mxu0 %v1774
      %2232 = vmatprep.subr.bf16.mxu0 0
      %2233 = vmatpush1.bf16.msra.mxu0 0
      %2234 = vmatprep.subr.bf16.mxu0 0
      %2235 = vmatpush1.bf16.msra.mxu0 0
      %2236 = vmatprep.subr.bf16.mxu0 0
      %2237 = vmatpush1.bf16.msra.mxu0 0
      %2238 = vmatprep.subr.bf16.mxu0 0
      %2239 = vmatpush1.bf16.msra.mxu0 0
      %2240 = vmatprep.subr.bf16.mxu0 0
      %2241 = vmatpush1.bf16.msra.mxu0 0
      %2242 = vmatprep.subr.bf16.mxu0 0
      %2243 = vmatpush1.bf16.msra.mxu0 0
      %2244 = vmatprep.subr.bf16.mxu0 0
      %2245 = vmatpush1.bf16.msra.mxu0 0
      %2246 = vmatprep.subr.bf16.mxu0 0
      %2247 = vmatpush1.bf16.msra.mxu0 0
      %2248 = vmatprep.subr.bf16.mxu0 0
      %2249 = vmatpush1.bf16.msra.mxu0 0
      %2250 = vmatprep.subr.bf16.mxu0 0
      %2251 = vmatpush1.bf16.msra.mxu0 0
      %2252 = vmatprep.subr.bf16.mxu0 0
      %2253 = vmatpush1.bf16.msra.mxu0 0
      %2254 = vmatprep.subr.bf16.mxu0 0
      %2255 = vmatpush1.bf16.msra.mxu0 0
      %2256 = vmatprep.subr.bf16.mxu0 0
      %2257 = vmatpush1.bf16.msra.mxu0 0
      %2258 = vmatprep.subr.bf16.mxu0 0
      %2259 = vmatpush1.bf16.msra.mxu0 0
      %2260 = vmatprep.subr.bf16.mxu0 0
      %2261 = vmatpush1.bf16.msra.mxu0 0
      %2262 = vmatprep.mubr.bf16.mxu0 0
      %2263 = vmatmul.mubr.bf16.gmra.mrb[0].mxu0 %v1705
      %v2264 = vpop.f32.mrb[0].mxu0
      %v2265 = vadd.f32 0.0, %v2264
      %v2266 = vpop.f32.mrb[0].mxu0
      %v2267 = vadd.f32 0.0, %v2266
      %v2268 = vpop.f32.mrb[0].mxu0
      %v2269 = vpop.f32.mrb[0].mxu0
      %2270 = vdwg.mxu0
      %v2271 = vadd.f32 %v1170, %v1814
      %v2272 = vadd.f32 %v1172, %v1816
      %v2273 = vadd.f32 %v1211, %v1855
      %v2274 = vadd.f32 %v1213, %v1857
      %v2275 = vadd.f32 %v1252, %v1896
      %v2276 = vadd.f32 %v1254, %v1898
      %v2277 = vadd.f32 %v1293, %v1937
      %v2278 = vadd.f32 %v1295, %v1939
      %v2279 = vadd.f32 %v1334, %v1978
      %v2280 = vadd.f32 %v1336, %v1980
      %v2281 = vadd.f32 %v1375, %v2019
      %v2282 = vadd.f32 %v1377, %v2021
      %v2283 = vadd.f32 %v1416, %v2060
      %v2284 = vadd.f32 %v1418, %v2062
      %v2285 = vadd.f32 %v1457, %v2101
      %v2286 = vadd.f32 %v1459, %v2103
      %v2287 = vadd.f32 %v1498, %v2142
      %v2288 = vadd.f32 %v1500, %v2144
      %v2289 = vadd.f32 %v1539, %v2183
      %v2290 = vadd.f32 %v1541, %v2185
      %v2291 = vadd.f32 %v1580, %v2224
      %v2292 = vadd.f32 %v1582, %v2226
      %v2293 = vadd.f32 %v1621, %v2265
      %v2294 = vadd.f32 %v1623, %v2267
      %s2295 = scalar_lea.vmem %s1, 12
      %v2296 = vld [vmem:[%s2295] sm:$0xf]
      %2297 = vrot.lane.b32.xlu0 %v314, 110
      %v2298 = vpop.permute.xlu0 %2297
      %2299 = vrot.lane.b32.xlu0 %v322, 110
      %v2300 = vpop.permute.xlu0 %2299
      %2301 = vrot.lane.b32.xlu0 %v321, 110
      %v2302 = vpop.permute.xlu0 %2301
      %2303 = vrot.lane.b32.xlu0 %v323, 110
      %v2304 = vpop.permute.xlu0 %2303
      %2305 = vrot.lane.b32.xlu0 %v331, 110
      %v2306 = vpop.permute.xlu0 %2305
      %2307 = vrot.lane.b32.xlu0 %v339, 110
      %v2308 = vpop.permute.xlu0 %2307
      %2309 = vrot.lane.b32.xlu0 %v338, 110
      %v2310 = vpop.permute.xlu0 %2309
      %2311 = vrot.lane.b32.xlu0 %v340, 110
      %v2312 = vpop.permute.xlu0 %2311
      %2313 = vrot.lane.b32.xlu0 %v348, 110
      %v2314 = vpop.permute.xlu0 %2313
      %2315 = vrot.lane.b32.xlu0 %v356, 110
      %v2316 = vpop.permute.xlu0 %2315
      %2317 = vrot.lane.b32.xlu0 %v355, 110
      %v2318 = vpop.permute.xlu0 %2317
      %2319 = vrot.lane.b32.xlu0 %v357, 110
      %v2320 = vpop.permute.xlu0 %2319
      %2321 = vrot.lane.b32.xlu0 %v365, 110
      %v2322 = vpop.permute.xlu0 %2321
      %2323 = vrot.lane.b32.xlu0 %v373, 110
      %v2324 = vpop.permute.xlu0 %2323
      %2325 = vrot.lane.b32.xlu0 %v372, 110
      %v2326 = vpop.permute.xlu0 %2325
      %2327 = vrot.lane.b32.xlu0 %v374, 110
      %v2328 = vpop.permute.xlu0 %2327
      %2329 = vrot.lane.b32.xlu0 %v382, 110
      %v2330 = vpop.permute.xlu0 %2329
      %2331 = vrot.lane.b32.xlu0 %v390, 110
      %v2332 = vpop.permute.xlu0 %2331
      %2333 = vrot.lane.b32.xlu0 %v389, 110
      %v2334 = vpop.permute.xlu0 %2333
      %2335 = vrot.lane.b32.xlu0 %v391, 110
      %v2336 = vpop.permute.xlu0 %2335
      %2337 = vrot.lane.b32.xlu0 %v399, 110
      %v2338 = vpop.permute.xlu0 %2337
      %2339 = vrot.lane.b32.xlu0 %v407, 110
      %v2340 = vpop.permute.xlu0 %2339
      %2341 = vrot.lane.b32.xlu0 %v406, 110
      %v2342 = vpop.permute.xlu0 %2341
      %2343 = vrot.lane.b32.xlu0 %v408, 110
      %v2344 = vpop.permute.xlu0 %2343
      %2345 = vrot.lane.b32.xlu0 %v415, 110
      %v2346 = vpop.permute.xlu0 %2345
      %vm2347 = vcmask 900096
      %v2348 = vsel %vm2347, %v2298, %v2300
      %v2349 = vsel %vm2347, %v2300, %v2302
      %v2350 = vsel %vm2347, %v2302, %v2304
      %v2351 = vsel %vm2347, %v2304, %v2306
      %v2352 = vsel %vm2347, %v2306, %v2308
      %v2353 = vsel %vm2347, %v2308, %v2310
      %v2354 = vsel %vm2347, %v2310, %v2312
      %v2355 = vsel %vm2347, %v2312, %v2314
      %v2356 = vsel %vm2347, %v2314, %v2316
      %v2357 = vsel %vm2347, %v2316, %v2318
      %v2358 = vsel %vm2347, %v2318, %v2320
      %v2359 = vsel %vm2347, %v2320, %v2322
      %v2360 = vsel %vm2347, %v2322, %v2324
      %v2361 = vsel %vm2347, %v2324, %v2326
      %v2362 = vsel %vm2347, %v2326, %v2328
      %v2363 = vsel %vm2347, %v2328, %v2330
      %v2364 = vsel %vm2347, %v2330, %v2332
      %v2365 = vsel %vm2347, %v2332, %v2334
      %v2366 = vsel %vm2347, %v2334, %v2336
      %v2367 = vsel %vm2347, %v2336, %v2338
      %v2368 = vsel %vm2347, %v2338, %v2340
      %v2369 = vsel %vm2347, %v2340, %v2342
      %v2370 = vsel %vm2347, %v2342, %v2344
      %v2371 = vsel %vm2347, %v2344, %v2346
      %v2373 = vsel %vm491, %v2296, 0
      %v2376 = vsel %vm495, %v2348, 0
      %v2379 = vsel %vm495, %v2349, 0
      %v2382 = vsel %vm495, %v2350, 0
      %v2385 = vsel %vm495, %v2351, 0
      %v2388 = vsel %vm495, %v2352, 0
      %v2391 = vsel %vm495, %v2353, 0
      %v2394 = vsel %vm495, %v2354, 0
      %v2397 = vsel %vm495, %v2355, 0
      %v2400 = vsel %vm495, %v2356, 0
      %v2403 = vsel %vm495, %v2357, 0
      %v2406 = vsel %vm495, %v2358, 0
      %v2409 = vsel %vm495, %v2359, 0
      %v2412 = vsel %vm495, %v2360, 0
      %v2415 = vsel %vm495, %v2361, 0
      %v2418 = vsel %vm495, %v2362, 0
      %v2421 = vsel %vm495, %v2363, 0
      %v2424 = vsel %vm495, %v2364, 0
      %v2427 = vsel %vm495, %v2365, 0
      %v2430 = vsel %vm495, %v2366, 0
      %v2433 = vsel %vm495, %v2367, 0
      %v2436 = vsel %vm495, %v2368, 0
      %v2439 = vsel %vm495, %v2369, 0
      %v2442 = vsel %vm495, %v2370, 0
      %v2445 = vsel %vm495, %v2371, 0
      %2447 = vmatprep.subr.bf16.mxu0 %v2379
      %2448 = vmatpush1.bf16.msra.mxu0 %v2376
      %2449 = vmatprep.subr.bf16.mxu0 0
      %2450 = vmatpush1.bf16.msra.mxu0 0
      %2451 = vmatprep.subr.bf16.mxu0 0
      %2452 = vmatpush1.bf16.msra.mxu0 0
      %2453 = vmatprep.subr.bf16.mxu0 0
      %2454 = vmatpush1.bf16.msra.mxu0 0
      %2455 = vmatprep.subr.bf16.mxu0 0
      %2456 = vmatpush1.bf16.msra.mxu0 0
      %2457 = vmatprep.subr.bf16.mxu0 0
      %2458 = vmatpush1.bf16.msra.mxu0 0
      %2459 = vmatprep.subr.bf16.mxu0 0
      %2460 = vmatpush1.bf16.msra.mxu0 0
      %2461 = vmatprep.subr.bf16.mxu0 0
      %2462 = vmatpush1.bf16.msra.mxu0 0
      %2463 = vmatprep.subr.bf16.mxu0 0
      %2464 = vmatpush1.bf16.msra.mxu0 0
      %2465 = vmatprep.subr.bf16.mxu0 0
      %2466 = vmatpush1.bf16.msra.mxu0 0
      %2467 = vmatprep.subr.bf16.mxu0 0
      %2468 = vmatpush1.bf16.msra.mxu0 0
      %2469 = vmatprep.subr.bf16.mxu0 0
      %2470 = vmatpush1.bf16.msra.mxu0 0
      %2471 = vmatprep.subr.bf16.mxu0 0
      %2472 = vmatpush1.bf16.msra.mxu0 0
      %2473 = vmatprep.subr.bf16.mxu0 0
      %2474 = vmatpush1.bf16.msra.mxu0 0
      %2475 = vmatprep.subr.bf16.mxu0 0
      %2476 = vmatpush1.bf16.msra.mxu0 0
      %2477 = vmatprep.subr.bf16.mxu0 0
      %2478 = vmatpush1.bf16.msra.mxu0 0
      %2479 = vmatprep.mubr.bf16.mxu0 0
      %2480 = vmatmul.mubr.bf16.gmra.mrb[0].mxu0 %v2373
      %v2481 = vpop.f32.mrb[0].mxu0
      %v2482 = vadd.f32 0.0, %v2481
      %v2483 = vpop.f32.mrb[0].mxu0
      %v2484 = vadd.f32 0.0, %v2483
      %v2485 = vpop.f32.mrb[0].mxu0
      %v2486 = vpop.f32.mrb[0].mxu0
      %2487 = vdwg.mxu0
      %2488 = vmatprep.subr.bf16.mxu0 %v2385
      %2489 = vmatpush1.bf16.msra.mxu0 %v2382
      %2490 = vmatprep.subr.bf16.mxu0 0
      %2491 = vmatpush1.bf16.msra.mxu0 0
      %2492 = vmatprep.subr.bf16.mxu0 0
      %2493 = vmatpush1.bf16.msra.mxu0 0
      %2494 = vmatprep.subr.bf16.mxu0 0
      %2495 = vmatpush1.bf16.msra.mxu0 0
      %2496 = vmatprep.subr.bf16.mxu0 0
      %2497 = vmatpush1.bf16.msra.mxu0 0
      %2498 = vmatprep.subr.bf16.mxu0 0
      %2499 = vmatpush1.bf16.msra.mxu0 0
      %2500 = vmatprep.subr.bf16.mxu0 0
      %2501 = vmatpush1.bf16.msra.mxu0 0
      %2502 = vmatprep.subr.bf16.mxu0 0
      %2503 = vmatpush1.bf16.msra.mxu0 0
      %2504 = vmatprep.subr.bf16.mxu0 0
      %2505 = vmatpush1.bf16.msra.mxu0 0
      %2506 = vmatprep.subr.bf16.mxu0 0
      %2507 = vmatpush1.bf16.msra.mxu0 0
      %2508 = vmatprep.subr.bf16.mxu0 0
      %2509 = vmatpush1.bf16.msra.mxu0 0
      %2510 = vmatprep.subr.bf16.mxu0 0
      %2511 = vmatpush1.bf16.msra.mxu0 0
      %2512 = vmatprep.subr.bf16.mxu0 0
      %2513 = vmatpush1.bf16.msra.mxu0 0
      %2514 = vmatprep.subr.bf16.mxu0 0
      %2515 = vmatpush1.bf16.msra.mxu0 0
      %2516 = vmatprep.subr.bf16.mxu0 0
      %2517 = vmatpush1.bf16.msra.mxu0 0
      %2518 = vmatprep.subr.bf16.mxu0 0
      %2519 = vmatpush1.bf16.msra.mxu0 0
      %2520 = vmatprep.mubr.bf16.mxu0 0
      %2521 = vmatmul.mubr.bf16.gmra.mrb[0].mxu0 %v2373
      %v2522 = vpop.f32.mrb[0].mxu0
      %v2523 = vadd.f32 0.0, %v2522
      %v2524 = vpop.f32.mrb[0].mxu0
      %v2525 = vadd.f32 0.0, %v2524
      %v2526 = vpop.f32.mrb[0].mxu0
      %v2527 = vpop.f32.mrb[0].mxu0
      %2528 = vdwg.mxu0
      %2529 = vmatprep.subr.bf16.mxu0 %v2391
      %2530 = vmatpush1.bf16.msra.mxu0 %v2388
      %2531 = vmatprep.subr.bf16.mxu0 0
      %2532 = vmatpush1.bf16.msra.mxu0 0
      %2533 = vmatprep.subr.bf16.mxu0 0
      %2534 = vmatpush1.bf16.msra.mxu0 0
      %2535 = vmatprep.subr.bf16.mxu0 0
      %2536 = vmatpush1.bf16.msra.mxu0 0
      %2537 = vmatprep.subr.bf16.mxu0 0
      %2538 = vmatpush1.bf16.msra.mxu0 0
      %2539 = vmatprep.subr.bf16.mxu0 0
      %2540 = vmatpush1.bf16.msra.mxu0 0
      %2541 = vmatprep.subr.bf16.mxu0 0
      %2542 = vmatpush1.bf16.msra.mxu0 0
      %2543 = vmatprep.subr.bf16.mxu0 0
      %2544 = vmatpush1.bf16.msra.mxu0 0
      %2545 = vmatprep.subr.bf16.mxu0 0
      %2546 = vmatpush1.bf16.msra.mxu0 0
      %2547 = vmatprep.subr.bf16.mxu0 0
      %2548 = vmatpush1.bf16.msra.mxu0 0
      %2549 = vmatprep.subr.bf16.mxu0 0
      %2550 = vmatpush1.bf16.msra.mxu0 0
      %2551 = vmatprep.subr.bf16.mxu0 0
      %2552 = vmatpush1.bf16.msra.mxu0 0
      %2553 = vmatprep.subr.bf16.mxu0 0
      %2554 = vmatpush1.bf16.msra.mxu0 0
      %2555 = vmatprep.subr.bf16.mxu0 0
      %2556 = vmatpush1.bf16.msra.mxu0 0
      %2557 = vmatprep.subr.bf16.mxu0 0
      %2558 = vmatpush1.bf16.msra.mxu0 0
      %2559 = vmatprep.subr.bf16.mxu0 0
      %2560 = vmatpush1.bf16.msra.mxu0 0
      %2561 = vmatprep.mubr.bf16.mxu0 0
      %2562 = vmatmul.mubr.bf16.gmra.mrb[0].mxu0 %v2373
      %v2563 = vpop.f32.mrb[0].mxu0
      %v2564 = vadd.f32 0.0, %v2563
      %v2565 = vpop.f32.mrb[0].mxu0
      %v2566 = vadd.f32 0.0, %v2565
      %v2567 = vpop.f32.mrb[0].mxu0
      %v2568 = vpop.f32.mrb[0].mxu0
      %2569 = vdwg.mxu0
      %2570 = vmatprep.subr.bf16.mxu0 %v2397
      %2571 = vmatpush1.bf16.msra.mxu0 %v2394
      %2572 = vmatprep.subr.bf16.mxu0 0
      %2573 = vmatpush1.bf16.msra.mxu0 0
      %2574 = vmatprep.subr.bf16.mxu0 0
      %2575 = vmatpush1.bf16.msra.mxu0 0
      %2576 = vmatprep.subr.bf16.mxu0 0
      %2577 = vmatpush1.bf16.msra.mxu0 0
      %2578 = vmatprep.subr.bf16.mxu0 0
      %2579 = vmatpush1.bf16.msra.mxu0 0
      %2580 = vmatprep.subr.bf16.mxu0 0
      %2581 = vmatpush1.bf16.msra.mxu0 0
      %2582 = vmatprep.subr.bf16.mxu0 0
      %2583 = vmatpush1.bf16.msra.mxu0 0
      %2584 = vmatprep.subr.bf16.mxu0 0
      %2585 = vmatpush1.bf16.msra.mxu0 0
      %2586 = vmatprep.subr.bf16.mxu0 0
      %2587 = vmatpush1.bf16.msra.mxu0 0
      %2588 = vmatprep.subr.bf16.mxu0 0
      %2589 = vmatpush1.bf16.msra.mxu0 0
      %2590 = vmatprep.subr.bf16.mxu0 0
      %2591 = vmatpush1.bf16.msra.mxu0 0
      %2592 = vmatprep.subr.bf16.mxu0 0
      %2593 = vmatpush1.bf16.msra.mxu0 0
      %2594 = vmatprep.subr.bf16.mxu0 0
      %2595 = vmatpush1.bf16.msra.mxu0 0
      %2596 = vmatprep.subr.bf16.mxu0 0
      %2597 = vmatpush1.bf16.msra.mxu0 0
      %2598 = vmatprep.subr.bf16.mxu0 0
      %2599 = vmatpush1.bf16.msra.mxu0 0
      %2600 = vmatprep.subr.bf16.mxu0 0
      %2601 = vmatpush1.bf16.msra.mxu0 0
      %2602 = vmatprep.mubr.bf16.mxu0 0
      %2603 = vmatmul.mubr.bf16.gmra.mrb[0].mxu0 %v2373
      %v2604 = vpop.f32.mrb[0].mxu0
      %v2605 = vadd.f32 0.0, %v2604
      %v2606 = vpop.f32.mrb[0].mxu0
      %v2607 = vadd.f32 0.0, %v2606
      %v2608 = vpop.f32.mrb[0].mxu0
      %v2609 = vpop.f32.mrb[0].mxu0
      %2610 = vdwg.mxu0
      %2611 = vmatprep.subr.bf16.mxu0 %v2403
      %2612 = vmatpush1.bf16.msra.mxu0 %v2400
      %2613 = vmatprep.subr.bf16.mxu0 0
      %2614 = vmatpush1.bf16.msra.mxu0 0
      %2615 = vmatprep.subr.bf16.mxu0 0
      %2616 = vmatpush1.bf16.msra.mxu0 0
      %2617 = vmatprep.subr.bf16.mxu0 0
      %2618 = vmatpush1.bf16.msra.mxu0 0
      %2619 = vmatprep.subr.bf16.mxu0 0
      %2620 = vmatpush1.bf16.msra.mxu0 0
      %2621 = vmatprep.subr.bf16.mxu0 0
      %2622 = vmatpush1.bf16.msra.mxu0 0
      %2623 = vmatprep.subr.bf16.mxu0 0
      %2624 = vmatpush1.bf16.msra.mxu0 0
      %2625 = vmatprep.subr.bf16.mxu0 0
      %2626 = vmatpush1.bf16.msra.mxu0 0
      %2627 = vmatprep.subr.bf16.mxu0 0
      %2628 = vmatpush1.bf16.msra.mxu0 0
      %2629 = vmatprep.subr.bf16.mxu0 0
      %2630 = vmatpush1.bf16.msra.mxu0 0
      %2631 = vmatprep.subr.bf16.mxu0 0
      %2632 = vmatpush1.bf16.msra.mxu0 0
      %2633 = vmatprep.subr.bf16.mxu0 0
      %2634 = vmatpush1.bf16.msra.mxu0 0
      %2635 = vmatprep.subr.bf16.mxu0 0
      %2636 = vmatpush1.bf16.msra.mxu0 0
      %2637 = vmatprep.subr.bf16.mxu0 0
      %2638 = vmatpush1.bf16.msra.mxu0 0
      %2639 = vmatprep.subr.bf16.mxu0 0
      %2640 = vmatpush1.bf16.msra.mxu0 0
      %2641 = vmatprep.subr.bf16.mxu0 0
      %2642 = vmatpush1.bf16.msra.mxu0 0
      %2643 = vmatprep.mubr.bf16.mxu0 0
      %2644 = vmatmul.mubr.bf16.gmra.mrb[0].mxu0 %v2373
      %v2645 = vpop.f32.mrb[0].mxu0
      %v2646 = vadd.f32 0.0, %v2645
      %v2647 = vpop.f32.mrb[0].mxu0
      %v2648 = vadd.f32 0.0, %v2647
      %v2649 = vpop.f32.mrb[0].mxu0
      %v2650 = vpop.f32.mrb[0].mxu0
      %2651 = vdwg.mxu0
      %2652 = vmatprep.subr.bf16.mxu0 %v2409
      %2653 = vmatpush1.bf16.msra.mxu0 %v2406
      %2654 = vmatprep.subr.bf16.mxu0 0
      %2655 = vmatpush1.bf16.msra.mxu0 0
      %2656 = vmatprep.subr.bf16.mxu0 0
      %2657 = vmatpush1.bf16.msra.mxu0 0
      %2658 = vmatprep.subr.bf16.mxu0 0
      %2659 = vmatpush1.bf16.msra.mxu0 0
      %2660 = vmatprep.subr.bf16.mxu0 0
      %2661 = vmatpush1.bf16.msra.mxu0 0
      %2662 = vmatprep.subr.bf16.mxu0 0
      %2663 = vmatpush1.bf16.msra.mxu0 0
      %2664 = vmatprep.subr.bf16.mxu0 0
      %2665 = vmatpush1.bf16.msra.mxu0 0
      %2666 = vmatprep.subr.bf16.mxu0 0
      %2667 = vmatpush1.bf16.msra.mxu0 0
      %2668 = vmatprep.subr.bf16.mxu0 0
      %2669 = vmatpush1.bf16.msra.mxu0 0
      %2670 = vmatprep.subr.bf16.mxu0 0
      %2671 = vmatpush1.bf16.msra.mxu0 0
      %2672 = vmatprep.subr.bf16.mxu0 0
      %2673 = vmatpush1.bf16.msra.mxu0 0
      %2674 = vmatprep.subr.bf16.mxu0 0
      %2675 = vmatpush1.bf16.msra.mxu0 0
      %2676 = vmatprep.subr.bf16.mxu0 0
      %2677 = vmatpush1.bf16.msra.mxu0 0
      %2678 = vmatprep.subr.bf16.mxu0 0
      %2679 = vmatpush1.bf16.msra.mxu0 0
      %2680 = vmatprep.subr.bf16.mxu0 0
      %2681 = vmatpush1.bf16.msra.mxu0 0
      %2682 = vmatprep.subr.bf16.mxu0 0
      %2683 = vmatpush1.bf16.msra.mxu0 0
      %2684 = vmatprep.mubr.bf16.mxu0 0
      %2685 = vmatmul.mubr.bf16.gmra.mrb[0].mxu0 %v2373
      %v2686 = vpop.f32.mrb[0].mxu0
      %v2687 = vadd.f32 0.0, %v2686
      %v2688 = vpop.f32.mrb[0].mxu0
      %v2689 = vadd.f32 0.0, %v2688
      %v2690 = vpop.f32.mrb[0].mxu0
      %v2691 = vpop.f32.mrb[0].mxu0
      %2692 = vdwg.mxu0
      %2693 = vmatprep.subr.bf16.mxu0 %v2415
      %2694 = vmatpush1.bf16.msra.mxu0 %v2412
      %2695 = vmatprep.subr.bf16.mxu0 0
      %2696 = vmatpush1.bf16.msra.mxu0 0
      %2697 = vmatprep.subr.bf16.mxu0 0
      %2698 = vmatpush1.bf16.msra.mxu0 0
      %2699 = vmatprep.subr.bf16.mxu0 0
      %2700 = vmatpush1.bf16.msra.mxu0 0
      %2701 = vmatprep.subr.bf16.mxu0 0
      %2702 = vmatpush1.bf16.msra.mxu0 0
      %2703 = vmatprep.subr.bf16.mxu0 0
      %2704 = vmatpush1.bf16.msra.mxu0 0
      %2705 = vmatprep.subr.bf16.mxu0 0
      %2706 = vmatpush1.bf16.msra.mxu0 0
      %2707 = vmatprep.subr.bf16.mxu0 0
      %2708 = vmatpush1.bf16.msra.mxu0 0
      %2709 = vmatprep.subr.bf16.mxu0 0
      %2710 = vmatpush1.bf16.msra.mxu0 0
      %2711 = vmatprep.subr.bf16.mxu0 0
      %2712 = vmatpush1.bf16.msra.mxu0 0
      %2713 = vmatprep.subr.bf16.mxu0 0
      %2714 = vmatpush1.bf16.msra.mxu0 0
      %2715 = vmatprep.subr.bf16.mxu0 0
      %2716 = vmatpush1.bf16.msra.mxu0 0
      %2717 = vmatprep.subr.bf16.mxu0 0
      %2718 = vmatpush1.bf16.msra.mxu0 0
      %2719 = vmatprep.subr.bf16.mxu0 0
      %2720 = vmatpush1.bf16.msra.mxu0 0
      %2721 = vmatprep.subr.bf16.mxu0 0
      %2722 = vmatpush1.bf16.msra.mxu0 0
      %2723 = vmatprep.subr.bf16.mxu0 0
      %2724 = vmatpush1.bf16.msra.mxu0 0
      %2725 = vmatprep.mubr.bf16.mxu0 0
      %2726 = vmatmul.mubr.bf16.gmra.mrb[0].mxu0 %v2373
      %v2727 = vpop.f32.mrb[0].mxu0
      %v2728 = vadd.f32 0.0, %v2727
      %v2729 = vpop.f32.mrb[0].mxu0
      %v2730 = vadd.f32 0.0, %v2729
      %v2731 = vpop.f32.mrb[0].mxu0
      %v2732 = vpop.f32.mrb[0].mxu0
      %2733 = vdwg.mxu0
      %2734 = vmatprep.subr.bf16.mxu0 %v2421
      %2735 = vmatpush1.bf16.msra.mxu0 %v2418
      %2736 = vmatprep.subr.bf16.mxu0 0
      %2737 = vmatpush1.bf16.msra.mxu0 0
      %2738 = vmatprep.subr.bf16.mxu0 0
      %2739 = vmatpush1.bf16.msra.mxu0 0
      %2740 = vmatprep.subr.bf16.mxu0 0
      %2741 = vmatpush1.bf16.msra.mxu0 0
      %2742 = vmatprep.subr.bf16.mxu0 0
      %2743 = vmatpush1.bf16.msra.mxu0 0
      %2744 = vmatprep.subr.bf16.mxu0 0
      %2745 = vmatpush1.bf16.msra.mxu0 0
      %2746 = vmatprep.subr.bf16.mxu0 0
      %2747 = vmatpush1.bf16.msra.mxu0 0
      %2748 = vmatprep.subr.bf16.mxu0 0
      %2749 = vmatpush1.bf16.msra.mxu0 0
      %2750 = vmatprep.subr.bf16.mxu0 0
      %2751 = vmatpush1.bf16.msra.mxu0 0
      %2752 = vmatprep.subr.bf16.mxu0 0
      %2753 = vmatpush1.bf16.msra.mxu0 0
      %2754 = vmatprep.subr.bf16.mxu0 0
      %2755 = vmatpush1.bf16.msra.mxu0 0
      %2756 = vmatprep.subr.bf16.mxu0 0
      %2757 = vmatpush1.bf16.msra.mxu0 0
      %2758 = vmatprep.subr.bf16.mxu0 0
      %2759 = vmatpush1.bf16.msra.mxu0 0
      %2760 = vmatprep.subr.bf16.mxu0 0
      %2761 = vmatpush1.bf16.msra.mxu0 0
      %2762 = vmatprep.subr.bf16.mxu0 0
      %2763 = vmatpush1.bf16.msra.mxu0 0
      %2764 = vmatprep.subr.bf16.mxu0 0
      %2765 = vmatpush1.bf16.msra.mxu0 0
      %2766 = vmatprep.mubr.bf16.mxu0 0
      %2767 = vmatmul.mubr.bf16.gmra.mrb[0].mxu0 %v2373
      %v2768 = vpop.f32.mrb[0].mxu0
      %v2769 = vadd.f32 0.0, %v2768
      %v2770 = vpop.f32.mrb[0].mxu0
      %v2771 = vadd.f32 0.0, %v2770
      %v2772 = vpop.f32.mrb[0].mxu0
      %v2773 = vpop.f32.mrb[0].mxu0
      %2774 = vdwg.mxu0
      %2775 = vmatprep.subr.bf16.mxu0 %v2427
      %2776 = vmatpush1.bf16.msra.mxu0 %v2424
      %2777 = vmatprep.subr.bf16.mxu0 0
      %2778 = vmatpush1.bf16.msra.mxu0 0
      %2779 = vmatprep.subr.bf16.mxu0 0
      %2780 = vmatpush1.bf16.msra.mxu0 0
      %2781 = vmatprep.subr.bf16.mxu0 0
      %2782 = vmatpush1.bf16.msra.mxu0 0
      %2783 = vmatprep.subr.bf16.mxu0 0
      %2784 = vmatpush1.bf16.msra.mxu0 0
      %2785 = vmatprep.subr.bf16.mxu0 0
      %2786 = vmatpush1.bf16.msra.mxu0 0
      %2787 = vmatprep.subr.bf16.mxu0 0
      %2788 = vmatpush1.bf16.msra.mxu0 0
      %2789 = vmatprep.subr.bf16.mxu0 0
      %2790 = vmatpush1.bf16.msra.mxu0 0
      %2791 = vmatprep.subr.bf16.mxu0 0
      %2792 = vmatpush1.bf16.msra.mxu0 0
      %2793 = vmatprep.subr.bf16.mxu0 0
      %2794 = vmatpush1.bf16.msra.mxu0 0
      %2795 = vmatprep.subr.bf16.mxu0 0
      %2796 = vmatpush1.bf16.msra.mxu0 0
      %2797 = vmatprep.subr.bf16.mxu0 0
      %2798 = vmatpush1.bf16.msra.mxu0 0
      %2799 = vmatprep.subr.bf16.mxu0 0
      %2800 = vmatpush1.bf16.msra.mxu0 0
      %2801 = vmatprep.subr.bf16.mxu0 0
      %2802 = vmatpush1.bf16.msra.mxu0 0
      %2803 = vmatprep.subr.bf16.mxu0 0
      %2804 = vmatpush1.bf16.msra.mxu0 0
      %2805 = vmatprep.subr.bf16.mxu0 0
      %2806 = vmatpush1.bf16.msra.mxu0 0
      %2807 = vmatprep.mubr.bf16.mxu0 0
      %2808 = vmatmul.mubr.bf16.gmra.mrb[0].mxu0 %v2373
      %v2809 = vpop.f32.mrb[0].mxu0
      %v2810 = vadd.f32 0.0, %v2809
      %v2811 = vpop.f32.mrb[0].mxu0
      %v2812 = vadd.f32 0.0, %v2811
      %v2813 = vpop.f32.mrb[0].mxu0
      %v2814 = vpop.f32.mrb[0].mxu0
      %2815 = vdwg.mxu0
      %2816 = vmatprep.subr.bf16.mxu0 %v2433
      %2817 = vmatpush1.bf16.msra.mxu0 %v2430
      %2818 = vmatprep.subr.bf16.mxu0 0
      %2819 = vmatpush1.bf16.msra.mxu0 0
      %2820 = vmatprep.subr.bf16.mxu0 0
      %2821 = vmatpush1.bf16.msra.mxu0 0
      %2822 = vmatprep.subr.bf16.mxu0 0
      %2823 = vmatpush1.bf16.msra.mxu0 0
      %2824 = vmatprep.subr.bf16.mxu0 0
      %2825 = vmatpush1.bf16.msra.mxu0 0
      %2826 = vmatprep.subr.bf16.mxu0 0
      %2827 = vmatpush1.bf16.msra.mxu0 0
      %2828 = vmatprep.subr.bf16.mxu0 0
      %2829 = vmatpush1.bf16.msra.mxu0 0
      %2830 = vmatprep.subr.bf16.mxu0 0
      %2831 = vmatpush1.bf16.msra.mxu0 0
      %2832 = vmatprep.subr.bf16.mxu0 0
      %2833 = vmatpush1.bf16.msra.mxu0 0
      %2834 = vmatprep.subr.bf16.mxu0 0
      %2835 = vmatpush1.bf16.msra.mxu0 0
      %2836 = vmatprep.subr.bf16.mxu0 0
      %2837 = vmatpush1.bf16.msra.mxu0 0
      %2838 = vmatprep.subr.bf16.mxu0 0
      %2839 = vmatpush1.bf16.msra.mxu0 0
      %2840 = vmatprep.subr.bf16.mxu0 0
      %2841 = vmatpush1.bf16.msra.mxu0 0
      %2842 = vmatprep.subr.bf16.mxu0 0
      %2843 = vmatpush1.bf16.msra.mxu0 0
      %2844 = vmatprep.subr.bf16.mxu0 0
      %2845 = vmatpush1.bf16.msra.mxu0 0
      %2846 = vmatprep.subr.bf16.mxu0 0
      %2847 = vmatpush1.bf16.msra.mxu0 0
      %2848 = vmatprep.mubr.bf16.mxu0 0
      %2849 = vmatmul.mubr.bf16.gmra.mrb[0].mxu0 %v2373
      %v2850 = vpop.f32.mrb[0].mxu0
      %v2851 = vadd.f32 0.0, %v2850
      %v2852 = vpop.f32.mrb[0].mxu0
      %v2853 = vadd.f32 0.0, %v2852
      %v2854 = vpop.f32.mrb[0].mxu0
      %v2855 = vpop.f32.mrb[0].mxu0
      %2856 = vdwg.mxu0
      %2857 = vmatprep.subr.bf16.mxu0 %v2439
      %2858 = vmatpush1.bf16.msra.mxu0 %v2436
      %2859 = vmatprep.subr.bf16.mxu0 0
      %2860 = vmatpush1.bf16.msra.mxu0 0
      %2861 = vmatprep.subr.bf16.mxu0 0
      %2862 = vmatpush1.bf16.msra.mxu0 0
      %2863 = vmatprep.subr.bf16.mxu0 0
      %2864 = vmatpush1.bf16.msra.mxu0 0
      %2865 = vmatprep.subr.bf16.mxu0 0
      %2866 = vmatpush1.bf16.msra.mxu0 0
      %2867 = vmatprep.subr.bf16.mxu0 0
      %2868 = vmatpush1.bf16.msra.mxu0 0
      %2869 = vmatprep.subr.bf16.mxu0 0
      %2870 = vmatpush1.bf16.msra.mxu0 0
      %2871 = vmatprep.subr.bf16.mxu0 0
      %2872 = vmatpush1.bf16.msra.mxu0 0
      %2873 = vmatprep.subr.bf16.mxu0 0
      %2874 = vmatpush1.bf16.msra.mxu0 0
      %2875 = vmatprep.subr.bf16.mxu0 0
      %2876 = vmatpush1.bf16.msra.mxu0 0
      %2877 = vmatprep.subr.bf16.mxu0 0
      %2878 = vmatpush1.bf16.msra.mxu0 0
      %2879 = vmatprep.subr.bf16.mxu0 0
      %2880 = vmatpush1.bf16.msra.mxu0 0
      %2881 = vmatprep.subr.bf16.mxu0 0
      %2882 = vmatpush1.bf16.msra.mxu0 0
      %2883 = vmatprep.subr.bf16.mxu0 0
      %2884 = vmatpush1.bf16.msra.mxu0 0
      %2885 = vmatprep.subr.bf16.mxu0 0
      %2886 = vmatpush1.bf16.msra.mxu0 0
      %2887 = vmatprep.subr.bf16.mxu0 0
      %2888 = vmatpush1.bf16.msra.mxu0 0
      %2889 = vmatprep.mubr.bf16.mxu0 0
      %2890 = vmatmul.mubr.bf16.gmra.mrb[0].mxu0 %v2373
      %v2891 = vpop.f32.mrb[0].mxu0
      %v2892 = vadd.f32 0.0, %v2891
      %v2893 = vpop.f32.mrb[0].mxu0
      %v2894 = vadd.f32 0.0, %v2893
      %v2895 = vpop.f32.mrb[0].mxu0
      %v2896 = vpop.f32.mrb[0].mxu0
      %2897 = vdwg.mxu0
      %2898 = vmatprep.subr.bf16.mxu0 %v2445
      %2899 = vmatpush1.bf16.msra.mxu0 %v2442
      %2900 = vmatprep.subr.bf16.mxu0 0
      %2901 = vmatpush1.bf16.msra.mxu0 0
      %2902 = vmatprep.subr.bf16.mxu0 0
      %2903 = vmatpush1.bf16.msra.mxu0 0
      %2904 = vmatprep.subr.bf16.mxu0 0
      %2905 = vmatpush1.bf16.msra.mxu0 0
      %2906 = vmatprep.subr.bf16.mxu0 0
      %2907 = vmatpush1.bf16.msra.mxu0 0
      %2908 = vmatprep.subr.bf16.mxu0 0
      %2909 = vmatpush1.bf16.msra.mxu0 0
      %2910 = vmatprep.subr.bf16.mxu0 0
      %2911 = vmatpush1.bf16.msra.mxu0 0
      %2912 = vmatprep.subr.bf16.mxu0 0
      %2913 = vmatpush1.bf16.msra.mxu0 0
      %2914 = vmatprep.subr.bf16.mxu0 0
      %2915 = vmatpush1.bf16.msra.mxu0 0
      %2916 = vmatprep.subr.bf16.mxu0 0
      %2917 = vmatpush1.bf16.msra.mxu0 0
      %2918 = vmatprep.subr.bf16.mxu0 0
      %2919 = vmatpush1.bf16.msra.mxu0 0
      %2920 = vmatprep.subr.bf16.mxu0 0
      %2921 = vmatpush1.bf16.msra.mxu0 0
      %2922 = vmatprep.subr.bf16.mxu0 0
      %2923 = vmatpush1.bf16.msra.mxu0 0
      %2924 = vmatprep.subr.bf16.mxu0 0
      %2925 = vmatpush1.bf16.msra.mxu0 0
      %2926 = vmatprep.subr.bf16.mxu0 0
      %2927 = vmatpush1.bf16.msra.mxu0 0
      %2928 = vmatprep.subr.bf16.mxu0 0
      %2929 = vmatpush1.bf16.msra.mxu0 0
      %2930 = vmatprep.mubr.bf16.mxu0 0
      %2931 = vmatmul.mubr.bf16.gmra.mrb[0].mxu0 %v2373
      %v2932 = vpop.f32.mrb[0].mxu0
      %v2933 = vadd.f32 0.0, %v2932
      %v2934 = vpop.f32.mrb[0].mxu0
      %v2935 = vadd.f32 0.0, %v2934
      %v2936 = vpop.f32.mrb[0].mxu0
      %v2937 = vpop.f32.mrb[0].mxu0
      %2938 = vdwg.mxu0
      %v2939 = vadd.f32 %v2271, %v2482
      %v2940 = vadd.f32 %v2272, %v2484
      %v2941 = vadd.f32 %v2273, %v2523
      %v2942 = vadd.f32 %v2274, %v2525
      %v2943 = vadd.f32 %v2275, %v2564
      %v2944 = vadd.f32 %v2276, %v2566
      %v2945 = vadd.f32 %v2277, %v2605
      %v2946 = vadd.f32 %v2278, %v2607
      %v2947 = vadd.f32 %v2279, %v2646
      %v2948 = vadd.f32 %v2280, %v2648
      %v2949 = vadd.f32 %v2281, %v2687
      %v2950 = vadd.f32 %v2282, %v2689
      %v2951 = vadd.f32 %v2283, %v2728
      %v2952 = vadd.f32 %v2284, %v2730
      %v2953 = vadd.f32 %v2285, %v2769
      %v2954 = vadd.f32 %v2286, %v2771
      %v2955 = vadd.f32 %v2287, %v2810
      %v2956 = vadd.f32 %v2288, %v2812
      %v2957 = vadd.f32 %v2289, %v2851
      %v2958 = vadd.f32 %v2290, %v2853
      %v2959 = vadd.f32 %v2291, %v2892
      %v2960 = vadd.f32 %v2292, %v2894
      %v2961 = vadd.f32 %v2293, %v2933
      %v2962 = vadd.f32 %v2294, %v2935
      %s2963 = scalar_lea.vmem %s1, 16
      %v2964 = vld [vmem:[%s2963] sm:$0xf]
      %2965 = vrot.lane.b32.xlu0 %v314, 109
      %v2966 = vpop.permute.xlu0 %2965
      %2967 = vrot.lane.b32.xlu0 %v322, 109
      %v2968 = vpop.permute.xlu0 %2967
      %2969 = vrot.lane.b32.xlu0 %v321, 109
      %v2970 = vpop.permute.xlu0 %2969
      %2971 = vrot.lane.b32.xlu0 %v323, 109
      %v2972 = vpop.permute.xlu0 %2971
      %2973 = vrot.lane.b32.xlu0 %v331, 109
      %v2974 = vpop.permute.xlu0 %2973
      %2975 = vrot.lane.b32.xlu0 %v339, 109
      %v2976 = vpop.permute.xlu0 %2975
      %2977 = vrot.lane.b32.xlu0 %v338, 109
      %v2978 = vpop.permute.xlu0 %2977
      %2979 = vrot.lane.b32.xlu0 %v340, 109
      %v2980 = vpop.permute.xlu0 %2979
      %2981 = vrot.lane.b32.xlu0 %v348, 109
      %v2982 = vpop.permute.xlu0 %2981
      %2983 = vrot.lane.b32.xlu0 %v356, 109
      %v2984 = vpop.permute.xlu0 %2983
      %2985 = vrot.lane.b32.xlu0 %v355, 109
      %v2986 = vpop.permute.xlu0 %2985
      %2987 = vrot.lane.b32.xlu0 %v357, 109
      %v2988 = vpop.permute.xlu0 %2987
      %2989 = vrot.lane.b32.xlu0 %v365, 109
      %v2990 = vpop.permute.xlu0 %2989
      %2991 = vrot.lane.b32.xlu0 %v373, 109
      %v2992 = vpop.permute.xlu0 %2991
      %2993 = vrot.lane.b32.xlu0 %v372, 109
      %v2994 = vpop.permute.xlu0 %2993
      %2995 = vrot.lane.b32.xlu0 %v374, 109
      %v2996 = vpop.permute.xlu0 %2995
      %2997 = vrot.lane.b32.xlu0 %v382, 109
      %v2998 = vpop.permute.xlu0 %2997
      %2999 = vrot.lane.b32.xlu0 %v390, 109
      %v3000 = vpop.permute.xlu0 %2999
      %3001 = vrot.lane.b32.xlu0 %v389, 109
      %v3002 = vpop.permute.xlu0 %3001
      %3003 = vrot.lane.b32.xlu0 %v391, 109
      %v3004 = vpop.permute.xlu0 %3003
      %3005 = vrot.lane.b32.xlu0 %v399, 109
      %v3006 = vpop.permute.xlu0 %3005
      %3007 = vrot.lane.b32.xlu0 %v407, 109
      %v3008 = vpop.permute.xlu0 %3007
      %3009 = vrot.lane.b32.xlu0 %v406, 109
      %v3010 = vpop.permute.xlu0 %3009
      %3011 = vrot.lane.b32.xlu0 %v408, 109
      %v3012 = vpop.permute.xlu0 %3011
      %3013 = vrot.lane.b32.xlu0 %v415, 109
      %v3014 = vpop.permute.xlu0 %3013
      %vm3015 = vcmask 891904
      %v3016 = vsel %vm3015, %v2966, %v2968
      %v3017 = vsel %vm3015, %v2968, %v2970
      %v3018 = vsel %vm3015, %v2970, %v2972
      %v3019 = vsel %vm3015, %v2972, %v2974
      %v3020 = vsel %vm3015, %v2974, %v2976
      %v3021 = vsel %vm3015, %v2976, %v2978
      %v3022 = vsel %vm3015, %v2978, %v2980
      %v3023 = vsel %vm3015, %v2980, %v2982
      %v3024 = vsel %vm3015, %v2982, %v2984
      %v3025 = vsel %vm3015, %v2984, %v2986
      %v3026 = vsel %vm3015, %v2986, %v2988
      %v3027 = vsel %vm3015, %v2988, %v2990
      %v3028 = vsel %vm3015, %v2990, %v2992
      %v3029 = vsel %vm3015, %v2992, %v2994
      %v3030 = vsel %vm3015, %v2994, %v2996
      %v3031 = vsel %vm3015, %v2996, %v2998
      %v3032 = vsel %vm3015, %v2998, %v3000
      %v3033 = vsel %vm3015, %v3000, %v3002
      %v3034 = vsel %vm3015, %v3002, %v3004
      %v3035 = vsel %vm3015, %v3004, %v3006
      %v3036 = vsel %vm3015, %v3006, %v3008
      %v3037 = vsel %vm3015, %v3008, %v3010
      %v3038 = vsel %vm3015, %v3010, %v3012
      %v3039 = vsel %vm3015, %v3012, %v3014
      %v3041 = vsel %vm491, %v2964, 0
      %v3044 = vsel %vm495, %v3016, 0
      %v3047 = vsel %vm495, %v3017, 0
      %v3050 = vsel %vm495, %v3018, 0
      %v3053 = vsel %vm495, %v3019, 0
      %v3056 = vsel %vm495, %v3020, 0
      %v3059 = vsel %vm495, %v3021, 0
      %v3062 = vsel %vm495, %v3022, 0
      %v3065 = vsel %vm495, %v3023, 0
      %v3068 = vsel %vm495, %v3024, 0
      %v3071 = vsel %vm495, %v3025, 0
      %v3074 = vsel %vm495, %v3026, 0
      %v3077 = vsel %vm495, %v3027, 0
      %v3080 = vsel %vm495, %v3028, 0
      %v3083 = vsel %vm495, %v3029, 0
      %v3086 = vsel %vm495, %v3030, 0
      %v3089 = vsel %vm495, %v3031, 0
      %v3092 = vsel %vm495, %v3032, 0
      %v3095 = vsel %vm495, %v3033, 0
      %v3098 = vsel %vm495, %v3034, 0
      %v3101 = vsel %vm495, %v3035, 0
      %v3104 = vsel %vm495, %v3036, 0
      %v3107 = vsel %vm495, %v3037, 0
      %v3110 = vsel %vm495, %v3038, 0
      %v3113 = vsel %vm495, %v3039, 0
      %3115 = vmatprep.subr.bf16.mxu0 %v3047
      %3116 = vmatpush1.bf16.msra.mxu0 %v3044
      %3117 = vmatprep.subr.bf16.mxu0 0
      %3118 = vmatpush1.bf16.msra.mxu0 0
      %3119 = vmatprep.subr.bf16.mxu0 0
      %3120 = vmatpush1.bf16.msra.mxu0 0
      %3121 = vmatprep.subr.bf16.mxu0 0
      %3122 = vmatpush1.bf16.msra.mxu0 0
      %3123 = vmatprep.subr.bf16.mxu0 0
      %3124 = vmatpush1.bf16.msra.mxu0 0
      %3125 = vmatprep.subr.bf16.mxu0 0
      %3126 = vmatpush1.bf16.msra.mxu0 0
      %3127 = vmatprep.subr.bf16.mxu0 0
      %3128 = vmatpush1.bf16.msra.mxu0 0
      %3129 = vmatprep.subr.bf16.mxu0 0
      %3130 = vmatpush1.bf16.msra.mxu0 0
      %3131 = vmatprep.subr.bf16.mxu0 0
      %3132 = vmatpush1.bf16.msra.mxu0 0
      %3133 = vmatprep.subr.bf16.mxu0 0
      %3134 = vmatpush1.bf16.msra.mxu0 0
      %3135 = vmatprep.subr.bf16.mxu0 0
      %3136 = vmatpush1.bf16.msra.mxu0 0
      %3137 = vmatprep.subr.bf16.mxu0 0
      %3138 = vmatpush1.bf16.msra.mxu0 0
      %3139 = vmatprep.subr.bf16.mxu0 0
      %3140 = vmatpush1.bf16.msra.mxu0 0
      %3141 = vmatprep.subr.bf16.mxu0 0
      %3142 = vmatpush1.bf16.msra.mxu0 0
      %3143 = vmatprep.subr.bf16.mxu0 0
      %3144 = vmatpush1.bf16.msra.mxu0 0
      %3145 = vmatprep.subr.bf16.mxu0 0
      %3146 = vmatpush1.bf16.msra.mxu0 0
      %3147 = vmatprep.mubr.bf16.mxu0 0
      %3148 = vmatmul.mubr.bf16.gmra.mrb[0].mxu0 %v3041
      %v3149 = vpop.f32.mrb[0].mxu0
      %v3150 = vadd.f32 0.0, %v3149
      %v3151 = vpop.f32.mrb[0].mxu0
      %v3152 = vadd.f32 0.0, %v3151
      %v3153 = vpop.f32.mrb[0].mxu0
      %v3154 = vpop.f32.mrb[0].mxu0
      %3155 = vdwg.mxu0
      %3156 = vmatprep.subr.bf16.mxu0 %v3053
      %3157 = vmatpush1.bf16.msra.mxu0 %v3050
      %3158 = vmatprep.subr.bf16.mxu0 0
      %3159 = vmatpush1.bf16.msra.mxu0 0
      %3160 = vmatprep.subr.bf16.mxu0 0
      %3161 = vmatpush1.bf16.msra.mxu0 0
      %3162 = vmatprep.subr.bf16.mxu0 0
      %3163 = vmatpush1.bf16.msra.mxu0 0
      %3164 = vmatprep.subr.bf16.mxu0 0
      %3165 = vmatpush1.bf16.msra.mxu0 0
      %3166 = vmatprep.subr.bf16.mxu0 0
      %3167 = vmatpush1.bf16.msra.mxu0 0
      %3168 = vmatprep.subr.bf16.mxu0 0
      %3169 = vmatpush1.bf16.msra.mxu0 0
      %3170 = vmatprep.subr.bf16.mxu0 0
      %3171 = vmatpush1.bf16.msra.mxu0 0
      %3172 = vmatprep.subr.bf16.mxu0 0
      %3173 = vmatpush1.bf16.msra.mxu0 0
      %3174 = vmatprep.subr.bf16.mxu0 0
      %3175 = vmatpush1.bf16.msra.mxu0 0
      %3176 = vmatprep.subr.bf16.mxu0 0
      %3177 = vmatpush1.bf16.msra.mxu0 0
      %3178 = vmatprep.subr.bf16.mxu0 0
      %3179 = vmatpush1.bf16.msra.mxu0 0
      %3180 = vmatprep.subr.bf16.mxu0 0
      %3181 = vmatpush1.bf16.msra.mxu0 0
      %3182 = vmatprep.subr.bf16.mxu0 0
      %3183 = vmatpush1.bf16.msra.mxu0 0
      %3184 = vmatprep.subr.bf16.mxu0 0
      %3185 = vmatpush1.bf16.msra.mxu0 0
      %3186 = vmatprep.subr.bf16.mxu0 0
      %3187 = vmatpush1.bf16.msra.mxu0 0
      %3188 = vmatprep.mubr.bf16.mxu0 0
      %3189 = vmatmul.mubr.bf16.gmra.mrb[0].mxu0 %v3041
      %v3190 = vpop.f32.mrb[0].mxu0
      %v3191 = vadd.f32 0.0, %v3190
      %v3192 = vpop.f32.mrb[0].mxu0
      %v3193 = vadd.f32 0.0, %v3192
      %v3194 = vpop.f32.mrb[0].mxu0
      %v3195 = vpop.f32.mrb[0].mxu0
      %3196 = vdwg.mxu0
      %3197 = vmatprep.subr.bf16.mxu0 %v3059
      %3198 = vmatpush1.bf16.msra.mxu0 %v3056
      %3199 = vmatprep.subr.bf16.mxu0 0
      %3200 = vmatpush1.bf16.msra.mxu0 0
      %3201 = vmatprep.subr.bf16.mxu0 0
      %3202 = vmatpush1.bf16.msra.mxu0 0
      %3203 = vmatprep.subr.bf16.mxu0 0
      %3204 = vmatpush1.bf16.msra.mxu0 0
      %3205 = vmatprep.subr.bf16.mxu0 0
      %3206 = vmatpush1.bf16.msra.mxu0 0
      %3207 = vmatprep.subr.bf16.mxu0 0
      %3208 = vmatpush1.bf16.msra.mxu0 0
      %3209 = vmatprep.subr.bf16.mxu0 0
      %3210 = vmatpush1.bf16.msra.mxu0 0
      %3211 = vmatprep.subr.bf16.mxu0 0
      %3212 = vmatpush1.bf16.msra.mxu0 0
      %3213 = vmatprep.subr.bf16.mxu0 0
      %3214 = vmatpush1.bf16.msra.mxu0 0
      %3215 = vmatprep.subr.bf16.mxu0 0
      %3216 = vmatpush1.bf16.msra.mxu0 0
      %3217 = vmatprep.subr.bf16.mxu0 0
      %3218 = vmatpush1.bf16.msra.mxu0 0
      %3219 = vmatprep.subr.bf16.mxu0 0
      %3220 = vmatpush1.bf16.msra.mxu0 0
      %3221 = vmatprep.subr.bf16.mxu0 0
      %3222 = vmatpush1.bf16.msra.mxu0 0
      %3223 = vmatprep.subr.bf16.mxu0 0
      %3224 = vmatpush1.bf16.msra.mxu0 0
      %3225 = vmatprep.subr.bf16.mxu0 0
      %3226 = vmatpush1.bf16.msra.mxu0 0
      %3227 = vmatprep.subr.bf16.mxu0 0
      %3228 = vmatpush1.bf16.msra.mxu0 0
      %3229 = vmatprep.mubr.bf16.mxu0 0
      %3230 = vmatmul.mubr.bf16.gmra.mrb[0].mxu0 %v3041
      %v3231 = vpop.f32.mrb[0].mxu0
      %v3232 = vadd.f32 0.0, %v3231
      %v3233 = vpop.f32.mrb[0].mxu0
      %v3234 = vadd.f32 0.0, %v3233
      %v3235 = vpop.f32.mrb[0].mxu0
      %v3236 = vpop.f32.mrb[0].mxu0
      %3237 = vdwg.mxu0
      %3238 = vmatprep.subr.bf16.mxu0 %v3065
      %3239 = vmatpush1.bf16.msra.mxu0 %v3062
      %3240 = vmatprep.subr.bf16.mxu0 0
      %3241 = vmatpush1.bf16.msra.mxu0 0
      %3242 = vmatprep.subr.bf16.mxu0 0
      %3243 = vmatpush1.bf16.msra.mxu0 0
      %3244 = vmatprep.subr.bf16.mxu0 0
      %3245 = vmatpush1.bf16.msra.mxu0 0
      %3246 = vmatprep.subr.bf16.mxu0 0
      %3247 = vmatpush1.bf16.msra.mxu0 0
      %3248 = vmatprep.subr.bf16.mxu0 0
      %3249 = vmatpush1.bf16.msra.mxu0 0
      %3250 = vmatprep.subr.bf16.mxu0 0
      %3251 = vmatpush1.bf16.msra.mxu0 0
      %3252 = vmatprep.subr.bf16.mxu0 0
      %3253 = vmatpush1.bf16.msra.mxu0 0
      %3254 = vmatprep.subr.bf16.mxu0 0
      %3255 = vmatpush1.bf16.msra.mxu0 0
      %3256 = vmatprep.subr.bf16.mxu0 0
      %3257 = vmatpush1.bf16.msra.mxu0 0
      %3258 = vmatprep.subr.bf16.mxu0 0
      %3259 = vmatpush1.bf16.msra.mxu0 0
      %3260 = vmatprep.subr.bf16.mxu0 0
      %3261 = vmatpush1.bf16.msra.mxu0 0
      %3262 = vmatprep.subr.bf16.mxu0 0
      %3263 = vmatpush1.bf16.msra.mxu0 0
      %3264 = vmatprep.subr.bf16.mxu0 0
      %3265 = vmatpush1.bf16.msra.mxu0 0
      %3266 = vmatprep.subr.bf16.mxu0 0
      %3267 = vmatpush1.bf16.msra.mxu0 0
      %3268 = vmatprep.subr.bf16.mxu0 0
      %3269 = vmatpush1.bf16.msra.mxu0 0
      %3270 = vmatprep.mubr.bf16.mxu0 0
      %3271 = vmatmul.mubr.bf16.gmra.mrb[0].mxu0 %v3041
      %v3272 = vpop.f32.mrb[0].mxu0
      %v3273 = vadd.f32 0.0, %v3272
      %v3274 = vpop.f32.mrb[0].mxu0
      %v3275 = vadd.f32 0.0, %v3274
      %v3276 = vpop.f32.mrb[0].mxu0
      %v3277 = vpop.f32.mrb[0].mxu0
      %3278 = vdwg.mxu0
      %3279 = vmatprep.subr.bf16.mxu0 %v3071
      %3280 = vmatpush1.bf16.msra.mxu0 %v3068
      %3281 = vmatprep.subr.bf16.mxu0 0
      %3282 = vmatpush1.bf16.msra.mxu0 0
      %3283 = vmatprep.subr.bf16.mxu0 0
      %3284 = vmatpush1.bf16.msra.mxu0 0
      %3285 = vmatprep.subr.bf16.mxu0 0
      %3286 = vmatpush1.bf16.msra.mxu0 0
      %3287 = vmatprep.subr.bf16.mxu0 0
      %3288 = vmatpush1.bf16.msra.mxu0 0
      %3289 = vmatprep.subr.bf16.mxu0 0
      %3290 = vmatpush1.bf16.msra.mxu0 0
      %3291 = vmatprep.subr.bf16.mxu0 0
      %3292 = vmatpush1.bf16.msra.mxu0 0
      %3293 = vmatprep.subr.bf16.mxu0 0
      %3294 = vmatpush1.bf16.msra.mxu0 0
      %3295 = vmatprep.subr.bf16.mxu0 0
      %3296 = vmatpush1.bf16.msra.mxu0 0
      %3297 = vmatprep.subr.bf16.mxu0 0
      %3298 = vmatpush1.bf16.msra.mxu0 0
      %3299 = vmatprep.subr.bf16.mxu0 0
      %3300 = vmatpush1.bf16.msra.mxu0 0
      %3301 = vmatprep.subr.bf16.mxu0 0
      %3302 = vmatpush1.bf16.msra.mxu0 0
      %3303 = vmatprep.subr.bf16.mxu0 0
      %3304 = vmatpush1.bf16.msra.mxu0 0
      %3305 = vmatprep.subr.bf16.mxu0 0
      %3306 = vmatpush1.bf16.msra.mxu0 0
      %3307 = vmatprep.subr.bf16.mxu0 0
      %3308 = vmatpush1.bf16.msra.mxu0 0
      %3309 = vmatprep.subr.bf16.mxu0 0
      %3310 = vmatpush1.bf16.msra.mxu0 0
      %3311 = vmatprep.mubr.bf16.mxu0 0
      %3312 = vmatmul.mubr.bf16.gmra.mrb[0].mxu0 %v3041
      %v3313 = vpop.f32.mrb[0].mxu0
      %v3314 = vadd.f32 0.0, %v3313
      %v3315 = vpop.f32.mrb[0].mxu0
      %v3316 = vadd.f32 0.0, %v3315
      %v3317 = vpop.f32.mrb[0].mxu0
      %v3318 = vpop.f32.mrb[0].mxu0
      %3319 = vdwg.mxu0
      %3320 = vmatprep.subr.bf16.mxu0 %v3077
      %3321 = vmatpush1.bf16.msra.mxu0 %v3074
      %3322 = vmatprep.subr.bf16.mxu0 0
      %3323 = vmatpush1.bf16.msra.mxu0 0
      %3324 = vmatprep.subr.bf16.mxu0 0
      %3325 = vmatpush1.bf16.msra.mxu0 0
      %3326 = vmatprep.subr.bf16.mxu0 0
      %3327 = vmatpush1.bf16.msra.mxu0 0
      %3328 = vmatprep.subr.bf16.mxu0 0
      %3329 = vmatpush1.bf16.msra.mxu0 0
      %3330 = vmatprep.subr.bf16.mxu0 0
      %3331 = vmatpush1.bf16.msra.mxu0 0
      %3332 = vmatprep.subr.bf16.mxu0 0
      %3333 = vmatpush1.bf16.msra.mxu0 0
      %3334 = vmatprep.subr.bf16.mxu0 0
      %3335 = vmatpush1.bf16.msra.mxu0 0
      %3336 = vmatprep.subr.bf16.mxu0 0
      %3337 = vmatpush1.bf16.msra.mxu0 0
      %3338 = vmatprep.subr.bf16.mxu0 0
      %3339 = vmatpush1.bf16.msra.mxu0 0
      %3340 = vmatprep.subr.bf16.mxu0 0
      %3341 = vmatpush1.bf16.msra.mxu0 0
      %3342 = vmatprep.subr.bf16.mxu0 0
      %3343 = vmatpush1.bf16.msra.mxu0 0
      %3344 = vmatprep.subr.bf16.mxu0 0
      %3345 = vmatpush1.bf16.msra.mxu0 0
      %3346 = vmatprep.subr.bf16.mxu0 0
      %3347 = vmatpush1.bf16.msra.mxu0 0
      %3348 = vmatprep.subr.bf16.mxu0 0
      %3349 = vmatpush1.bf16.msra.mxu0 0
      %3350 = vmatprep.subr.bf16.mxu0 0
      %3351 = vmatpush1.bf16.msra.mxu0 0
      %3352 = vmatprep.mubr.bf16.mxu0 0
      %3353 = vmatmul.mubr.bf16.gmra.mrb[0].mxu0 %v3041
      %v3354 = vpop.f32.mrb[0].mxu0
      %v3355 = vadd.f32 0.0, %v3354
      %v3356 = vpop.f32.mrb[0].mxu0
      %v3357 = vadd.f32 0.0, %v3356
      %v3358 = vpop.f32.mrb[0].mxu0
      %v3359 = vpop.f32.mrb[0].mxu0
      %3360 = vdwg.mxu0
      %3361 = vmatprep.subr.bf16.mxu0 %v3083
      %3362 = vmatpush1.bf16.msra.mxu0 %v3080
      %3363 = vmatprep.subr.bf16.mxu0 0
      %3364 = vmatpush1.bf16.msra.mxu0 0
      %3365 = vmatprep.subr.bf16.mxu0 0
      %3366 = vmatpush1.bf16.msra.mxu0 0
      %3367 = vmatprep.subr.bf16.mxu0 0
      %3368 = vmatpush1.bf16.msra.mxu0 0
      %3369 = vmatprep.subr.bf16.mxu0 0
      %3370 = vmatpush1.bf16.msra.mxu0 0
      %3371 = vmatprep.subr.bf16.mxu0 0
      %3372 = vmatpush1.bf16.msra.mxu0 0
      %3373 = vmatprep.subr.bf16.mxu0 0
      %3374 = vmatpush1.bf16.msra.mxu0 0
      %3375 = vmatprep.subr.bf16.mxu0 0
      %3376 = vmatpush1.bf16.msra.mxu0 0
      %3377 = vmatprep.subr.bf16.mxu0 0
      %3378 = vmatpush1.bf16.msra.mxu0 0
      %3379 = vmatprep.subr.bf16.mxu0 0
      %3380 = vmatpush1.bf16.msra.mxu0 0
      %3381 = vmatprep.subr.bf16.mxu0 0
      %3382 = vmatpush1.bf16.msra.mxu0 0
      %3383 = vmatprep.subr.bf16.mxu0 0
      %3384 = vmatpush1.bf16.msra.mxu0 0
      %3385 = vmatprep.subr.bf16.mxu0 0
      %3386 = vmatpush1.bf16.msra.mxu0 0
      %3387 = vmatprep.subr.bf16.mxu0 0
      %3388 = vmatpush1.bf16.msra.mxu0 0
      %3389 = vmatprep.subr.bf16.mxu0 0
      %3390 = vmatpush1.bf16.msra.mxu0 0
      %3391 = vmatprep.subr.bf16.mxu0 0
      %3392 = vmatpush1.bf16.msra.mxu0 0
      %3393 = vmatprep.mubr.bf16.mxu0 0
      %3394 = vmatmul.mubr.bf16.gmra.mrb[0].mxu0 %v3041
      %v3395 = vpop.f32.mrb[0].mxu0
      %v3396 = vadd.f32 0.0, %v3395
      %v3397 = vpop.f32.mrb[0].mxu0
      %v3398 = vadd.f32 0.0, %v3397
      %v3399 = vpop.f32.mrb[0].mxu0
      %v3400 = vpop.f32.mrb[0].mxu0
      %3401 = vdwg.mxu0
      %3402 = vmatprep.subr.bf16.mxu0 %v3089
      %3403 = vmatpush1.bf16.msra.mxu0 %v3086
      %3404 = vmatprep.subr.bf16.mxu0 0
      %3405 = vmatpush1.bf16.msra.mxu0 0
      %3406 = vmatprep.subr.bf16.mxu0 0
      %3407 = vmatpush1.bf16.msra.mxu0 0
      %3408 = vmatprep.subr.bf16.mxu0 0
      %3409 = vmatpush1.bf16.msra.mxu0 0
      %3410 = vmatprep.subr.bf16.mxu0 0
      %3411 = vmatpush1.bf16.msra.mxu0 0
      %3412 = vmatprep.subr.bf16.mxu0 0
      %3413 = vmatpush1.bf16.msra.mxu0 0
      %3414 = vmatprep.subr.bf16.mxu0 0
      %3415 = vmatpush1.bf16.msra.mxu0 0
      %3416 = vmatprep.subr.bf16.mxu0 0
      %3417 = vmatpush1.bf16.msra.mxu0 0
      %3418 = vmatprep.subr.bf16.mxu0 0
      %3419 = vmatpush1.bf16.msra.mxu0 0
      %3420 = vmatprep.subr.bf16.mxu0 0
      %3421 = vmatpush1.bf16.msra.mxu0 0
      %3422 = vmatprep.subr.bf16.mxu0 0
      %3423 = vmatpush1.bf16.msra.mxu0 0
      %3424 = vmatprep.subr.bf16.mxu0 0
      %3425 = vmatpush1.bf16.msra.mxu0 0
      %3426 = vmatprep.subr.bf16.mxu0 0
      %3427 = vmatpush1.bf16.msra.mxu0 0
      %3428 = vmatprep.subr.bf16.mxu0 0
      %3429 = vmatpush1.bf16.msra.mxu0 0
      %3430 = vmatprep.subr.bf16.mxu0 0
      %3431 = vmatpush1.bf16.msra.mxu0 0
      %3432 = vmatprep.subr.bf16.mxu0 0
      %3433 = vmatpush1.bf16.msra.mxu0 0
      %3434 = vmatprep.mubr.bf16.mxu0 0
      %3435 = vmatmul.mubr.bf16.gmra.mrb[0].mxu0 %v3041
      %v3436 = vpop.f32.mrb[0].mxu0
      %v3437 = vadd.f32 0.0, %v3436
      %v3438 = vpop.f32.mrb[0].mxu0
      %v3439 = vadd.f32 0.0, %v3438
      %v3440 = vpop.f32.mrb[0].mxu0
      %v3441 = vpop.f32.mrb[0].mxu0
      %3442 = vdwg.mxu0
      %3443 = vmatprep.subr.bf16.mxu0 %v3095
      %3444 = vmatpush1.bf16.msra.mxu0 %v3092
      %3445 = vmatprep.subr.bf16.mxu0 0
      %3446 = vmatpush1.bf16.msra.mxu0 0
      %3447 = vmatprep.subr.bf16.mxu0 0
      %3448 = vmatpush1.bf16.msra.mxu0 0
      %3449 = vmatprep.subr.bf16.mxu0 0
      %3450 = vmatpush1.bf16.msra.mxu0 0
      %3451 = vmatprep.subr.bf16.mxu0 0
      %3452 = vmatpush1.bf16.msra.mxu0 0
      %3453 = vmatprep.subr.bf16.mxu0 0
      %3454 = vmatpush1.bf16.msra.mxu0 0
      %3455 = vmatprep.subr.bf16.mxu0 0
      %3456 = vmatpush1.bf16.msra.mxu0 0
      %3457 = vmatprep.subr.bf16.mxu0 0
      %3458 = vmatpush1.bf16.msra.mxu0 0
      %3459 = vmatprep.subr.bf16.mxu0 0
      %3460 = vmatpush1.bf16.msra.mxu0 0
      %3461 = vmatprep.subr.bf16.mxu0 0
      %3462 = vmatpush1.bf16.msra.mxu0 0
      %3463 = vmatprep.subr.bf16.mxu0 0
      %3464 = vmatpush1.bf16.msra.mxu0 0
      %3465 = vmatprep.subr.bf16.mxu0 0
      %3466 = vmatpush1.bf16.msra.mxu0 0
      %3467 = vmatprep.subr.bf16.mxu0 0
      %3468 = vmatpush1.bf16.msra.mxu0 0
      %3469 = vmatprep.subr.bf16.mxu0 0
      %3470 = vmatpush1.bf16.msra.mxu0 0
      %3471 = vmatprep.subr.bf16.mxu0 0
      %3472 = vmatpush1.bf16.msra.mxu0 0
      %3473 = vmatprep.subr.bf16.mxu0 0
      %3474 = vmatpush1.bf16.msra.mxu0 0
      %3475 = vmatprep.mubr.bf16.mxu0 0
      %3476 = vmatmul.mubr.bf16.gmra.mrb[0].mxu0 %v3041
      %v3477 = vpop.f32.mrb[0].mxu0
      %v3478 = vadd.f32 0.0, %v3477
      %v3479 = vpop.f32.mrb[0].mxu0
      %v3480 = vadd.f32 0.0, %v3479
      %v3481 = vpop.f32.mrb[0].mxu0
      %v3482 = vpop.f32.mrb[0].mxu0
      %3483 = vdwg.mxu0
      %3484 = vmatprep.subr.bf16.mxu0 %v3101
      %3485 = vmatpush1.bf16.msra.mxu0 %v3098
      %3486 = vmatprep.subr.bf16.mxu0 0
      %3487 = vmatpush1.bf16.msra.mxu0 0
      %3488 = vmatprep.subr.bf16.mxu0 0
      %3489 = vmatpush1.bf16.msra.mxu0 0
      %3490 = vmatprep.subr.bf16.mxu0 0
      %3491 = vmatpush1.bf16.msra.mxu0 0
      %3492 = vmatprep.subr.bf16.mxu0 0
      %3493 = vmatpush1.bf16.msra.mxu0 0
      %3494 = vmatprep.subr.bf16.mxu0 0
      %3495 = vmatpush1.bf16.msra.mxu0 0
      %3496 = vmatprep.subr.bf16.mxu0 0
      %3497 = vmatpush1.bf16.msra.mxu0 0
      %3498 = vmatprep.subr.bf16.mxu0 0
      %3499 = vmatpush1.bf16.msra.mxu0 0
      %3500 = vmatprep.subr.bf16.mxu0 0
      %3501 = vmatpush1.bf16.msra.mxu0 0
      %3502 = vmatprep.subr.bf16.mxu0 0
      %3503 = vmatpush1.bf16.msra.mxu0 0
      %3504 = vmatprep.subr.bf16.mxu0 0
      %3505 = vmatpush1.bf16.msra.mxu0 0
      %3506 = vmatprep.subr.bf16.mxu0 0
      %3507 = vmatpush1.bf16.msra.mxu0 0
      %3508 = vmatprep.subr.bf16.mxu0 0
      %3509 = vmatpush1.bf16.msra.mxu0 0
      %3510 = vmatprep.subr.bf16.mxu0 0
      %3511 = vmatpush1.bf16.msra.mxu0 0
      %3512 = vmatprep.subr.bf16.mxu0 0
      %3513 = vmatpush1.bf16.msra.mxu0 0
      %3514 = vmatprep.subr.bf16.mxu0 0
      %3515 = vmatpush1.bf16.msra.mxu0 0
      %3516 = vmatprep.mubr.bf16.mxu0 0
      %3517 = vmatmul.mubr.bf16.gmra.mrb[0].mxu0 %v3041
      %v3518 = vpop.f32.mrb[0].mxu0
      %v3519 = vadd.f32 0.0, %v3518
      %v3520 = vpop.f32.mrb[0].mxu0
      %v3521 = vadd.f32 0.0, %v3520
      %v3522 = vpop.f32.mrb[0].mxu0
      %v3523 = vpop.f32.mrb[0].mxu0
      %3524 = vdwg.mxu0
      %3525 = vmatprep.subr.bf16.mxu0 %v3107
      %3526 = vmatpush1.bf16.msra.mxu0 %v3104
      %3527 = vmatprep.subr.bf16.mxu0 0
      %3528 = vmatpush1.bf16.msra.mxu0 0
      %3529 = vmatprep.subr.bf16.mxu0 0
      %3530 = vmatpush1.bf16.msra.mxu0 0
      %3531 = vmatprep.subr.bf16.mxu0 0
      %3532 = vmatpush1.bf16.msra.mxu0 0
      %3533 = vmatprep.subr.bf16.mxu0 0
      %3534 = vmatpush1.bf16.msra.mxu0 0
      %3535 = vmatprep.subr.bf16.mxu0 0
      %3536 = vmatpush1.bf16.msra.mxu0 0
      %3537 = vmatprep.subr.bf16.mxu0 0
      %3538 = vmatpush1.bf16.msra.mxu0 0
      %3539 = vmatprep.subr.bf16.mxu0 0
      %3540 = vmatpush1.bf16.msra.mxu0 0
      %3541 = vmatprep.subr.bf16.mxu0 0
      %3542 = vmatpush1.bf16.msra.mxu0 0
      %3543 = vmatprep.subr.bf16.mxu0 0
      %3544 = vmatpush1.bf16.msra.mxu0 0
      %3545 = vmatprep.subr.bf16.mxu0 0
      %3546 = vmatpush1.bf16.msra.mxu0 0
      %3547 = vmatprep.subr.bf16.mxu0 0
      %3548 = vmatpush1.bf16.msra.mxu0 0
      %3549 = vmatprep.subr.bf16.mxu0 0
      %3550 = vmatpush1.bf16.msra.mxu0 0
      %3551 = vmatprep.subr.bf16.mxu0 0
      %3552 = vmatpush1.bf16.msra.mxu0 0
      %3553 = vmatprep.subr.bf16.mxu0 0
      %3554 = vmatpush1.bf16.msra.mxu0 0
      %3555 = vmatprep.subr.bf16.mxu0 0
      %3556 = vmatpush1.bf16.msra.mxu0 0
      %3557 = vmatprep.mubr.bf16.mxu0 0
      %3558 = vmatmul.mubr.bf16.gmra.mrb[0].mxu0 %v3041
      %v3559 = vpop.f32.mrb[0].mxu0
      %v3560 = vadd.f32 0.0, %v3559
      %v3561 = vpop.f32.mrb[0].mxu0
      %v3562 = vadd.f32 0.0, %v3561
      %v3563 = vpop.f32.mrb[0].mxu0
      %v3564 = vpop.f32.mrb[0].mxu0
      %3565 = vdwg.mxu0
      %3566 = vmatprep.subr.bf16.mxu0 %v3113
      %3567 = vmatpush1.bf16.msra.mxu0 %v3110
      %3568 = vmatprep.subr.bf16.mxu0 0
      %3569 = vmatpush1.bf16.msra.mxu0 0
      %3570 = vmatprep.subr.bf16.mxu0 0
      %3571 = vmatpush1.bf16.msra.mxu0 0
      %3572 = vmatprep.subr.bf16.mxu0 0
      %3573 = vmatpush1.bf16.msra.mxu0 0
      %3574 = vmatprep.subr.bf16.mxu0 0
      %3575 = vmatpush1.bf16.msra.mxu0 0
      %3576 = vmatprep.subr.bf16.mxu0 0
      %3577 = vmatpush1.bf16.msra.mxu0 0
      %3578 = vmatprep.subr.bf16.mxu0 0
      %3579 = vmatpush1.bf16.msra.mxu0 0
      %3580 = vmatprep.subr.bf16.mxu0 0
      %3581 = vmatpush1.bf16.msra.mxu0 0
      %3582 = vmatprep.subr.bf16.mxu0 0
      %3583 = vmatpush1.bf16.msra.mxu0 0
      %3584 = vmatprep.subr.bf16.mxu0 0
      %3585 = vmatpush1.bf16.msra.mxu0 0
      %3586 = vmatprep.subr.bf16.mxu0 0
      %3587 = vmatpush1.bf16.msra.mxu0 0
      %3588 = vmatprep.subr.bf16.mxu0 0
      %3589 = vmatpush1.bf16.msra.mxu0 0
      %3590 = vmatprep.subr.bf16.mxu0 0
      %3591 = vmatpush1.bf16.msra.mxu0 0
      %3592 = vmatprep.subr.bf16.mxu0 0
      %3593 = vmatpush1.bf16.msra.mxu0 0
      %3594 = vmatprep.subr.bf16.mxu0 0
      %3595 = vmatpush1.bf16.msra.mxu0 0
      %3596 = vmatprep.subr.bf16.mxu0 0
      %3597 = vmatpush1.bf16.msra.mxu0 0
      %3598 = vmatprep.mubr.bf16.mxu0 0
      %3599 = vmatmul.mubr.bf16.gmra.mrb[0].mxu0 %v3041
      %v3600 = vpop.f32.mrb[0].mxu0
      %v3601 = vadd.f32 0.0, %v3600
      %v3602 = vpop.f32.mrb[0].mxu0
      %v3603 = vadd.f32 0.0, %v3602
      %v3604 = vpop.f32.mrb[0].mxu0
      %v3605 = vpop.f32.mrb[0].mxu0
      %3606 = vdwg.mxu0
      %v3607 = vadd.f32 %v2939, %v3150
      %v3608 = vadd.f32 %v2940, %v3152
      %v3609 = vadd.f32 %v2941, %v3191
      %v3610 = vadd.f32 %v2942, %v3193
      %v3611 = vadd.f32 %v2943, %v3232
      %v3612 = vadd.f32 %v2944, %v3234
      %v3613 = vadd.f32 %v2945, %v3273
      %v3614 = vadd.f32 %v2946, %v3275
      %v3615 = vadd.f32 %v2947, %v3314
      %v3616 = vadd.f32 %v2948, %v3316
      %v3617 = vadd.f32 %v2949, %v3355
      %v3618 = vadd.f32 %v2950, %v3357
      %v3619 = vadd.f32 %v2951, %v3396
      %v3620 = vadd.f32 %v2952, %v3398
      %v3621 = vadd.f32 %v2953, %v3437
      %v3622 = vadd.f32 %v2954, %v3439
      %v3623 = vadd.f32 %v2955, %v3478
      %v3624 = vadd.f32 %v2956, %v3480
      %v3625 = vadd.f32 %v2957, %v3519
      %v3626 = vadd.f32 %v2958, %v3521
      %v3627 = vadd.f32 %v2959, %v3560
      %v3628 = vadd.f32 %v2960, %v3562
      %v3629 = vadd.f32 %v2961, %v3601
      %v3630 = vadd.f32 %v2962, %v3603
      %s3631 = scalar_lea.vmem %s1, 20
      %v3632 = vld [vmem:[%s3631] sm:$0xf]
      %3633 = vrot.lane.b32.xlu0 %v314, 108
      %v3634 = vpop.permute.xlu0 %3633
      %3635 = vrot.lane.b32.xlu0 %v322, 108
      %v3636 = vpop.permute.xlu0 %3635
      %3637 = vrot.lane.b32.xlu0 %v321, 108
      %v3638 = vpop.permute.xlu0 %3637
      %3639 = vrot.lane.b32.xlu0 %v323, 108
      %v3640 = vpop.permute.xlu0 %3639
      %3641 = vrot.lane.b32.xlu0 %v331, 108
      %v3642 = vpop.permute.xlu0 %3641
      %3643 = vrot.lane.b32.xlu0 %v339, 108
      %v3644 = vpop.permute.xlu0 %3643
      %3645 = vrot.lane.b32.xlu0 %v338, 108
      %v3646 = vpop.permute.xlu0 %3645
      %3647 = vrot.lane.b32.xlu0 %v340, 108
      %v3648 = vpop.permute.xlu0 %3647
      %3649 = vrot.lane.b32.xlu0 %v348, 108
      %v3650 = vpop.permute.xlu0 %3649
      %3651 = vrot.lane.b32.xlu0 %v356, 108
      %v3652 = vpop.permute.xlu0 %3651
      %3653 = vrot.lane.b32.xlu0 %v355, 108
      %v3654 = vpop.permute.xlu0 %3653
      %3655 = vrot.lane.b32.xlu0 %v357, 108
      %v3656 = vpop.permute.xlu0 %3655
      %3657 = vrot.lane.b32.xlu0 %v365, 108
      %v3658 = vpop.permute.xlu0 %3657
      %3659 = vrot.lane.b32.xlu0 %v373, 108
      %v3660 = vpop.permute.xlu0 %3659
      %3661 = vrot.lane.b32.xlu0 %v372, 108
      %v3662 = vpop.permute.xlu0 %3661
      %3663 = vrot.lane.b32.xlu0 %v374, 108
      %v3664 = vpop.permute.xlu0 %3663
      %3665 = vrot.lane.b32.xlu0 %v382, 108
      %v3666 = vpop.permute.xlu0 %3665
      %3667 = vrot.lane.b32.xlu0 %v390, 108
      %v3668 = vpop.permute.xlu0 %3667
      %3669 = vrot.lane.b32.xlu0 %v389, 108
      %v3670 = vpop.permute.xlu0 %3669
      %3671 = vrot.lane.b32.xlu0 %v391, 108
      %v3672 = vpop.permute.xlu0 %3671
      %3673 = vrot.lane.b32.xlu0 %v399, 108
      %v3674 = vpop.permute.xlu0 %3673
      %3675 = vrot.lane.b32.xlu0 %v407, 108
      %v3676 = vpop.permute.xlu0 %3675
      %3677 = vrot.lane.b32.xlu0 %v406, 108
      %v3678 = vpop.permute.xlu0 %3677
      %3679 = vrot.lane.b32.xlu0 %v408, 108
      %v3680 = vpop.permute.xlu0 %3679
      %3681 = vrot.lane.b32.xlu0 %v415, 108
      %v3682 = vpop.permute.xlu0 %3681
      %vm3683 = vcmask 883712
      %v3684 = vsel %vm3683, %v3634, %v3636
      %v3685 = vsel %vm3683, %v3636, %v3638
      %v3686 = vsel %vm3683, %v3638, %v3640
      %v3687 = vsel %vm3683, %v3640, %v3642
      %v3688 = vsel %vm3683, %v3642, %v3644
      %v3689 = vsel %vm3683, %v3644, %v3646
      %v3690 = vsel %vm3683, %v3646, %v3648
      %v3691 = vsel %vm3683, %v3648, %v3650
      %v3692 = vsel %vm3683, %v3650, %v3652
      %v3693 = vsel %vm3683, %v3652, %v3654
      %v3694 = vsel %vm3683, %v3654, %v3656
      %v3695 = vsel %vm3683, %v3656, %v3658
      %v3696 = vsel %vm3683, %v3658, %v3660
      %v3697 = vsel %vm3683, %v3660, %v3662
      %v3698 = vsel %vm3683, %v3662, %v3664
      %v3699 = vsel %vm3683, %v3664, %v3666
      %v3700 = vsel %vm3683, %v3666, %v3668
      %v3701 = vsel %vm3683, %v3668, %v3670
      %v3702 = vsel %vm3683, %v3670, %v3672
      %v3703 = vsel %vm3683, %v3672, %v3674
      %v3704 = vsel %vm3683, %v3674, %v3676
      %v3705 = vsel %vm3683, %v3676, %v3678
      %v3706 = vsel %vm3683, %v3678, %v3680
      %v3707 = vsel %vm3683, %v3680, %v3682
      %v3709 = vsel %vm491, %v3632, 0
      %v3712 = vsel %vm495, %v3684, 0
      %v3715 = vsel %vm495, %v3685, 0
      %v3718 = vsel %vm495, %v3686, 0
      %v3721 = vsel %vm495, %v3687, 0
      %v3724 = vsel %vm495, %v3688, 0
      %v3727 = vsel %vm495, %v3689, 0
      %v3730 = vsel %vm495, %v3690, 0
      %v3733 = vsel %vm495, %v3691, 0
      %v3736 = vsel %vm495, %v3692, 0
      %v3739 = vsel %vm495, %v3693, 0
      %v3742 = vsel %vm495, %v3694, 0
      %v3745 = vsel %vm495, %v3695, 0
      %v3748 = vsel %vm495, %v3696, 0
      %v3751 = vsel %vm495, %v3697, 0
      %v3754 = vsel %vm495, %v3698, 0
      %v3757 = vsel %vm495, %v3699, 0
      %v3760 = vsel %vm495, %v3700, 0
      %v3763 = vsel %vm495, %v3701, 0
      %v3766 = vsel %vm495, %v3702, 0
      %v3769 = vsel %vm495, %v3703, 0
      %v3772 = vsel %vm495, %v3704, 0
      %v3775 = vsel %vm495, %v3705, 0
      %v3778 = vsel %vm495, %v3706, 0
      %v3781 = vsel %vm495, %v3707, 0
      %3783 = vmatprep.subr.bf16.mxu0 %v3715
      %3784 = vmatpush1.bf16.msra.mxu0 %v3712
      %3785 = vmatprep.subr.bf16.mxu0 0
      %3786 = vmatpush1.bf16.msra.mxu0 0
      %3787 = vmatprep.subr.bf16.mxu0 0
      %3788 = vmatpush1.bf16.msra.mxu0 0
      %3789 = vmatprep.subr.bf16.mxu0 0
      %3790 = vmatpush1.bf16.msra.mxu0 0
      %3791 = vmatprep.subr.bf16.mxu0 0
      %3792 = vmatpush1.bf16.msra.mxu0 0
      %3793 = vmatprep.subr.bf16.mxu0 0
      %3794 = vmatpush1.bf16.msra.mxu0 0
      %3795 = vmatprep.subr.bf16.mxu0 0
      %3796 = vmatpush1.bf16.msra.mxu0 0
      %3797 = vmatprep.subr.bf16.mxu0 0
      %3798 = vmatpush1.bf16.msra.mxu0 0
      %3799 = vmatprep.subr.bf16.mxu0 0
      %3800 = vmatpush1.bf16.msra.mxu0 0
      %3801 = vmatprep.subr.bf16.mxu0 0
      %3802 = vmatpush1.bf16.msra.mxu0 0
      %3803 = vmatprep.subr.bf16.mxu0 0
      %3804 = vmatpush1.bf16.msra.mxu0 0
      %3805 = vmatprep.subr.bf16.mxu0 0
      %3806 = vmatpush1.bf16.msra.mxu0 0
      %3807 = vmatprep.subr.bf16.mxu0 0
      %3808 = vmatpush1.bf16.msra.mxu0 0
      %3809 = vmatprep.subr.bf16.mxu0 0
      %3810 = vmatpush1.bf16.msra.mxu0 0
      %3811 = vmatprep.subr.bf16.mxu0 0
      %3812 = vmatpush1.bf16.msra.mxu0 0
      %3813 = vmatprep.subr.bf16.mxu0 0
      %3814 = vmatpush1.bf16.msra.mxu0 0
      %3815 = vmatprep.mubr.bf16.mxu0 0
      %3816 = vmatmul.mubr.bf16.gmra.mrb[0].mxu0 %v3709
      %v3817 = vpop.f32.mrb[0].mxu0
      %v3818 = vadd.f32 0.0, %v3817
      %v3819 = vpop.f32.mrb[0].mxu0
      %v3820 = vadd.f32 0.0, %v3819
      %v3821 = vpop.f32.mrb[0].mxu0
      %v3822 = vpop.f32.mrb[0].mxu0
      %3823 = vdwg.mxu0
      %3824 = vmatprep.subr.bf16.mxu0 %v3721
      %3825 = vmatpush1.bf16.msra.mxu0 %v3718
      %3826 = vmatprep.subr.bf16.mxu0 0
      %3827 = vmatpush1.bf16.msra.mxu0 0
      %3828 = vmatprep.subr.bf16.mxu0 0
      %3829 = vmatpush1.bf16.msra.mxu0 0
      %3830 = vmatprep.subr.bf16.mxu0 0
      %3831 = vmatpush1.bf16.msra.mxu0 0
      %3832 = vmatprep.subr.bf16.mxu0 0
      %3833 = vmatpush1.bf16.msra.mxu0 0
      %3834 = vmatprep.subr.bf16.mxu0 0
      %3835 = vmatpush1.bf16.msra.mxu0 0
      %3836 = vmatprep.subr.bf16.mxu0 0
      %3837 = vmatpush1.bf16.msra.mxu0 0
      %3838 = vmatprep.subr.bf16.mxu0 0
      %3839 = vmatpush1.bf16.msra.mxu0 0
      %3840 = vmatprep.subr.bf16.mxu0 0
      %3841 = vmatpush1.bf16.msra.mxu0 0
      %3842 = vmatprep.subr.bf16.mxu0 0
      %3843 = vmatpush1.bf16.msra.mxu0 0
      %3844 = vmatprep.subr.bf16.mxu0 0
      %3845 = vmatpush1.bf16.msra.mxu0 0
      %3846 = vmatprep.subr.bf16.mxu0 0
      %3847 = vmatpush1.bf16.msra.mxu0 0
      %3848 = vmatprep.subr.bf16.mxu0 0
      %3849 = vmatpush1.bf16.msra.mxu0 0
      %3850 = vmatprep.subr.bf16.mxu0 0
      %3851 = vmatpush1.bf16.msra.mxu0 0
      %3852 = vmatprep.subr.bf16.mxu0 0
      %3853 = vmatpush1.bf16.msra.mxu0 0
      %3854 = vmatprep.subr.bf16.mxu0 0
      %3855 = vmatpush1.bf16.msra.mxu0 0
      %3856 = vmatprep.mubr.bf16.mxu0 0
      %3857 = vmatmul.mubr.bf16.gmra.mrb[0].mxu0 %v3709
      %v3858 = vpop.f32.mrb[0].mxu0
      %v3859 = vadd.f32 0.0, %v3858
      %v3860 = vpop.f32.mrb[0].mxu0
      %v3861 = vadd.f32 0.0, %v3860
      %v3862 = vpop.f32.mrb[0].mxu0
      %v3863 = vpop.f32.mrb[0].mxu0
      %3864 = vdwg.mxu0
      %3865 = vmatprep.subr.bf16.mxu0 %v3727
      %3866 = vmatpush1.bf16.msra.mxu0 %v3724
      %3867 = vmatprep.subr.bf16.mxu0 0
      %3868 = vmatpush1.bf16.msra.mxu0 0
      %3869 = vmatprep.subr.bf16.mxu0 0
      %3870 = vmatpush1.bf16.msra.mxu0 0
      %3871 = vmatprep.subr.bf16.mxu0 0
      %3872 = vmatpush1.bf16.msra.mxu0 0
      %3873 = vmatprep.subr.bf16.mxu0 0
      %3874 = vmatpush1.bf16.msra.mxu0 0
      %3875 = vmatprep.subr.bf16.mxu0 0
      %3876 = vmatpush1.bf16.msra.mxu0 0
      %3877 = vmatprep.subr.bf16.mxu0 0
      %3878 = vmatpush1.bf16.msra.mxu0 0
      %3879 = vmatprep.subr.bf16.mxu0 0
      %3880 = vmatpush1.bf16.msra.mxu0 0
      %3881 = vmatprep.subr.bf16.mxu0 0
      %3882 = vmatpush1.bf16.msra.mxu0 0
      %3883 = vmatprep.subr.bf16.mxu0 0
      %3884 = vmatpush1.bf16.msra.mxu0 0
      %3885 = vmatprep.subr.bf16.mxu0 0
      %3886 = vmatpush1.bf16.msra.mxu0 0
      %3887 = vmatprep.subr.bf16.mxu0 0
      %3888 = vmatpush1.bf16.msra.mxu0 0
      %3889 = vmatprep.subr.bf16.mxu0 0
      %3890 = vmatpush1.bf16.msra.mxu0 0
      %3891 = vmatprep.subr.bf16.mxu0 0
      %3892 = vmatpush1.bf16.msra.mxu0 0
      %3893 = vmatprep.subr.bf16.mxu0 0
      %3894 = vmatpush1.bf16.msra.mxu0 0
      %3895 = vmatprep.subr.bf16.mxu0 0
      %3896 = vmatpush1.bf16.msra.mxu0 0
      %3897 = vmatprep.mubr.bf16.mxu0 0
      %3898 = vmatmul.mubr.bf16.gmra.mrb[0].mxu0 %v3709
      %v3899 = vpop.f32.mrb[0].mxu0
      %v3900 = vadd.f32 0.0, %v3899
      %v3901 = vpop.f32.mrb[0].mxu0
      %v3902 = vadd.f32 0.0, %v3901
      %v3903 = vpop.f32.mrb[0].mxu0
      %v3904 = vpop.f32.mrb[0].mxu0
      %3905 = vdwg.mxu0
      %3906 = vmatprep.subr.bf16.mxu0 %v3733
      %3907 = vmatpush1.bf16.msra.mxu0 %v3730
      %3908 = vmatprep.subr.bf16.mxu0 0
      %3909 = vmatpush1.bf16.msra.mxu0 0
      %3910 = vmatprep.subr.bf16.mxu0 0
      %3911 = vmatpush1.bf16.msra.mxu0 0
      %3912 = vmatprep.subr.bf16.mxu0 0
      %3913 = vmatpush1.bf16.msra.mxu0 0
      %3914 = vmatprep.subr.bf16.mxu0 0
      %3915 = vmatpush1.bf16.msra.mxu0 0
      %3916 = vmatprep.subr.bf16.mxu0 0
      %3917 = vmatpush1.bf16.msra.mxu0 0
      %3918 = vmatprep.subr.bf16.mxu0 0
      %3919 = vmatpush1.bf16.msra.mxu0 0
      %3920 = vmatprep.subr.bf16.mxu0 0
      %3921 = vmatpush1.bf16.msra.mxu0 0
      %3922 = vmatprep.subr.bf16.mxu0 0
      %3923 = vmatpush1.bf16.msra.mxu0 0
      %3924 = vmatprep.subr.bf16.mxu0 0
      %3925 = vmatpush1.bf16.msra.mxu0 0
      %3926 = vmatprep.subr.bf16.mxu0 0
      %3927 = vmatpush1.bf16.msra.mxu0 0
      %3928 = vmatprep.subr.bf16.mxu0 0
      %3929 = vmatpush1.bf16.msra.mxu0 0
      %3930 = vmatprep.subr.bf16.mxu0 0
      %3931 = vmatpush1.bf16.msra.mxu0 0
      %3932 = vmatprep.subr.bf16.mxu0 0
      %3933 = vmatpush1.bf16.msra.mxu0 0
      %3934 = vmatprep.subr.bf16.mxu0 0
      %3935 = vmatpush1.bf16.msra.mxu0 0
      %3936 = vmatprep.subr.bf16.mxu0 0
      %3937 = vmatpush1.bf16.msra.mxu0 0
      %3938 = vmatprep.mubr.bf16.mxu0 0
      %3939 = vmatmul.mubr.bf16.gmra.mrb[0].mxu0 %v3709
      %v3940 = vpop.f32.mrb[0].mxu0
      %v3941 = vadd.f32 0.0, %v3940
      %v3942 = vpop.f32.mrb[0].mxu0
      %v3943 = vadd.f32 0.0, %v3942
      %v3944 = vpop.f32.mrb[0].mxu0
      %v3945 = vpop.f32.mrb[0].mxu0
      %3946 = vdwg.mxu0
      %3947 = vmatprep.subr.bf16.mxu0 %v3739
      %3948 = vmatpush1.bf16.msra.mxu0 %v3736
      %3949 = vmatprep.subr.bf16.mxu0 0
      %3950 = vmatpush1.bf16.msra.mxu0 0
      %3951 = vmatprep.subr.bf16.mxu0 0
      %3952 = vmatpush1.bf16.msra.mxu0 0
      %3953 = vmatprep.subr.bf16.mxu0 0
      %3954 = vmatpush1.bf16.msra.mxu0 0
      %3955 = vmatprep.subr.bf16.mxu0 0
      %3956 = vmatpush1.bf16.msra.mxu0 0
      %3957 = vmatprep.subr.bf16.mxu0 0
      %3958 = vmatpush1.bf16.msra.mxu0 0
      %3959 = vmatprep.subr.bf16.mxu0 0
      %3960 = vmatpush1.bf16.msra.mxu0 0
      %3961 = vmatprep.subr.bf16.mxu0 0
      %3962 = vmatpush1.bf16.msra.mxu0 0
      %3963 = vmatprep.subr.bf16.mxu0 0
      %3964 = vmatpush1.bf16.msra.mxu0 0
      %3965 = vmatprep.subr.bf16.mxu0 0
      %3966 = vmatpush1.bf16.msra.mxu0 0
      %3967 = vmatprep.subr.bf16.mxu0 0
      %3968 = vmatpush1.bf16.msra.mxu0 0
      %3969 = vmatprep.subr.bf16.mxu0 0
      %3970 = vmatpush1.bf16.msra.mxu0 0
      %3971 = vmatprep.subr.bf16.mxu0 0
      %3972 = vmatpush1.bf16.msra.mxu0 0
      %3973 = vmatprep.subr.bf16.mxu0 0
      %3974 = vmatpush1.bf16.msra.mxu0 0
      %3975 = vmatprep.subr.bf16.mxu0 0
      %3976 = vmatpush1.bf16.msra.mxu0 0
      %3977 = vmatprep.subr.bf16.mxu0 0
      %3978 = vmatpush1.bf16.msra.mxu0 0
      %3979 = vmatprep.mubr.bf16.mxu0 0
      %3980 = vmatmul.mubr.bf16.gmra.mrb[0].mxu0 %v3709
      %v3981 = vpop.f32.mrb[0].mxu0
      %v3982 = vadd.f32 0.0, %v3981
      %v3983 = vpop.f32.mrb[0].mxu0
      %v3984 = vadd.f32 0.0, %v3983
      %v3985 = vpop.f32.mrb[0].mxu0
      %v3986 = vpop.f32.mrb[0].mxu0
      %3987 = vdwg.mxu0
      %3988 = vmatprep.subr.bf16.mxu0 %v3745
      %3989 = vmatpush1.bf16.msra.mxu0 %v3742
      %3990 = vmatprep.subr.bf16.mxu0 0
      %3991 = vmatpush1.bf16.msra.mxu0 0
      %3992 = vmatprep.subr.bf16.mxu0 0
      %3993 = vmatpush1.bf16.msra.mxu0 0
      %3994 = vmatprep.subr.bf16.mxu0 0
      %3995 = vmatpush1.bf16.msra.mxu0 0
      %3996 = vmatprep.subr.bf16.mxu0 0
      %3997 = vmatpush1.bf16.msra.mxu0 0
      %3998 = vmatprep.subr.bf16.mxu0 0
      %3999 = vmatpush1.bf16.msra.mxu0 0
      %4000 = vmatprep.subr.bf16.mxu0 0
      %4001 = vmatpush1.bf16.msra.mxu0 0
      %4002 = vmatprep.subr.bf16.mxu0 0
      %4003 = vmatpush1.bf16.msra.mxu0 0
      %4004 = vmatprep.subr.bf16.mxu0 0
      %4005 = vmatpush1.bf16.msra.mxu0 0
      %4006 = vmatprep.subr.bf16.mxu0 0
      %4007 = vmatpush1.bf16.msra.mxu0 0
      %4008 = vmatprep.subr.bf16.mxu0 0
      %4009 = vmatpush1.bf16.msra.mxu0 0
      %4010 = vmatprep.subr.bf16.mxu0 0
      %4011 = vmatpush1.bf16.msra.mxu0 0
      %4012 = vmatprep.subr.bf16.mxu0 0
      %4013 = vmatpush1.bf16.msra.mxu0 0
      %4014 = vmatprep.subr.bf16.mxu0 0
      %4015 = vmatpush1.bf16.msra.mxu0 0
      %4016 = vmatprep.subr.bf16.mxu0 0
      %4017 = vmatpush1.bf16.msra.mxu0 0
      %4018 = vmatprep.subr.bf16.mxu0 0
      %4019 = vmatpush1.bf16.msra.mxu0 0
      %4020 = vmatprep.mubr.bf16.mxu0 0
      %4021 = vmatmul.mubr.bf16.gmra.mrb[0].mxu0 %v3709
      %v4022 = vpop.f32.mrb[0].mxu0
      %v4023 = vadd.f32 0.0, %v4022
      %v4024 = vpop.f32.mrb[0].mxu0
      %v4025 = vadd.f32 0.0, %v4024
      %v4026 = vpop.f32.mrb[0].mxu0
      %v4027 = vpop.f32.mrb[0].mxu0
      %4028 = vdwg.mxu0
      %4029 = vmatprep.subr.bf16.mxu0 %v3751
      %4030 = vmatpush1.bf16.msra.mxu0 %v3748
      %4031 = vmatprep.subr.bf16.mxu0 0
      %4032 = vmatpush1.bf16.msra.mxu0 0
      %4033 = vmatprep.subr.bf16.mxu0 0
      %4034 = vmatpush1.bf16.msra.mxu0 0
      %4035 = vmatprep.subr.bf16.mxu0 0
      %4036 = vmatpush1.bf16.msra.mxu0 0
      %4037 = vmatprep.subr.bf16.mxu0 0
      %4038 = vmatpush1.bf16.msra.mxu0 0
      %4039 = vmatprep.subr.bf16.mxu0 0
      %4040 = vmatpush1.bf16.msra.mxu0 0
      %4041 = vmatprep.subr.bf16.mxu0 0
      %4042 = vmatpush1.bf16.msra.mxu0 0
      %4043 = vmatprep.subr.bf16.mxu0 0
      %4044 = vmatpush1.bf16.msra.mxu0 0
      %4045 = vmatprep.subr.bf16.mxu0 0
      %4046 = vmatpush1.bf16.msra.mxu0 0
      %4047 = vmatprep.subr.bf16.mxu0 0
      %4048 = vmatpush1.bf16.msra.mxu0 0
      %4049 = vmatprep.subr.bf16.mxu0 0
      %4050 = vmatpush1.bf16.msra.mxu0 0
      %4051 = vmatprep.subr.bf16.mxu0 0
      %4052 = vmatpush1.bf16.msra.mxu0 0
      %4053 = vmatprep.subr.bf16.mxu0 0
      %4054 = vmatpush1.bf16.msra.mxu0 0
      %4055 = vmatprep.subr.bf16.mxu0 0
      %4056 = vmatpush1.bf16.msra.mxu0 0
      %4057 = vmatprep.subr.bf16.mxu0 0
      %4058 = vmatpush1.bf16.msra.mxu0 0
      %4059 = vmatprep.subr.bf16.mxu0 0
      %4060 = vmatpush1.bf16.msra.mxu0 0
      %4061 = vmatprep.mubr.bf16.mxu0 0
      %4062 = vmatmul.mubr.bf16.gmra.mrb[0].mxu0 %v3709
      %v4063 = vpop.f32.mrb[0].mxu0
      %v4064 = vadd.f32 0.0, %v4063
      %v4065 = vpop.f32.mrb[0].mxu0
      %v4066 = vadd.f32 0.0, %v4065
      %v4067 = vpop.f32.mrb[0].mxu0
      %v4068 = vpop.f32.mrb[0].mxu0
      %4069 = vdwg.mxu0
      %4070 = vmatprep.subr.bf16.mxu0 %v3757
      %4071 = vmatpush1.bf16.msra.mxu0 %v3754
      %4072 = vmatprep.subr.bf16.mxu0 0
      %4073 = vmatpush1.bf16.msra.mxu0 0
      %4074 = vmatprep.subr.bf16.mxu0 0
      %4075 = vmatpush1.bf16.msra.mxu0 0
      %4076 = vmatprep.subr.bf16.mxu0 0
      %4077 = vmatpush1.bf16.msra.mxu0 0
      %4078 = vmatprep.subr.bf16.mxu0 0
      %4079 = vmatpush1.bf16.msra.mxu0 0
      %4080 = vmatprep.subr.bf16.mxu0 0
      %4081 = vmatpush1.bf16.msra.mxu0 0
      %4082 = vmatprep.subr.bf16.mxu0 0
      %4083 = vmatpush1.bf16.msra.mxu0 0
      %4084 = vmatprep.subr.bf16.mxu0 0
      %4085 = vmatpush1.bf16.msra.mxu0 0
      %4086 = vmatprep.subr.bf16.mxu0 0
      %4087 = vmatpush1.bf16.msra.mxu0 0
      %4088 = vmatprep.subr.bf16.mxu0 0
      %4089 = vmatpush1.bf16.msra.mxu0 0
      %4090 = vmatprep.subr.bf16.mxu0 0
      %4091 = vmatpush1.bf16.msra.mxu0 0
      %4092 = vmatprep.subr.bf16.mxu0 0
      %4093 = vmatpush1.bf16.msra.mxu0 0
      %4094 = vmatprep.subr.bf16.mxu0 0
      %4095 = vmatpush1.bf16.msra.mxu0 0
      %4096 = vmatprep.subr.bf16.mxu0 0
      %4097 = vmatpush1.bf16.msra.mxu0 0
      %4098 = vmatprep.subr.bf16.mxu0 0
      %4099 = vmatpush1.bf16.msra.mxu0 0
      %4100 = vmatprep.subr.bf16.mxu0 0
      %4101 = vmatpush1.bf16.msra.mxu0 0
      %4102 = vmatprep.mubr.bf16.mxu0 0
      %4103 = vmatmul.mubr.bf16.gmra.mrb[0].mxu0 %v3709
      %v4104 = vpop.f32.mrb[0].mxu0
      %v4105 = vadd.f32 0.0, %v4104
      %v4106 = vpop.f32.mrb[0].mxu0
      %v4107 = vadd.f32 0.0, %v4106
      %v4108 = vpop.f32.mrb[0].mxu0
      %v4109 = vpop.f32.mrb[0].mxu0
      %4110 = vdwg.mxu0
      %4111 = vmatprep.subr.bf16.mxu0 %v3763
      %4112 = vmatpush1.bf16.msra.mxu0 %v3760
      %4113 = vmatprep.subr.bf16.mxu0 0
      %4114 = vmatpush1.bf16.msra.mxu0 0
      %4115 = vmatprep.subr.bf16.mxu0 0
      %4116 = vmatpush1.bf16.msra.mxu0 0
      %4117 = vmatprep.subr.bf16.mxu0 0
      %4118 = vmatpush1.bf16.msra.mxu0 0
      %4119 = vmatprep.subr.bf16.mxu0 0
      %4120 = vmatpush1.bf16.msra.mxu0 0
      %4121 = vmatprep.subr.bf16.mxu0 0
      %4122 = vmatpush1.bf16.msra.mxu0 0
      %4123 = vmatprep.subr.bf16.mxu0 0
      %4124 = vmatpush1.bf16.msra.mxu0 0
      %4125 = vmatprep.subr.bf16.mxu0 0
      %4126 = vmatpush1.bf16.msra.mxu0 0
      %4127 = vmatprep.subr.bf16.mxu0 0
      %4128 = vmatpush1.bf16.msra.mxu0 0
      %4129 = vmatprep.subr.bf16.mxu0 0
      %4130 = vmatpush1.bf16.msra.mxu0 0
      %4131 = vmatprep.subr.bf16.mxu0 0
      %4132 = vmatpush1.bf16.msra.mxu0 0
      %4133 = vmatprep.subr.bf16.mxu0 0
      %4134 = vmatpush1.bf16.msra.mxu0 0
      %4135 = vmatprep.subr.bf16.mxu0 0
      %4136 = vmatpush1.bf16.msra.mxu0 0
      %4137 = vmatprep.subr.bf16.mxu0 0
      %4138 = vmatpush1.bf16.msra.mxu0 0
      %4139 = vmatprep.subr.bf16.mxu0 0
      %4140 = vmatpush1.bf16.msra.mxu0 0
      %4141 = vmatprep.subr.bf16.mxu0 0
      %4142 = vmatpush1.bf16.msra.mxu0 0
      %4143 = vmatprep.mubr.bf16.mxu0 0
      %4144 = vmatmul.mubr.bf16.gmra.mrb[0].mxu0 %v3709
      %v4145 = vpop.f32.mrb[0].mxu0
      %v4146 = vadd.f32 0.0, %v4145
      %v4147 = vpop.f32.mrb[0].mxu0
      %v4148 = vadd.f32 0.0, %v4147
      %v4149 = vpop.f32.mrb[0].mxu0
      %v4150 = vpop.f32.mrb[0].mxu0
      %4151 = vdwg.mxu0
      %4152 = vmatprep.subr.bf16.mxu0 %v3769
      %4153 = vmatpush1.bf16.msra.mxu0 %v3766
      %4154 = vmatprep.subr.bf16.mxu0 0
      %4155 = vmatpush1.bf16.msra.mxu0 0
      %4156 = vmatprep.subr.bf16.mxu0 0
      %4157 = vmatpush1.bf16.msra.mxu0 0
      %4158 = vmatprep.subr.bf16.mxu0 0
      %4159 = vmatpush1.bf16.msra.mxu0 0
      %4160 = vmatprep.subr.bf16.mxu0 0
      %4161 = vmatpush1.bf16.msra.mxu0 0
      %4162 = vmatprep.subr.bf16.mxu0 0
      %4163 = vmatpush1.bf16.msra.mxu0 0
      %4164 = vmatprep.subr.bf16.mxu0 0
      %4165 = vmatpush1.bf16.msra.mxu0 0
      %4166 = vmatprep.subr.bf16.mxu0 0
      %4167 = vmatpush1.bf16.msra.mxu0 0
      %4168 = vmatprep.subr.bf16.mxu0 0
      %4169 = vmatpush1.bf16.msra.mxu0 0
      %4170 = vmatprep.subr.bf16.mxu0 0
      %4171 = vmatpush1.bf16.msra.mxu0 0
      %4172 = vmatprep.subr.bf16.mxu0 0
      %4173 = vmatpush1.bf16.msra.mxu0 0
      %4174 = vmatprep.subr.bf16.mxu0 0
      %4175 = vmatpush1.bf16.msra.mxu0 0
      %4176 = vmatprep.subr.bf16.mxu0 0
      %4177 = vmatpush1.bf16.msra.mxu0 0
      %4178 = vmatprep.subr.bf16.mxu0 0
      %4179 = vmatpush1.bf16.msra.mxu0 0
      %4180 = vmatprep.subr.bf16.mxu0 0
      %4181 = vmatpush1.bf16.msra.mxu0 0
      %4182 = vmatprep.subr.bf16.mxu0 0
      %4183 = vmatpush1.bf16.msra.mxu0 0
      %4184 = vmatprep.mubr.bf16.mxu0 0
      %4185 = vmatmul.mubr.bf16.gmra.mrb[0].mxu0 %v3709
      %v4186 = vpop.f32.mrb[0].mxu0
      %v4187 = vadd.f32 0.0, %v4186
      %v4188 = vpop.f32.mrb[0].mxu0
      %v4189 = vadd.f32 0.0, %v4188
      %v4190 = vpop.f32.mrb[0].mxu0
      %v4191 = vpop.f32.mrb[0].mxu0
      %4192 = vdwg.mxu0
      %4193 = vmatprep.subr.bf16.mxu0 %v3775
      %4194 = vmatpush1.bf16.msra.mxu0 %v3772
      %4195 = vmatprep.subr.bf16.mxu0 0
      %4196 = vmatpush1.bf16.msra.mxu0 0
      %4197 = vmatprep.subr.bf16.mxu0 0
      %4198 = vmatpush1.bf16.msra.mxu0 0
      %4199 = vmatprep.subr.bf16.mxu0 0
      %4200 = vmatpush1.bf16.msra.mxu0 0
      %4201 = vmatprep.subr.bf16.mxu0 0
      %4202 = vmatpush1.bf16.msra.mxu0 0
      %4203 = vmatprep.subr.bf16.mxu0 0
      %4204 = vmatpush1.bf16.msra.mxu0 0
      %4205 = vmatprep.subr.bf16.mxu0 0
      %4206 = vmatpush1.bf16.msra.mxu0 0
      %4207 = vmatprep.subr.bf16.mxu0 0
      %4208 = vmatpush1.bf16.msra.mxu0 0
      %4209 = vmatprep.subr.bf16.mxu0 0
      %4210 = vmatpush1.bf16.msra.mxu0 0
      %4211 = vmatprep.subr.bf16.mxu0 0
      %4212 = vmatpush1.bf16.msra.mxu0 0
      %4213 = vmatprep.subr.bf16.mxu0 0
      %4214 = vmatpush1.bf16.msra.mxu0 0
      %4215 = vmatprep.subr.bf16.mxu0 0
      %4216 = vmatpush1.bf16.msra.mxu0 0
      %4217 = vmatprep.subr.bf16.mxu0 0
      %4218 = vmatpush1.bf16.msra.mxu0 0
      %4219 = vmatprep.subr.bf16.mxu0 0
      %4220 = vmatpush1.bf16.msra.mxu0 0
      %4221 = vmatprep.subr.bf16.mxu0 0
      %4222 = vmatpush1.bf16.msra.mxu0 0
      %4223 = vmatprep.subr.bf16.mxu0 0
      %4224 = vmatpush1.bf16.msra.mxu0 0
      %4225 = vmatprep.mubr.bf16.mxu0 0
      %4226 = vmatmul.mubr.bf16.gmra.mrb[0].mxu0 %v3709
      %v4227 = vpop.f32.mrb[0].mxu0
      %v4228 = vadd.f32 0.0, %v4227
      %v4229 = vpop.f32.mrb[0].mxu0
      %v4230 = vadd.f32 0.0, %v4229
      %v4231 = vpop.f32.mrb[0].mxu0
      %v4232 = vpop.f32.mrb[0].mxu0
      %4233 = vdwg.mxu0
      %4234 = vmatprep.subr.bf16.mxu0 %v3781
      %4235 = vmatpush1.bf16.msra.mxu0 %v3778
      %4236 = vmatprep.subr.bf16.mxu0 0
      %4237 = vmatpush1.bf16.msra.mxu0 0
      %4238 = vmatprep.subr.bf16.mxu0 0
      %4239 = vmatpush1.bf16.msra.mxu0 0
      %4240 = vmatprep.subr.bf16.mxu0 0
      %4241 = vmatpush1.bf16.msra.mxu0 0
      %4242 = vmatprep.subr.bf16.mxu0 0
      %4243 = vmatpush1.bf16.msra.mxu0 0
      %4244 = vmatprep.subr.bf16.mxu0 0
      %4245 = vmatpush1.bf16.msra.mxu0 0
      %4246 = vmatprep.subr.bf16.mxu0 0
      %4247 = vmatpush1.bf16.msra.mxu0 0
      %4248 = vmatprep.subr.bf16.mxu0 0
      %4249 = vmatpush1.bf16.msra.mxu0 0
      %4250 = vmatprep.subr.bf16.mxu0 0
      %4251 = vmatpush1.bf16.msra.mxu0 0
      %4252 = vmatprep.subr.bf16.mxu0 0
      %4253 = vmatpush1.bf16.msra.mxu0 0
      %4254 = vmatprep.subr.bf16.mxu0 0
      %4255 = vmatpush1.bf16.msra.mxu0 0
      %4256 = vmatprep.subr.bf16.mxu0 0
      %4257 = vmatpush1.bf16.msra.mxu0 0
      %4258 = vmatprep.subr.bf16.mxu0 0
      %4259 = vmatpush1.bf16.msra.mxu0 0
      %4260 = vmatprep.subr.bf16.mxu0 0
      %4261 = vmatpush1.bf16.msra.mxu0 0
      %4262 = vmatprep.subr.bf16.mxu0 0
      %4263 = vmatpush1.bf16.msra.mxu0 0
      %4264 = vmatprep.subr.bf16.mxu0 0
      %4265 = vmatpush1.bf16.msra.mxu0 0
      %4266 = vmatprep.mubr.bf16.mxu0 0
      %4267 = vmatmul.mubr.bf16.gmra.mrb[0].mxu0 %v3709
      %v4268 = vpop.f32.mrb[0].mxu0
      %v4269 = vadd.f32 0.0, %v4268
      %v4270 = vpop.f32.mrb[0].mxu0
      %v4271 = vadd.f32 0.0, %v4270
      %v4272 = vpop.f32.mrb[0].mxu0
      %v4273 = vpop.f32.mrb[0].mxu0
      %4274 = vdwg.mxu0
      %v4275 = vadd.f32 %v3607, %v3818
      %v4276 = vadd.f32 %v3608, %v3820
      %v4277 = vadd.f32 %v3609, %v3859
      %v4278 = vadd.f32 %v3610, %v3861
      %v4279 = vadd.f32 %v3611, %v3900
      %v4280 = vadd.f32 %v3612, %v3902
      %v4281 = vadd.f32 %v3613, %v3941
      %v4282 = vadd.f32 %v3614, %v3943
      %v4283 = vadd.f32 %v3615, %v3982
      %v4284 = vadd.f32 %v3616, %v3984
      %v4285 = vadd.f32 %v3617, %v4023
      %v4286 = vadd.f32 %v3618, %v4025
      %v4287 = vadd.f32 %v3619, %v4064
      %v4288 = vadd.f32 %v3620, %v4066
      %v4289 = vadd.f32 %v3621, %v4105
      %v4290 = vadd.f32 %v3622, %v4107
      %v4291 = vadd.f32 %v3623, %v4146
      %v4292 = vadd.f32 %v3624, %v4148
      %v4293 = vadd.f32 %v3625, %v4187
      %v4294 = vadd.f32 %v3626, %v4189
      %v4295 = vadd.f32 %v3627, %v4228
      %v4296 = vadd.f32 %v3628, %v4230
      %v4297 = vadd.f32 %v3629, %v4269
      %v4298 = vadd.f32 %v3630, %v4271
      %s4299 = scalar_lea.vmem %s1, 24
      %v4300 = vld [vmem:[%s4299] sm:$0xf]
      %4301 = vrot.lane.b32.xlu0 %v314, 92
      %v4302 = vpop.permute.xlu0 %4301
      %4303 = vrot.lane.b32.xlu0 %v322, 92
      %v4304 = vpop.permute.xlu0 %4303
      %4305 = vrot.lane.b32.xlu0 %v321, 92
      %v4306 = vpop.permute.xlu0 %4305
      %4307 = vrot.lane.b32.xlu0 %v323, 92
      %v4308 = vpop.permute.xlu0 %4307
      %4309 = vrot.lane.b32.xlu0 %v331, 92
      %v4310 = vpop.permute.xlu0 %4309
      %4311 = vrot.lane.b32.xlu0 %v339, 92
      %v4312 = vpop.permute.xlu0 %4311
      %4313 = vrot.lane.b32.xlu0 %v338, 92
      %v4314 = vpop.permute.xlu0 %4313
      %4315 = vrot.lane.b32.xlu0 %v340, 92
      %v4316 = vpop.permute.xlu0 %4315
      %4317 = vrot.lane.b32.xlu0 %v348, 92
      %v4318 = vpop.permute.xlu0 %4317
      %4319 = vrot.lane.b32.xlu0 %v356, 92
      %v4320 = vpop.permute.xlu0 %4319
      %4321 = vrot.lane.b32.xlu0 %v355, 92
      %v4322 = vpop.permute.xlu0 %4321
      %4323 = vrot.lane.b32.xlu0 %v357, 92
      %v4324 = vpop.permute.xlu0 %4323
      %4325 = vrot.lane.b32.xlu0 %v365, 92
      %v4326 = vpop.permute.xlu0 %4325
      %4327 = vrot.lane.b32.xlu0 %v373, 92
      %v4328 = vpop.permute.xlu0 %4327
      %4329 = vrot.lane.b32.xlu0 %v372, 92
      %v4330 = vpop.permute.xlu0 %4329
      %4331 = vrot.lane.b32.xlu0 %v374, 92
      %v4332 = vpop.permute.xlu0 %4331
      %4333 = vrot.lane.b32.xlu0 %v382, 92
      %v4334 = vpop.permute.xlu0 %4333
      %4335 = vrot.lane.b32.xlu0 %v390, 92
      %v4336 = vpop.permute.xlu0 %4335
      %4337 = vrot.lane.b32.xlu0 %v389, 92
      %v4338 = vpop.permute.xlu0 %4337
      %4339 = vrot.lane.b32.xlu0 %v391, 92
      %v4340 = vpop.permute.xlu0 %4339
      %4341 = vrot.lane.b32.xlu0 %v399, 92
      %v4342 = vpop.permute.xlu0 %4341
      %4343 = vrot.lane.b32.xlu0 %v407, 92
      %v4344 = vpop.permute.xlu0 %4343
      %4345 = vrot.lane.b32.xlu0 %v406, 92
      %v4346 = vpop.permute.xlu0 %4345
      %4347 = vrot.lane.b32.xlu0 %v408, 92
      %v4348 = vpop.permute.xlu0 %4347
      %4349 = vrot.lane.b32.xlu0 %v415, 92
      %v4350 = vpop.permute.xlu0 %4349
      %vm4351 = vcmask 752640
      %v4352 = vsel %vm4351, %v4302, %v4304
      %v4353 = vsel %vm4351, %v4304, %v4306
      %v4354 = vsel %vm4351, %v4306, %v4308
      %v4355 = vsel %vm4351, %v4308, %v4310
      %v4356 = vsel %vm4351, %v4310, %v4312
      %v4357 = vsel %vm4351, %v4312, %v4314
      %v4358 = vsel %vm4351, %v4314, %v4316
      %v4359 = vsel %vm4351, %v4316, %v4318
      %v4360 = vsel %vm4351, %v4318, %v4320
      %v4361 = vsel %vm4351, %v4320, %v4322
      %v4362 = vsel %vm4351, %v4322, %v4324
      %v4363 = vsel %vm4351, %v4324, %v4326
      %v4364 = vsel %vm4351, %v4326, %v4328
      %v4365 = vsel %vm4351, %v4328, %v4330
      %v4366 = vsel %vm4351, %v4330, %v4332
      %v4367 = vsel %vm4351, %v4332, %v4334
      %v4368 = vsel %vm4351, %v4334, %v4336
      %v4369 = vsel %vm4351, %v4336, %v4338
      %v4370 = vsel %vm4351, %v4338, %v4340
      %v4371 = vsel %vm4351, %v4340, %v4342
      %v4372 = vsel %vm4351, %v4342, %v4344
      %v4373 = vsel %vm4351, %v4344, %v4346
      %v4374 = vsel %vm4351, %v4346, %v4348
      %v4375 = vsel %vm4351, %v4348, %v4350
      %v4377 = vsel %vm491, %v4300, 0
      %v4380 = vsel %vm495, %v4352, 0
      %v4383 = vsel %vm495, %v4353, 0
      %v4386 = vsel %vm495, %v4354, 0
      %v4389 = vsel %vm495, %v4355, 0
      %v4392 = vsel %vm495, %v4356, 0
      %v4395 = vsel %vm495, %v4357, 0
      %v4398 = vsel %vm495, %v4358, 0
      %v4401 = vsel %vm495, %v4359, 0
      %v4404 = vsel %vm495, %v4360, 0
      %v4407 = vsel %vm495, %v4361, 0
      %v4410 = vsel %vm495, %v4362, 0
      %v4413 = vsel %vm495, %v4363, 0
      %v4416 = vsel %vm495, %v4364, 0
      %v4419 = vsel %vm495, %v4365, 0
      %v4422 = vsel %vm495, %v4366, 0
      %v4425 = vsel %vm495, %v4367, 0
      %v4428 = vsel %vm495, %v4368, 0
      %v4431 = vsel %vm495, %v4369, 0
      %v4434 = vsel %vm495, %v4370, 0
      %v4437 = vsel %vm495, %v4371, 0
      %v4440 = vsel %vm495, %v4372, 0
      %v4443 = vsel %vm495, %v4373, 0
      %v4446 = vsel %vm495, %v4374, 0
      %v4449 = vsel %vm495, %v4375, 0
      %4451 = vmatprep.subr.bf16.mxu0 %v4383
      %4452 = vmatpush1.bf16.msra.mxu0 %v4380
      %4453 = vmatprep.subr.bf16.mxu0 0
      %4454 = vmatpush1.bf16.msra.mxu0 0
      %4455 = vmatprep.subr.bf16.mxu0 0
      %4456 = vmatpush1.bf16.msra.mxu0 0
      %4457 = vmatprep.subr.bf16.mxu0 0
      %4458 = vmatpush1.bf16.msra.mxu0 0
      %4459 = vmatprep.subr.bf16.mxu0 0
      %4460 = vmatpush1.bf16.msra.mxu0 0
      %4461 = vmatprep.subr.bf16.mxu0 0
      %4462 = vmatpush1.bf16.msra.mxu0 0
      %4463 = vmatprep.subr.bf16.mxu0 0
      %4464 = vmatpush1.bf16.msra.mxu0 0
      %4465 = vmatprep.subr.bf16.mxu0 0
      %4466 = vmatpush1.bf16.msra.mxu0 0
      %4467 = vmatprep.subr.bf16.mxu0 0
      %4468 = vmatpush1.bf16.msra.mxu0 0
      %4469 = vmatprep.subr.bf16.mxu0 0
      %4470 = vmatpush1.bf16.msra.mxu0 0
      %4471 = vmatprep.subr.bf16.mxu0 0
      %4472 = vmatpush1.bf16.msra.mxu0 0
      %4473 = vmatprep.subr.bf16.mxu0 0
      %4474 = vmatpush1.bf16.msra.mxu0 0
      %4475 = vmatprep.subr.bf16.mxu0 0
      %4476 = vmatpush1.bf16.msra.mxu0 0
      %4477 = vmatprep.subr.bf16.mxu0 0
      %4478 = vmatpush1.bf16.msra.mxu0 0
      %4479 = vmatprep.subr.bf16.mxu0 0
      %4480 = vmatpush1.bf16.msra.mxu0 0
      %4481 = vmatprep.subr.bf16.mxu0 0
      %4482 = vmatpush1.bf16.msra.mxu0 0
      %4483 = vmatprep.mubr.bf16.mxu0 0
      %4484 = vmatmul.mubr.bf16.gmra.mrb[0].mxu0 %v4377
      %v4485 = vpop.f32.mrb[0].mxu0
      %v4486 = vadd.f32 0.0, %v4485
      %v4487 = vpop.f32.mrb[0].mxu0
      %v4488 = vadd.f32 0.0, %v4487
      %v4489 = vpop.f32.mrb[0].mxu0
      %v4490 = vpop.f32.mrb[0].mxu0
      %4491 = vdwg.mxu0
      %4492 = vmatprep.subr.bf16.mxu0 %v4389
      %4493 = vmatpush1.bf16.msra.mxu0 %v4386
      %4494 = vmatprep.subr.bf16.mxu0 0
      %4495 = vmatpush1.bf16.msra.mxu0 0
      %4496 = vmatprep.subr.bf16.mxu0 0
      %4497 = vmatpush1.bf16.msra.mxu0 0
      %4498 = vmatprep.subr.bf16.mxu0 0
      %4499 = vmatpush1.bf16.msra.mxu0 0
      %4500 = vmatprep.subr.bf16.mxu0 0
      %4501 = vmatpush1.bf16.msra.mxu0 0
      %4502 = vmatprep.subr.bf16.mxu0 0
      %4503 = vmatpush1.bf16.msra.mxu0 0
      %4504 = vmatprep.subr.bf16.mxu0 0
      %4505 = vmatpush1.bf16.msra.mxu0 0
      %4506 = vmatprep.subr.bf16.mxu0 0
      %4507 = vmatpush1.bf16.msra.mxu0 0
      %4508 = vmatprep.subr.bf16.mxu0 0
      %4509 = vmatpush1.bf16.msra.mxu0 0
      %4510 = vmatprep.subr.bf16.mxu0 0
      %4511 = vmatpush1.bf16.msra.mxu0 0
      %4512 = vmatprep.subr.bf16.mxu0 0
      %4513 = vmatpush1.bf16.msra.mxu0 0
      %4514 = vmatprep.subr.bf16.mxu0 0
      %4515 = vmatpush1.bf16.msra.mxu0 0
      %4516 = vmatprep.subr.bf16.mxu0 0
      %4517 = vmatpush1.bf16.msra.mxu0 0
      %4518 = vmatprep.subr.bf16.mxu0 0
      %4519 = vmatpush1.bf16.msra.mxu0 0
      %4520 = vmatprep.subr.bf16.mxu0 0
      %4521 = vmatpush1.bf16.msra.mxu0 0
      %4522 = vmatprep.subr.bf16.mxu0 0
      %4523 = vmatpush1.bf16.msra.mxu0 0
      %4524 = vmatprep.mubr.bf16.mxu0 0
      %4525 = vmatmul.mubr.bf16.gmra.mrb[0].mxu0 %v4377
      %v4526 = vpop.f32.mrb[0].mxu0
      %v4527 = vadd.f32 0.0, %v4526
      %v4528 = vpop.f32.mrb[0].mxu0
      %v4529 = vadd.f32 0.0, %v4528
      %v4530 = vpop.f32.mrb[0].mxu0
      %v4531 = vpop.f32.mrb[0].mxu0
      %4532 = vdwg.mxu0
      %4533 = vmatprep.subr.bf16.mxu0 %v4395
      %4534 = vmatpush1.bf16.msra.mxu0 %v4392
      %4535 = vmatprep.subr.bf16.mxu0 0
      %4536 = vmatpush1.bf16.msra.mxu0 0
      %4537 = vmatprep.subr.bf16.mxu0 0
      %4538 = vmatpush1.bf16.msra.mxu0 0
      %4539 = vmatprep.subr.bf16.mxu0 0
      %4540 = vmatpush1.bf16.msra.mxu0 0
      %4541 = vmatprep.subr.bf16.mxu0 0
      %4542 = vmatpush1.bf16.msra.mxu0 0
      %4543 = vmatprep.subr.bf16.mxu0 0
      %4544 = vmatpush1.bf16.msra.mxu0 0
      %4545 = vmatprep.subr.bf16.mxu0 0
      %4546 = vmatpush1.bf16.msra.mxu0 0
      %4547 = vmatprep.subr.bf16.mxu0 0
      %4548 = vmatpush1.bf16.msra.mxu0 0
      %4549 = vmatprep.subr.bf16.mxu0 0
      %4550 = vmatpush1.bf16.msra.mxu0 0
      %4551 = vmatprep.subr.bf16.mxu0 0
      %4552 = vmatpush1.bf16.msra.mxu0 0
      %4553 = vmatprep.subr.bf16.mxu0 0
      %4554 = vmatpush1.bf16.msra.mxu0 0
      %4555 = vmatprep.subr.bf16.mxu0 0
      %4556 = vmatpush1.bf16.msra.mxu0 0
      %4557 = vmatprep.subr.bf16.mxu0 0
      %4558 = vmatpush1.bf16.msra.mxu0 0
      %4559 = vmatprep.subr.bf16.mxu0 0
      %4560 = vmatpush1.bf16.msra.mxu0 0
      %4561 = vmatprep.subr.bf16.mxu0 0
      %4562 = vmatpush1.bf16.msra.mxu0 0
      %4563 = vmatprep.subr.bf16.mxu0 0
      %4564 = vmatpush1.bf16.msra.mxu0 0
      %4565 = vmatprep.mubr.bf16.mxu0 0
      %4566 = vmatmul.mubr.bf16.gmra.mrb[0].mxu0 %v4377
      %v4567 = vpop.f32.mrb[0].mxu0
      %v4568 = vadd.f32 0.0, %v4567
      %v4569 = vpop.f32.mrb[0].mxu0
      %v4570 = vadd.f32 0.0, %v4569
      %v4571 = vpop.f32.mrb[0].mxu0
      %v4572 = vpop.f32.mrb[0].mxu0
      %4573 = vdwg.mxu0
      %4574 = vmatprep.subr.bf16.mxu0 %v4401
      %4575 = vmatpush1.bf16.msra.mxu0 %v4398
      %4576 = vmatprep.subr.bf16.mxu0 0
      %4577 = vmatpush1.bf16.msra.mxu0 0
      %4578 = vmatprep.subr.bf16.mxu0 0
      %4579 = vmatpush1.bf16.msra.mxu0 0
      %4580 = vmatprep.subr.bf16.mxu0 0
      %4581 = vmatpush1.bf16.msra.mxu0 0
      %4582 = vmatprep.subr.bf16.mxu0 0
      %4583 = vmatpush1.bf16.msra.mxu0 0
      %4584 = vmatprep.subr.bf16.mxu0 0
      %4585 = vmatpush1.bf16.msra.mxu0 0
      %4586 = vmatprep.subr.bf16.mxu0 0
      %4587 = vmatpush1.bf16.msra.mxu0 0
      %4588 = vmatprep.subr.bf16.mxu0 0
      %4589 = vmatpush1.bf16.msra.mxu0 0
      %4590 = vmatprep.subr.bf16.mxu0 0
      %4591 = vmatpush1.bf16.msra.mxu0 0
      %4592 = vmatprep.subr.bf16.mxu0 0
      %4593 = vmatpush1.bf16.msra.mxu0 0
      %4594 = vmatprep.subr.bf16.mxu0 0
      %4595 = vmatpush1.bf16.msra.mxu0 0
      %4596 = vmatprep.subr.bf16.mxu0 0
      %4597 = vmatpush1.bf16.msra.mxu0 0
      %4598 = vmatprep.subr.bf16.mxu0 0
      %4599 = vmatpush1.bf16.msra.mxu0 0
      %4600 = vmatprep.subr.bf16.mxu0 0
      %4601 = vmatpush1.bf16.msra.mxu0 0
      %4602 = vmatprep.subr.bf16.mxu0 0
      %4603 = vmatpush1.bf16.msra.mxu0 0
      %4604 = vmatprep.subr.bf16.mxu0 0
      %4605 = vmatpush1.bf16.msra.mxu0 0
      %4606 = vmatprep.mubr.bf16.mxu0 0
      %4607 = vmatmul.mubr.bf16.gmra.mrb[0].mxu0 %v4377
      %v4608 = vpop.f32.mrb[0].mxu0
      %v4609 = vadd.f32 0.0, %v4608
      %v4610 = vpop.f32.mrb[0].mxu0
      %v4611 = vadd.f32 0.0, %v4610
      %v4612 = vpop.f32.mrb[0].mxu0
      %v4613 = vpop.f32.mrb[0].mxu0
      %4614 = vdwg.mxu0
      %4615 = vmatprep.subr.bf16.mxu0 %v4407
      %4616 = vmatpush1.bf16.msra.mxu0 %v4404
      %4617 = vmatprep.subr.bf16.mxu0 0
      %4618 = vmatpush1.bf16.msra.mxu0 0
      %4619 = vmatprep.subr.bf16.mxu0 0
      %4620 = vmatpush1.bf16.msra.mxu0 0
      %4621 = vmatprep.subr.bf16.mxu0 0
      %4622 = vmatpush1.bf16.msra.mxu0 0
      %4623 = vmatprep.subr.bf16.mxu0 0
      %4624 = vmatpush1.bf16.msra.mxu0 0
      %4625 = vmatprep.subr.bf16.mxu0 0
      %4626 = vmatpush1.bf16.msra.mxu0 0
      %4627 = vmatprep.subr.bf16.mxu0 0
      %4628 = vmatpush1.bf16.msra.mxu0 0
      %4629 = vmatprep.subr.bf16.mxu0 0
      %4630 = vmatpush1.bf16.msra.mxu0 0
      %4631 = vmatprep.subr.bf16.mxu0 0
      %4632 = vmatpush1.bf16.msra.mxu0 0
      %4633 = vmatprep.subr.bf16.mxu0 0
      %4634 = vmatpush1.bf16.msra.mxu0 0
      %4635 = vmatprep.subr.bf16.mxu0 0
      %4636 = vmatpush1.bf16.msra.mxu0 0
      %4637 = vmatprep.subr.bf16.mxu0 0
      %4638 = vmatpush1.bf16.msra.mxu0 0
      %4639 = vmatprep.subr.bf16.mxu0 0
      %4640 = vmatpush1.bf16.msra.mxu0 0
      %4641 = vmatprep.subr.bf16.mxu0 0
      %4642 = vmatpush1.bf16.msra.mxu0 0
      %4643 = vmatprep.subr.bf16.mxu0 0
      %4644 = vmatpush1.bf16.msra.mxu0 0
      %4645 = vmatprep.subr.bf16.mxu0 0
      %4646 = vmatpush1.bf16.msra.mxu0 0
      %4647 = vmatprep.mubr.bf16.mxu0 0
      %4648 = vmatmul.mubr.bf16.gmra.mrb[0].mxu0 %v4377
      %v4649 = vpop.f32.mrb[0].mxu0
      %v4650 = vadd.f32 0.0, %v4649
      %v4651 = vpop.f32.mrb[0].mxu0
      %v4652 = vadd.f32 0.0, %v4651
      %v4653 = vpop.f32.mrb[0].mxu0
      %v4654 = vpop.f32.mrb[0].mxu0
      %4655 = vdwg.mxu0
      %4656 = vmatprep.subr.bf16.mxu0 %v4413
      %4657 = vmatpush1.bf16.msra.mxu0 %v4410
      %4658 = vmatprep.subr.bf16.mxu0 0
      %4659 = vmatpush1.bf16.msra.mxu0 0
      %4660 = vmatprep.subr.bf16.mxu0 0
      %4661 = vmatpush1.bf16.msra.mxu0 0
      %4662 = vmatprep.subr.bf16.mxu0 0
      %4663 = vmatpush1.bf16.msra.mxu0 0
      %4664 = vmatprep.subr.bf16.mxu0 0
      %4665 = vmatpush1.bf16.msra.mxu0 0
      %4666 = vmatprep.subr.bf16.mxu0 0
      %4667 = vmatpush1.bf16.msra.mxu0 0
      %4668 = vmatprep.subr.bf16.mxu0 0
      %4669 = vmatpush1.bf16.msra.mxu0 0
      %4670 = vmatprep.subr.bf16.mxu0 0
      %4671 = vmatpush1.bf16.msra.mxu0 0
      %4672 = vmatprep.subr.bf16.mxu0 0
      %4673 = vmatpush1.bf16.msra.mxu0 0
      %4674 = vmatprep.subr.bf16.mxu0 0
      %4675 = vmatpush1.bf16.msra.mxu0 0
      %4676 = vmatprep.subr.bf16.mxu0 0
      %4677 = vmatpush1.bf16.msra.mxu0 0
      %4678 = vmatprep.subr.bf16.mxu0 0
      %4679 = vmatpush1.bf16.msra.mxu0 0
      %4680 = vmatprep.subr.bf16.mxu0 0
      %4681 = vmatpush1.bf16.msra.mxu0 0
      %4682 = vmatprep.subr.bf16.mxu0 0
      %4683 = vmatpush1.bf16.msra.mxu0 0
      %4684 = vmatprep.subr.bf16.mxu0 0
      %4685 = vmatpush1.bf16.msra.mxu0 0
      %4686 = vmatprep.subr.bf16.mxu0 0
      %4687 = vmatpush1.bf16.msra.mxu0 0
      %4688 = vmatprep.mubr.bf16.mxu0 0
      %4689 = vmatmul.mubr.bf16.gmra.mrb[0].mxu0 %v4377
      %v4690 = vpop.f32.mrb[0].mxu0
      %v4691 = vadd.f32 0.0, %v4690
      %v4692 = vpop.f32.mrb[0].mxu0
      %v4693 = vadd.f32 0.0, %v4692
      %v4694 = vpop.f32.mrb[0].mxu0
      %v4695 = vpop.f32.mrb[0].mxu0
      %4696 = vdwg.mxu0
      %4697 = vmatprep.subr.bf16.mxu0 %v4419
      %4698 = vmatpush1.bf16.msra.mxu0 %v4416
      %4699 = vmatprep.subr.bf16.mxu0 0
      %4700 = vmatpush1.bf16.msra.mxu0 0
      %4701 = vmatprep.subr.bf16.mxu0 0
      %4702 = vmatpush1.bf16.msra.mxu0 0
      %4703 = vmatprep.subr.bf16.mxu0 0
      %4704 = vmatpush1.bf16.msra.mxu0 0
      %4705 = vmatprep.subr.bf16.mxu0 0
      %4706 = vmatpush1.bf16.msra.mxu0 0
      %4707 = vmatprep.subr.bf16.mxu0 0
      %4708 = vmatpush1.bf16.msra.mxu0 0
      %4709 = vmatprep.subr.bf16.mxu0 0
      %4710 = vmatpush1.bf16.msra.mxu0 0
      %4711 = vmatprep.subr.bf16.mxu0 0
      %4712 = vmatpush1.bf16.msra.mxu0 0
      %4713 = vmatprep.subr.bf16.mxu0 0
      %4714 = vmatpush1.bf16.msra.mxu0 0
      %4715 = vmatprep.subr.bf16.mxu0 0
      %4716 = vmatpush1.bf16.msra.mxu0 0
      %4717 = vmatprep.subr.bf16.mxu0 0
      %4718 = vmatpush1.bf16.msra.mxu0 0
      %4719 = vmatprep.subr.bf16.mxu0 0
      %4720 = vmatpush1.bf16.msra.mxu0 0
      %4721 = vmatprep.subr.bf16.mxu0 0
      %4722 = vmatpush1.bf16.msra.mxu0 0
      %4723 = vmatprep.subr.bf16.mxu0 0
      %4724 = vmatpush1.bf16.msra.mxu0 0
      %4725 = vmatprep.subr.bf16.mxu0 0
      %4726 = vmatpush1.bf16.msra.mxu0 0
      %4727 = vmatprep.subr.bf16.mxu0 0
      %4728 = vmatpush1.bf16.msra.mxu0 0
      %4729 = vmatprep.mubr.bf16.mxu0 0
      %4730 = vmatmul.mubr.bf16.gmra.mrb[0].mxu0 %v4377
      %v4731 = vpop.f32.mrb[0].mxu0
      %v4732 = vadd.f32 0.0, %v4731
      %v4733 = vpop.f32.mrb[0].mxu0
      %v4734 = vadd.f32 0.0, %v4733
      %v4735 = vpop.f32.mrb[0].mxu0
      %v4736 = vpop.f32.mrb[0].mxu0
      %4737 = vdwg.mxu0
      %4738 = vmatprep.subr.bf16.mxu0 %v4425
      %4739 = vmatpush1.bf16.msra.mxu0 %v4422
      %4740 = vmatprep.subr.bf16.mxu0 0
      %4741 = vmatpush1.bf16.msra.mxu0 0
      %4742 = vmatprep.subr.bf16.mxu0 0
      %4743 = vmatpush1.bf16.msra.mxu0 0
      %4744 = vmatprep.subr.bf16.mxu0 0
      %4745 = vmatpush1.bf16.msra.mxu0 0
      %4746 = vmatprep.subr.bf16.mxu0 0
      %4747 = vmatpush1.bf16.msra.mxu0 0
      %4748 = vmatprep.subr.bf16.mxu0 0
      %4749 = vmatpush1.bf16.msra.mxu0 0
      %4750 = vmatprep.subr.bf16.mxu0 0
      %4751 = vmatpush1.bf16.msra.mxu0 0
      %4752 = vmatprep.subr.bf16.mxu0 0
      %4753 = vmatpush1.bf16.msra.mxu0 0
      %4754 = vmatprep.subr.bf16.mxu0 0
      %4755 = vmatpush1.bf16.msra.mxu0 0
      %4756 = vmatprep.subr.bf16.mxu0 0
      %4757 = vmatpush1.bf16.msra.mxu0 0
      %4758 = vmatprep.subr.bf16.mxu0 0
      %4759 = vmatpush1.bf16.msra.mxu0 0
      %4760 = vmatprep.subr.bf16.mxu0 0
      %4761 = vmatpush1.bf16.msra.mxu0 0
      %4762 = vmatprep.subr.bf16.mxu0 0
      %4763 = vmatpush1.bf16.msra.mxu0 0
      %4764 = vmatprep.subr.bf16.mxu0 0
      %4765 = vmatpush1.bf16.msra.mxu0 0
      %4766 = vmatprep.subr.bf16.mxu0 0
      %4767 = vmatpush1.bf16.msra.mxu0 0
      %4768 = vmatprep.subr.bf16.mxu0 0
      %4769 = vmatpush1.bf16.msra.mxu0 0
      %4770 = vmatprep.mubr.bf16.mxu0 0
      %4771 = vmatmul.mubr.bf16.gmra.mrb[0].mxu0 %v4377
      %v4772 = vpop.f32.mrb[0].mxu0
      %v4773 = vadd.f32 0.0, %v4772
      %v4774 = vpop.f32.mrb[0].mxu0
      %v4775 = vadd.f32 0.0, %v4774
      %v4776 = vpop.f32.mrb[0].mxu0
      %v4777 = vpop.f32.mrb[0].mxu0
      %4778 = vdwg.mxu0
      %4779 = vmatprep.subr.bf16.mxu0 %v4431
      %4780 = vmatpush1.bf16.msra.mxu0 %v4428
      %4781 = vmatprep.subr.bf16.mxu0 0
      %4782 = vmatpush1.bf16.msra.mxu0 0
      %4783 = vmatprep.subr.bf16.mxu0 0
      %4784 = vmatpush1.bf16.msra.mxu0 0
      %4785 = vmatprep.subr.bf16.mxu0 0
      %4786 = vmatpush1.bf16.msra.mxu0 0
      %4787 = vmatprep.subr.bf16.mxu0 0
      %4788 = vmatpush1.bf16.msra.mxu0 0
      %4789 = vmatprep.subr.bf16.mxu0 0
      %4790 = vmatpush1.bf16.msra.mxu0 0
      %4791 = vmatprep.subr.bf16.mxu0 0
      %4792 = vmatpush1.bf16.msra.mxu0 0
      %4793 = vmatprep.subr.bf16.mxu0 0
      %4794 = vmatpush1.bf16.msra.mxu0 0
      %4795 = vmatprep.subr.bf16.mxu0 0
      %4796 = vmatpush1.bf16.msra.mxu0 0
      %4797 = vmatprep.subr.bf16.mxu0 0
      %4798 = vmatpush1.bf16.msra.mxu0 0
      %4799 = vmatprep.subr.bf16.mxu0 0
      %4800 = vmatpush1.bf16.msra.mxu0 0
      %4801 = vmatprep.subr.bf16.mxu0 0
      %4802 = vmatpush1.bf16.msra.mxu0 0
      %4803 = vmatprep.subr.bf16.mxu0 0
      %4804 = vmatpush1.bf16.msra.mxu0 0
      %4805 = vmatprep.subr.bf16.mxu0 0
      %4806 = vmatpush1.bf16.msra.mxu0 0
      %4807 = vmatprep.subr.bf16.mxu0 0
      %4808 = vmatpush1.bf16.msra.mxu0 0
      %4809 = vmatprep.subr.bf16.mxu0 0
      %4810 = vmatpush1.bf16.msra.mxu0 0
      %4811 = vmatprep.mubr.bf16.mxu0 0
      %4812 = vmatmul.mubr.bf16.gmra.mrb[0].mxu0 %v4377
      %v4813 = vpop.f32.mrb[0].mxu0
      %v4814 = vadd.f32 0.0, %v4813
      %v4815 = vpop.f32.mrb[0].mxu0
      %v4816 = vadd.f32 0.0, %v4815
      %v4817 = vpop.f32.mrb[0].mxu0
      %v4818 = vpop.f32.mrb[0].mxu0
      %4819 = vdwg.mxu0
      %4820 = vmatprep.subr.bf16.mxu0 %v4437
      %4821 = vmatpush1.bf16.msra.mxu0 %v4434
      %4822 = vmatprep.subr.bf16.mxu0 0
      %4823 = vmatpush1.bf16.msra.mxu0 0
      %4824 = vmatprep.subr.bf16.mxu0 0
      %4825 = vmatpush1.bf16.msra.mxu0 0
      %4826 = vmatprep.subr.bf16.mxu0 0
      %4827 = vmatpush1.bf16.msra.mxu0 0
      %4828 = vmatprep.subr.bf16.mxu0 0
      %4829 = vmatpush1.bf16.msra.mxu0 0
      %4830 = vmatprep.subr.bf16.mxu0 0
      %4831 = vmatpush1.bf16.msra.mxu0 0
      %4832 = vmatprep.subr.bf16.mxu0 0
      %4833 = vmatpush1.bf16.msra.mxu0 0
      %4834 = vmatprep.subr.bf16.mxu0 0
      %4835 = vmatpush1.bf16.msra.mxu0 0
      %4836 = vmatprep.subr.bf16.mxu0 0
      %4837 = vmatpush1.bf16.msra.mxu0 0
      %4838 = vmatprep.subr.bf16.mxu0 0
      %4839 = vmatpush1.bf16.msra.mxu0 0
      %4840 = vmatprep.subr.bf16.mxu0 0
      %4841 = vmatpush1.bf16.msra.mxu0 0
      %4842 = vmatprep.subr.bf16.mxu0 0
      %4843 = vmatpush1.bf16.msra.mxu0 0
      %4844 = vmatprep.subr.bf16.mxu0 0
      %4845 = vmatpush1.bf16.msra.mxu0 0
      %4846 = vmatprep.subr.bf16.mxu0 0
      %4847 = vmatpush1.bf16.msra.mxu0 0
      %4848 = vmatprep.subr.bf16.mxu0 0
      %4849 = vmatpush1.bf16.msra.mxu0 0
      %4850 = vmatprep.subr.bf16.mxu0 0
      %4851 = vmatpush1.bf16.msra.mxu0 0
      %4852 = vmatprep.mubr.bf16.mxu0 0
      %4853 = vmatmul.mubr.bf16.gmra.mrb[0].mxu0 %v4377
      %v4854 = vpop.f32.mrb[0].mxu0
      %v4855 = vadd.f32 0.0, %v4854
      %v4856 = vpop.f32.mrb[0].mxu0
      %v4857 = vadd.f32 0.0, %v4856
      %v4858 = vpop.f32.mrb[0].mxu0
      %v4859 = vpop.f32.mrb[0].mxu0
      %4860 = vdwg.mxu0
      %4861 = vmatprep.subr.bf16.mxu0 %v4443
      %4862 = vmatpush1.bf16.msra.mxu0 %v4440
      %4863 = vmatprep.subr.bf16.mxu0 0
      %4864 = vmatpush1.bf16.msra.mxu0 0
      %4865 = vmatprep.subr.bf16.mxu0 0
      %4866 = vmatpush1.bf16.msra.mxu0 0
      %4867 = vmatprep.subr.bf16.mxu0 0
      %4868 = vmatpush1.bf16.msra.mxu0 0
      %4869 = vmatprep.subr.bf16.mxu0 0
      %4870 = vmatpush1.bf16.msra.mxu0 0
      %4871 = vmatprep.subr.bf16.mxu0 0
      %4872 = vmatpush1.bf16.msra.mxu0 0
      %4873 = vmatprep.subr.bf16.mxu0 0
      %4874 = vmatpush1.bf16.msra.mxu0 0
      %4875 = vmatprep.subr.bf16.mxu0 0
      %4876 = vmatpush1.bf16.msra.mxu0 0
      %4877 = vmatprep.subr.bf16.mxu0 0
      %4878 = vmatpush1.bf16.msra.mxu0 0
      %4879 = vmatprep.subr.bf16.mxu0 0
      %4880 = vmatpush1.bf16.msra.mxu0 0
      %4881 = vmatprep.subr.bf16.mxu0 0
      %4882 = vmatpush1.bf16.msra.mxu0 0
      %4883 = vmatprep.subr.bf16.mxu0 0
      %4884 = vmatpush1.bf16.msra.mxu0 0
      %4885 = vmatprep.subr.bf16.mxu0 0
      %4886 = vmatpush1.bf16.msra.mxu0 0
      %4887 = vmatprep.subr.bf16.mxu0 0
      %4888 = vmatpush1.bf16.msra.mxu0 0
      %4889 = vmatprep.subr.bf16.mxu0 0
      %4890 = vmatpush1.bf16.msra.mxu0 0
      %4891 = vmatprep.subr.bf16.mxu0 0
      %4892 = vmatpush1.bf16.msra.mxu0 0
      %4893 = vmatprep.mubr.bf16.mxu0 0
      %4894 = vmatmul.mubr.bf16.gmra.mrb[0].mxu0 %v4377
      %v4895 = vpop.f32.mrb[0].mxu0
      %v4896 = vadd.f32 0.0, %v4895
      %v4897 = vpop.f32.mrb[0].mxu0
      %v4898 = vadd.f32 0.0, %v4897
      %v4899 = vpop.f32.mrb[0].mxu0
      %v4900 = vpop.f32.mrb[0].mxu0
      %4901 = vdwg.mxu0
      %4902 = vmatprep.subr.bf16.mxu0 %v4449
      %4903 = vmatpush1.bf16.msra.mxu0 %v4446
      %4904 = vmatprep.subr.bf16.mxu0 0
      %4905 = vmatpush1.bf16.msra.mxu0 0
      %4906 = vmatprep.subr.bf16.mxu0 0
      %4907 = vmatpush1.bf16.msra.mxu0 0
      %4908 = vmatprep.subr.bf16.mxu0 0
      %4909 = vmatpush1.bf16.msra.mxu0 0
      %4910 = vmatprep.subr.bf16.mxu0 0
      %4911 = vmatpush1.bf16.msra.mxu0 0
      %4912 = vmatprep.subr.bf16.mxu0 0
      %4913 = vmatpush1.bf16.msra.mxu0 0
      %4914 = vmatprep.subr.bf16.mxu0 0
      %4915 = vmatpush1.bf16.msra.mxu0 0
      %4916 = vmatprep.subr.bf16.mxu0 0
      %4917 = vmatpush1.bf16.msra.mxu0 0
      %4918 = vmatprep.subr.bf16.mxu0 0
      %4919 = vmatpush1.bf16.msra.mxu0 0
      %4920 = vmatprep.subr.bf16.mxu0 0
      %4921 = vmatpush1.bf16.msra.mxu0 0
      %4922 = vmatprep.subr.bf16.mxu0 0
      %4923 = vmatpush1.bf16.msra.mxu0 0
      %4924 = vmatprep.subr.bf16.mxu0 0
      %4925 = vmatpush1.bf16.msra.mxu0 0
      %4926 = vmatprep.subr.bf16.mxu0 0
      %4927 = vmatpush1.bf16.msra.mxu0 0
      %4928 = vmatprep.subr.bf16.mxu0 0
      %4929 = vmatpush1.bf16.msra.mxu0 0
      %4930 = vmatprep.subr.bf16.mxu0 0
      %4931 = vmatpush1.bf16.msra.mxu0 0
      %4932 = vmatprep.subr.bf16.mxu0 0
      %4933 = vmatpush1.bf16.msra.mxu0 0
      %4934 = vmatprep.mubr.bf16.mxu0 0
      %4935 = vmatmul.mubr.bf16.gmra.mrb[0].mxu0 %v4377
      %v4936 = vpop.f32.mrb[0].mxu0
      %v4937 = vadd.f32 0.0, %v4936
      %v4938 = vpop.f32.mrb[0].mxu0
      %v4939 = vadd.f32 0.0, %v4938
      %v4940 = vpop.f32.mrb[0].mxu0
      %v4941 = vpop.f32.mrb[0].mxu0
      %4942 = vdwg.mxu0
      %v4943 = vadd.f32 %v4275, %v4486
      %v4944 = vadd.f32 %v4276, %v4488
      %v4945 = vadd.f32 %v4277, %v4527
      %v4946 = vadd.f32 %v4278, %v4529
      %v4947 = vadd.f32 %v4279, %v4568
      %v4948 = vadd.f32 %v4280, %v4570
      %v4949 = vadd.f32 %v4281, %v4609
      %v4950 = vadd.f32 %v4282, %v4611
      %v4951 = vadd.f32 %v4283, %v4650
      %v4952 = vadd.f32 %v4284, %v4652
      %v4953 = vadd.f32 %v4285, %v4691
      %v4954 = vadd.f32 %v4286, %v4693
      %v4955 = vadd.f32 %v4287, %v4732
      %v4956 = vadd.f32 %v4288, %v4734
      %v4957 = vadd.f32 %v4289, %v4773
      %v4958 = vadd.f32 %v4290, %v4775
      %v4959 = vadd.f32 %v4291, %v4814
      %v4960 = vadd.f32 %v4292, %v4816
      %v4961 = vadd.f32 %v4293, %v4855
      %v4962 = vadd.f32 %v4294, %v4857
      %v4963 = vadd.f32 %v4295, %v4896
      %v4964 = vadd.f32 %v4296, %v4898
      %v4965 = vadd.f32 %v4297, %v4937
      %v4966 = vadd.f32 %v4298, %v4939
      %s4967 = scalar_lea.vmem %s1, 28
      %v4968 = vld [vmem:[%s4967] sm:$0xf]
      %4969 = vrot.lane.b32.xlu0 %v314, 91
      %v4970 = vpop.permute.xlu0 %4969
      %4971 = vrot.lane.b32.xlu0 %v322, 91
      %v4972 = vpop.permute.xlu0 %4971
      %4973 = vrot.lane.b32.xlu0 %v321, 91
      %v4974 = vpop.permute.xlu0 %4973
      %4975 = vrot.lane.b32.xlu0 %v323, 91
      %v4976 = vpop.permute.xlu0 %4975
      %4977 = vrot.lane.b32.xlu0 %v331, 91
      %v4978 = vpop.permute.xlu0 %4977
      %4979 = vrot.lane.b32.xlu0 %v339, 91
      %v4980 = vpop.permute.xlu0 %4979
      %4981 = vrot.lane.b32.xlu0 %v338, 91
      %v4982 = vpop.permute.xlu0 %4981
      %4983 = vrot.lane.b32.xlu0 %v340, 91
      %v4984 = vpop.permute.xlu0 %4983
      %4985 = vrot.lane.b32.xlu0 %v348, 91
      %v4986 = vpop.permute.xlu0 %4985
      %4987 = vrot.lane.b32.xlu0 %v356, 91
      %v4988 = vpop.permute.xlu0 %4987
      %4989 = vrot.lane.b32.xlu0 %v355, 91
      %v4990 = vpop.permute.xlu0 %4989
      %4991 = vrot.lane.b32.xlu0 %v357, 91
      %v4992 = vpop.permute.xlu0 %4991
      %4993 = vrot.lane.b32.xlu0 %v365, 91
      %v4994 = vpop.permute.xlu0 %4993
      %4995 = vrot.lane.b32.xlu0 %v373, 91
      %v4996 = vpop.permute.xlu0 %4995
      %4997 = vrot.lane.b32.xlu0 %v372, 91
      %v4998 = vpop.permute.xlu0 %4997
      %4999 = vrot.lane.b32.xlu0 %v374, 91
      %v5000 = vpop.permute.xlu0 %4999
      %5001 = vrot.lane.b32.xlu0 %v382, 91
      %v5002 = vpop.permute.xlu0 %5001
      %5003 = vrot.lane.b32.xlu0 %v390, 91
      %v5004 = vpop.permute.xlu0 %5003
      %5005 = vrot.lane.b32.xlu0 %v389, 91
      %v5006 = vpop.permute.xlu0 %5005
      %5007 = vrot.lane.b32.xlu0 %v391, 91
      %v5008 = vpop.permute.xlu0 %5007
      %5009 = vrot.lane.b32.xlu0 %v399, 91
      %v5010 = vpop.permute.xlu0 %5009
      %5011 = vrot.lane.b32.xlu0 %v407, 91
      %v5012 = vpop.permute.xlu0 %5011
      %5013 = vrot.lane.b32.xlu0 %v406, 91
      %v5014 = vpop.permute.xlu0 %5013
      %5015 = vrot.lane.b32.xlu0 %v408, 91
      %v5016 = vpop.permute.xlu0 %5015
      %5017 = vrot.lane.b32.xlu0 %v415, 91
      %v5018 = vpop.permute.xlu0 %5017
      %vm5019 = vcmask 744448
      %v5020 = vsel %vm5019, %v4970, %v4972
      %v5021 = vsel %vm5019, %v4972, %v4974
      %v5022 = vsel %vm5019, %v4974, %v4976
      %v5023 = vsel %vm5019, %v4976, %v4978
      %v5024 = vsel %vm5019, %v4978, %v4980
      %v5025 = vsel %vm5019, %v4980, %v4982
      %v5026 = vsel %vm5019, %v4982, %v4984
      %v5027 = vsel %vm5019, %v4984, %v4986
      %v5028 = vsel %vm5019, %v4986, %v4988
      %v5029 = vsel %vm5019, %v4988, %v4990
      %v5030 = vsel %vm5019, %v4990, %v4992
      %v5031 = vsel %vm5019, %v4992, %v4994
      %v5032 = vsel %vm5019, %v4994, %v4996
      %v5033 = vsel %vm5019, %v4996, %v4998
      %v5034 = vsel %vm5019, %v4998, %v5000
      %v5035 = vsel %vm5019, %v5000, %v5002
      %v5036 = vsel %vm5019, %v5002, %v5004
      %v5037 = vsel %vm5019, %v5004, %v5006
      %v5038 = vsel %vm5019, %v5006, %v5008
      %v5039 = vsel %vm5019, %v5008, %v5010
      %v5040 = vsel %vm5019, %v5010, %v5012
      %v5041 = vsel %vm5019, %v5012, %v5014
      %v5042 = vsel %vm5019, %v5014, %v5016
      %v5043 = vsel %vm5019, %v5016, %v5018
      %v5045 = vsel %vm491, %v4968, 0
      %v5048 = vsel %vm495, %v5020, 0
      %v5051 = vsel %vm495, %v5021, 0
      %v5054 = vsel %vm495, %v5022, 0
      %v5057 = vsel %vm495, %v5023, 0
      %v5060 = vsel %vm495, %v5024, 0
      %v5063 = vsel %vm495, %v5025, 0
      %v5066 = vsel %vm495, %v5026, 0
      %v5069 = vsel %vm495, %v5027, 0
      %v5072 = vsel %vm495, %v5028, 0
      %v5075 = vsel %vm495, %v5029, 0
      %v5078 = vsel %vm495, %v5030, 0
      %v5081 = vsel %vm495, %v5031, 0
      %v5084 = vsel %vm495, %v5032, 0
      %v5087 = vsel %vm495, %v5033, 0
      %v5090 = vsel %vm495, %v5034, 0
      %v5093 = vsel %vm495, %v5035, 0
      %v5096 = vsel %vm495, %v5036, 0
      %v5099 = vsel %vm495, %v5037, 0
      %v5102 = vsel %vm495, %v5038, 0
      %v5105 = vsel %vm495, %v5039, 0
      %v5108 = vsel %vm495, %v5040, 0
      %v5111 = vsel %vm495, %v5041, 0
      %v5114 = vsel %vm495, %v5042, 0
      %v5117 = vsel %vm495, %v5043, 0
      %5119 = vmatprep.subr.bf16.mxu0 %v5051
      %5120 = vmatpush1.bf16.msra.mxu0 %v5048
      %5121 = vmatprep.subr.bf16.mxu0 0
      %5122 = vmatpush1.bf16.msra.mxu0 0
      %5123 = vmatprep.subr.bf16.mxu0 0
      %5124 = vmatpush1.bf16.msra.mxu0 0
      %5125 = vmatprep.subr.bf16.mxu0 0
      %5126 = vmatpush1.bf16.msra.mxu0 0
      %5127 = vmatprep.subr.bf16.mxu0 0
      %5128 = vmatpush1.bf16.msra.mxu0 0
      %5129 = vmatprep.subr.bf16.mxu0 0
      %5130 = vmatpush1.bf16.msra.mxu0 0
      %5131 = vmatprep.subr.bf16.mxu0 0
      %5132 = vmatpush1.bf16.msra.mxu0 0
      %5133 = vmatprep.subr.bf16.mxu0 0
      %5134 = vmatpush1.bf16.msra.mxu0 0
      %5135 = vmatprep.subr.bf16.mxu0 0
      %5136 = vmatpush1.bf16.msra.mxu0 0
      %5137 = vmatprep.subr.bf16.mxu0 0
      %5138 = vmatpush1.bf16.msra.mxu0 0
      %5139 = vmatprep.subr.bf16.mxu0 0
      %5140 = vmatpush1.bf16.msra.mxu0 0
      %5141 = vmatprep.subr.bf16.mxu0 0
      %5142 = vmatpush1.bf16.msra.mxu0 0
      %5143 = vmatprep.subr.bf16.mxu0 0
      %5144 = vmatpush1.bf16.msra.mxu0 0
      %5145 = vmatprep.subr.bf16.mxu0 0
      %5146 = vmatpush1.bf16.msra.mxu0 0
      %5147 = vmatprep.subr.bf16.mxu0 0
      %5148 = vmatpush1.bf16.msra.mxu0 0
      %5149 = vmatprep.subr.bf16.mxu0 0
      %5150 = vmatpush1.bf16.msra.mxu0 0
      %5151 = vmatprep.mubr.bf16.mxu0 0
      %5152 = vmatmul.mubr.bf16.gmra.mrb[0].mxu0 %v5045
      %v5153 = vpop.f32.mrb[0].mxu0
      %v5154 = vadd.f32 0.0, %v5153
      %v5155 = vpop.f32.mrb[0].mxu0
      %v5156 = vadd.f32 0.0, %v5155
      %v5157 = vpop.f32.mrb[0].mxu0
      %v5158 = vpop.f32.mrb[0].mxu0
      %5159 = vdwg.mxu0
      %5160 = vmatprep.subr.bf16.mxu0 %v5057
      %5161 = vmatpush1.bf16.msra.mxu0 %v5054
      %5162 = vmatprep.subr.bf16.mxu0 0
      %5163 = vmatpush1.bf16.msra.mxu0 0
      %5164 = vmatprep.subr.bf16.mxu0 0
      %5165 = vmatpush1.bf16.msra.mxu0 0
      %5166 = vmatprep.subr.bf16.mxu0 0
      %5167 = vmatpush1.bf16.msra.mxu0 0
      %5168 = vmatprep.subr.bf16.mxu0 0
      %5169 = vmatpush1.bf16.msra.mxu0 0
      %5170 = vmatprep.subr.bf16.mxu0 0
      %5171 = vmatpush1.bf16.msra.mxu0 0
      %5172 = vmatprep.subr.bf16.mxu0 0
      %5173 = vmatpush1.bf16.msra.mxu0 0
      %5174 = vmatprep.subr.bf16.mxu0 0
      %5175 = vmatpush1.bf16.msra.mxu0 0
      %5176 = vmatprep.subr.bf16.mxu0 0
      %5177 = vmatpush1.bf16.msra.mxu0 0
      %5178 = vmatprep.subr.bf16.mxu0 0
      %5179 = vmatpush1.bf16.msra.mxu0 0
      %5180 = vmatprep.subr.bf16.mxu0 0
      %5181 = vmatpush1.bf16.msra.mxu0 0
      %5182 = vmatprep.subr.bf16.mxu0 0
      %5183 = vmatpush1.bf16.msra.mxu0 0
      %5184 = vmatprep.subr.bf16.mxu0 0
      %5185 = vmatpush1.bf16.msra.mxu0 0
      %5186 = vmatprep.subr.bf16.mxu0 0
      %5187 = vmatpush1.bf16.msra.mxu0 0
      %5188 = vmatprep.subr.bf16.mxu0 0
      %5189 = vmatpush1.bf16.msra.mxu0 0
      %5190 = vmatprep.subr.bf16.mxu0 0
      %5191 = vmatpush1.bf16.msra.mxu0 0
      %5192 = vmatprep.mubr.bf16.mxu0 0
      %5193 = vmatmul.mubr.bf16.gmra.mrb[0].mxu0 %v5045
      %v5194 = vpop.f32.mrb[0].mxu0
      %v5195 = vadd.f32 0.0, %v5194
      %v5196 = vpop.f32.mrb[0].mxu0
      %v5197 = vadd.f32 0.0, %v5196
      %v5198 = vpop.f32.mrb[0].mxu0
      %v5199 = vpop.f32.mrb[0].mxu0
      %5200 = vdwg.mxu0
      %5201 = vmatprep.subr.bf16.mxu0 %v5063
      %5202 = vmatpush1.bf16.msra.mxu0 %v5060
      %5203 = vmatprep.subr.bf16.mxu0 0
      %5204 = vmatpush1.bf16.msra.mxu0 0
      %5205 = vmatprep.subr.bf16.mxu0 0
      %5206 = vmatpush1.bf16.msra.mxu0 0
      %5207 = vmatprep.subr.bf16.mxu0 0
      %5208 = vmatpush1.bf16.msra.mxu0 0
      %5209 = vmatprep.subr.bf16.mxu0 0
      %5210 = vmatpush1.bf16.msra.mxu0 0
      %5211 = vmatprep.subr.bf16.mxu0 0
      %5212 = vmatpush1.bf16.msra.mxu0 0
      %5213 = vmatprep.subr.bf16.mxu0 0
      %5214 = vmatpush1.bf16.msra.mxu0 0
      %5215 = vmatprep.subr.bf16.mxu0 0
      %5216 = vmatpush1.bf16.msra.mxu0 0
      %5217 = vmatprep.subr.bf16.mxu0 0
      %5218 = vmatpush1.bf16.msra.mxu0 0
      %5219 = vmatprep.subr.bf16.mxu0 0
      %5220 = vmatpush1.bf16.msra.mxu0 0
      %5221 = vmatprep.subr.bf16.mxu0 0
      %5222 = vmatpush1.bf16.msra.mxu0 0
      %5223 = vmatprep.subr.bf16.mxu0 0
      %5224 = vmatpush1.bf16.msra.mxu0 0
      %5225 = vmatprep.subr.bf16.mxu0 0
      %5226 = vmatpush1.bf16.msra.mxu0 0
      %5227 = vmatprep.subr.bf16.mxu0 0
      %5228 = vmatpush1.bf16.msra.mxu0 0
      %5229 = vmatprep.subr.bf16.mxu0 0
      %5230 = vmatpush1.bf16.msra.mxu0 0
      %5231 = vmatprep.subr.bf16.mxu0 0
      %5232 = vmatpush1.bf16.msra.mxu0 0
      %5233 = vmatprep.mubr.bf16.mxu0 0
      %5234 = vmatmul.mubr.bf16.gmra.mrb[0].mxu0 %v5045
      %v5235 = vpop.f32.mrb[0].mxu0
      %v5236 = vadd.f32 0.0, %v5235
      %v5237 = vpop.f32.mrb[0].mxu0
      %v5238 = vadd.f32 0.0, %v5237
      %v5239 = vpop.f32.mrb[0].mxu0
      %v5240 = vpop.f32.mrb[0].mxu0
      %5241 = vdwg.mxu0
      %5242 = vmatprep.subr.bf16.mxu0 %v5069
      %5243 = vmatpush1.bf16.msra.mxu0 %v5066
      %5244 = vmatprep.subr.bf16.mxu0 0
      %5245 = vmatpush1.bf16.msra.mxu0 0
      %5246 = vmatprep.subr.bf16.mxu0 0
      %5247 = vmatpush1.bf16.msra.mxu0 0
      %5248 = vmatprep.subr.bf16.mxu0 0
      %5249 = vmatpush1.bf16.msra.mxu0 0
      %5250 = vmatprep.subr.bf16.mxu0 0
      %5251 = vmatpush1.bf16.msra.mxu0 0
      %5252 = vmatprep.subr.bf16.mxu0 0
      %5253 = vmatpush1.bf16.msra.mxu0 0
      %5254 = vmatprep.subr.bf16.mxu0 0
      %5255 = vmatpush1.bf16.msra.mxu0 0
      %5256 = vmatprep.subr.bf16.mxu0 0
      %5257 = vmatpush1.bf16.msra.mxu0 0
      %5258 = vmatprep.subr.bf16.mxu0 0
      %5259 = vmatpush1.bf16.msra.mxu0 0
      %5260 = vmatprep.subr.bf16.mxu0 0
      %5261 = vmatpush1.bf16.msra.mxu0 0
      %5262 = vmatprep.subr.bf16.mxu0 0
      %5263 = vmatpush1.bf16.msra.mxu0 0
      %5264 = vmatprep.subr.bf16.mxu0 0
      %5265 = vmatpush1.bf16.msra.mxu0 0
      %5266 = vmatprep.subr.bf16.mxu0 0
      %5267 = vmatpush1.bf16.msra.mxu0 0
      %5268 = vmatprep.subr.bf16.mxu0 0
      %5269 = vmatpush1.bf16.msra.mxu0 0
      %5270 = vmatprep.subr.bf16.mxu0 0
      %5271 = vmatpush1.bf16.msra.mxu0 0
      %5272 = vmatprep.subr.bf16.mxu0 0
      %5273 = vmatpush1.bf16.msra.mxu0 0
      %5274 = vmatprep.mubr.bf16.mxu0 0
      %5275 = vmatmul.mubr.bf16.gmra.mrb[0].mxu0 %v5045
      %v5276 = vpop.f32.mrb[0].mxu0
      %v5277 = vadd.f32 0.0, %v5276
      %v5278 = vpop.f32.mrb[0].mxu0
      %v5279 = vadd.f32 0.0, %v5278
      %v5280 = vpop.f32.mrb[0].mxu0
      %v5281 = vpop.f32.mrb[0].mxu0
      %5282 = vdwg.mxu0
      %5283 = vmatprep.subr.bf16.mxu0 %v5075
      %5284 = vmatpush1.bf16.msra.mxu0 %v5072
      %5285 = vmatprep.subr.bf16.mxu0 0
      %5286 = vmatpush1.bf16.msra.mxu0 0
      %5287 = vmatprep.subr.bf16.mxu0 0
      %5288 = vmatpush1.bf16.msra.mxu0 0
      %5289 = vmatprep.subr.bf16.mxu0 0
      %5290 = vmatpush1.bf16.msra.mxu0 0
      %5291 = vmatprep.subr.bf16.mxu0 0
      %5292 = vmatpush1.bf16.msra.mxu0 0
      %5293 = vmatprep.subr.bf16.mxu0 0
      %5294 = vmatpush1.bf16.msra.mxu0 0
      %5295 = vmatprep.subr.bf16.mxu0 0
      %5296 = vmatpush1.bf16.msra.mxu0 0
      %5297 = vmatprep.subr.bf16.mxu0 0
      %5298 = vmatpush1.bf16.msra.mxu0 0
      %5299 = vmatprep.subr.bf16.mxu0 0
      %5300 = vmatpush1.bf16.msra.mxu0 0
      %5301 = vmatprep.subr.bf16.mxu0 0
      %5302 = vmatpush1.bf16.msra.mxu0 0
      %5303 = vmatprep.subr.bf16.mxu0 0
      %5304 = vmatpush1.bf16.msra.mxu0 0
      %5305 = vmatprep.subr.bf16.mxu0 0
      %5306 = vmatpush1.bf16.msra.mxu0 0
      %5307 = vmatprep.subr.bf16.mxu0 0
      %5308 = vmatpush1.bf16.msra.mxu0 0
      %5309 = vmatprep.subr.bf16.mxu0 0
      %5310 = vmatpush1.bf16.msra.mxu0 0
      %5311 = vmatprep.subr.bf16.mxu0 0
      %5312 = vmatpush1.bf16.msra.mxu0 0
      %5313 = vmatprep.subr.bf16.mxu0 0
      %5314 = vmatpush1.bf16.msra.mxu0 0
      %5315 = vmatprep.mubr.bf16.mxu0 0
      %5316 = vmatmul.mubr.bf16.gmra.mrb[0].mxu0 %v5045
      %v5317 = vpop.f32.mrb[0].mxu0
      %v5318 = vadd.f32 0.0, %v5317
      %v5319 = vpop.f32.mrb[0].mxu0
      %v5320 = vadd.f32 0.0, %v5319
      %v5321 = vpop.f32.mrb[0].mxu0
      %v5322 = vpop.f32.mrb[0].mxu0
      %5323 = vdwg.mxu0
      %5324 = vmatprep.subr.bf16.mxu0 %v5081
      %5325 = vmatpush1.bf16.msra.mxu0 %v5078
      %5326 = vmatprep.subr.bf16.mxu0 0
      %5327 = vmatpush1.bf16.msra.mxu0 0
      %5328 = vmatprep.subr.bf16.mxu0 0
      %5329 = vmatpush1.bf16.msra.mxu0 0
      %5330 = vmatprep.subr.bf16.mxu0 0
      %5331 = vmatpush1.bf16.msra.mxu0 0
      %5332 = vmatprep.subr.bf16.mxu0 0
      %5333 = vmatpush1.bf16.msra.mxu0 0
      %5334 = vmatprep.subr.bf16.mxu0 0
      %5335 = vmatpush1.bf16.msra.mxu0 0
      %5336 = vmatprep.subr.bf16.mxu0 0
      %5337 = vmatpush1.bf16.msra.mxu0 0
      %5338 = vmatprep.subr.bf16.mxu0 0
      %5339 = vmatpush1.bf16.msra.mxu0 0
      %5340 = vmatprep.subr.bf16.mxu0 0
      %5341 = vmatpush1.bf16.msra.mxu0 0
      %5342 = vmatprep.subr.bf16.mxu0 0
      %5343 = vmatpush1.bf16.msra.mxu0 0
      %5344 = vmatprep.subr.bf16.mxu0 0
      %5345 = vmatpush1.bf16.msra.mxu0 0
      %5346 = vmatprep.subr.bf16.mxu0 0
      %5347 = vmatpush1.bf16.msra.mxu0 0
      %5348 = vmatprep.subr.bf16.mxu0 0
      %5349 = vmatpush1.bf16.msra.mxu0 0
      %5350 = vmatprep.subr.bf16.mxu0 0
      %5351 = vmatpush1.bf16.msra.mxu0 0
      %5352 = vmatprep.subr.bf16.mxu0 0
      %5353 = vmatpush1.bf16.msra.mxu0 0
      %5354 = vmatprep.subr.bf16.mxu0 0
      %5355 = vmatpush1.bf16.msra.mxu0 0
      %5356 = vmatprep.mubr.bf16.mxu0 0
      %5357 = vmatmul.mubr.bf16.gmra.mrb[0].mxu0 %v5045
      %v5358 = vpop.f32.mrb[0].mxu0
      %v5359 = vadd.f32 0.0, %v5358
      %v5360 = vpop.f32.mrb[0].mxu0
      %v5361 = vadd.f32 0.0, %v5360
      %v5362 = vpop.f32.mrb[0].mxu0
      %v5363 = vpop.f32.mrb[0].mxu0
      %5364 = vdwg.mxu0
      %5365 = vmatprep.subr.bf16.mxu0 %v5087
      %5366 = vmatpush1.bf16.msra.mxu0 %v5084
      %5367 = vmatprep.subr.bf16.mxu0 0
      %5368 = vmatpush1.bf16.msra.mxu0 0
      %5369 = vmatprep.subr.bf16.mxu0 0
      %5370 = vmatpush1.bf16.msra.mxu0 0
      %5371 = vmatprep.subr.bf16.mxu0 0
      %5372 = vmatpush1.bf16.msra.mxu0 0
      %5373 = vmatprep.subr.bf16.mxu0 0
      %5374 = vmatpush1.bf16.msra.mxu0 0
      %5375 = vmatprep.subr.bf16.mxu0 0
      %5376 = vmatpush1.bf16.msra.mxu0 0
      %5377 = vmatprep.subr.bf16.mxu0 0
      %5378 = vmatpush1.bf16.msra.mxu0 0
      %5379 = vmatprep.subr.bf16.mxu0 0
      %5380 = vmatpush1.bf16.msra.mxu0 0
      %5381 = vmatprep.subr.bf16.mxu0 0
      %5382 = vmatpush1.bf16.msra.mxu0 0
      %5383 = vmatprep.subr.bf16.mxu0 0
      %5384 = vmatpush1.bf16.msra.mxu0 0
      %5385 = vmatprep.subr.bf16.mxu0 0
      %5386 = vmatpush1.bf16.msra.mxu0 0
      %5387 = vmatprep.subr.bf16.mxu0 0
      %5388 = vmatpush1.bf16.msra.mxu0 0
      %5389 = vmatprep.subr.bf16.mxu0 0
      %5390 = vmatpush1.bf16.msra.mxu0 0
      %5391 = vmatprep.subr.bf16.mxu0 0
      %5392 = vmatpush1.bf16.msra.mxu0 0
      %5393 = vmatprep.subr.bf16.mxu0 0
      %5394 = vmatpush1.bf16.msra.mxu0 0
      %5395 = vmatprep.subr.bf16.mxu0 0
      %5396 = vmatpush1.bf16.msra.mxu0 0
      %5397 = vmatprep.mubr.bf16.mxu0 0
      %5398 = vmatmul.mubr.bf16.gmra.mrb[0].mxu0 %v5045
      %v5399 = vpop.f32.mrb[0].mxu0
      %v5400 = vadd.f32 0.0, %v5399
      %v5401 = vpop.f32.mrb[0].mxu0
      %v5402 = vadd.f32 0.0, %v5401
      %v5403 = vpop.f32.mrb[0].mxu0
      %v5404 = vpop.f32.mrb[0].mxu0
      %5405 = vdwg.mxu0
      %5406 = vmatprep.subr.bf16.mxu0 %v5093
      %5407 = vmatpush1.bf16.msra.mxu0 %v5090
      %5408 = vmatprep.subr.bf16.mxu0 0
      %5409 = vmatpush1.bf16.msra.mxu0 0
      %5410 = vmatprep.subr.bf16.mxu0 0
      %5411 = vmatpush1.bf16.msra.mxu0 0
      %5412 = vmatprep.subr.bf16.mxu0 0
      %5413 = vmatpush1.bf16.msra.mxu0 0
      %5414 = vmatprep.subr.bf16.mxu0 0
      %5415 = vmatpush1.bf16.msra.mxu0 0
      %5416 = vmatprep.subr.bf16.mxu0 0
      %5417 = vmatpush1.bf16.msra.mxu0 0
      %5418 = vmatprep.subr.bf16.mxu0 0
      %5419 = vmatpush1.bf16.msra.mxu0 0
      %5420 = vmatprep.subr.bf16.mxu0 0
      %5421 = vmatpush1.bf16.msra.mxu0 0
      %5422 = vmatprep.subr.bf16.mxu0 0
      %5423 = vmatpush1.bf16.msra.mxu0 0
      %5424 = vmatprep.subr.bf16.mxu0 0
      %5425 = vmatpush1.bf16.msra.mxu0 0
      %5426 = vmatprep.subr.bf16.mxu0 0
      %5427 = vmatpush1.bf16.msra.mxu0 0
      %5428 = vmatprep.subr.bf16.mxu0 0
      %5429 = vmatpush1.bf16.msra.mxu0 0
      %5430 = vmatprep.subr.bf16.mxu0 0
      %5431 = vmatpush1.bf16.msra.mxu0 0
      %5432 = vmatprep.subr.bf16.mxu0 0
      %5433 = vmatpush1.bf16.msra.mxu0 0
      %5434 = vmatprep.subr.bf16.mxu0 0
      %5435 = vmatpush1.bf16.msra.mxu0 0
      %5436 = vmatprep.subr.bf16.mxu0 0
      %5437 = vmatpush1.bf16.msra.mxu0 0
      %5438 = vmatprep.mubr.bf16.mxu0 0
      %5439 = vmatmul.mubr.bf16.gmra.mrb[0].mxu0 %v5045
      %v5440 = vpop.f32.mrb[0].mxu0
      %v5441 = vadd.f32 0.0, %v5440
      %v5442 = vpop.f32.mrb[0].mxu0
      %v5443 = vadd.f32 0.0, %v5442
      %v5444 = vpop.f32.mrb[0].mxu0
      %v5445 = vpop.f32.mrb[0].mxu0
      %5446 = vdwg.mxu0
      %5447 = vmatprep.subr.bf16.mxu0 %v5099
      %5448 = vmatpush1.bf16.msra.mxu0 %v5096
      %5449 = vmatprep.subr.bf16.mxu0 0
      %5450 = vmatpush1.bf16.msra.mxu0 0
      %5451 = vmatprep.subr.bf16.mxu0 0
      %5452 = vmatpush1.bf16.msra.mxu0 0
      %5453 = vmatprep.subr.bf16.mxu0 0
      %5454 = vmatpush1.bf16.msra.mxu0 0
      %5455 = vmatprep.subr.bf16.mxu0 0
      %5456 = vmatpush1.bf16.msra.mxu0 0
      %5457 = vmatprep.subr.bf16.mxu0 0
      %5458 = vmatpush1.bf16.msra.mxu0 0
      %5459 = vmatprep.subr.bf16.mxu0 0
      %5460 = vmatpush1.bf16.msra.mxu0 0
      %5461 = vmatprep.subr.bf16.mxu0 0
      %5462 = vmatpush1.bf16.msra.mxu0 0
      %5463 = vmatprep.subr.bf16.mxu0 0
      %5464 = vmatpush1.bf16.msra.mxu0 0
      %5465 = vmatprep.subr.bf16.mxu0 0
      %5466 = vmatpush1.bf16.msra.mxu0 0
      %5467 = vmatprep.subr.bf16.mxu0 0
      %5468 = vmatpush1.bf16.msra.mxu0 0
      %5469 = vmatprep.subr.bf16.mxu0 0
      %5470 = vmatpush1.bf16.msra.mxu0 0
      %5471 = vmatprep.subr.bf16.mxu0 0
      %5472 = vmatpush1.bf16.msra.mxu0 0
      %5473 = vmatprep.subr.bf16.mxu0 0
      %5474 = vmatpush1.bf16.msra.mxu0 0
      %5475 = vmatprep.subr.bf16.mxu0 0
      %5476 = vmatpush1.bf16.msra.mxu0 0
      %5477 = vmatprep.subr.bf16.mxu0 0
      %5478 = vmatpush1.bf16.msra.mxu0 0
      %5479 = vmatprep.mubr.bf16.mxu0 0
      %5480 = vmatmul.mubr.bf16.gmra.mrb[0].mxu0 %v5045
      %v5481 = vpop.f32.mrb[0].mxu0
      %v5482 = vadd.f32 0.0, %v5481
      %v5483 = vpop.f32.mrb[0].mxu0
      %v5484 = vadd.f32 0.0, %v5483
      %v5485 = vpop.f32.mrb[0].mxu0
      %v5486 = vpop.f32.mrb[0].mxu0
      %5487 = vdwg.mxu0
      %5488 = vmatprep.subr.bf16.mxu0 %v5105
      %5489 = vmatpush1.bf16.msra.mxu0 %v5102
      %5490 = vmatprep.subr.bf16.mxu0 0
      %5491 = vmatpush1.bf16.msra.mxu0 0
      %5492 = vmatprep.subr.bf16.mxu0 0
      %5493 = vmatpush1.bf16.msra.mxu0 0
      %5494 = vmatprep.subr.bf16.mxu0 0
      %5495 = vmatpush1.bf16.msra.mxu0 0
      %5496 = vmatprep.subr.bf16.mxu0 0
      %5497 = vmatpush1.bf16.msra.mxu0 0
      %5498 = vmatprep.subr.bf16.mxu0 0
      %5499 = vmatpush1.bf16.msra.mxu0 0
      %5500 = vmatprep.subr.bf16.mxu0 0
      %5501 = vmatpush1.bf16.msra.mxu0 0
      %5502 = vmatprep.subr.bf16.mxu0 0
      %5503 = vmatpush1.bf16.msra.mxu0 0
      %5504 = vmatprep.subr.bf16.mxu0 0
      %5505 = vmatpush1.bf16.msra.mxu0 0
      %5506 = vmatprep.subr.bf16.mxu0 0
      %5507 = vmatpush1.bf16.msra.mxu0 0
      %5508 = vmatprep.subr.bf16.mxu0 0
      %5509 = vmatpush1.bf16.msra.mxu0 0
      %5510 = vmatprep.subr.bf16.mxu0 0
      %5511 = vmatpush1.bf16.msra.mxu0 0
      %5512 = vmatprep.subr.bf16.mxu0 0
      %5513 = vmatpush1.bf16.msra.mxu0 0
      %5514 = vmatprep.subr.bf16.mxu0 0
      %5515 = vmatpush1.bf16.msra.mxu0 0
      %5516 = vmatprep.subr.bf16.mxu0 0
      %5517 = vmatpush1.bf16.msra.mxu0 0
      %5518 = vmatprep.subr.bf16.mxu0 0
      %5519 = vmatpush1.bf16.msra.mxu0 0
      %5520 = vmatprep.mubr.bf16.mxu0 0
      %5521 = vmatmul.mubr.bf16.gmra.mrb[0].mxu0 %v5045
      %v5522 = vpop.f32.mrb[0].mxu0
      %v5523 = vadd.f32 0.0, %v5522
      %v5524 = vpop.f32.mrb[0].mxu0
      %v5525 = vadd.f32 0.0, %v5524
      %v5526 = vpop.f32.mrb[0].mxu0
      %v5527 = vpop.f32.mrb[0].mxu0
      %5528 = vdwg.mxu0
      %5529 = vmatprep.subr.bf16.mxu0 %v5111
      %5530 = vmatpush1.bf16.msra.mxu0 %v5108
      %5531 = vmatprep.subr.bf16.mxu0 0
      %5532 = vmatpush1.bf16.msra.mxu0 0
      %5533 = vmatprep.subr.bf16.mxu0 0
      %5534 = vmatpush1.bf16.msra.mxu0 0
      %5535 = vmatprep.subr.bf16.mxu0 0
      %5536 = vmatpush1.bf16.msra.mxu0 0
      %5537 = vmatprep.subr.bf16.mxu0 0
      %5538 = vmatpush1.bf16.msra.mxu0 0
      %5539 = vmatprep.subr.bf16.mxu0 0
      %5540 = vmatpush1.bf16.msra.mxu0 0
      %5541 = vmatprep.subr.bf16.mxu0 0
      %5542 = vmatpush1.bf16.msra.mxu0 0
      %5543 = vmatprep.subr.bf16.mxu0 0
      %5544 = vmatpush1.bf16.msra.mxu0 0
      %5545 = vmatprep.subr.bf16.mxu0 0
      %5546 = vmatpush1.bf16.msra.mxu0 0
      %5547 = vmatprep.subr.bf16.mxu0 0
      %5548 = vmatpush1.bf16.msra.mxu0 0
      %5549 = vmatprep.subr.bf16.mxu0 0
      %5550 = vmatpush1.bf16.msra.mxu0 0
      %5551 = vmatprep.subr.bf16.mxu0 0
      %5552 = vmatpush1.bf16.msra.mxu0 0
      %5553 = vmatprep.subr.bf16.mxu0 0
      %5554 = vmatpush1.bf16.msra.mxu0 0
      %5555 = vmatprep.subr.bf16.mxu0 0
      %5556 = vmatpush1.bf16.msra.mxu0 0
      %5557 = vmatprep.subr.bf16.mxu0 0
      %5558 = vmatpush1.bf16.msra.mxu0 0
      %5559 = vmatprep.subr.bf16.mxu0 0
      %5560 = vmatpush1.bf16.msra.mxu0 0
      %5561 = vmatprep.mubr.bf16.mxu0 0
      %5562 = vmatmul.mubr.bf16.gmra.mrb[0].mxu0 %v5045
      %v5563 = vpop.f32.mrb[0].mxu0
      %v5564 = vadd.f32 0.0, %v5563
      %v5565 = vpop.f32.mrb[0].mxu0
      %v5566 = vadd.f32 0.0, %v5565
      %v5567 = vpop.f32.mrb[0].mxu0
      %v5568 = vpop.f32.mrb[0].mxu0
      %5569 = vdwg.mxu0
      %5570 = vmatprep.subr.bf16.mxu0 %v5117
      %5571 = vmatpush1.bf16.msra.mxu0 %v5114
      %5572 = vmatprep.subr.bf16.mxu0 0
      %5573 = vmatpush1.bf16.msra.mxu0 0
      %5574 = vmatprep.subr.bf16.mxu0 0
      %5575 = vmatpush1.bf16.msra.mxu0 0
      %5576 = vmatprep.subr.bf16.mxu0 0
      %5577 = vmatpush1.bf16.msra.mxu0 0
      %5578 = vmatprep.subr.bf16.mxu0 0
      %5579 = vmatpush1.bf16.msra.mxu0 0
      %5580 = vmatprep.subr.bf16.mxu0 0
      %5581 = vmatpush1.bf16.msra.mxu0 0
      %5582 = vmatprep.subr.bf16.mxu0 0
      %5583 = vmatpush1.bf16.msra.mxu0 0
      %5584 = vmatprep.subr.bf16.mxu0 0
      %5585 = vmatpush1.bf16.msra.mxu0 0
      %5586 = vmatprep.subr.bf16.mxu0 0
      %5587 = vmatpush1.bf16.msra.mxu0 0
      %5588 = vmatprep.subr.bf16.mxu0 0
      %5589 = vmatpush1.bf16.msra.mxu0 0
      %5590 = vmatprep.subr.bf16.mxu0 0
      %5591 = vmatpush1.bf16.msra.mxu0 0
      %5592 = vmatprep.subr.bf16.mxu0 0
      %5593 = vmatpush1.bf16.msra.mxu0 0
      %5594 = vmatprep.subr.bf16.mxu0 0
      %5595 = vmatpush1.bf16.msra.mxu0 0
      %5596 = vmatprep.subr.bf16.mxu0 0
      %5597 = vmatpush1.bf16.msra.mxu0 0
      %5598 = vmatprep.subr.bf16.mxu0 0
      %5599 = vmatpush1.bf16.msra.mxu0 0
      %5600 = vmatprep.subr.bf16.mxu0 0
      %5601 = vmatpush1.bf16.msra.mxu0 0
      %5602 = vmatprep.mubr.bf16.mxu0 0
      %5603 = vmatmul.mubr.bf16.gmra.mrb[0].mxu0 %v5045
      %v5604 = vpop.f32.mrb[0].mxu0
      %v5605 = vadd.f32 0.0, %v5604
      %v5606 = vpop.f32.mrb[0].mxu0
      %v5607 = vadd.f32 0.0, %v5606
      %v5608 = vpop.f32.mrb[0].mxu0
      %v5609 = vpop.f32.mrb[0].mxu0
      %5610 = vdwg.mxu0
      %v5611 = vadd.f32 %v4943, %v5154
      %v5612 = vadd.f32 %v4944, %v5156
      %v5613 = vadd.f32 %v4945, %v5195
      %v5614 = vadd.f32 %v4946, %v5197
      %v5615 = vadd.f32 %v4947, %v5236
      %v5616 = vadd.f32 %v4948, %v5238
      %v5617 = vadd.f32 %v4949, %v5277
      %v5618 = vadd.f32 %v4950, %v5279
      %v5619 = vadd.f32 %v4951, %v5318
      %v5620 = vadd.f32 %v4952, %v5320
      %v5621 = vadd.f32 %v4953, %v5359
      %v5622 = vadd.f32 %v4954, %v5361
      %v5623 = vadd.f32 %v4955, %v5400
      %v5624 = vadd.f32 %v4956, %v5402
      %v5625 = vadd.f32 %v4957, %v5441
      %v5626 = vadd.f32 %v4958, %v5443
      %v5627 = vadd.f32 %v4959, %v5482
      %v5628 = vadd.f32 %v4960, %v5484
      %v5629 = vadd.f32 %v4961, %v5523
      %v5630 = vadd.f32 %v4962, %v5525
      %v5631 = vadd.f32 %v4963, %v5564
      %v5632 = vadd.f32 %v4964, %v5566
      %v5633 = vadd.f32 %v4965, %v5605
      %v5634 = vadd.f32 %v4966, %v5607
      %s5635 = scalar_lea.vmem %s1, 32
      %v5636 = vld [vmem:[%s5635] sm:$0xf]
      %5637 = vrot.lane.b32.xlu0 %v314, 90
      %v5638 = vpop.permute.xlu0 %5637
      %5639 = vrot.lane.b32.xlu0 %v322, 90
      %v5640 = vpop.permute.xlu0 %5639
      %5641 = vrot.lane.b32.xlu0 %v321, 90
      %v5642 = vpop.permute.xlu0 %5641
      %5643 = vrot.lane.b32.xlu0 %v323, 90
      %v5644 = vpop.permute.xlu0 %5643
      %5645 = vrot.lane.b32.xlu0 %v331, 90
      %v5646 = vpop.permute.xlu0 %5645
      %5647 = vrot.lane.b32.xlu0 %v339, 90
      %v5648 = vpop.permute.xlu0 %5647
      %5649 = vrot.lane.b32.xlu0 %v338, 90
      %v5650 = vpop.permute.xlu0 %5649
      %5651 = vrot.lane.b32.xlu0 %v340, 90
      %v5652 = vpop.permute.xlu0 %5651
      %5653 = vrot.lane.b32.xlu0 %v348, 90
      %v5654 = vpop.permute.xlu0 %5653
      %5655 = vrot.lane.b32.xlu0 %v356, 90
      %v5656 = vpop.permute.xlu0 %5655
      %5657 = vrot.lane.b32.xlu0 %v355, 90
      %v5658 = vpop.permute.xlu0 %5657
      %5659 = vrot.lane.b32.xlu0 %v357, 90
      %v5660 = vpop.permute.xlu0 %5659
      %5661 = vrot.lane.b32.xlu0 %v365, 90
      %v5662 = vpop.permute.xlu0 %5661
      %5663 = vrot.lane.b32.xlu0 %v373, 90
      %v5664 = vpop.permute.xlu0 %5663
      %5665 = vrot.lane.b32.xlu0 %v372, 90
      %v5666 = vpop.permute.xlu0 %5665
      %5667 = vrot.lane.b32.xlu0 %v374, 90
      %v5668 = vpop.permute.xlu0 %5667
      %5669 = vrot.lane.b32.xlu0 %v382, 90
      %v5670 = vpop.permute.xlu0 %5669
      %5671 = vrot.lane.b32.xlu0 %v390, 90
      %v5672 = vpop.permute.xlu0 %5671
      %5673 = vrot.lane.b32.xlu0 %v389, 90
      %v5674 = vpop.permute.xlu0 %5673
      %5675 = vrot.lane.b32.xlu0 %v391, 90
      %v5676 = vpop.permute.xlu0 %5675
      %5677 = vrot.lane.b32.xlu0 %v399, 90
      %v5678 = vpop.permute.xlu0 %5677
      %5679 = vrot.lane.b32.xlu0 %v407, 90
      %v5680 = vpop.permute.xlu0 %5679
      %5681 = vrot.lane.b32.xlu0 %v406, 90
      %v5682 = vpop.permute.xlu0 %5681
      %5683 = vrot.lane.b32.xlu0 %v408, 90
      %v5684 = vpop.permute.xlu0 %5683
      %5685 = vrot.lane.b32.xlu0 %v415, 90
      %v5686 = vpop.permute.xlu0 %5685
      %vm5687 = vcmask 736256
      %v5688 = vsel %vm5687, %v5638, %v5640
      %v5689 = vsel %vm5687, %v5640, %v5642
      %v5690 = vsel %vm5687, %v5642, %v5644
      %v5691 = vsel %vm5687, %v5644, %v5646
      %v5692 = vsel %vm5687, %v5646, %v5648
      %v5693 = vsel %vm5687, %v5648, %v5650
      %v5694 = vsel %vm5687, %v5650, %v5652
      %v5695 = vsel %vm5687, %v5652, %v5654
      %v5696 = vsel %vm5687, %v5654, %v5656
      %v5697 = vsel %vm5687, %v5656, %v5658
      %v5698 = vsel %vm5687, %v5658, %v5660
      %v5699 = vsel %vm5687, %v5660, %v5662
      %v5700 = vsel %vm5687, %v5662, %v5664
      %v5701 = vsel %vm5687, %v5664, %v5666
      %v5702 = vsel %vm5687, %v5666, %v5668
      %v5703 = vsel %vm5687, %v5668, %v5670
      %v5704 = vsel %vm5687, %v5670, %v5672
      %v5705 = vsel %vm5687, %v5672, %v5674
      %v5706 = vsel %vm5687, %v5674, %v5676
      %v5707 = vsel %vm5687, %v5676, %v5678
      %v5708 = vsel %vm5687, %v5678, %v5680
      %v5709 = vsel %vm5687, %v5680, %v5682
      %v5710 = vsel %vm5687, %v5682, %v5684
      %v5711 = vsel %vm5687, %v5684, %v5686
      %v5713 = vsel %vm491, %v5636, 0
      %v5716 = vsel %vm495, %v5688, 0
      %v5719 = vsel %vm495, %v5689, 0
      %v5722 = vsel %vm495, %v5690, 0
      %v5725 = vsel %vm495, %v5691, 0
      %v5728 = vsel %vm495, %v5692, 0
      %v5731 = vsel %vm495, %v5693, 0
      %v5734 = vsel %vm495, %v5694, 0
      %v5737 = vsel %vm495, %v5695, 0
      %v5740 = vsel %vm495, %v5696, 0
      %v5743 = vsel %vm495, %v5697, 0
      %v5746 = vsel %vm495, %v5698, 0
      %v5749 = vsel %vm495, %v5699, 0
      %v5752 = vsel %vm495, %v5700, 0
      %v5755 = vsel %vm495, %v5701, 0
      %v5758 = vsel %vm495, %v5702, 0
      %v5761 = vsel %vm495, %v5703, 0
      %v5764 = vsel %vm495, %v5704, 0
      %v5767 = vsel %vm495, %v5705, 0
      %v5770 = vsel %vm495, %v5706, 0
      %v5773 = vsel %vm495, %v5707, 0
      %v5776 = vsel %vm495, %v5708, 0
      %v5779 = vsel %vm495, %v5709, 0
      %v5782 = vsel %vm495, %v5710, 0
      %v5785 = vsel %vm495, %v5711, 0
      %5787 = vmatprep.subr.bf16.mxu0 %v5719
      %5788 = vmatpush1.bf16.msra.mxu0 %v5716
      %5789 = vmatprep.subr.bf16.mxu0 0
      %5790 = vmatpush1.bf16.msra.mxu0 0
      %5791 = vmatprep.subr.bf16.mxu0 0
      %5792 = vmatpush1.bf16.msra.mxu0 0
      %5793 = vmatprep.subr.bf16.mxu0 0
      %5794 = vmatpush1.bf16.msra.mxu0 0
      %5795 = vmatprep.subr.bf16.mxu0 0
      %5796 = vmatpush1.bf16.msra.mxu0 0
      %5797 = vmatprep.subr.bf16.mxu0 0
      %5798 = vmatpush1.bf16.msra.mxu0 0
      %5799 = vmatprep.subr.bf16.mxu0 0
      %5800 = vmatpush1.bf16.msra.mxu0 0
      %5801 = vmatprep.subr.bf16.mxu0 0
      %5802 = vmatpush1.bf16.msra.mxu0 0
      %5803 = vmatprep.subr.bf16.mxu0 0
      %5804 = vmatpush1.bf16.msra.mxu0 0
      %5805 = vmatprep.subr.bf16.mxu0 0
      %5806 = vmatpush1.bf16.msra.mxu0 0
      %5807 = vmatprep.subr.bf16.mxu0 0
      %5808 = vmatpush1.bf16.msra.mxu0 0
      %5809 = vmatprep.subr.bf16.mxu0 0
      %5810 = vmatpush1.bf16.msra.mxu0 0
      %5811 = vmatprep.subr.bf16.mxu0 0
      %5812 = vmatpush1.bf16.msra.mxu0 0
      %5813 = vmatprep.subr.bf16.mxu0 0
      %5814 = vmatpush1.bf16.msra.mxu0 0
      %5815 = vmatprep.subr.bf16.mxu0 0
      %5816 = vmatpush1.bf16.msra.mxu0 0
      %5817 = vmatprep.subr.bf16.mxu0 0
      %5818 = vmatpush1.bf16.msra.mxu0 0
      %5819 = vmatprep.mubr.bf16.mxu0 0
      %5820 = vmatmul.mubr.bf16.gmra.mrb[0].mxu0 %v5713
      %v5821 = vpop.f32.mrb[0].mxu0
      %v5822 = vadd.f32 0.0, %v5821
      %v5823 = vpop.f32.mrb[0].mxu0
      %v5824 = vadd.f32 0.0, %v5823
      %v5825 = vpop.f32.mrb[0].mxu0
      %v5826 = vpop.f32.mrb[0].mxu0
      %5827 = vdwg.mxu0
      %5828 = vmatprep.subr.bf16.mxu0 %v5725
      %5829 = vmatpush1.bf16.msra.mxu0 %v5722
      %5830 = vmatprep.subr.bf16.mxu0 0
      %5831 = vmatpush1.bf16.msra.mxu0 0
      %5832 = vmatprep.subr.bf16.mxu0 0
      %5833 = vmatpush1.bf16.msra.mxu0 0
      %5834 = vmatprep.subr.bf16.mxu0 0
      %5835 = vmatpush1.bf16.msra.mxu0 0
      %5836 = vmatprep.subr.bf16.mxu0 0
      %5837 = vmatpush1.bf16.msra.mxu0 0
      %5838 = vmatprep.subr.bf16.mxu0 0
      %5839 = vmatpush1.bf16.msra.mxu0 0
      %5840 = vmatprep.subr.bf16.mxu0 0
      %5841 = vmatpush1.bf16.msra.mxu0 0
      %5842 = vmatprep.subr.bf16.mxu0 0
      %5843 = vmatpush1.bf16.msra.mxu0 0
      %5844 = vmatprep.subr.bf16.mxu0 0
      %5845 = vmatpush1.bf16.msra.mxu0 0
      %5846 = vmatprep.subr.bf16.mxu0 0
      %5847 = vmatpush1.bf16.msra.mxu0 0
      %5848 = vmatprep.subr.bf16.mxu0 0
      %5849 = vmatpush1.bf16.msra.mxu0 0
      %5850 = vmatprep.subr.bf16.mxu0 0
      %5851 = vmatpush1.bf16.msra.mxu0 0
      %5852 = vmatprep.subr.bf16.mxu0 0
      %5853 = vmatpush1.bf16.msra.mxu0 0
      %5854 = vmatprep.subr.bf16.mxu0 0
      %5855 = vmatpush1.bf16.msra.mxu0 0
      %5856 = vmatprep.subr.bf16.mxu0 0
      %5857 = vmatpush1.bf16.msra.mxu0 0
      %5858 = vmatprep.subr.bf16.mxu0 0
      %5859 = vmatpush1.bf16.msra.mxu0 0
      %5860 = vmatprep.mubr.bf16.mxu0 0
      %5861 = vmatmul.mubr.bf16.gmra.mrb[0].mxu0 %v5713
      %v5862 = vpop.f32.mrb[0].mxu0
      %v5863 = vadd.f32 0.0, %v5862
      %v5864 = vpop.f32.mrb[0].mxu0
      %v5865 = vadd.f32 0.0, %v5864
      %v5866 = vpop.f32.mrb[0].mxu0
      %v5867 = vpop.f32.mrb[0].mxu0
      %5868 = vdwg.mxu0
      %5869 = vmatprep.subr.bf16.mxu0 %v5731
      %5870 = vmatpush1.bf16.msra.mxu0 %v5728
      %5871 = vmatprep.subr.bf16.mxu0 0
      %5872 = vmatpush1.bf16.msra.mxu0 0
      %5873 = vmatprep.subr.bf16.mxu0 0
      %5874 = vmatpush1.bf16.msra.mxu0 0
      %5875 = vmatprep.subr.bf16.mxu0 0
      %5876 = vmatpush1.bf16.msra.mxu0 0
      %5877 = vmatprep.subr.bf16.mxu0 0
      %5878 = vmatpush1.bf16.msra.mxu0 0
      %5879 = vmatprep.subr.bf16.mxu0 0
      %5880 = vmatpush1.bf16.msra.mxu0 0
      %5881 = vmatprep.subr.bf16.mxu0 0
      %5882 = vmatpush1.bf16.msra.mxu0 0
      %5883 = vmatprep.subr.bf16.mxu0 0
      %5884 = vmatpush1.bf16.msra.mxu0 0
      %5885 = vmatprep.subr.bf16.mxu0 0
      %5886 = vmatpush1.bf16.msra.mxu0 0
      %5887 = vmatprep.subr.bf16.mxu0 0
      %5888 = vmatpush1.bf16.msra.mxu0 0
      %5889 = vmatprep.subr.bf16.mxu0 0
      %5890 = vmatpush1.bf16.msra.mxu0 0
      %5891 = vmatprep.subr.bf16.mxu0 0
      %5892 = vmatpush1.bf16.msra.mxu0 0
      %5893 = vmatprep.subr.bf16.mxu0 0
      %5894 = vmatpush1.bf16.msra.mxu0 0
      %5895 = vmatprep.subr.bf16.mxu0 0
      %5896 = vmatpush1.bf16.msra.mxu0 0
      %5897 = vmatprep.subr.bf16.mxu0 0
      %5898 = vmatpush1.bf16.msra.mxu0 0
      %5899 = vmatprep.subr.bf16.mxu0 0
      %5900 = vmatpush1.bf16.msra.mxu0 0
      %5901 = vmatprep.mubr.bf16.mxu0 0
      %5902 = vmatmul.mubr.bf16.gmra.mrb[0].mxu0 %v5713
      %v5903 = vpop.f32.mrb[0].mxu0
      %v5904 = vadd.f32 0.0, %v5903
      %v5905 = vpop.f32.mrb[0].mxu0
      %v5906 = vadd.f32 0.0, %v5905
      %v5907 = vpop.f32.mrb[0].mxu0
      %v5908 = vpop.f32.mrb[0].mxu0
      %5909 = vdwg.mxu0
      %5910 = vmatprep.subr.bf16.mxu0 %v5737
      %5911 = vmatpush1.bf16.msra.mxu0 %v5734
      %5912 = vmatprep.subr.bf16.mxu0 0
      %5913 = vmatpush1.bf16.msra.mxu0 0
      %5914 = vmatprep.subr.bf16.mxu0 0
      %5915 = vmatpush1.bf16.msra.mxu0 0
      %5916 = vmatprep.subr.bf16.mxu0 0
      %5917 = vmatpush1.bf16.msra.mxu0 0
      %5918 = vmatprep.subr.bf16.mxu0 0
      %5919 = vmatpush1.bf16.msra.mxu0 0
      %5920 = vmatprep.subr.bf16.mxu0 0
      %5921 = vmatpush1.bf16.msra.mxu0 0
      %5922 = vmatprep.subr.bf16.mxu0 0
      %5923 = vmatpush1.bf16.msra.mxu0 0
      %5924 = vmatprep.subr.bf16.mxu0 0
      %5925 = vmatpush1.bf16.msra.mxu0 0
      %5926 = vmatprep.subr.bf16.mxu0 0
      %5927 = vmatpush1.bf16.msra.mxu0 0
      %5928 = vmatprep.subr.bf16.mxu0 0
      %5929 = vmatpush1.bf16.msra.mxu0 0
      %5930 = vmatprep.subr.bf16.mxu0 0
      %5931 = vmatpush1.bf16.msra.mxu0 0
      %5932 = vmatprep.subr.bf16.mxu0 0
      %5933 = vmatpush1.bf16.msra.mxu0 0
      %5934 = vmatprep.subr.bf16.mxu0 0
      %5935 = vmatpush1.bf16.msra.mxu0 0
      %5936 = vmatprep.subr.bf16.mxu0 0
      %5937 = vmatpush1.bf16.msra.mxu0 0
      %5938 = vmatprep.subr.bf16.mxu0 0
      %5939 = vmatpush1.bf16.msra.mxu0 0
      %5940 = vmatprep.subr.bf16.mxu0 0
      %5941 = vmatpush1.bf16.msra.mxu0 0
      %5942 = vmatprep.mubr.bf16.mxu0 0
      %5943 = vmatmul.mubr.bf16.gmra.mrb[0].mxu0 %v5713
      %v5944 = vpop.f32.mrb[0].mxu0
      %v5945 = vadd.f32 0.0, %v5944
      %v5946 = vpop.f32.mrb[0].mxu0
      %v5947 = vadd.f32 0.0, %v5946
      %v5948 = vpop.f32.mrb[0].mxu0
      %v5949 = vpop.f32.mrb[0].mxu0
      %5950 = vdwg.mxu0
      %5951 = vmatprep.subr.bf16.mxu0 %v5743
      %5952 = vmatpush1.bf16.msra.mxu0 %v5740
      %5953 = vmatprep.subr.bf16.mxu0 0
      %5954 = vmatpush1.bf16.msra.mxu0 0
      %5955 = vmatprep.subr.bf16.mxu0 0
      %5956 = vmatpush1.bf16.msra.mxu0 0
      %5957 = vmatprep.subr.bf16.mxu0 0
      %5958 = vmatpush1.bf16.msra.mxu0 0
      %5959 = vmatprep.subr.bf16.mxu0 0
      %5960 = vmatpush1.bf16.msra.mxu0 0
      %5961 = vmatprep.subr.bf16.mxu0 0
      %5962 = vmatpush1.bf16.msra.mxu0 0
      %5963 = vmatprep.subr.bf16.mxu0 0
      %5964 = vmatpush1.bf16.msra.mxu0 0
      %5965 = vmatprep.subr.bf16.mxu0 0
      %5966 = vmatpush1.bf16.msra.mxu0 0
      %5967 = vmatprep.subr.bf16.mxu0 0
      %5968 = vmatpush1.bf16.msra.mxu0 0
      %5969 = vmatprep.subr.bf16.mxu0 0
      %5970 = vmatpush1.bf16.msra.mxu0 0
      %5971 = vmatprep.subr.bf16.mxu0 0
      %5972 = vmatpush1.bf16.msra.mxu0 0
      %5973 = vmatprep.subr.bf16.mxu0 0
      %5974 = vmatpush1.bf16.msra.mxu0 0
      %5975 = vmatprep.subr.bf16.mxu0 0
      %5976 = vmatpush1.bf16.msra.mxu0 0
      %5977 = vmatprep.subr.bf16.mxu0 0
      %5978 = vmatpush1.bf16.msra.mxu0 0
      %5979 = vmatprep.subr.bf16.mxu0 0
      %5980 = vmatpush1.bf16.msra.mxu0 0
      %5981 = vmatprep.subr.bf16.mxu0 0
      %5982 = vmatpush1.bf16.msra.mxu0 0
      %5983 = vmatprep.mubr.bf16.mxu0 0
      %5984 = vmatmul.mubr.bf16.gmra.mrb[0].mxu0 %v5713
      %v5985 = vpop.f32.mrb[0].mxu0
      %v5986 = vadd.f32 0.0, %v5985
      %v5987 = vpop.f32.mrb[0].mxu0
      %v5988 = vadd.f32 0.0, %v5987
      %v5989 = vpop.f32.mrb[0].mxu0
      %v5990 = vpop.f32.mrb[0].mxu0
      %5991 = vdwg.mxu0
      %5992 = vmatprep.subr.bf16.mxu0 %v5749
      %5993 = vmatpush1.bf16.msra.mxu0 %v5746
      %5994 = vmatprep.subr.bf16.mxu0 0
      %5995 = vmatpush1.bf16.msra.mxu0 0
      %5996 = vmatprep.subr.bf16.mxu0 0
      %5997 = vmatpush1.bf16.msra.mxu0 0
      %5998 = vmatprep.subr.bf16.mxu0 0
      %5999 = vmatpush1.bf16.msra.mxu0 0
      %6000 = vmatprep.subr.bf16.mxu0 0
      %6001 = vmatpush1.bf16.msra.mxu0 0
      %6002 = vmatprep.subr.bf16.mxu0 0
      %6003 = vmatpush1.bf16.msra.mxu0 0
      %6004 = vmatprep.subr.bf16.mxu0 0
      %6005 = vmatpush1.bf16.msra.mxu0 0
      %6006 = vmatprep.subr.bf16.mxu0 0
      %6007 = vmatpush1.bf16.msra.mxu0 0
      %6008 = vmatprep.subr.bf16.mxu0 0
      %6009 = vmatpush1.bf16.msra.mxu0 0
      %6010 = vmatprep.subr.bf16.mxu0 0
      %6011 = vmatpush1.bf16.msra.mxu0 0
      %6012 = vmatprep.subr.bf16.mxu0 0
      %6013 = vmatpush1.bf16.msra.mxu0 0
      %6014 = vmatprep.subr.bf16.mxu0 0
      %6015 = vmatpush1.bf16.msra.mxu0 0
      %6016 = vmatprep.subr.bf16.mxu0 0
      %6017 = vmatpush1.bf16.msra.mxu0 0
      %6018 = vmatprep.subr.bf16.mxu0 0
      %6019 = vmatpush1.bf16.msra.mxu0 0
      %6020 = vmatprep.subr.bf16.mxu0 0
      %6021 = vmatpush1.bf16.msra.mxu0 0
      %6022 = vmatprep.subr.bf16.mxu0 0
      %6023 = vmatpush1.bf16.msra.mxu0 0
      %6024 = vmatprep.mubr.bf16.mxu0 0
      %6025 = vmatmul.mubr.bf16.gmra.mrb[0].mxu0 %v5713
      %v6026 = vpop.f32.mrb[0].mxu0
      %v6027 = vadd.f32 0.0, %v6026
      %v6028 = vpop.f32.mrb[0].mxu0
      %v6029 = vadd.f32 0.0, %v6028
      %v6030 = vpop.f32.mrb[0].mxu0
      %v6031 = vpop.f32.mrb[0].mxu0
      %6032 = vdwg.mxu0
      %6033 = vmatprep.subr.bf16.mxu0 %v5755
      %6034 = vmatpush1.bf16.msra.mxu0 %v5752
      %6035 = vmatprep.subr.bf16.mxu0 0
      %6036 = vmatpush1.bf16.msra.mxu0 0
      %6037 = vmatprep.subr.bf16.mxu0 0
      %6038 = vmatpush1.bf16.msra.mxu0 0
      %6039 = vmatprep.subr.bf16.mxu0 0
      %6040 = vmatpush1.bf16.msra.mxu0 0
      %6041 = vmatprep.subr.bf16.mxu0 0
      %6042 = vmatpush1.bf16.msra.mxu0 0
      %6043 = vmatprep.subr.bf16.mxu0 0
      %6044 = vmatpush1.bf16.msra.mxu0 0
      %6045 = vmatprep.subr.bf16.mxu0 0
      %6046 = vmatpush1.bf16.msra.mxu0 0
      %6047 = vmatprep.subr.bf16.mxu0 0
      %6048 = vmatpush1.bf16.msra.mxu0 0
      %6049 = vmatprep.subr.bf16.mxu0 0
      %6050 = vmatpush1.bf16.msra.mxu0 0
      %6051 = vmatprep.subr.bf16.mxu0 0
      %6052 = vmatpush1.bf16.msra.mxu0 0
      %6053 = vmatprep.subr.bf16.mxu0 0
      %6054 = vmatpush1.bf16.msra.mxu0 0
      %6055 = vmatprep.subr.bf16.mxu0 0
      %6056 = vmatpush1.bf16.msra.mxu0 0
      %6057 = vmatprep.subr.bf16.mxu0 0
      %6058 = vmatpush1.bf16.msra.mxu0 0
      %6059 = vmatprep.subr.bf16.mxu0 0
      %6060 = vmatpush1.bf16.msra.mxu0 0
      %6061 = vmatprep.subr.bf16.mxu0 0
      %6062 = vmatpush1.bf16.msra.mxu0 0
      %6063 = vmatprep.subr.bf16.mxu0 0
      %6064 = vmatpush1.bf16.msra.mxu0 0
      %6065 = vmatprep.mubr.bf16.mxu0 0
      %6066 = vmatmul.mubr.bf16.gmra.mrb[0].mxu0 %v5713
      %v6067 = vpop.f32.mrb[0].mxu0
      %v6068 = vadd.f32 0.0, %v6067
      %v6069 = vpop.f32.mrb[0].mxu0
      %v6070 = vadd.f32 0.0, %v6069
      %v6071 = vpop.f32.mrb[0].mxu0
      %v6072 = vpop.f32.mrb[0].mxu0
      %6073 = vdwg.mxu0
      %6074 = vmatprep.subr.bf16.mxu0 %v5761
      %6075 = vmatpush1.bf16.msra.mxu0 %v5758
      %6076 = vmatprep.subr.bf16.mxu0 0
      %6077 = vmatpush1.bf16.msra.mxu0 0
      %6078 = vmatprep.subr.bf16.mxu0 0
      %6079 = vmatpush1.bf16.msra.mxu0 0
      %6080 = vmatprep.subr.bf16.mxu0 0
      %6081 = vmatpush1.bf16.msra.mxu0 0
      %6082 = vmatprep.subr.bf16.mxu0 0
      %6083 = vmatpush1.bf16.msra.mxu0 0
      %6084 = vmatprep.subr.bf16.mxu0 0
      %6085 = vmatpush1.bf16.msra.mxu0 0
      %6086 = vmatprep.subr.bf16.mxu0 0
      %6087 = vmatpush1.bf16.msra.mxu0 0
      %6088 = vmatprep.subr.bf16.mxu0 0
      %6089 = vmatpush1.bf16.msra.mxu0 0
      %6090 = vmatprep.subr.bf16.mxu0 0
      %6091 = vmatpush1.bf16.msra.mxu0 0
      %6092 = vmatprep.subr.bf16.mxu0 0
      %6093 = vmatpush1.bf16.msra.mxu0 0
      %6094 = vmatprep.subr.bf16.mxu0 0
      %6095 = vmatpush1.bf16.msra.mxu0 0
      %6096 = vmatprep.subr.bf16.mxu0 0
      %6097 = vmatpush1.bf16.msra.mxu0 0
      %6098 = vmatprep.subr.bf16.mxu0 0
      %6099 = vmatpush1.bf16.msra.mxu0 0
      %6100 = vmatprep.subr.bf16.mxu0 0
      %6101 = vmatpush1.bf16.msra.mxu0 0
      %6102 = vmatprep.subr.bf16.mxu0 0
      %6103 = vmatpush1.bf16.msra.mxu0 0
      %6104 = vmatprep.subr.bf16.mxu0 0
      %6105 = vmatpush1.bf16.msra.mxu0 0
      %6106 = vmatprep.mubr.bf16.mxu0 0
      %6107 = vmatmul.mubr.bf16.gmra.mrb[0].mxu0 %v5713
      %v6108 = vpop.f32.mrb[0].mxu0
      %v6109 = vadd.f32 0.0, %v6108
      %v6110 = vpop.f32.mrb[0].mxu0
      %v6111 = vadd.f32 0.0, %v6110
      %v6112 = vpop.f32.mrb[0].mxu0
      %v6113 = vpop.f32.mrb[0].mxu0
      %6114 = vdwg.mxu0
      %6115 = vmatprep.subr.bf16.mxu0 %v5767
      %6116 = vmatpush1.bf16.msra.mxu0 %v5764
      %6117 = vmatprep.subr.bf16.mxu0 0
      %6118 = vmatpush1.bf16.msra.mxu0 0
      %6119 = vmatprep.subr.bf16.mxu0 0
      %6120 = vmatpush1.bf16.msra.mxu0 0
      %6121 = vmatprep.subr.bf16.mxu0 0
      %6122 = vmatpush1.bf16.msra.mxu0 0
      %6123 = vmatprep.subr.bf16.mxu0 0
      %6124 = vmatpush1.bf16.msra.mxu0 0
      %6125 = vmatprep.subr.bf16.mxu0 0
      %6126 = vmatpush1.bf16.msra.mxu0 0
      %6127 = vmatprep.subr.bf16.mxu0 0
      %6128 = vmatpush1.bf16.msra.mxu0 0
      %6129 = vmatprep.subr.bf16.mxu0 0
      %6130 = vmatpush1.bf16.msra.mxu0 0
      %6131 = vmatprep.subr.bf16.mxu0 0
      %6132 = vmatpush1.bf16.msra.mxu0 0
      %6133 = vmatprep.subr.bf16.mxu0 0
      %6134 = vmatpush1.bf16.msra.mxu0 0
      %6135 = vmatprep.subr.bf16.mxu0 0
      %6136 = vmatpush1.bf16.msra.mxu0 0
      %6137 = vmatprep.subr.bf16.mxu0 0
      %6138 = vmatpush1.bf16.msra.mxu0 0
      %6139 = vmatprep.subr.bf16.mxu0 0
      %6140 = vmatpush1.bf16.msra.mxu0 0
      %6141 = vmatprep.subr.bf16.mxu0 0
      %6142 = vmatpush1.bf16.msra.mxu0 0
      %6143 = vmatprep.subr.bf16.mxu0 0
      %6144 = vmatpush1.bf16.msra.mxu0 0
      %6145 = vmatprep.subr.bf16.mxu0 0
      %6146 = vmatpush1.bf16.msra.mxu0 0
      %6147 = vmatprep.mubr.bf16.mxu0 0
      %6148 = vmatmul.mubr.bf16.gmra.mrb[0].mxu0 %v5713
      %v6149 = vpop.f32.mrb[0].mxu0
      %v6150 = vadd.f32 0.0, %v6149
      %v6151 = vpop.f32.mrb[0].mxu0
      %v6152 = vadd.f32 0.0, %v6151
      %v6153 = vpop.f32.mrb[0].mxu0
      %v6154 = vpop.f32.mrb[0].mxu0
      %6155 = vdwg.mxu0
      %6156 = vmatprep.subr.bf16.mxu0 %v5773
      %6157 = vmatpush1.bf16.msra.mxu0 %v5770
      %6158 = vmatprep.subr.bf16.mxu0 0
      %6159 = vmatpush1.bf16.msra.mxu0 0
      %6160 = vmatprep.subr.bf16.mxu0 0
      %6161 = vmatpush1.bf16.msra.mxu0 0
      %6162 = vmatprep.subr.bf16.mxu0 0
      %6163 = vmatpush1.bf16.msra.mxu0 0
      %6164 = vmatprep.subr.bf16.mxu0 0
      %6165 = vmatpush1.bf16.msra.mxu0 0
      %6166 = vmatprep.subr.bf16.mxu0 0
      %6167 = vmatpush1.bf16.msra.mxu0 0
      %6168 = vmatprep.subr.bf16.mxu0 0
      %6169 = vmatpush1.bf16.msra.mxu0 0
      %6170 = vmatprep.subr.bf16.mxu0 0
      %6171 = vmatpush1.bf16.msra.mxu0 0
      %6172 = vmatprep.subr.bf16.mxu0 0
      %6173 = vmatpush1.bf16.msra.mxu0 0
      %6174 = vmatprep.subr.bf16.mxu0 0
      %6175 = vmatpush1.bf16.msra.mxu0 0
      %6176 = vmatprep.subr.bf16.mxu0 0
      %6177 = vmatpush1.bf16.msra.mxu0 0
      %6178 = vmatprep.subr.bf16.mxu0 0
      %6179 = vmatpush1.bf16.msra.mxu0 0
      %6180 = vmatprep.subr.bf16.mxu0 0
      %6181 = vmatpush1.bf16.msra.mxu0 0
      %6182 = vmatprep.subr.bf16.mxu0 0
      %6183 = vmatpush1.bf16.msra.mxu0 0
      %6184 = vmatprep.subr.bf16.mxu0 0
      %6185 = vmatpush1.bf16.msra.mxu0 0
      %6186 = vmatprep.subr.bf16.mxu0 0
      %6187 = vmatpush1.bf16.msra.mxu0 0
      %6188 = vmatprep.mubr.bf16.mxu0 0
      %6189 = vmatmul.mubr.bf16.gmra.mrb[0].mxu0 %v5713
      %v6190 = vpop.f32.mrb[0].mxu0
      %v6191 = vadd.f32 0.0, %v6190
      %v6192 = vpop.f32.mrb[0].mxu0
      %v6193 = vadd.f32 0.0, %v6192
      %v6194 = vpop.f32.mrb[0].mxu0
      %v6195 = vpop.f32.mrb[0].mxu0
      %6196 = vdwg.mxu0
      %6197 = vmatprep.subr.bf16.mxu0 %v5779
      %6198 = vmatpush1.bf16.msra.mxu0 %v5776
      %6199 = vmatprep.subr.bf16.mxu0 0
      %6200 = vmatpush1.bf16.msra.mxu0 0
      %6201 = vmatprep.subr.bf16.mxu0 0
      %6202 = vmatpush1.bf16.msra.mxu0 0
      %6203 = vmatprep.subr.bf16.mxu0 0
      %6204 = vmatpush1.bf16.msra.mxu0 0
      %6205 = vmatprep.subr.bf16.mxu0 0
      %6206 = vmatpush1.bf16.msra.mxu0 0
      %6207 = vmatprep.subr.bf16.mxu0 0
      %6208 = vmatpush1.bf16.msra.mxu0 0
      %6209 = vmatprep.subr.bf16.mxu0 0
      %6210 = vmatpush1.bf16.msra.mxu0 0
      %6211 = vmatprep.subr.bf16.mxu0 0
      %6212 = vmatpush1.bf16.msra.mxu0 0
      %6213 = vmatprep.subr.bf16.mxu0 0
      %6214 = vmatpush1.bf16.msra.mxu0 0
      %6215 = vmatprep.subr.bf16.mxu0 0
      %6216 = vmatpush1.bf16.msra.mxu0 0
      %6217 = vmatprep.subr.bf16.mxu0 0
      %6218 = vmatpush1.bf16.msra.mxu0 0
      %6219 = vmatprep.subr.bf16.mxu0 0
      %6220 = vmatpush1.bf16.msra.mxu0 0
      %6221 = vmatprep.subr.bf16.mxu0 0
      %6222 = vmatpush1.bf16.msra.mxu0 0
      %6223 = vmatprep.subr.bf16.mxu0 0
      %6224 = vmatpush1.bf16.msra.mxu0 0
      %6225 = vmatprep.subr.bf16.mxu0 0
      %6226 = vmatpush1.bf16.msra.mxu0 0
      %6227 = vmatprep.subr.bf16.mxu0 0
      %6228 = vmatpush1.bf16.msra.mxu0 0
      %6229 = vmatprep.mubr.bf16.mxu0 0
      %6230 = vmatmul.mubr.bf16.gmra.mrb[0].mxu0 %v5713
      %v6231 = vpop.f32.mrb[0].mxu0
      %v6232 = vadd.f32 0.0, %v6231
      %v6233 = vpop.f32.mrb[0].mxu0
      %v6234 = vadd.f32 0.0, %v6233
      %v6235 = vpop.f32.mrb[0].mxu0
      %v6236 = vpop.f32.mrb[0].mxu0
      %6237 = vdwg.mxu0
      %6238 = vmatprep.subr.bf16.mxu0 %v5785
      %6239 = vmatpush1.bf16.msra.mxu0 %v5782
      %6240 = vmatprep.subr.bf16.mxu0 0
      %6241 = vmatpush1.bf16.msra.mxu0 0
      %6242 = vmatprep.subr.bf16.mxu0 0
      %6243 = vmatpush1.bf16.msra.mxu0 0
      %6244 = vmatprep.subr.bf16.mxu0 0
      %6245 = vmatpush1.bf16.msra.mxu0 0
      %6246 = vmatprep.subr.bf16.mxu0 0
      %6247 = vmatpush1.bf16.msra.mxu0 0
      %6248 = vmatprep.subr.bf16.mxu0 0
      %6249 = vmatpush1.bf16.msra.mxu0 0
      %6250 = vmatprep.subr.bf16.mxu0 0
      %6251 = vmatpush1.bf16.msra.mxu0 0
      %6252 = vmatprep.subr.bf16.mxu0 0
      %6253 = vmatpush1.bf16.msra.mxu0 0
      %6254 = vmatprep.subr.bf16.mxu0 0
      %6255 = vmatpush1.bf16.msra.mxu0 0
      %6256 = vmatprep.subr.bf16.mxu0 0
      %6257 = vmatpush1.bf16.msra.mxu0 0
      %6258 = vmatprep.subr.bf16.mxu0 0
      %6259 = vmatpush1.bf16.msra.mxu0 0
      %6260 = vmatprep.subr.bf16.mxu0 0
      %6261 = vmatpush1.bf16.msra.mxu0 0
      %6262 = vmatprep.subr.bf16.mxu0 0
      %6263 = vmatpush1.bf16.msra.mxu0 0
      %6264 = vmatprep.subr.bf16.mxu0 0
      %6265 = vmatpush1.bf16.msra.mxu0 0
      %6266 = vmatprep.subr.bf16.mxu0 0
      %6267 = vmatpush1.bf16.msra.mxu0 0
      %6268 = vmatprep.subr.bf16.mxu0 0
      %6269 = vmatpush1.bf16.msra.mxu0 0
      %6270 = vmatprep.mubr.bf16.mxu0 0
      %6271 = vmatmul.mubr.bf16.gmra.mrb[0].mxu0 %v5713
      %v6272 = vpop.f32.mrb[0].mxu0
      %v6273 = vadd.f32 0.0, %v6272
      %v6274 = vpop.f32.mrb[0].mxu0
      %v6275 = vadd.f32 0.0, %v6274
      %v6276 = vpop.f32.mrb[0].mxu0
      %v6277 = vpop.f32.mrb[0].mxu0
      %6278 = vdwg.mxu0
      %v6279 = vadd.f32 %v5611, %v5822
      %v6280 = vadd.f32 %v5612, %v5824
      %v6281 = vadd.f32 %v5613, %v5863
      %v6282 = vadd.f32 %v5614, %v5865
      %v6283 = vadd.f32 %v5615, %v5904
      %v6284 = vadd.f32 %v5616, %v5906
      %v6285 = vadd.f32 %v5617, %v5945
      %v6286 = vadd.f32 %v5618, %v5947
      %v6287 = vadd.f32 %v5619, %v5986
      %v6288 = vadd.f32 %v5620, %v5988
      %v6289 = vadd.f32 %v5621, %v6027
      %v6290 = vadd.f32 %v5622, %v6029
      %v6291 = vadd.f32 %v5623, %v6068
      %v6292 = vadd.f32 %v5624, %v6070
      %v6293 = vadd.f32 %v5625, %v6109
      %v6294 = vadd.f32 %v5626, %v6111
      %v6295 = vadd.f32 %v5627, %v6150
      %v6296 = vadd.f32 %v5628, %v6152
      %v6297 = vadd.f32 %v5629, %v6191
      %v6298 = vadd.f32 %v5630, %v6193
      %v6299 = vadd.f32 %v5631, %v6232
      %v6300 = vadd.f32 %v5632, %v6234
      %v6301 = vadd.f32 %v5633, %v6273
      %v6302 = vadd.f32 %v5634, %v6275
      %v6303 = vld [vmem:[%s2] sm:$0xff]
      %6305 = vset.pattern.permute.xlu0 0
      %6306 = vperm.xlu0 %6305, %v6303
      %v6307 = vpop.permute.xlu0 %6306
      %v6309 = vmul.f32 %v6279, %v6307
      %v6310 = vmul.f32 %v6280, %v6307
      %v6311 = vmul.f32 %v6281, %v6307
      %v6312 = vmul.f32 %v6282, %v6307
      %v6313 = vmul.f32 %v6283, %v6307
      %v6314 = vmul.f32 %v6284, %v6307
      %v6315 = vmul.f32 %v6285, %v6307
      %v6316 = vmul.f32 %v6286, %v6307
      %v6317 = vmul.f32 %v6287, %v6307
      %v6318 = vmul.f32 %v6288, %v6307
      %v6319 = vmul.f32 %v6289, %v6307
      %v6320 = vmul.f32 %v6290, %v6307
      %v6321 = vmul.f32 %v6291, %v6307
      %v6322 = vmul.f32 %v6292, %v6307
      %v6323 = vmul.f32 %v6293, %v6307
      %v6324 = vmul.f32 %v6294, %v6307
      %v6325 = vmul.f32 %v6295, %v6307
      %v6326 = vmul.f32 %v6296, %v6307
      %v6327 = vmul.f32 %v6297, %v6307
      %v6328 = vmul.f32 %v6298, %v6307
      %v6329 = vmul.f32 %v6299, %v6307
      %v6330 = vmul.f32 %v6300, %v6307
      %v6331 = vmul.f32 %v6301, %v6307
      %v6332 = vmul.f32 %v6302, %v6307
      %v6333 = vld [vmem:[%s3] sm:$0xff]
      %6335 = vset.pattern.permute.xlu0 0
      %6336 = vperm.xlu0 %6335, %v6333
      %v6337 = vpop.permute.xlu0 %6336
      %v6339 = vadd.f32 %v6309, %v6337
      %v6340 = vadd.f32 %v6310, %v6337
      %v6341 = vadd.f32 %v6311, %v6337
      %v6342 = vadd.f32 %v6312, %v6337
      %v6343 = vadd.f32 %v6313, %v6337
      %v6344 = vadd.f32 %v6314, %v6337
      %v6345 = vadd.f32 %v6315, %v6337
      %v6346 = vadd.f32 %v6316, %v6337
      %v6347 = vadd.f32 %v6317, %v6337
      %v6348 = vadd.f32 %v6318, %v6337
      %v6349 = vadd.f32 %v6319, %v6337
      %v6350 = vadd.f32 %v6320, %v6337
      %v6351 = vadd.f32 %v6321, %v6337
      %v6352 = vadd.f32 %v6322, %v6337
      %v6353 = vadd.f32 %v6323, %v6337
      %v6354 = vadd.f32 %v6324, %v6337
      %v6355 = vadd.f32 %v6325, %v6337
      %v6356 = vadd.f32 %v6326, %v6337
      %v6357 = vadd.f32 %v6327, %v6337
      %v6358 = vadd.f32 %v6328, %v6337
      %v6359 = vadd.f32 %v6329, %v6337
      %v6360 = vadd.f32 %v6330, %v6337
      %v6361 = vadd.f32 %v6331, %v6337
      %v6362 = vadd.f32 %v6332, %v6337
      %v6363 = vmax.f32 %v6339, 0.0
      %v6364 = vmax.f32 %v6340, 0.0
      %v6365 = vmax.f32 %v6341, 0.0
      %v6366 = vmax.f32 %v6342, 0.0
      %v6367 = vmax.f32 %v6343, 0.0
      %v6368 = vmax.f32 %v6344, 0.0
      %v6369 = vmax.f32 %v6345, 0.0
      %v6370 = vmax.f32 %v6346, 0.0
      %v6371 = vmax.f32 %v6347, 0.0
      %v6372 = vmax.f32 %v6348, 0.0
      %v6373 = vmax.f32 %v6349, 0.0
      %v6374 = vmax.f32 %v6350, 0.0
      %v6375 = vmax.f32 %v6351, 0.0
      %v6376 = vmax.f32 %v6352, 0.0
      %v6377 = vmax.f32 %v6353, 0.0
      %v6378 = vmax.f32 %v6354, 0.0
      %v6379 = vmax.f32 %v6355, 0.0
      %v6380 = vmax.f32 %v6356, 0.0
      %v6381 = vmax.f32 %v6357, 0.0
      %v6382 = vmax.f32 %v6358, 0.0
      %v6383 = vmax.f32 %v6359, 0.0
      %v6384 = vmax.f32 %v6360, 0.0
      %v6385 = vmax.f32 %v6361, 0.0
      %v6386 = vmax.f32 %v6362, 0.0
      %v6387 = vpack.c.bf16 %v6363, %v6363
      %v6388 = vpack.c.bf16 %v6364, %v6364
      %v6389 = vpack.c.bf16 %v6365, %v6365
      %v6390 = vpack.c.bf16 %v6366, %v6366
      %v6391 = vpack.c.bf16 %v6367, %v6367
      %v6392 = vpack.c.bf16 %v6368, %v6368
      %v6393 = vpack.c.bf16 %v6369, %v6369
      %v6394 = vpack.c.bf16 %v6370, %v6370
      %v6395 = vpack.c.bf16 %v6371, %v6371
      %v6396 = vpack.c.bf16 %v6372, %v6372
      %v6397 = vpack.c.bf16 %v6373, %v6373
      %v6398 = vpack.c.bf16 %v6374, %v6374
      %v6399 = vpack.c.bf16 %v6375, %v6375
      %v6400 = vpack.c.bf16 %v6376, %v6376
      %v6401 = vpack.c.bf16 %v6377, %v6377
      %v6402 = vpack.c.bf16 %v6378, %v6378
      %v6403 = vpack.c.bf16 %v6379, %v6379
      %v6404 = vpack.c.bf16 %v6380, %v6380
      %v6405 = vpack.c.bf16 %v6381, %v6381
      %v6406 = vpack.c.bf16 %v6382, %v6382
      %v6407 = vpack.c.bf16 %v6383, %v6383
      %v6408 = vpack.c.bf16 %v6384, %v6384
      %v6409 = vpack.c.bf16 %v6385, %v6385
      %v6410 = vpack.c.bf16 %v6386, %v6386
      %v6435 = vunpack.c.l.b16 %v6387
      %v6436 = vunpack.c.l.b16 %v6388
      %v6437 = vunpack.c.l.b16 %v6389
      %v6438 = vunpack.c.l.b16 %v6390
      %v6439 = vunpack.c.l.b16 %v6391
      %v6440 = vunpack.c.l.b16 %v6392
      %v6441 = vunpack.c.l.b16 %v6393
      %v6442 = vunpack.c.l.b16 %v6394
      %v6443 = vunpack.c.l.b16 %v6395
      %v6444 = vunpack.c.l.b16 %v6396
      %v6445 = vunpack.c.l.b16 %v6397
      %v6446 = vunpack.c.l.b16 %v6398
      %v6447 = vunpack.c.l.b16 %v6399
      %v6448 = vunpack.c.l.b16 %v6400
      %v6449 = vunpack.c.l.b16 %v6401
      %v6450 = vunpack.c.l.b16 %v6402
      %v6451 = vunpack.c.l.b16 %v6403
      %v6452 = vunpack.c.l.b16 %v6404
      %v6453 = vunpack.c.l.b16 %v6405
      %v6454 = vunpack.c.l.b16 %v6406
      %v6455 = vunpack.c.l.b16 %v6407
      %v6456 = vunpack.c.l.b16 %v6408
      %v6457 = vunpack.c.l.b16 %v6409
      %v6458 = vunpack.c.l.b16 %v6410
      %v6459 = vpack.c.b16 %v6436, %v6435
      %v6460 = vpack.c.b16 %v6438, %v6437
      %v6461 = vpack.c.b16 %v6440, %v6439
      %v6462 = vpack.c.b16 %v6442, %v6441
      %v6463 = vpack.c.b16 %v6444, %v6443
      %v6464 = vpack.c.b16 %v6446, %v6445
      %v6465 = vpack.c.b16 %v6448, %v6447
      %v6466 = vpack.c.b16 %v6450, %v6449
      %v6467 = vpack.c.b16 %v6452, %v6451
      %v6468 = vpack.c.b16 %v6454, %v6453
      %v6469 = vpack.c.b16 %v6456, %v6455
      %v6470 = vpack.c.b16 %v6458, %v6457
      %6483 = vst [vmem:[#allocation2] sm:$0xff] %v6459
      %6484 = vst [vmem:[#allocation2 + $0x8] sm:$0xff] %v6460
      %6485 = vst [vmem:[#allocation2 + $0x10] sm:$0xff] %v6461
      %6486 = vst [vmem:[#allocation2 + $0x18] sm:$0xff] %v6462
      %6487 = vst [vmem:[#allocation2 + $0x20] sm:$0xff] %v6463
      %6488 = vst [vmem:[#allocation2 + $0x28] sm:$0xff] %v6464
      %6489 = vst [vmem:[#allocation2 + $0x30] sm:$0xff] %v6465
      %6490 = vst [vmem:[#allocation2 + $0x38] sm:$0xff] %v6466
      %6491 = vst [vmem:[#allocation2 + $0x40] sm:$0xff] %v6467
      %6492 = vst [vmem:[#allocation2 + $0x48] sm:$0xff] %v6468
      %6493 = vst [vmem:[#allocation2 + $0x50] sm:$0xff] %v6469
      %6494 = vst [vmem:[#allocation2 + $0x58] sm:$0xff] %v6470
      %p6495 = scmp.eq.s32.totalorder %s22, 0
      // Predicated region
      $region45: #{conv2plus1d_temporal_enhanced.1} parent=43 // pred_check
        %p6496 = pneg %p6495
      $region46: #{conv2plus1d_temporal_enhanced.1} parent=43 // pred_check_branch
        %6498 = sbr.rel (%p6496) target = $region48
      $region47: #{conv2plus1d_temporal_enhanced.1} parent=43 // pred_region
        %6499 = vst [vmem:[#allocation2] sm:$0xff] 0
        %6500 = vst [vmem:[#allocation2 + $0x8] sm:$0xff] 0
        %6501 = vst [vmem:[#allocation2 + $0x10] sm:$0xff] 0
      $region48: #{conv2plus1d_temporal_enhanced.1} parent=43 // pred_fallthru
        _
      %p6502 = scmp.eq.s32.totalorder %s22, 1
      // Predicated region
      $region49: #{conv2plus1d_temporal_enhanced.1} parent=43 // pred_check
        %p6503 = pneg %p6502
      $region50: #{conv2plus1d_temporal_enhanced.1} parent=43 // pred_check_branch
        %6505 = sbr.rel (%p6503) target = $region52
      $region51: #{conv2plus1d_temporal_enhanced.1} parent=43 // pred_region
        %6506 = vst [vmem:[#allocation2 + $0x48] sm:$0xff] 0
        %6507 = vst [vmem:[#allocation2 + $0x50] sm:$0xff] 0
        %6508 = vst [vmem:[#allocation2 + $0x58] sm:$0xff] 0
      $region52: #{conv2plus1d_temporal_enhanced.1} parent=43 // pred_fallthru
        _
      %v6509 = vld [vmem:[%s4] sm:$0xf]
      %v6510 = vld [vmem:[#allocation2] sm:$0xff]
      %v6511 = vld [vmem:[#allocation2 + $0x8] sm:$0xff]
      %v6512 = vld [vmem:[#allocation2 + $0x10] sm:$0xff]
      %v6513 = vld [vmem:[#allocation2 + $0x18] sm:$0xff]
      %v6514 = vld [vmem:[#allocation2 + $0x20] sm:$0xff]
      %v6515 = vld [vmem:[#allocation2 + $0x28] sm:$0xff]
      %s6516 = scalar_lea.vmem %s4, 4
      %v6517 = vld [vmem:[%s6516] sm:$0xf]
      %v6518 = vld [vmem:[#allocation2 + $0xc] sm:$0xff]
      %v6519 = vld [vmem:[#allocation2 + $0x14] sm:$0xff]
      %v6520 = vld [vmem:[#allocation2 + $0x1c] sm:$0xff]
      %v6521 = vld [vmem:[#allocation2 + $0x24] sm:$0xff]
      %v6522 = vld [vmem:[#allocation2 + $0x2c] sm:$0xff]
      %v6523 = vld [vmem:[#allocation2 + $0x34] sm:$0xff]
      %v6530 = vunpack.c.l.b16 %v6518
      %v6531 = vunpack.c.h.b16 %v6518
      %v6532 = vunpack.c.l.b16 %v6519
      %v6533 = vunpack.c.h.b16 %v6519
      %v6534 = vunpack.c.l.b16 %v6520
      %v6535 = vunpack.c.h.b16 %v6520
      %v6536 = vunpack.c.l.b16 %v6521
      %v6537 = vunpack.c.h.b16 %v6521
      %v6538 = vunpack.c.l.b16 %v6522
      %v6539 = vunpack.c.h.b16 %v6522
      %v6540 = vunpack.c.l.b16 %v6523
      %v6541 = vunpack.c.h.b16 %v6523
      %v6542 = vpack.c.b16 %v6530, %v6530
      %v6543 = vpack.c.b16 %v6531, %v6531
      %v6544 = vpack.c.b16 %v6532, %v6532
      %v6545 = vpack.c.b16 %v6533, %v6533
      %v6546 = vpack.c.b16 %v6534, %v6534
      %v6547 = vpack.c.b16 %v6535, %v6535
      %v6548 = vpack.c.b16 %v6536, %v6536
      %v6549 = vpack.c.b16 %v6537, %v6537
      %v6550 = vpack.c.b16 %v6538, %v6538
      %v6551 = vpack.c.b16 %v6539, %v6539
      %v6552 = vpack.c.b16 %v6540, %v6540
      %v6553 = vpack.c.b16 %v6541, %v6541
      %vm6554 = vcmask 64512
      %v6556 = vsel %vm6554, %v6517, 0
      %vm6558 = vcmask 1043456
      %v6560 = vsel %vm6558, %v6542, 0
      %v6563 = vsel %vm6558, %v6543, 0
      %v6566 = vsel %vm6558, %v6544, 0
      %v6569 = vsel %vm6558, %v6545, 0
      %v6572 = vsel %vm6558, %v6546, 0
      %v6575 = vsel %vm6558, %v6547, 0
      %v6578 = vsel %vm6558, %v6548, 0
      %v6581 = vsel %vm6558, %v6549, 0
      %v6584 = vsel %vm6558, %v6550, 0
      %v6587 = vsel %vm6558, %v6551, 0
      %v6590 = vsel %vm6558, %v6552, 0
      %v6593 = vsel %vm6558, %v6553, 0
      %6595 = vmatprep.subr.bf16.mxu0 %v6563
      %6596 = vmatpush1.bf16.msra.mxu0 %v6560
      %6597 = vmatprep.subr.bf16.mxu0 0
      %6598 = vmatpush1.bf16.msra.mxu0 0
      %6599 = vmatprep.subr.bf16.mxu0 0
      %6600 = vmatpush1.bf16.msra.mxu0 0
      %6601 = vmatprep.subr.bf16.mxu0 0
      %6602 = vmatpush1.bf16.msra.mxu0 0
      %6603 = vmatprep.subr.bf16.mxu0 0
      %6604 = vmatpush1.bf16.msra.mxu0 0
      %6605 = vmatprep.subr.bf16.mxu0 0
      %6606 = vmatpush1.bf16.msra.mxu0 0
      %6607 = vmatprep.subr.bf16.mxu0 0
      %6608 = vmatpush1.bf16.msra.mxu0 0
      %6609 = vmatprep.subr.bf16.mxu0 0
      %6610 = vmatpush1.bf16.msra.mxu0 0
      %6611 = vmatprep.subr.bf16.mxu0 0
      %6612 = vmatpush1.bf16.msra.mxu0 0
      %6613 = vmatprep.subr.bf16.mxu0 0
      %6614 = vmatpush1.bf16.msra.mxu0 0
      %6615 = vmatprep.subr.bf16.mxu0 0
      %6616 = vmatpush1.bf16.msra.mxu0 0
      %6617 = vmatprep.subr.bf16.mxu0 0
      %6618 = vmatpush1.bf16.msra.mxu0 0
      %6619 = vmatprep.subr.bf16.mxu0 0
      %6620 = vmatpush1.bf16.msra.mxu0 0
      %6621 = vmatprep.subr.bf16.mxu0 0
      %6622 = vmatpush1.bf16.msra.mxu0 0
      %6623 = vmatprep.subr.bf16.mxu0 0
      %6624 = vmatpush1.bf16.msra.mxu0 0
      %6625 = vmatprep.subr.bf16.mxu0 0
      %6626 = vmatpush1.bf16.msra.mxu0 0
      %6627 = vmatprep.mubr.bf16.mxu0 0
      %6628 = vmatmul.mubr.bf16.gmra.mrb[0].mxu0 %v6556
      %v6629 = vpop.f32.mrb[0].mxu0
      %v6630 = vadd.f32 0.0, %v6629
      %v6631 = vpop.f32.mrb[0].mxu0
      %v6632 = vadd.f32 0.0, %v6631
      %v6633 = vpop.f32.mrb[0].mxu0
      %v6634 = vpop.f32.mrb[0].mxu0
      %6635 = vdwg.mxu0
      %6636 = vmatprep.subr.bf16.mxu0 %v6569
      %6637 = vmatpush1.bf16.msra.mxu0 %v6566
      %6638 = vmatprep.subr.bf16.mxu0 0
      %6639 = vmatpush1.bf16.msra.mxu0 0
      %6640 = vmatprep.subr.bf16.mxu0 0
      %6641 = vmatpush1.bf16.msra.mxu0 0
      %6642 = vmatprep.subr.bf16.mxu0 0
      %6643 = vmatpush1.bf16.msra.mxu0 0
      %6644 = vmatprep.subr.bf16.mxu0 0
      %6645 = vmatpush1.bf16.msra.mxu0 0
      %6646 = vmatprep.subr.bf16.mxu0 0
      %6647 = vmatpush1.bf16.msra.mxu0 0
      %6648 = vmatprep.subr.bf16.mxu0 0
      %6649 = vmatpush1.bf16.msra.mxu0 0
      %6650 = vmatprep.subr.bf16.mxu0 0
      %6651 = vmatpush1.bf16.msra.mxu0 0
      %6652 = vmatprep.subr.bf16.mxu0 0
      %6653 = vmatpush1.bf16.msra.mxu0 0
      %6654 = vmatprep.subr.bf16.mxu0 0
      %6655 = vmatpush1.bf16.msra.mxu0 0
      %6656 = vmatprep.subr.bf16.mxu0 0
      %6657 = vmatpush1.bf16.msra.mxu0 0
      %6658 = vmatprep.subr.bf16.mxu0 0
      %6659 = vmatpush1.bf16.msra.mxu0 0
      %6660 = vmatprep.subr.bf16.mxu0 0
      %6661 = vmatpush1.bf16.msra.mxu0 0
      %6662 = vmatprep.subr.bf16.mxu0 0
      %6663 = vmatpush1.bf16.msra.mxu0 0
      %6664 = vmatprep.subr.bf16.mxu0 0
      %6665 = vmatpush1.bf16.msra.mxu0 0
      %6666 = vmatprep.subr.bf16.mxu0 0
      %6667 = vmatpush1.bf16.msra.mxu0 0
      %6668 = vmatprep.mubr.bf16.mxu0 0
      %6669 = vmatmul.mubr.bf16.gmra.mrb[0].mxu0 %v6556
      %v6670 = vpop.f32.mrb[0].mxu0
      %v6671 = vadd.f32 0.0, %v6670
      %v6672 = vpop.f32.mrb[0].mxu0
      %v6673 = vadd.f32 0.0, %v6672
      %v6674 = vpop.f32.mrb[0].mxu0
      %v6675 = vpop.f32.mrb[0].mxu0
      %6676 = vdwg.mxu0
      %6677 = vmatprep.subr.bf16.mxu0 %v6575
      %6678 = vmatpush1.bf16.msra.mxu0 %v6572
      %6679 = vmatprep.subr.bf16.mxu0 0
      %6680 = vmatpush1.bf16.msra.mxu0 0
      %6681 = vmatprep.subr.bf16.mxu0 0
      %6682 = vmatpush1.bf16.msra.mxu0 0
      %6683 = vmatprep.subr.bf16.mxu0 0
      %6684 = vmatpush1.bf16.msra.mxu0 0
      %6685 = vmatprep.subr.bf16.mxu0 0
      %6686 = vmatpush1.bf16.msra.mxu0 0
      %6687 = vmatprep.subr.bf16.mxu0 0
      %6688 = vmatpush1.bf16.msra.mxu0 0
      %6689 = vmatprep.subr.bf16.mxu0 0
      %6690 = vmatpush1.bf16.msra.mxu0 0
      %6691 = vmatprep.subr.bf16.mxu0 0
      %6692 = vmatpush1.bf16.msra.mxu0 0
      %6693 = vmatprep.subr.bf16.mxu0 0
      %6694 = vmatpush1.bf16.msra.mxu0 0
      %6695 = vmatprep.subr.bf16.mxu0 0
      %6696 = vmatpush1.bf16.msra.mxu0 0
      %6697 = vmatprep.subr.bf16.mxu0 0
      %6698 = vmatpush1.bf16.msra.mxu0 0
      %6699 = vmatprep.subr.bf16.mxu0 0
      %6700 = vmatpush1.bf16.msra.mxu0 0
      %6701 = vmatprep.subr.bf16.mxu0 0
      %6702 = vmatpush1.bf16.msra.mxu0 0
      %6703 = vmatprep.subr.bf16.mxu0 0
      %6704 = vmatpush1.bf16.msra.mxu0 0
      %6705 = vmatprep.subr.bf16.mxu0 0
      %6706 = vmatpush1.bf16.msra.mxu0 0
      %6707 = vmatprep.subr.bf16.mxu0 0
      %6708 = vmatpush1.bf16.msra.mxu0 0
      %6709 = vmatprep.mubr.bf16.mxu0 0
      %6710 = vmatmul.mubr.bf16.gmra.mrb[0].mxu0 %v6556
      %v6711 = vpop.f32.mrb[0].mxu0
      %v6712 = vadd.f32 0.0, %v6711
      %v6713 = vpop.f32.mrb[0].mxu0
      %v6714 = vadd.f32 0.0, %v6713
      %v6715 = vpop.f32.mrb[0].mxu0
      %v6716 = vpop.f32.mrb[0].mxu0
      %6717 = vdwg.mxu0
      %6718 = vmatprep.subr.bf16.mxu0 %v6581
      %6719 = vmatpush1.bf16.msra.mxu0 %v6578
      %6720 = vmatprep.subr.bf16.mxu0 0
      %6721 = vmatpush1.bf16.msra.mxu0 0
      %6722 = vmatprep.subr.bf16.mxu0 0
      %6723 = vmatpush1.bf16.msra.mxu0 0
      %6724 = vmatprep.subr.bf16.mxu0 0
      %6725 = vmatpush1.bf16.msra.mxu0 0
      %6726 = vmatprep.subr.bf16.mxu0 0
      %6727 = vmatpush1.bf16.msra.mxu0 0
      %6728 = vmatprep.subr.bf16.mxu0 0
      %6729 = vmatpush1.bf16.msra.mxu0 0
      %6730 = vmatprep.subr.bf16.mxu0 0
      %6731 = vmatpush1.bf16.msra.mxu0 0
      %6732 = vmatprep.subr.bf16.mxu0 0
      %6733 = vmatpush1.bf16.msra.mxu0 0
      %6734 = vmatprep.subr.bf16.mxu0 0
      %6735 = vmatpush1.bf16.msra.mxu0 0
      %6736 = vmatprep.subr.bf16.mxu0 0
      %6737 = vmatpush1.bf16.msra.mxu0 0
      %6738 = vmatprep.subr.bf16.mxu0 0
      %6739 = vmatpush1.bf16.msra.mxu0 0
      %6740 = vmatprep.subr.bf16.mxu0 0
      %6741 = vmatpush1.bf16.msra.mxu0 0
      %6742 = vmatprep.subr.bf16.mxu0 0
      %6743 = vmatpush1.bf16.msra.mxu0 0
      %6744 = vmatprep.subr.bf16.mxu0 0
      %6745 = vmatpush1.bf16.msra.mxu0 0
      %6746 = vmatprep.subr.bf16.mxu0 0
      %6747 = vmatpush1.bf16.msra.mxu0 0
      %6748 = vmatprep.subr.bf16.mxu0 0
      %6749 = vmatpush1.bf16.msra.mxu0 0
      %6750 = vmatprep.mubr.bf16.mxu0 0
      %6751 = vmatmul.mubr.bf16.gmra.mrb[0].mxu0 %v6556
      %v6752 = vpop.f32.mrb[0].mxu0
      %v6753 = vadd.f32 0.0, %v6752
      %v6754 = vpop.f32.mrb[0].mxu0
      %v6755 = vadd.f32 0.0, %v6754
      %v6756 = vpop.f32.mrb[0].mxu0
      %v6757 = vpop.f32.mrb[0].mxu0
      %6758 = vdwg.mxu0
      %6759 = vmatprep.subr.bf16.mxu0 %v6587
      %6760 = vmatpush1.bf16.msra.mxu0 %v6584
      %6761 = vmatprep.subr.bf16.mxu0 0
      %6762 = vmatpush1.bf16.msra.mxu0 0
      %6763 = vmatprep.subr.bf16.mxu0 0
      %6764 = vmatpush1.bf16.msra.mxu0 0
      %6765 = vmatprep.subr.bf16.mxu0 0
      %6766 = vmatpush1.bf16.msra.mxu0 0
      %6767 = vmatprep.subr.bf16.mxu0 0
      %6768 = vmatpush1.bf16.msra.mxu0 0
      %6769 = vmatprep.subr.bf16.mxu0 0
      %6770 = vmatpush1.bf16.msra.mxu0 0
      %6771 = vmatprep.subr.bf16.mxu0 0
      %6772 = vmatpush1.bf16.msra.mxu0 0
      %6773 = vmatprep.subr.bf16.mxu0 0
      %6774 = vmatpush1.bf16.msra.mxu0 0
      %6775 = vmatprep.subr.bf16.mxu0 0
      %6776 = vmatpush1.bf16.msra.mxu0 0
      %6777 = vmatprep.subr.bf16.mxu0 0
      %6778 = vmatpush1.bf16.msra.mxu0 0
      %6779 = vmatprep.subr.bf16.mxu0 0
      %6780 = vmatpush1.bf16.msra.mxu0 0
      %6781 = vmatprep.subr.bf16.mxu0 0
      %6782 = vmatpush1.bf16.msra.mxu0 0
      %6783 = vmatprep.subr.bf16.mxu0 0
      %6784 = vmatpush1.bf16.msra.mxu0 0
      %6785 = vmatprep.subr.bf16.mxu0 0
      %6786 = vmatpush1.bf16.msra.mxu0 0
      %6787 = vmatprep.subr.bf16.mxu0 0
      %6788 = vmatpush1.bf16.msra.mxu0 0
      %6789 = vmatprep.subr.bf16.mxu0 0
      %6790 = vmatpush1.bf16.msra.mxu0 0
      %6791 = vmatprep.mubr.bf16.mxu0 0
      %6792 = vmatmul.mubr.bf16.gmra.mrb[0].mxu0 %v6556
      %v6793 = vpop.f32.mrb[0].mxu0
      %v6794 = vadd.f32 0.0, %v6793
      %v6795 = vpop.f32.mrb[0].mxu0
      %v6796 = vadd.f32 0.0, %v6795
      %v6797 = vpop.f32.mrb[0].mxu0
      %v6798 = vpop.f32.mrb[0].mxu0
      %6799 = vdwg.mxu0
      %6800 = vmatprep.subr.bf16.mxu0 %v6593
      %6801 = vmatpush1.bf16.msra.mxu0 %v6590
      %6802 = vmatprep.subr.bf16.mxu0 0
      %6803 = vmatpush1.bf16.msra.mxu0 0
      %6804 = vmatprep.subr.bf16.mxu0 0
      %6805 = vmatpush1.bf16.msra.mxu0 0
      %6806 = vmatprep.subr.bf16.mxu0 0
      %6807 = vmatpush1.bf16.msra.mxu0 0
      %6808 = vmatprep.subr.bf16.mxu0 0
      %6809 = vmatpush1.bf16.msra.mxu0 0
      %6810 = vmatprep.subr.bf16.mxu0 0
      %6811 = vmatpush1.bf16.msra.mxu0 0
      %6812 = vmatprep.subr.bf16.mxu0 0
      %6813 = vmatpush1.bf16.msra.mxu0 0
      %6814 = vmatprep.subr.bf16.mxu0 0
      %6815 = vmatpush1.bf16.msra.mxu0 0
      %6816 = vmatprep.subr.bf16.mxu0 0
      %6817 = vmatpush1.bf16.msra.mxu0 0
      %6818 = vmatprep.subr.bf16.mxu0 0
      %6819 = vmatpush1.bf16.msra.mxu0 0
      %6820 = vmatprep.subr.bf16.mxu0 0
      %6821 = vmatpush1.bf16.msra.mxu0 0
      %6822 = vmatprep.subr.bf16.mxu0 0
      %6823 = vmatpush1.bf16.msra.mxu0 0
      %6824 = vmatprep.subr.bf16.mxu0 0
      %6825 = vmatpush1.bf16.msra.mxu0 0
      %6826 = vmatprep.subr.bf16.mxu0 0
      %6827 = vmatpush1.bf16.msra.mxu0 0
      %6828 = vmatprep.subr.bf16.mxu0 0
      %6829 = vmatpush1.bf16.msra.mxu0 0
      %6830 = vmatprep.subr.bf16.mxu0 0
      %6831 = vmatpush1.bf16.msra.mxu0 0
      %6832 = vmatprep.mubr.bf16.mxu0 0
      %6833 = vmatmul.mubr.bf16.gmra.mrb[0].mxu0 %v6556
      %v6834 = vpop.f32.mrb[0].mxu0
      %v6835 = vadd.f32 0.0, %v6834
      %v6836 = vpop.f32.mrb[0].mxu0
      %v6837 = vadd.f32 0.0, %v6836
      %v6838 = vpop.f32.mrb[0].mxu0
      %v6839 = vpop.f32.mrb[0].mxu0
      %6840 = vdwg.mxu0
      %v6847 = vunpack.c.l.b16 %v6510
      %v6848 = vunpack.c.h.b16 %v6510
      %v6849 = vunpack.c.l.b16 %v6511
      %v6850 = vunpack.c.h.b16 %v6511
      %v6851 = vunpack.c.l.b16 %v6512
      %v6852 = vunpack.c.h.b16 %v6512
      %v6853 = vunpack.c.l.b16 %v6513
      %v6854 = vunpack.c.h.b16 %v6513
      %v6855 = vunpack.c.l.b16 %v6514
      %v6856 = vunpack.c.h.b16 %v6514
      %v6857 = vunpack.c.l.b16 %v6515
      %v6858 = vunpack.c.h.b16 %v6515
      %v6859 = vpack.c.b16 %v6847, %v6847
      %v6860 = vpack.c.b16 %v6848, %v6848
      %v6861 = vpack.c.b16 %v6849, %v6849
      %v6862 = vpack.c.b16 %v6850, %v6850
      %v6863 = vpack.c.b16 %v6851, %v6851
      %v6864 = vpack.c.b16 %v6852, %v6852
      %v6865 = vpack.c.b16 %v6853, %v6853
      %v6866 = vpack.c.b16 %v6854, %v6854
      %v6867 = vpack.c.b16 %v6855, %v6855
      %v6868 = vpack.c.b16 %v6856, %v6856
      %v6869 = vpack.c.b16 %v6857, %v6857
      %v6870 = vpack.c.b16 %v6858, %v6858
      %v6872 = vsel %vm6554, %v6509, 0
      %v6875 = vsel %vm6558, %v6859, 0
      %v6878 = vsel %vm6558, %v6860, 0
      %v6881 = vsel %vm6558, %v6861, 0
      %v6884 = vsel %vm6558, %v6862, 0
      %v6887 = vsel %vm6558, %v6863, 0
      %v6890 = vsel %vm6558, %v6864, 0
      %v6893 = vsel %vm6558, %v6865, 0
      %v6896 = vsel %vm6558, %v6866, 0
      %v6899 = vsel %vm6558, %v6867, 0
      %v6902 = vsel %vm6558, %v6868, 0
      %v6905 = vsel %vm6558, %v6869, 0
      %v6908 = vsel %vm6558, %v6870, 0
      %6910 = vmatprep.subr.bf16.mxu0 %v6878
      %6911 = vmatpush1.bf16.msra.mxu0 %v6875
      %6912 = vmatprep.subr.bf16.mxu0 0
      %6913 = vmatpush1.bf16.msra.mxu0 0
      %6914 = vmatprep.subr.bf16.mxu0 0
      %6915 = vmatpush1.bf16.msra.mxu0 0
      %6916 = vmatprep.subr.bf16.mxu0 0
      %6917 = vmatpush1.bf16.msra.mxu0 0
      %6918 = vmatprep.subr.bf16.mxu0 0
      %6919 = vmatpush1.bf16.msra.mxu0 0
      %6920 = vmatprep.subr.bf16.mxu0 0
      %6921 = vmatpush1.bf16.msra.mxu0 0
      %6922 = vmatprep.subr.bf16.mxu0 0
      %6923 = vmatpush1.bf16.msra.mxu0 0
      %6924 = vmatprep.subr.bf16.mxu0 0
      %6925 = vmatpush1.bf16.msra.mxu0 0
      %6926 = vmatprep.subr.bf16.mxu0 0
      %6927 = vmatpush1.bf16.msra.mxu0 0
      %6928 = vmatprep.subr.bf16.mxu0 0
      %6929 = vmatpush1.bf16.msra.mxu0 0
      %6930 = vmatprep.subr.bf16.mxu0 0
      %6931 = vmatpush1.bf16.msra.mxu0 0
      %6932 = vmatprep.subr.bf16.mxu0 0
      %6933 = vmatpush1.bf16.msra.mxu0 0
      %6934 = vmatprep.subr.bf16.mxu0 0
      %6935 = vmatpush1.bf16.msra.mxu0 0
      %6936 = vmatprep.subr.bf16.mxu0 0
      %6937 = vmatpush1.bf16.msra.mxu0 0
      %6938 = vmatprep.subr.bf16.mxu0 0
      %6939 = vmatpush1.bf16.msra.mxu0 0
      %6940 = vmatprep.subr.bf16.mxu0 0
      %6941 = vmatpush1.bf16.msra.mxu0 0
      %6942 = vmatprep.mubr.bf16.mxu0 0
      %6943 = vmatmul.mubr.bf16.gmra.mrb[0].mxu0 %v6872
      %v6944 = vpop.f32.mrb[0].mxu0
      %v6945 = vadd.f32 %v6630, %v6944
      %v6946 = vpop.f32.mrb[0].mxu0
      %v6947 = vadd.f32 %v6632, %v6946
      %v6948 = vpop.f32.mrb[0].mxu0
      %v6949 = vpop.f32.mrb[0].mxu0
      %6950 = vdwg.mxu0
      %6951 = vmatprep.subr.bf16.mxu0 %v6884
      %6952 = vmatpush1.bf16.msra.mxu0 %v6881
      %6953 = vmatprep.subr.bf16.mxu0 0
      %6954 = vmatpush1.bf16.msra.mxu0 0
      %6955 = vmatprep.subr.bf16.mxu0 0
      %6956 = vmatpush1.bf16.msra.mxu0 0
      %6957 = vmatprep.subr.bf16.mxu0 0
      %6958 = vmatpush1.bf16.msra.mxu0 0
      %6959 = vmatprep.subr.bf16.mxu0 0
      %6960 = vmatpush1.bf16.msra.mxu0 0
      %6961 = vmatprep.subr.bf16.mxu0 0
      %6962 = vmatpush1.bf16.msra.mxu0 0
      %6963 = vmatprep.subr.bf16.mxu0 0
      %6964 = vmatpush1.bf16.msra.mxu0 0
      %6965 = vmatprep.subr.bf16.mxu0 0
      %6966 = vmatpush1.bf16.msra.mxu0 0
      %6967 = vmatprep.subr.bf16.mxu0 0
      %6968 = vmatpush1.bf16.msra.mxu0 0
      %6969 = vmatprep.subr.bf16.mxu0 0
      %6970 = vmatpush1.bf16.msra.mxu0 0
      %6971 = vmatprep.subr.bf16.mxu0 0
      %6972 = vmatpush1.bf16.msra.mxu0 0
      %6973 = vmatprep.subr.bf16.mxu0 0
      %6974 = vmatpush1.bf16.msra.mxu0 0
      %6975 = vmatprep.subr.bf16.mxu0 0
      %6976 = vmatpush1.bf16.msra.mxu0 0
      %6977 = vmatprep.subr.bf16.mxu0 0
      %6978 = vmatpush1.bf16.msra.mxu0 0
      %6979 = vmatprep.subr.bf16.mxu0 0
      %6980 = vmatpush1.bf16.msra.mxu0 0
      %6981 = vmatprep.subr.bf16.mxu0 0
      %6982 = vmatpush1.bf16.msra.mxu0 0
      %6983 = vmatprep.mubr.bf16.mxu0 0
      %6984 = vmatmul.mubr.bf16.gmra.mrb[0].mxu0 %v6872
      %v6985 = vpop.f32.mrb[0].mxu0
      %v6986 = vadd.f32 %v6671, %v6985
      %v6987 = vpop.f32.mrb[0].mxu0
      %v6988 = vadd.f32 %v6673, %v6987
      %v6989 = vpop.f32.mrb[0].mxu0
      %v6990 = vpop.f32.mrb[0].mxu0
      %6991 = vdwg.mxu0
      %6992 = vmatprep.subr.bf16.mxu0 %v6890
      %6993 = vmatpush1.bf16.msra.mxu0 %v6887
      %6994 = vmatprep.subr.bf16.mxu0 0
      %6995 = vmatpush1.bf16.msra.mxu0 0
      %6996 = vmatprep.subr.bf16.mxu0 0
      %6997 = vmatpush1.bf16.msra.mxu0 0
      %6998 = vmatprep.subr.bf16.mxu0 0
      %6999 = vmatpush1.bf16.msra.mxu0 0
      %7000 = vmatprep.subr.bf16.mxu0 0
      %7001 = vmatpush1.bf16.msra.mxu0 0
      %7002 = vmatprep.subr.bf16.mxu0 0
      %7003 = vmatpush1.bf16.msra.mxu0 0
      %7004 = vmatprep.subr.bf16.mxu0 0
      %7005 = vmatpush1.bf16.msra.mxu0 0
      %7006 = vmatprep.subr.bf16.mxu0 0
      %7007 = vmatpush1.bf16.msra.mxu0 0
      %7008 = vmatprep.subr.bf16.mxu0 0
      %7009 = vmatpush1.bf16.msra.mxu0 0
      %7010 = vmatprep.subr.bf16.mxu0 0
      %7011 = vmatpush1.bf16.msra.mxu0 0
      %7012 = vmatprep.subr.bf16.mxu0 0
      %7013 = vmatpush1.bf16.msra.mxu0 0
      %7014 = vmatprep.subr.bf16.mxu0 0
      %7015 = vmatpush1.bf16.msra.mxu0 0
      %7016 = vmatprep.subr.bf16.mxu0 0
      %7017 = vmatpush1.bf16.msra.mxu0 0
      %7018 = vmatprep.subr.bf16.mxu0 0
      %7019 = vmatpush1.bf16.msra.mxu0 0
      %7020 = vmatprep.subr.bf16.mxu0 0
      %7021 = vmatpush1.bf16.msra.mxu0 0
      %7022 = vmatprep.subr.bf16.mxu0 0
      %7023 = vmatpush1.bf16.msra.mxu0 0
      %7024 = vmatprep.mubr.bf16.mxu0 0
      %7025 = vmatmul.mubr.bf16.gmra.mrb[0].mxu0 %v6872
      %v7026 = vpop.f32.mrb[0].mxu0
      %v7027 = vadd.f32 %v6712, %v7026
      %v7028 = vpop.f32.mrb[0].mxu0
      %v7029 = vadd.f32 %v6714, %v7028
      %v7030 = vpop.f32.mrb[0].mxu0
      %v7031 = vpop.f32.mrb[0].mxu0
      %7032 = vdwg.mxu0
      %7033 = vmatprep.subr.bf16.mxu0 %v6896
      %7034 = vmatpush1.bf16.msra.mxu0 %v6893
      %7035 = vmatprep.subr.bf16.mxu0 0
      %7036 = vmatpush1.bf16.msra.mxu0 0
      %7037 = vmatprep.subr.bf16.mxu0 0
      %7038 = vmatpush1.bf16.msra.mxu0 0
      %7039 = vmatprep.subr.bf16.mxu0 0
      %7040 = vmatpush1.bf16.msra.mxu0 0
      %7041 = vmatprep.subr.bf16.mxu0 0
      %7042 = vmatpush1.bf16.msra.mxu0 0
      %7043 = vmatprep.subr.bf16.mxu0 0
      %7044 = vmatpush1.bf16.msra.mxu0 0
      %7045 = vmatprep.subr.bf16.mxu0 0
      %7046 = vmatpush1.bf16.msra.mxu0 0
      %7047 = vmatprep.subr.bf16.mxu0 0
      %7048 = vmatpush1.bf16.msra.mxu0 0
      %7049 = vmatprep.subr.bf16.mxu0 0
      %7050 = vmatpush1.bf16.msra.mxu0 0
      %7051 = vmatprep.subr.bf16.mxu0 0
      %7052 = vmatpush1.bf16.msra.mxu0 0
      %7053 = vmatprep.subr.bf16.mxu0 0
      %7054 = vmatpush1.bf16.msra.mxu0 0
      %7055 = vmatprep.subr.bf16.mxu0 0
      %7056 = vmatpush1.bf16.msra.mxu0 0
      %7057 = vmatprep.subr.bf16.mxu0 0
      %7058 = vmatpush1.bf16.msra.mxu0 0
      %7059 = vmatprep.subr.bf16.mxu0 0
      %7060 = vmatpush1.bf16.msra.mxu0 0
      %7061 = vmatprep.subr.bf16.mxu0 0
      %7062 = vmatpush1.bf16.msra.mxu0 0
      %7063 = vmatprep.subr.bf16.mxu0 0
      %7064 = vmatpush1.bf16.msra.mxu0 0
      %7065 = vmatprep.mubr.bf16.mxu0 0
      %7066 = vmatmul.mubr.bf16.gmra.mrb[0].mxu0 %v6872
      %v7067 = vpop.f32.mrb[0].mxu0
      %v7068 = vadd.f32 %v6753, %v7067
      %v7069 = vpop.f32.mrb[0].mxu0
      %v7070 = vadd.f32 %v6755, %v7069
      %v7071 = vpop.f32.mrb[0].mxu0
      %v7072 = vpop.f32.mrb[0].mxu0
      %7073 = vdwg.mxu0
      %7074 = vmatprep.subr.bf16.mxu0 %v6902
      %7075 = vmatpush1.bf16.msra.mxu0 %v6899
      %7076 = vmatprep.subr.bf16.mxu0 0
      %7077 = vmatpush1.bf16.msra.mxu0 0
      %7078 = vmatprep.subr.bf16.mxu0 0
      %7079 = vmatpush1.bf16.msra.mxu0 0
      %7080 = vmatprep.subr.bf16.mxu0 0
      %7081 = vmatpush1.bf16.msra.mxu0 0
      %7082 = vmatprep.subr.bf16.mxu0 0
      %7083 = vmatpush1.bf16.msra.mxu0 0
      %7084 = vmatprep.subr.bf16.mxu0 0
      %7085 = vmatpush1.bf16.msra.mxu0 0
      %7086 = vmatprep.subr.bf16.mxu0 0
      %7087 = vmatpush1.bf16.msra.mxu0 0
      %7088 = vmatprep.subr.bf16.mxu0 0
      %7089 = vmatpush1.bf16.msra.mxu0 0
      %7090 = vmatprep.subr.bf16.mxu0 0
      %7091 = vmatpush1.bf16.msra.mxu0 0
      %7092 = vmatprep.subr.bf16.mxu0 0
      %7093 = vmatpush1.bf16.msra.mxu0 0
      %7094 = vmatprep.subr.bf16.mxu0 0
      %7095 = vmatpush1.bf16.msra.mxu0 0
      %7096 = vmatprep.subr.bf16.mxu0 0
      %7097 = vmatpush1.bf16.msra.mxu0 0
      %7098 = vmatprep.subr.bf16.mxu0 0
      %7099 = vmatpush1.bf16.msra.mxu0 0
      %7100 = vmatprep.subr.bf16.mxu0 0
      %7101 = vmatpush1.bf16.msra.mxu0 0
      %7102 = vmatprep.subr.bf16.mxu0 0
      %7103 = vmatpush1.bf16.msra.mxu0 0
      %7104 = vmatprep.subr.bf16.mxu0 0
      %7105 = vmatpush1.bf16.msra.mxu0 0
      %7106 = vmatprep.mubr.bf16.mxu0 0
      %7107 = vmatmul.mubr.bf16.gmra.mrb[0].mxu0 %v6872
      %v7108 = vpop.f32.mrb[0].mxu0
      %v7109 = vadd.f32 %v6794, %v7108
      %v7110 = vpop.f32.mrb[0].mxu0
      %v7111 = vadd.f32 %v6796, %v7110
      %v7112 = vpop.f32.mrb[0].mxu0
      %v7113 = vpop.f32.mrb[0].mxu0
      %7114 = vdwg.mxu0
      %7115 = vmatprep.subr.bf16.mxu0 %v6908
      %7116 = vmatpush1.bf16.msra.mxu0 %v6905
      %7117 = vmatprep.subr.bf16.mxu0 0
      %7118 = vmatpush1.bf16.msra.mxu0 0
      %7119 = vmatprep.subr.bf16.mxu0 0
      %7120 = vmatpush1.bf16.msra.mxu0 0
      %7121 = vmatprep.subr.bf16.mxu0 0
      %7122 = vmatpush1.bf16.msra.mxu0 0
      %7123 = vmatprep.subr.bf16.mxu0 0
      %7124 = vmatpush1.bf16.msra.mxu0 0
      %7125 = vmatprep.subr.bf16.mxu0 0
      %7126 = vmatpush1.bf16.msra.mxu0 0
      %7127 = vmatprep.subr.bf16.mxu0 0
      %7128 = vmatpush1.bf16.msra.mxu0 0
      %7129 = vmatprep.subr.bf16.mxu0 0
      %7130 = vmatpush1.bf16.msra.mxu0 0
      %7131 = vmatprep.subr.bf16.mxu0 0
      %7132 = vmatpush1.bf16.msra.mxu0 0
      %7133 = vmatprep.subr.bf16.mxu0 0
      %7134 = vmatpush1.bf16.msra.mxu0 0
      %7135 = vmatprep.subr.bf16.mxu0 0
      %7136 = vmatpush1.bf16.msra.mxu0 0
      %7137 = vmatprep.subr.bf16.mxu0 0
      %7138 = vmatpush1.bf16.msra.mxu0 0
      %7139 = vmatprep.subr.bf16.mxu0 0
      %7140 = vmatpush1.bf16.msra.mxu0 0
      %7141 = vmatprep.subr.bf16.mxu0 0
      %7142 = vmatpush1.bf16.msra.mxu0 0
      %7143 = vmatprep.subr.bf16.mxu0 0
      %7144 = vmatpush1.bf16.msra.mxu0 0
      %7145 = vmatprep.subr.bf16.mxu0 0
      %7146 = vmatpush1.bf16.msra.mxu0 0
      %7147 = vmatprep.mubr.bf16.mxu0 0
      %7148 = vmatmul.mubr.bf16.gmra.mrb[0].mxu0 %v6872
      %v7149 = vpop.f32.mrb[0].mxu0
      %v7150 = vadd.f32 %v6835, %v7149
      %v7151 = vpop.f32.mrb[0].mxu0
      %v7152 = vadd.f32 %v6837, %v7151
      %v7153 = vpop.f32.mrb[0].mxu0
      %v7154 = vpop.f32.mrb[0].mxu0
      %7155 = vdwg.mxu0
      %s7156 = scalar_lea.vmem %s4, 8
      %v7157 = vld [vmem:[%s7156] sm:$0xf]
      %v7158 = vld [vmem:[#allocation2 + $0x18] sm:$0xff]
      %v7159 = vld [vmem:[#allocation2 + $0x20] sm:$0xff]
      %v7160 = vld [vmem:[#allocation2 + $0x28] sm:$0xff]
      %v7161 = vld [vmem:[#allocation2 + $0x30] sm:$0xff]
      %v7162 = vld [vmem:[#allocation2 + $0x38] sm:$0xff]
      %v7163 = vld [vmem:[#allocation2 + $0x40] sm:$0xff]
      %v7170 = vunpack.c.l.b16 %v7158
      %v7171 = vunpack.c.h.b16 %v7158
      %v7172 = vunpack.c.l.b16 %v7159
      %v7173 = vunpack.c.h.b16 %v7159
      %v7174 = vunpack.c.l.b16 %v7160
      %v7175 = vunpack.c.h.b16 %v7160
      %v7176 = vunpack.c.l.b16 %v7161
      %v7177 = vunpack.c.h.b16 %v7161
      %v7178 = vunpack.c.l.b16 %v7162
      %v7179 = vunpack.c.h.b16 %v7162
      %v7180 = vunpack.c.l.b16 %v7163
      %v7181 = vunpack.c.h.b16 %v7163
      %v7182 = vpack.c.b16 %v7170, %v7170
      %v7183 = vpack.c.b16 %v7171, %v7171
      %v7184 = vpack.c.b16 %v7172, %v7172
      %v7185 = vpack.c.b16 %v7173, %v7173
      %v7186 = vpack.c.b16 %v7174, %v7174
      %v7187 = vpack.c.b16 %v7175, %v7175
      %v7188 = vpack.c.b16 %v7176, %v7176
      %v7189 = vpack.c.b16 %v7177, %v7177
      %v7190 = vpack.c.b16 %v7178, %v7178
      %v7191 = vpack.c.b16 %v7179, %v7179
      %v7192 = vpack.c.b16 %v7180, %v7180
      %v7193 = vpack.c.b16 %v7181, %v7181
      %v7195 = vsel %vm6554, %v7157, 0
      %v7198 = vsel %vm6558, %v7182, 0
      %v7201 = vsel %vm6558, %v7183, 0
      %v7204 = vsel %vm6558, %v7184, 0
      %v7207 = vsel %vm6558, %v7185, 0
      %v7210 = vsel %vm6558, %v7186, 0
      %v7213 = vsel %vm6558, %v7187, 0
      %v7216 = vsel %vm6558, %v7188, 0
      %v7219 = vsel %vm6558, %v7189, 0
      %v7222 = vsel %vm6558, %v7190, 0
      %v7225 = vsel %vm6558, %v7191, 0
      %v7228 = vsel %vm6558, %v7192, 0
      %v7231 = vsel %vm6558, %v7193, 0
      %7233 = vmatprep.subr.bf16.mxu0 %v7201
      %7234 = vmatpush1.bf16.msra.mxu0 %v7198
      %7235 = vmatprep.subr.bf16.mxu0 0
      %7236 = vmatpush1.bf16.msra.mxu0 0
      %7237 = vmatprep.subr.bf16.mxu0 0
      %7238 = vmatpush1.bf16.msra.mxu0 0
      %7239 = vmatprep.subr.bf16.mxu0 0
      %7240 = vmatpush1.bf16.msra.mxu0 0
      %7241 = vmatprep.subr.bf16.mxu0 0
      %7242 = vmatpush1.bf16.msra.mxu0 0
      %7243 = vmatprep.subr.bf16.mxu0 0
      %7244 = vmatpush1.bf16.msra.mxu0 0
      %7245 = vmatprep.subr.bf16.mxu0 0
      %7246 = vmatpush1.bf16.msra.mxu0 0
      %7247 = vmatprep.subr.bf16.mxu0 0
      %7248 = vmatpush1.bf16.msra.mxu0 0
      %7249 = vmatprep.subr.bf16.mxu0 0
      %7250 = vmatpush1.bf16.msra.mxu0 0
      %7251 = vmatprep.subr.bf16.mxu0 0
      %7252 = vmatpush1.bf16.msra.mxu0 0
      %7253 = vmatprep.subr.bf16.mxu0 0
      %7254 = vmatpush1.bf16.msra.mxu0 0
      %7255 = vmatprep.subr.bf16.mxu0 0
      %7256 = vmatpush1.bf16.msra.mxu0 0
      %7257 = vmatprep.subr.bf16.mxu0 0
      %7258 = vmatpush1.bf16.msra.mxu0 0
      %7259 = vmatprep.subr.bf16.mxu0 0
      %7260 = vmatpush1.bf16.msra.mxu0 0
      %7261 = vmatprep.subr.bf16.mxu0 0
      %7262 = vmatpush1.bf16.msra.mxu0 0
      %7263 = vmatprep.subr.bf16.mxu0 0
      %7264 = vmatpush1.bf16.msra.mxu0 0
      %7265 = vmatprep.mubr.bf16.mxu0 0
      %7266 = vmatmul.mubr.bf16.gmra.mrb[0].mxu0 %v7195
      %v7267 = vpop.f32.mrb[0].mxu0
      %v7268 = vadd.f32 0.0, %v7267
      %v7269 = vpop.f32.mrb[0].mxu0
      %v7270 = vadd.f32 0.0, %v7269
      %v7271 = vpop.f32.mrb[0].mxu0
      %v7272 = vpop.f32.mrb[0].mxu0
      %7273 = vdwg.mxu0
      %7274 = vmatprep.subr.bf16.mxu0 %v7207
      %7275 = vmatpush1.bf16.msra.mxu0 %v7204
      %7276 = vmatprep.subr.bf16.mxu0 0
      %7277 = vmatpush1.bf16.msra.mxu0 0
      %7278 = vmatprep.subr.bf16.mxu0 0
      %7279 = vmatpush1.bf16.msra.mxu0 0
      %7280 = vmatprep.subr.bf16.mxu0 0
      %7281 = vmatpush1.bf16.msra.mxu0 0
      %7282 = vmatprep.subr.bf16.mxu0 0
      %7283 = vmatpush1.bf16.msra.mxu0 0
      %7284 = vmatprep.subr.bf16.mxu0 0
      %7285 = vmatpush1.bf16.msra.mxu0 0
      %7286 = vmatprep.subr.bf16.mxu0 0
      %7287 = vmatpush1.bf16.msra.mxu0 0
      %7288 = vmatprep.subr.bf16.mxu0 0
      %7289 = vmatpush1.bf16.msra.mxu0 0
      %7290 = vmatprep.subr.bf16.mxu0 0
      %7291 = vmatpush1.bf16.msra.mxu0 0
      %7292 = vmatprep.subr.bf16.mxu0 0
      %7293 = vmatpush1.bf16.msra.mxu0 0
      %7294 = vmatprep.subr.bf16.mxu0 0
      %7295 = vmatpush1.bf16.msra.mxu0 0
      %7296 = vmatprep.subr.bf16.mxu0 0
      %7297 = vmatpush1.bf16.msra.mxu0 0
      %7298 = vmatprep.subr.bf16.mxu0 0
      %7299 = vmatpush1.bf16.msra.mxu0 0
      %7300 = vmatprep.subr.bf16.mxu0 0
      %7301 = vmatpush1.bf16.msra.mxu0 0
      %7302 = vmatprep.subr.bf16.mxu0 0
      %7303 = vmatpush1.bf16.msra.mxu0 0
      %7304 = vmatprep.subr.bf16.mxu0 0
      %7305 = vmatpush1.bf16.msra.mxu0 0
      %7306 = vmatprep.mubr.bf16.mxu0 0
      %7307 = vmatmul.mubr.bf16.gmra.mrb[0].mxu0 %v7195
      %v7308 = vpop.f32.mrb[0].mxu0
      %v7309 = vadd.f32 0.0, %v7308
      %v7310 = vpop.f32.mrb[0].mxu0
      %v7311 = vadd.f32 0.0, %v7310
      %v7312 = vpop.f32.mrb[0].mxu0
      %v7313 = vpop.f32.mrb[0].mxu0
      %7314 = vdwg.mxu0
      %7315 = vmatprep.subr.bf16.mxu0 %v7213
      %7316 = vmatpush1.bf16.msra.mxu0 %v7210
      %7317 = vmatprep.subr.bf16.mxu0 0
      %7318 = vmatpush1.bf16.msra.mxu0 0
      %7319 = vmatprep.subr.bf16.mxu0 0
      %7320 = vmatpush1.bf16.msra.mxu0 0
      %7321 = vmatprep.subr.bf16.mxu0 0
      %7322 = vmatpush1.bf16.msra.mxu0 0
      %7323 = vmatprep.subr.bf16.mxu0 0
      %7324 = vmatpush1.bf16.msra.mxu0 0
      %7325 = vmatprep.subr.bf16.mxu0 0
      %7326 = vmatpush1.bf16.msra.mxu0 0
      %7327 = vmatprep.subr.bf16.mxu0 0
      %7328 = vmatpush1.bf16.msra.mxu0 0
      %7329 = vmatprep.subr.bf16.mxu0 0
      %7330 = vmatpush1.bf16.msra.mxu0 0
      %7331 = vmatprep.subr.bf16.mxu0 0
      %7332 = vmatpush1.bf16.msra.mxu0 0
      %7333 = vmatprep.subr.bf16.mxu0 0
      %7334 = vmatpush1.bf16.msra.mxu0 0
      %7335 = vmatprep.subr.bf16.mxu0 0
      %7336 = vmatpush1.bf16.msra.mxu0 0
      %7337 = vmatprep.subr.bf16.mxu0 0
      %7338 = vmatpush1.bf16.msra.mxu0 0
      %7339 = vmatprep.subr.bf16.mxu0 0
      %7340 = vmatpush1.bf16.msra.mxu0 0
      %7341 = vmatprep.subr.bf16.mxu0 0
      %7342 = vmatpush1.bf16.msra.mxu0 0
      %7343 = vmatprep.subr.bf16.mxu0 0
      %7344 = vmatpush1.bf16.msra.mxu0 0
      %7345 = vmatprep.subr.bf16.mxu0 0
      %7346 = vmatpush1.bf16.msra.mxu0 0
      %7347 = vmatprep.mubr.bf16.mxu0 0
      %7348 = vmatmul.mubr.bf16.gmra.mrb[0].mxu0 %v7195
      %v7349 = vpop.f32.mrb[0].mxu0
      %v7350 = vadd.f32 0.0, %v7349
      %v7351 = vpop.f32.mrb[0].mxu0
      %v7352 = vadd.f32 0.0, %v7351
      %v7353 = vpop.f32.mrb[0].mxu0
      %v7354 = vpop.f32.mrb[0].mxu0
      %7355 = vdwg.mxu0
      %7356 = vmatprep.subr.bf16.mxu0 %v7219
      %7357 = vmatpush1.bf16.msra.mxu0 %v7216
      %7358 = vmatprep.subr.bf16.mxu0 0
      %7359 = vmatpush1.bf16.msra.mxu0 0
      %7360 = vmatprep.subr.bf16.mxu0 0
      %7361 = vmatpush1.bf16.msra.mxu0 0
      %7362 = vmatprep.subr.bf16.mxu0 0
      %7363 = vmatpush1.bf16.msra.mxu0 0
      %7364 = vmatprep.subr.bf16.mxu0 0
      %7365 = vmatpush1.bf16.msra.mxu0 0
      %7366 = vmatprep.subr.bf16.mxu0 0
      %7367 = vmatpush1.bf16.msra.mxu0 0
      %7368 = vmatprep.subr.bf16.mxu0 0
      %7369 = vmatpush1.bf16.msra.mxu0 0
      %7370 = vmatprep.subr.bf16.mxu0 0
      %7371 = vmatpush1.bf16.msra.mxu0 0
      %7372 = vmatprep.subr.bf16.mxu0 0
      %7373 = vmatpush1.bf16.msra.mxu0 0
      %7374 = vmatprep.subr.bf16.mxu0 0
      %7375 = vmatpush1.bf16.msra.mxu0 0
      %7376 = vmatprep.subr.bf16.mxu0 0
      %7377 = vmatpush1.bf16.msra.mxu0 0
      %7378 = vmatprep.subr.bf16.mxu0 0
      %7379 = vmatpush1.bf16.msra.mxu0 0
      %7380 = vmatprep.subr.bf16.mxu0 0
      %7381 = vmatpush1.bf16.msra.mxu0 0
      %7382 = vmatprep.subr.bf16.mxu0 0
      %7383 = vmatpush1.bf16.msra.mxu0 0
      %7384 = vmatprep.subr.bf16.mxu0 0
      %7385 = vmatpush1.bf16.msra.mxu0 0
      %7386 = vmatprep.subr.bf16.mxu0 0
      %7387 = vmatpush1.bf16.msra.mxu0 0
      %7388 = vmatprep.mubr.bf16.mxu0 0
      %7389 = vmatmul.mubr.bf16.gmra.mrb[0].mxu0 %v7195
      %v7390 = vpop.f32.mrb[0].mxu0
      %v7391 = vadd.f32 0.0, %v7390
      %v7392 = vpop.f32.mrb[0].mxu0
      %v7393 = vadd.f32 0.0, %v7392
      %v7394 = vpop.f32.mrb[0].mxu0
      %v7395 = vpop.f32.mrb[0].mxu0
      %7396 = vdwg.mxu0
      %7397 = vmatprep.subr.bf16.mxu0 %v7225
      %7398 = vmatpush1.bf16.msra.mxu0 %v7222
      %7399 = vmatprep.subr.bf16.mxu0 0
      %7400 = vmatpush1.bf16.msra.mxu0 0
      %7401 = vmatprep.subr.bf16.mxu0 0
      %7402 = vmatpush1.bf16.msra.mxu0 0
      %7403 = vmatprep.subr.bf16.mxu0 0
      %7404 = vmatpush1.bf16.msra.mxu0 0
      %7405 = vmatprep.subr.bf16.mxu0 0
      %7406 = vmatpush1.bf16.msra.mxu0 0
      %7407 = vmatprep.subr.bf16.mxu0 0
      %7408 = vmatpush1.bf16.msra.mxu0 0
      %7409 = vmatprep.subr.bf16.mxu0 0
      %7410 = vmatpush1.bf16.msra.mxu0 0
      %7411 = vmatprep.subr.bf16.mxu0 0
      %7412 = vmatpush1.bf16.msra.mxu0 0
      %7413 = vmatprep.subr.bf16.mxu0 0
      %7414 = vmatpush1.bf16.msra.mxu0 0
      %7415 = vmatprep.subr.bf16.mxu0 0
      %7416 = vmatpush1.bf16.msra.mxu0 0
      %7417 = vmatprep.subr.bf16.mxu0 0
      %7418 = vmatpush1.bf16.msra.mxu0 0
      %7419 = vmatprep.subr.bf16.mxu0 0
      %7420 = vmatpush1.bf16.msra.mxu0 0
      %7421 = vmatprep.subr.bf16.mxu0 0
      %7422 = vmatpush1.bf16.msra.mxu0 0
      %7423 = vmatprep.subr.bf16.mxu0 0
      %7424 = vmatpush1.bf16.msra.mxu0 0
      %7425 = vmatprep.subr.bf16.mxu0 0
      %7426 = vmatpush1.bf16.msra.mxu0 0
      %7427 = vmatprep.subr.bf16.mxu0 0
      %7428 = vmatpush1.bf16.msra.mxu0 0
      %7429 = vmatprep.mubr.bf16.mxu0 0
      %7430 = vmatmul.mubr.bf16.gmra.mrb[0].mxu0 %v7195
      %v7431 = vpop.f32.mrb[0].mxu0
      %v7432 = vadd.f32 0.0, %v7431
      %v7433 = vpop.f32.mrb[0].mxu0
      %v7434 = vadd.f32 0.0, %v7433
      %v7435 = vpop.f32.mrb[0].mxu0
      %v7436 = vpop.f32.mrb[0].mxu0
      %7437 = vdwg.mxu0
      %7438 = vmatprep.subr.bf16.mxu0 %v7231
      %7439 = vmatpush1.bf16.msra.mxu0 %v7228
      %7440 = vmatprep.subr.bf16.mxu0 0
      %7441 = vmatpush1.bf16.msra.mxu0 0
      %7442 = vmatprep.subr.bf16.mxu0 0
      %7443 = vmatpush1.bf16.msra.mxu0 0
      %7444 = vmatprep.subr.bf16.mxu0 0
      %7445 = vmatpush1.bf16.msra.mxu0 0
      %7446 = vmatprep.subr.bf16.mxu0 0
      %7447 = vmatpush1.bf16.msra.mxu0 0
      %7448 = vmatprep.subr.bf16.mxu0 0
      %7449 = vmatpush1.bf16.msra.mxu0 0
      %7450 = vmatprep.subr.bf16.mxu0 0
      %7451 = vmatpush1.bf16.msra.mxu0 0
      %7452 = vmatprep.subr.bf16.mxu0 0
      %7453 = vmatpush1.bf16.msra.mxu0 0
      %7454 = vmatprep.subr.bf16.mxu0 0
      %7455 = vmatpush1.bf16.msra.mxu0 0
      %7456 = vmatprep.subr.bf16.mxu0 0
      %7457 = vmatpush1.bf16.msra.mxu0 0
      %7458 = vmatprep.subr.bf16.mxu0 0
      %7459 = vmatpush1.bf16.msra.mxu0 0
      %7460 = vmatprep.subr.bf16.mxu0 0
      %7461 = vmatpush1.bf16.msra.mxu0 0
      %7462 = vmatprep.subr.bf16.mxu0 0
      %7463 = vmatpush1.bf16.msra.mxu0 0
      %7464 = vmatprep.subr.bf16.mxu0 0
      %7465 = vmatpush1.bf16.msra.mxu0 0
      %7466 = vmatprep.subr.bf16.mxu0 0
      %7467 = vmatpush1.bf16.msra.mxu0 0
      %7468 = vmatprep.subr.bf16.mxu0 0
      %7469 = vmatpush1.bf16.msra.mxu0 0
      %7470 = vmatprep.mubr.bf16.mxu0 0
      %7471 = vmatmul.mubr.bf16.gmra.mrb[0].mxu0 %v7195
      %v7472 = vpop.f32.mrb[0].mxu0
      %v7473 = vadd.f32 0.0, %v7472
      %v7474 = vpop.f32.mrb[0].mxu0
      %v7475 = vadd.f32 0.0, %v7474
      %v7476 = vpop.f32.mrb[0].mxu0
      %v7477 = vpop.f32.mrb[0].mxu0
      %7478 = vdwg.mxu0
      %v7479 = vadd.f32 %v6945, %v7268
      %v7480 = vadd.f32 %v6947, %v7270
      %v7481 = vadd.f32 %v6986, %v7309
      %v7482 = vadd.f32 %v6988, %v7311
      %v7483 = vadd.f32 %v7027, %v7350
      %v7484 = vadd.f32 %v7029, %v7352
      %v7485 = vadd.f32 %v7068, %v7391
      %v7486 = vadd.f32 %v7070, %v7393
      %v7487 = vadd.f32 %v7109, %v7432
      %v7488 = vadd.f32 %v7111, %v7434
      %v7489 = vadd.f32 %v7150, %v7473
      %v7490 = vadd.f32 %v7152, %v7475
      %s7491 = scalar_lea.vmem %s4, 12
      %v7492 = vld [vmem:[%s7491] sm:$0xf]
      %v7493 = vld [vmem:[#allocation2 + $0x24] sm:$0xff]
      %v7494 = vld [vmem:[#allocation2 + $0x2c] sm:$0xff]
      %v7495 = vld [vmem:[#allocation2 + $0x34] sm:$0xff]
      %v7496 = vld [vmem:[#allocation2 + $0x3c] sm:$0xff]
      %v7497 = vld [vmem:[#allocation2 + $0x44] sm:$0xff]
      %v7498 = vld [vmem:[#allocation2 + $0x4c] sm:$0xff]
      %v7505 = vunpack.c.l.b16 %v7493
      %v7506 = vunpack.c.h.b16 %v7493
      %v7507 = vunpack.c.l.b16 %v7494
      %v7508 = vunpack.c.h.b16 %v7494
      %v7509 = vunpack.c.l.b16 %v7495
      %v7510 = vunpack.c.h.b16 %v7495
      %v7511 = vunpack.c.l.b16 %v7496
      %v7512 = vunpack.c.h.b16 %v7496
      %v7513 = vunpack.c.l.b16 %v7497
      %v7514 = vunpack.c.h.b16 %v7497
      %v7515 = vunpack.c.l.b16 %v7498
      %v7516 = vunpack.c.h.b16 %v7498
      %v7517 = vpack.c.b16 %v7505, %v7505
      %v7518 = vpack.c.b16 %v7506, %v7506
      %v7519 = vpack.c.b16 %v7507, %v7507
      %v7520 = vpack.c.b16 %v7508, %v7508
      %v7521 = vpack.c.b16 %v7509, %v7509
      %v7522 = vpack.c.b16 %v7510, %v7510
      %v7523 = vpack.c.b16 %v7511, %v7511
      %v7524 = vpack.c.b16 %v7512, %v7512
      %v7525 = vpack.c.b16 %v7513, %v7513
      %v7526 = vpack.c.b16 %v7514, %v7514
      %v7527 = vpack.c.b16 %v7515, %v7515
      %v7528 = vpack.c.b16 %v7516, %v7516
      %v7530 = vsel %vm6554, %v7492, 0
      %v7533 = vsel %vm6558, %v7517, 0
      %v7536 = vsel %vm6558, %v7518, 0
      %v7539 = vsel %vm6558, %v7519, 0
      %v7542 = vsel %vm6558, %v7520, 0
      %v7545 = vsel %vm6558, %v7521, 0
      %v7548 = vsel %vm6558, %v7522, 0
      %v7551 = vsel %vm6558, %v7523, 0
      %v7554 = vsel %vm6558, %v7524, 0
      %v7557 = vsel %vm6558, %v7525, 0
      %v7560 = vsel %vm6558, %v7526, 0
      %v7563 = vsel %vm6558, %v7527, 0
      %v7566 = vsel %vm6558, %v7528, 0
      %7568 = vmatprep.subr.bf16.mxu0 %v7536
      %7569 = vmatpush1.bf16.msra.mxu0 %v7533
      %7570 = vmatprep.subr.bf16.mxu0 0
      %7571 = vmatpush1.bf16.msra.mxu0 0
      %7572 = vmatprep.subr.bf16.mxu0 0
      %7573 = vmatpush1.bf16.msra.mxu0 0
      %7574 = vmatprep.subr.bf16.mxu0 0
      %7575 = vmatpush1.bf16.msra.mxu0 0
      %7576 = vmatprep.subr.bf16.mxu0 0
      %7577 = vmatpush1.bf16.msra.mxu0 0
      %7578 = vmatprep.subr.bf16.mxu0 0
      %7579 = vmatpush1.bf16.msra.mxu0 0
      %7580 = vmatprep.subr.bf16.mxu0 0
      %7581 = vmatpush1.bf16.msra.mxu0 0
      %7582 = vmatprep.subr.bf16.mxu0 0
      %7583 = vmatpush1.bf16.msra.mxu0 0
      %7584 = vmatprep.subr.bf16.mxu0 0
      %7585 = vmatpush1.bf16.msra.mxu0 0
      %7586 = vmatprep.subr.bf16.mxu0 0
      %7587 = vmatpush1.bf16.msra.mxu0 0
      %7588 = vmatprep.subr.bf16.mxu0 0
      %7589 = vmatpush1.bf16.msra.mxu0 0
      %7590 = vmatprep.subr.bf16.mxu0 0
      %7591 = vmatpush1.bf16.msra.mxu0 0
      %7592 = vmatprep.subr.bf16.mxu0 0
      %7593 = vmatpush1.bf16.msra.mxu0 0
      %7594 = vmatprep.subr.bf16.mxu0 0
      %7595 = vmatpush1.bf16.msra.mxu0 0
      %7596 = vmatprep.subr.bf16.mxu0 0
      %7597 = vmatpush1.bf16.msra.mxu0 0
      %7598 = vmatprep.subr.bf16.mxu0 0
      %7599 = vmatpush1.bf16.msra.mxu0 0
      %7600 = vmatprep.mubr.bf16.mxu0 0
      %7601 = vmatmul.mubr.bf16.gmra.mrb[0].mxu0 %v7530
      %v7602 = vpop.f32.mrb[0].mxu0
      %v7603 = vadd.f32 0.0, %v7602
      %v7604 = vpop.f32.mrb[0].mxu0
      %v7605 = vadd.f32 0.0, %v7604
      %v7606 = vpop.f32.mrb[0].mxu0
      %v7607 = vpop.f32.mrb[0].mxu0
      %7608 = vdwg.mxu0
      %7609 = vmatprep.subr.bf16.mxu0 %v7542
      %7610 = vmatpush1.bf16.msra.mxu0 %v7539
      %7611 = vmatprep.subr.bf16.mxu0 0
      %7612 = vmatpush1.bf16.msra.mxu0 0
      %7613 = vmatprep.subr.bf16.mxu0 0
      %7614 = vmatpush1.bf16.msra.mxu0 0
      %7615 = vmatprep.subr.bf16.mxu0 0
      %7616 = vmatpush1.bf16.msra.mxu0 0
      %7617 = vmatprep.subr.bf16.mxu0 0
      %7618 = vmatpush1.bf16.msra.mxu0 0
      %7619 = vmatprep.subr.bf16.mxu0 0
      %7620 = vmatpush1.bf16.msra.mxu0 0
      %7621 = vmatprep.subr.bf16.mxu0 0
      %7622 = vmatpush1.bf16.msra.mxu0 0
      %7623 = vmatprep.subr.bf16.mxu0 0
      %7624 = vmatpush1.bf16.msra.mxu0 0
      %7625 = vmatprep.subr.bf16.mxu0 0
      %7626 = vmatpush1.bf16.msra.mxu0 0
      %7627 = vmatprep.subr.bf16.mxu0 0
      %7628 = vmatpush1.bf16.msra.mxu0 0
      %7629 = vmatprep.subr.bf16.mxu0 0
      %7630 = vmatpush1.bf16.msra.mxu0 0
      %7631 = vmatprep.subr.bf16.mxu0 0
      %7632 = vmatpush1.bf16.msra.mxu0 0
      %7633 = vmatprep.subr.bf16.mxu0 0
      %7634 = vmatpush1.bf16.msra.mxu0 0
      %7635 = vmatprep.subr.bf16.mxu0 0
      %7636 = vmatpush1.bf16.msra.mxu0 0
      %7637 = vmatprep.subr.bf16.mxu0 0
      %7638 = vmatpush1.bf16.msra.mxu0 0
      %7639 = vmatprep.subr.bf16.mxu0 0
      %7640 = vmatpush1.bf16.msra.mxu0 0
      %7641 = vmatprep.mubr.bf16.mxu0 0
      %7642 = vmatmul.mubr.bf16.gmra.mrb[0].mxu0 %v7530
      %v7643 = vpop.f32.mrb[0].mxu0
      %v7644 = vadd.f32 0.0, %v7643
      %v7645 = vpop.f32.mrb[0].mxu0
      %v7646 = vadd.f32 0.0, %v7645
      %v7647 = vpop.f32.mrb[0].mxu0
      %v7648 = vpop.f32.mrb[0].mxu0
      %7649 = vdwg.mxu0
      %7650 = vmatprep.subr.bf16.mxu0 %v7548
      %7651 = vmatpush1.bf16.msra.mxu0 %v7545
      %7652 = vmatprep.subr.bf16.mxu0 0
      %7653 = vmatpush1.bf16.msra.mxu0 0
      %7654 = vmatprep.subr.bf16.mxu0 0
      %7655 = vmatpush1.bf16.msra.mxu0 0
      %7656 = vmatprep.subr.bf16.mxu0 0
      %7657 = vmatpush1.bf16.msra.mxu0 0
      %7658 = vmatprep.subr.bf16.mxu0 0
      %7659 = vmatpush1.bf16.msra.mxu0 0
      %7660 = vmatprep.subr.bf16.mxu0 0
      %7661 = vmatpush1.bf16.msra.mxu0 0
      %7662 = vmatprep.subr.bf16.mxu0 0
      %7663 = vmatpush1.bf16.msra.mxu0 0
      %7664 = vmatprep.subr.bf16.mxu0 0
      %7665 = vmatpush1.bf16.msra.mxu0 0
      %7666 = vmatprep.subr.bf16.mxu0 0
      %7667 = vmatpush1.bf16.msra.mxu0 0
      %7668 = vmatprep.subr.bf16.mxu0 0
      %7669 = vmatpush1.bf16.msra.mxu0 0
      %7670 = vmatprep.subr.bf16.mxu0 0
      %7671 = vmatpush1.bf16.msra.mxu0 0
      %7672 = vmatprep.subr.bf16.mxu0 0
      %7673 = vmatpush1.bf16.msra.mxu0 0
      %7674 = vmatprep.subr.bf16.mxu0 0
      %7675 = vmatpush1.bf16.msra.mxu0 0
      %7676 = vmatprep.subr.bf16.mxu0 0
      %7677 = vmatpush1.bf16.msra.mxu0 0
      %7678 = vmatprep.subr.bf16.mxu0 0
      %7679 = vmatpush1.bf16.msra.mxu0 0
      %7680 = vmatprep.subr.bf16.mxu0 0
      %7681 = vmatpush1.bf16.msra.mxu0 0
      %7682 = vmatprep.mubr.bf16.mxu0 0
      %7683 = vmatmul.mubr.bf16.gmra.mrb[0].mxu0 %v7530
      %v7684 = vpop.f32.mrb[0].mxu0
      %v7685 = vadd.f32 0.0, %v7684
      %v7686 = vpop.f32.mrb[0].mxu0
      %v7687 = vadd.f32 0.0, %v7686
      %v7688 = vpop.f32.mrb[0].mxu0
      %v7689 = vpop.f32.mrb[0].mxu0
      %7690 = vdwg.mxu0
      %7691 = vmatprep.subr.bf16.mxu0 %v7554
      %7692 = vmatpush1.bf16.msra.mxu0 %v7551
      %7693 = vmatprep.subr.bf16.mxu0 0
      %7694 = vmatpush1.bf16.msra.mxu0 0
      %7695 = vmatprep.subr.bf16.mxu0 0
      %7696 = vmatpush1.bf16.msra.mxu0 0
      %7697 = vmatprep.subr.bf16.mxu0 0
      %7698 = vmatpush1.bf16.msra.mxu0 0
      %7699 = vmatprep.subr.bf16.mxu0 0
      %7700 = vmatpush1.bf16.msra.mxu0 0
      %7701 = vmatprep.subr.bf16.mxu0 0
      %7702 = vmatpush1.bf16.msra.mxu0 0
      %7703 = vmatprep.subr.bf16.mxu0 0
      %7704 = vmatpush1.bf16.msra.mxu0 0
      %7705 = vmatprep.subr.bf16.mxu0 0
      %7706 = vmatpush1.bf16.msra.mxu0 0
      %7707 = vmatprep.subr.bf16.mxu0 0
      %7708 = vmatpush1.bf16.msra.mxu0 0
      %7709 = vmatprep.subr.bf16.mxu0 0
      %7710 = vmatpush1.bf16.msra.mxu0 0
      %7711 = vmatprep.subr.bf16.mxu0 0
      %7712 = vmatpush1.bf16.msra.mxu0 0
      %7713 = vmatprep.subr.bf16.mxu0 0
      %7714 = vmatpush1.bf16.msra.mxu0 0
      %7715 = vmatprep.subr.bf16.mxu0 0
      %7716 = vmatpush1.bf16.msra.mxu0 0
      %7717 = vmatprep.subr.bf16.mxu0 0
      %7718 = vmatpush1.bf16.msra.mxu0 0
      %7719 = vmatprep.subr.bf16.mxu0 0
      %7720 = vmatpush1.bf16.msra.mxu0 0
      %7721 = vmatprep.subr.bf16.mxu0 0
      %7722 = vmatpush1.bf16.msra.mxu0 0
      %7723 = vmatprep.mubr.bf16.mxu0 0
      %7724 = vmatmul.mubr.bf16.gmra.mrb[0].mxu0 %v7530
      %v7725 = vpop.f32.mrb[0].mxu0
      %v7726 = vadd.f32 0.0, %v7725
      %v7727 = vpop.f32.mrb[0].mxu0
      %v7728 = vadd.f32 0.0, %v7727
      %v7729 = vpop.f32.mrb[0].mxu0
      %v7730 = vpop.f32.mrb[0].mxu0
      %7731 = vdwg.mxu0
      %7732 = vmatprep.subr.bf16.mxu0 %v7560
      %7733 = vmatpush1.bf16.msra.mxu0 %v7557
      %7734 = vmatprep.subr.bf16.mxu0 0
      %7735 = vmatpush1.bf16.msra.mxu0 0
      %7736 = vmatprep.subr.bf16.mxu0 0
      %7737 = vmatpush1.bf16.msra.mxu0 0
      %7738 = vmatprep.subr.bf16.mxu0 0
      %7739 = vmatpush1.bf16.msra.mxu0 0
      %7740 = vmatprep.subr.bf16.mxu0 0
      %7741 = vmatpush1.bf16.msra.mxu0 0
      %7742 = vmatprep.subr.bf16.mxu0 0
      %7743 = vmatpush1.bf16.msra.mxu0 0
      %7744 = vmatprep.subr.bf16.mxu0 0
      %7745 = vmatpush1.bf16.msra.mxu0 0
      %7746 = vmatprep.subr.bf16.mxu0 0
      %7747 = vmatpush1.bf16.msra.mxu0 0
      %7748 = vmatprep.subr.bf16.mxu0 0
      %7749 = vmatpush1.bf16.msra.mxu0 0
      %7750 = vmatprep.subr.bf16.mxu0 0
      %7751 = vmatpush1.bf16.msra.mxu0 0
      %7752 = vmatprep.subr.bf16.mxu0 0
      %7753 = vmatpush1.bf16.msra.mxu0 0
      %7754 = vmatprep.subr.bf16.mxu0 0
      %7755 = vmatpush1.bf16.msra.mxu0 0
      %7756 = vmatprep.subr.bf16.mxu0 0
      %7757 = vmatpush1.bf16.msra.mxu0 0
      %7758 = vmatprep.subr.bf16.mxu0 0
      %7759 = vmatpush1.bf16.msra.mxu0 0
      %7760 = vmatprep.subr.bf16.mxu0 0
      %7761 = vmatpush1.bf16.msra.mxu0 0
      %7762 = vmatprep.subr.bf16.mxu0 0
      %7763 = vmatpush1.bf16.msra.mxu0 0
      %7764 = vmatprep.mubr.bf16.mxu0 0
      %7765 = vmatmul.mubr.bf16.gmra.mrb[0].mxu0 %v7530
      %v7766 = vpop.f32.mrb[0].mxu0
      %v7767 = vadd.f32 0.0, %v7766
      %v7768 = vpop.f32.mrb[0].mxu0
      %v7769 = vadd.f32 0.0, %v7768
      %v7770 = vpop.f32.mrb[0].mxu0
      %v7771 = vpop.f32.mrb[0].mxu0
      %7772 = vdwg.mxu0
      %7773 = vmatprep.subr.bf16.mxu0 %v7566
      %7774 = vmatpush1.bf16.msra.mxu0 %v7563
      %7775 = vmatprep.subr.bf16.mxu0 0
      %7776 = vmatpush1.bf16.msra.mxu0 0
      %7777 = vmatprep.subr.bf16.mxu0 0
      %7778 = vmatpush1.bf16.msra.mxu0 0
      %7779 = vmatprep.subr.bf16.mxu0 0
      %7780 = vmatpush1.bf16.msra.mxu0 0
      %7781 = vmatprep.subr.bf16.mxu0 0
      %7782 = vmatpush1.bf16.msra.mxu0 0
      %7783 = vmatprep.subr.bf16.mxu0 0
      %7784 = vmatpush1.bf16.msra.mxu0 0
      %7785 = vmatprep.subr.bf16.mxu0 0
      %7786 = vmatpush1.bf16.msra.mxu0 0
      %7787 = vmatprep.subr.bf16.mxu0 0
      %7788 = vmatpush1.bf16.msra.mxu0 0
      %7789 = vmatprep.subr.bf16.mxu0 0
      %7790 = vmatpush1.bf16.msra.mxu0 0
      %7791 = vmatprep.subr.bf16.mxu0 0
      %7792 = vmatpush1.bf16.msra.mxu0 0
      %7793 = vmatprep.subr.bf16.mxu0 0
      %7794 = vmatpush1.bf16.msra.mxu0 0
      %7795 = vmatprep.subr.bf16.mxu0 0
      %7796 = vmatpush1.bf16.msra.mxu0 0
      %7797 = vmatprep.subr.bf16.mxu0 0
      %7798 = vmatpush1.bf16.msra.mxu0 0
      %7799 = vmatprep.subr.bf16.mxu0 0
      %7800 = vmatpush1.bf16.msra.mxu0 0
      %7801 = vmatprep.subr.bf16.mxu0 0
      %7802 = vmatpush1.bf16.msra.mxu0 0
      %7803 = vmatprep.subr.bf16.mxu0 0
      %7804 = vmatpush1.bf16.msra.mxu0 0
      %7805 = vmatprep.mubr.bf16.mxu0 0
      %7806 = vmatmul.mubr.bf16.gmra.mrb[0].mxu0 %v7530
      %v7807 = vpop.f32.mrb[0].mxu0
      %v7808 = vadd.f32 0.0, %v7807
      %v7809 = vpop.f32.mrb[0].mxu0
      %v7810 = vadd.f32 0.0, %v7809
      %v7811 = vpop.f32.mrb[0].mxu0
      %v7812 = vpop.f32.mrb[0].mxu0
      %7813 = vdwg.mxu0
      %v7814 = vadd.f32 %v7479, %v7603
      %v7815 = vadd.f32 %v7480, %v7605
      %v7816 = vadd.f32 %v7481, %v7644
      %v7817 = vadd.f32 %v7482, %v7646
      %v7818 = vadd.f32 %v7483, %v7685
      %v7819 = vadd.f32 %v7484, %v7687
      %v7820 = vadd.f32 %v7485, %v7726
      %v7821 = vadd.f32 %v7486, %v7728
      %v7822 = vadd.f32 %v7487, %v7767
      %v7823 = vadd.f32 %v7488, %v7769
      %v7824 = vadd.f32 %v7489, %v7808
      %v7825 = vadd.f32 %v7490, %v7810
      %s7826 = scalar_lea.vmem %s4, 16
      %v7827 = vld [vmem:[%s7826] sm:$0xf]
      %v7828 = vld [vmem:[#allocation2 + $0x30] sm:$0xff]
      %v7829 = vld [vmem:[#allocation2 + $0x38] sm:$0xff]
      %v7830 = vld [vmem:[#allocation2 + $0x40] sm:$0xff]
      %v7831 = vld [vmem:[#allocation2 + $0x48] sm:$0xff]
      %v7832 = vld [vmem:[#allocation2 + $0x50] sm:$0xff]
      %v7833 = vld [vmem:[#allocation2 + $0x58] sm:$0xff]
      %v7840 = vunpack.c.l.b16 %v7828
      %v7841 = vunpack.c.h.b16 %v7828
      %v7842 = vunpack.c.l.b16 %v7829
      %v7843 = vunpack.c.h.b16 %v7829
      %v7844 = vunpack.c.l.b16 %v7830
      %v7845 = vunpack.c.h.b16 %v7830
      %v7846 = vunpack.c.l.b16 %v7831
      %v7847 = vunpack.c.h.b16 %v7831
      %v7848 = vunpack.c.l.b16 %v7832
      %v7849 = vunpack.c.h.b16 %v7832
      %v7850 = vunpack.c.l.b16 %v7833
      %v7851 = vunpack.c.h.b16 %v7833
      %v7852 = vpack.c.b16 %v7840, %v7840
      %v7853 = vpack.c.b16 %v7841, %v7841
      %v7854 = vpack.c.b16 %v7842, %v7842
      %v7855 = vpack.c.b16 %v7843, %v7843
      %v7856 = vpack.c.b16 %v7844, %v7844
      %v7857 = vpack.c.b16 %v7845, %v7845
      %v7858 = vpack.c.b16 %v7846, %v7846
      %v7859 = vpack.c.b16 %v7847, %v7847
      %v7860 = vpack.c.b16 %v7848, %v7848
      %v7861 = vpack.c.b16 %v7849, %v7849
      %v7862 = vpack.c.b16 %v7850, %v7850
      %v7863 = vpack.c.b16 %v7851, %v7851
      %v7865 = vsel %vm6554, %v7827, 0
      %v7868 = vsel %vm6558, %v7852, 0
      %v7871 = vsel %vm6558, %v7853, 0
      %v7874 = vsel %vm6558, %v7854, 0
      %v7877 = vsel %vm6558, %v7855, 0
      %v7880 = vsel %vm6558, %v7856, 0
      %v7883 = vsel %vm6558, %v7857, 0
      %v7886 = vsel %vm6558, %v7858, 0
      %v7889 = vsel %vm6558, %v7859, 0
      %v7892 = vsel %vm6558, %v7860, 0
      %v7895 = vsel %vm6558, %v7861, 0
      %v7898 = vsel %vm6558, %v7862, 0
      %v7901 = vsel %vm6558, %v7863, 0
      %7903 = vmatprep.subr.bf16.mxu0 %v7871
      %7904 = vmatpush1.bf16.msra.mxu0 %v7868
      %7905 = vmatprep.subr.bf16.mxu0 0
      %7906 = vmatpush1.bf16.msra.mxu0 0
      %7907 = vmatprep.subr.bf16.mxu0 0
      %7908 = vmatpush1.bf16.msra.mxu0 0
      %7909 = vmatprep.subr.bf16.mxu0 0
      %7910 = vmatpush1.bf16.msra.mxu0 0
      %7911 = vmatprep.subr.bf16.mxu0 0
      %7912 = vmatpush1.bf16.msra.mxu0 0
      %7913 = vmatprep.subr.bf16.mxu0 0
      %7914 = vmatpush1.bf16.msra.mxu0 0
      %7915 = vmatprep.subr.bf16.mxu0 0
      %7916 = vmatpush1.bf16.msra.mxu0 0
      %7917 = vmatprep.subr.bf16.mxu0 0
      %7918 = vmatpush1.bf16.msra.mxu0 0
      %7919 = vmatprep.subr.bf16.mxu0 0
      %7920 = vmatpush1.bf16.msra.mxu0 0
      %7921 = vmatprep.subr.bf16.mxu0 0
      %7922 = vmatpush1.bf16.msra.mxu0 0
      %7923 = vmatprep.subr.bf16.mxu0 0
      %7924 = vmatpush1.bf16.msra.mxu0 0
      %7925 = vmatprep.subr.bf16.mxu0 0
      %7926 = vmatpush1.bf16.msra.mxu0 0
      %7927 = vmatprep.subr.bf16.mxu0 0
      %7928 = vmatpush1.bf16.msra.mxu0 0
      %7929 = vmatprep.subr.bf16.mxu0 0
      %7930 = vmatpush1.bf16.msra.mxu0 0
      %7931 = vmatprep.subr.bf16.mxu0 0
      %7932 = vmatpush1.bf16.msra.mxu0 0
      %7933 = vmatprep.subr.bf16.mxu0 0
      %7934 = vmatpush1.bf16.msra.mxu0 0
      %7935 = vmatprep.mubr.bf16.mxu0 0
      %7936 = vmatmul.mubr.bf16.gmra.mrb[0].mxu0 %v7865
      %v7937 = vpop.f32.mrb[0].mxu0
      %v7938 = vadd.f32 0.0, %v7937
      %v7939 = vpop.f32.mrb[0].mxu0
      %v7940 = vadd.f32 0.0, %v7939
      %v7941 = vpop.f32.mrb[0].mxu0
      %v7942 = vpop.f32.mrb[0].mxu0
      %7943 = vdwg.mxu0
      %7944 = vmatprep.subr.bf16.mxu0 %v7877
      %7945 = vmatpush1.bf16.msra.mxu0 %v7874
      %7946 = vmatprep.subr.bf16.mxu0 0
      %7947 = vmatpush1.bf16.msra.mxu0 0
      %7948 = vmatprep.subr.bf16.mxu0 0
      %7949 = vmatpush1.bf16.msra.mxu0 0
      %7950 = vmatprep.subr.bf16.mxu0 0
      %7951 = vmatpush1.bf16.msra.mxu0 0
      %7952 = vmatprep.subr.bf16.mxu0 0
      %7953 = vmatpush1.bf16.msra.mxu0 0
      %7954 = vmatprep.subr.bf16.mxu0 0
      %7955 = vmatpush1.bf16.msra.mxu0 0
      %7956 = vmatprep.subr.bf16.mxu0 0
      %7957 = vmatpush1.bf16.msra.mxu0 0
      %7958 = vmatprep.subr.bf16.mxu0 0
      %7959 = vmatpush1.bf16.msra.mxu0 0
      %7960 = vmatprep.subr.bf16.mxu0 0
      %7961 = vmatpush1.bf16.msra.mxu0 0
      %7962 = vmatprep.subr.bf16.mxu0 0
      %7963 = vmatpush1.bf16.msra.mxu0 0
      %7964 = vmatprep.subr.bf16.mxu0 0
      %7965 = vmatpush1.bf16.msra.mxu0 0
      %7966 = vmatprep.subr.bf16.mxu0 0
      %7967 = vmatpush1.bf16.msra.mxu0 0
      %7968 = vmatprep.subr.bf16.mxu0 0
      %7969 = vmatpush1.bf16.msra.mxu0 0
      %7970 = vmatprep.subr.bf16.mxu0 0
      %7971 = vmatpush1.bf16.msra.mxu0 0
      %7972 = vmatprep.subr.bf16.mxu0 0
      %7973 = vmatpush1.bf16.msra.mxu0 0
      %7974 = vmatprep.subr.bf16.mxu0 0
      %7975 = vmatpush1.bf16.msra.mxu0 0
      %7976 = vmatprep.mubr.bf16.mxu0 0
      %7977 = vmatmul.mubr.bf16.gmra.mrb[0].mxu0 %v7865
      %v7978 = vpop.f32.mrb[0].mxu0
      %v7979 = vadd.f32 0.0, %v7978
      %v7980 = vpop.f32.mrb[0].mxu0
      %v7981 = vadd.f32 0.0, %v7980
      %v7982 = vpop.f32.mrb[0].mxu0
      %v7983 = vpop.f32.mrb[0].mxu0
      %7984 = vdwg.mxu0
      %7985 = vmatprep.subr.bf16.mxu0 %v7883
      %7986 = vmatpush1.bf16.msra.mxu0 %v7880
      %7987 = vmatprep.subr.bf16.mxu0 0
      %7988 = vmatpush1.bf16.msra.mxu0 0
      %7989 = vmatprep.subr.bf16.mxu0 0
      %7990 = vmatpush1.bf16.msra.mxu0 0
      %7991 = vmatprep.subr.bf16.mxu0 0
      %7992 = vmatpush1.bf16.msra.mxu0 0
      %7993 = vmatprep.subr.bf16.mxu0 0
      %7994 = vmatpush1.bf16.msra.mxu0 0
      %7995 = vmatprep.subr.bf16.mxu0 0
      %7996 = vmatpush1.bf16.msra.mxu0 0
      %7997 = vmatprep.subr.bf16.mxu0 0
      %7998 = vmatpush1.bf16.msra.mxu0 0
      %7999 = vmatprep.subr.bf16.mxu0 0
      %8000 = vmatpush1.bf16.msra.mxu0 0
      %8001 = vmatprep.subr.bf16.mxu0 0
      %8002 = vmatpush1.bf16.msra.mxu0 0
      %8003 = vmatprep.subr.bf16.mxu0 0
      %8004 = vmatpush1.bf16.msra.mxu0 0
      %8005 = vmatprep.subr.bf16.mxu0 0
      %8006 = vmatpush1.bf16.msra.mxu0 0
      %8007 = vmatprep.subr.bf16.mxu0 0
      %8008 = vmatpush1.bf16.msra.mxu0 0
      %8009 = vmatprep.subr.bf16.mxu0 0
      %8010 = vmatpush1.bf16.msra.mxu0 0
      %8011 = vmatprep.subr.bf16.mxu0 0
      %8012 = vmatpush1.bf16.msra.mxu0 0
      %8013 = vmatprep.subr.bf16.mxu0 0
      %8014 = vmatpush1.bf16.msra.mxu0 0
      %8015 = vmatprep.subr.bf16.mxu0 0
      %8016 = vmatpush1.bf16.msra.mxu0 0
      %8017 = vmatprep.mubr.bf16.mxu0 0
      %8018 = vmatmul.mubr.bf16.gmra.mrb[0].mxu0 %v7865
      %v8019 = vpop.f32.mrb[0].mxu0
      %v8020 = vadd.f32 0.0, %v8019
      %v8021 = vpop.f32.mrb[0].mxu0
      %v8022 = vadd.f32 0.0, %v8021
      %v8023 = vpop.f32.mrb[0].mxu0
      %v8024 = vpop.f32.mrb[0].mxu0
      %8025 = vdwg.mxu0
      %8026 = vmatprep.subr.bf16.mxu0 %v7889
      %8027 = vmatpush1.bf16.msra.mxu0 %v7886
      %8028 = vmatprep.subr.bf16.mxu0 0
      %8029 = vmatpush1.bf16.msra.mxu0 0
      %8030 = vmatprep.subr.bf16.mxu0 0
      %8031 = vmatpush1.bf16.msra.mxu0 0
      %8032 = vmatprep.subr.bf16.mxu0 0
      %8033 = vmatpush1.bf16.msra.mxu0 0
      %8034 = vmatprep.subr.bf16.mxu0 0
      %8035 = vmatpush1.bf16.msra.mxu0 0
      %8036 = vmatprep.subr.bf16.mxu0 0
      %8037 = vmatpush1.bf16.msra.mxu0 0
      %8038 = vmatprep.subr.bf16.mxu0 0
      %8039 = vmatpush1.bf16.msra.mxu0 0
      %8040 = vmatprep.subr.bf16.mxu0 0
      %8041 = vmatpush1.bf16.msra.mxu0 0
      %8042 = vmatprep.subr.bf16.mxu0 0
      %8043 = vmatpush1.bf16.msra.mxu0 0
      %8044 = vmatprep.subr.bf16.mxu0 0
      %8045 = vmatpush1.bf16.msra.mxu0 0
      %8046 = vmatprep.subr.bf16.mxu0 0
      %8047 = vmatpush1.bf16.msra.mxu0 0
      %8048 = vmatprep.subr.bf16.mxu0 0
      %8049 = vmatpush1.bf16.msra.mxu0 0
      %8050 = vmatprep.subr.bf16.mxu0 0
      %8051 = vmatpush1.bf16.msra.mxu0 0
      %8052 = vmatprep.subr.bf16.mxu0 0
      %8053 = vmatpush1.bf16.msra.mxu0 0
      %8054 = vmatprep.subr.bf16.mxu0 0
      %8055 = vmatpush1.bf16.msra.mxu0 0
      %8056 = vmatprep.subr.bf16.mxu0 0
      %8057 = vmatpush1.bf16.msra.mxu0 0
      %8058 = vmatprep.mubr.bf16.mxu0 0
      %8059 = vmatmul.mubr.bf16.gmra.mrb[0].mxu0 %v7865
      %v8060 = vpop.f32.mrb[0].mxu0
      %v8061 = vadd.f32 0.0, %v8060
      %v8062 = vpop.f32.mrb[0].mxu0
      %v8063 = vadd.f32 0.0, %v8062
      %v8064 = vpop.f32.mrb[0].mxu0
      %v8065 = vpop.f32.mrb[0].mxu0
      %8066 = vdwg.mxu0
      %8067 = vmatprep.subr.bf16.mxu0 %v7895
      %8068 = vmatpush1.bf16.msra.mxu0 %v7892
      %8069 = vmatprep.subr.bf16.mxu0 0
      %8070 = vmatpush1.bf16.msra.mxu0 0
      %8071 = vmatprep.subr.bf16.mxu0 0
      %8072 = vmatpush1.bf16.msra.mxu0 0
      %8073 = vmatprep.subr.bf16.mxu0 0
      %8074 = vmatpush1.bf16.msra.mxu0 0
      %8075 = vmatprep.subr.bf16.mxu0 0
      %8076 = vmatpush1.bf16.msra.mxu0 0
      %8077 = vmatprep.subr.bf16.mxu0 0
      %8078 = vmatpush1.bf16.msra.mxu0 0
      %8079 = vmatprep.subr.bf16.mxu0 0
      %8080 = vmatpush1.bf16.msra.mxu0 0
      %8081 = vmatprep.subr.bf16.mxu0 0
      %8082 = vmatpush1.bf16.msra.mxu0 0
      %8083 = vmatprep.subr.bf16.mxu0 0
      %8084 = vmatpush1.bf16.msra.mxu0 0
      %8085 = vmatprep.subr.bf16.mxu0 0
      %8086 = vmatpush1.bf16.msra.mxu0 0
      %8087 = vmatprep.subr.bf16.mxu0 0
      %8088 = vmatpush1.bf16.msra.mxu0 0
      %8089 = vmatprep.subr.bf16.mxu0 0
      %8090 = vmatpush1.bf16.msra.mxu0 0
      %8091 = vmatprep.subr.bf16.mxu0 0
      %8092 = vmatpush1.bf16.msra.mxu0 0
      %8093 = vmatprep.subr.bf16.mxu0 0
      %8094 = vmatpush1.bf16.msra.mxu0 0
      %8095 = vmatprep.subr.bf16.mxu0 0
      %8096 = vmatpush1.bf16.msra.mxu0 0
      %8097 = vmatprep.subr.bf16.mxu0 0
      %8098 = vmatpush1.bf16.msra.mxu0 0
      %8099 = vmatprep.mubr.bf16.mxu0 0
      %8100 = vmatmul.mubr.bf16.gmra.mrb[0].mxu0 %v7865
      %v8101 = vpop.f32.mrb[0].mxu0
      %v8102 = vadd.f32 0.0, %v8101
      %v8103 = vpop.f32.mrb[0].mxu0
      %v8104 = vadd.f32 0.0, %v8103
      %v8105 = vpop.f32.mrb[0].mxu0
      %v8106 = vpop.f32.mrb[0].mxu0
      %8107 = vdwg.mxu0
      %8108 = vmatprep.subr.bf16.mxu0 %v7901
      %8109 = vmatpush1.bf16.msra.mxu0 %v7898
      %8110 = vmatprep.subr.bf16.mxu0 0
      %8111 = vmatpush1.bf16.msra.mxu0 0
      %8112 = vmatprep.subr.bf16.mxu0 0
      %8113 = vmatpush1.bf16.msra.mxu0 0
      %8114 = vmatprep.subr.bf16.mxu0 0
      %8115 = vmatpush1.bf16.msra.mxu0 0
      %8116 = vmatprep.subr.bf16.mxu0 0
      %8117 = vmatpush1.bf16.msra.mxu0 0
      %8118 = vmatprep.subr.bf16.mxu0 0
      %8119 = vmatpush1.bf16.msra.mxu0 0
      %8120 = vmatprep.subr.bf16.mxu0 0
      %8121 = vmatpush1.bf16.msra.mxu0 0
      %8122 = vmatprep.subr.bf16.mxu0 0
      %8123 = vmatpush1.bf16.msra.mxu0 0
      %8124 = vmatprep.subr.bf16.mxu0 0
      %8125 = vmatpush1.bf16.msra.mxu0 0
      %8126 = vmatprep.subr.bf16.mxu0 0
      %8127 = vmatpush1.bf16.msra.mxu0 0
      %8128 = vmatprep.subr.bf16.mxu0 0
      %8129 = vmatpush1.bf16.msra.mxu0 0
      %8130 = vmatprep.subr.bf16.mxu0 0
      %8131 = vmatpush1.bf16.msra.mxu0 0
      %8132 = vmatprep.subr.bf16.mxu0 0
      %8133 = vmatpush1.bf16.msra.mxu0 0
      %8134 = vmatprep.subr.bf16.mxu0 0
      %8135 = vmatpush1.bf16.msra.mxu0 0
      %8136 = vmatprep.subr.bf16.mxu0 0
      %8137 = vmatpush1.bf16.msra.mxu0 0
      %8138 = vmatprep.subr.bf16.mxu0 0
      %8139 = vmatpush1.bf16.msra.mxu0 0
      %8140 = vmatprep.mubr.bf16.mxu0 0
      %8141 = vmatmul.mubr.bf16.gmra.mrb[0].mxu0 %v7865
      %v8142 = vpop.f32.mrb[0].mxu0
      %v8143 = vadd.f32 0.0, %v8142
      %v8144 = vpop.f32.mrb[0].mxu0
      %v8145 = vadd.f32 0.0, %v8144
      %v8146 = vpop.f32.mrb[0].mxu0
      %v8147 = vpop.f32.mrb[0].mxu0
      %8148 = vdwg.mxu0
      %v8149 = vadd.f32 %v7814, %v7938
      %v8150 = vadd.f32 %v7815, %v7940
      %v8151 = vadd.f32 %v7816, %v7979
      %v8152 = vadd.f32 %v7817, %v7981
      %v8153 = vadd.f32 %v7818, %v8020
      %v8154 = vadd.f32 %v7819, %v8022
      %v8155 = vadd.f32 %v7820, %v8061
      %v8156 = vadd.f32 %v7821, %v8063
      %v8157 = vadd.f32 %v7822, %v8102
      %v8158 = vadd.f32 %v7823, %v8104
      %v8159 = vadd.f32 %v7824, %v8143
      %v8160 = vadd.f32 %v7825, %v8145
      %v8161 = vld [vmem:[%s5] sm:$0xff]
      %8163 = vset.pattern.permute.xlu0 0
      %8164 = vperm.xlu0 %8163, %v8161
      %v8165 = vpop.permute.xlu0 %8164
      %v8167 = vadd.f32 %v8149, %v8165
      %v8168 = vadd.f32 %v8150, %v8165
      %v8169 = vadd.f32 %v8151, %v8165
      %v8170 = vadd.f32 %v8152, %v8165
      %v8171 = vadd.f32 %v8153, %v8165
      %v8172 = vadd.f32 %v8154, %v8165
      %v8173 = vadd.f32 %v8155, %v8165
      %v8174 = vadd.f32 %v8156, %v8165
      %v8175 = vadd.f32 %v8157, %v8165
      %v8176 = vadd.f32 %v8158, %v8165
      %v8177 = vadd.f32 %v8159, %v8165
      %v8178 = vadd.f32 %v8160, %v8165
      %8179 = vst [vmem:[%s287] sm:$0xff] %v8167
      %8180 = vst [vmem:[%s287 + $0x8] sm:$0xff] %v8168
      %8181 = vst [vmem:[%s287 + $0x10] sm:$0xff] %v8169
      %8182 = vst [vmem:[%s287 + $0x18] sm:$0xff] %v8170
      %8183 = vst [vmem:[%s287 + $0x20] sm:$0xff] %v8171
      %8184 = vst [vmem:[%s287 + $0x28] sm:$0xff] %v8172
      %8185 = vst [vmem:[%s287 + $0x30] sm:$0xff] %v8173
      %8186 = vst [vmem:[%s287 + $0x38] sm:$0xff] %v8174
      %8187 = vst [vmem:[%s287 + $0x40] sm:$0xff] %v8175
      %8188 = vst [vmem:[%s287 + $0x48] sm:$0xff] %v8176
      %8189 = vst [vmem:[%s287 + $0x50] sm:$0xff] %v8177
      %8190 = vst [vmem:[%s287 + $0x58] sm:$0xff] %v8178
      %s8191 = smul.u32 12, %s22
      %p8192 = scmp.lt.s32.totalorder %s21, 1
      %s8193 = scalar_select %p8192, %s21, 1
      %p8194 = scmp.lt.s32.totalorder %s8191, 23
      %s8195 = scalar_select %p8194, %s8191, 23
      %s8196 = smul.addr %s8193, 24
      %s8197 = sadd.s32 %s8195, %s8196
      %s8198 = smul.addr %s8197, 8
      %s8199 = scalar_lea.vmem %s6, %s8198
      // Predicated region
      $region53: #{conv2plus1d_temporal_enhanced.1} parent=43 // pred_check
        %p8200 = pneg %p182
      $region54: #{conv2plus1d_temporal_enhanced.1} parent=43 // pred_check_branch
        %8202 = sbr.rel (%p8200) target = $region56
      $region55: #{conv2plus1d_temporal_enhanced.1} parent=43 // pred_region
        %s8203 = smul.u32 12, %s22
      $region56: #{conv2plus1d_temporal_enhanced.1} parent=43 // pred_fallthru
        _
    $region44: #{conv2plus1d_temporal_enhanced.1} parent=5 // pred_fallthru
      _
    %p8204 = scmp.le.s32.totalorder 2, %s12
    // Predicated region
    $region57: #{conv2plus1d_temporal_enhanced.1} parent=5 // pred_check
      %p8205 = pneg %p8204
    $region58: #{conv2plus1d_temporal_enhanced.1} parent=5 // pred_check_branch
      %8207 = sbr.rel (%p8205) target = $region60
    $region59: #{conv2plus1d_temporal_enhanced.1} parent=5 // pred_region
      %s8208 = ssub.s32 %s12, 2
      // Predicated region
      $region61: #{conv2plus1d_temporal_enhanced.1} parent=59 // pred_check
        %p8209 = pneg %p188
      $region62: #{conv2plus1d_temporal_enhanced.1} parent=59 // pred_check_branch
        %8211 = sbr.rel (%p8209) target = $region64
      $region63: #{conv2plus1d_temporal_enhanced.1} parent=59 // pred_region
        %s8212 = smul.u32 12, %s24
        %p8213 = scmp.lt.s32.totalorder %s23, 1
        %s8214 = scalar_select %p8213, %s23, 1
        %p8215 = scmp.lt.s32.totalorder %s8212, 23
        %s8216 = scalar_select %p8215, %s8212, 23
        %s8217 = smul.addr %s8214, 24
        %s8218 = sadd.s32 %s8216, %s8217
        %s8219 = smul.addr %s8218, 8
        %s8220 = scalar_lea.vmem %s6, %s8219
      $region64: #{conv2plus1d_temporal_enhanced.1} parent=59 // pred_fallthru
        _
    $region60: #{conv2plus1d_temporal_enhanced.1} parent=5 // pred_fallthru
      _
  $region6: #{conv2plus1d_temporal_enhanced.1} parent=0 // loop_footer
    %s16 = sadd.s32 1, %s12
  $region7: #{conv2plus1d_temporal_enhanced.1} parent=0 // loop_footer_branch
    %11 = sbr.rel target = $region3
  $region8: #{conv2plus1d_temporal_enhanced.1} parent=0 // loop_exit
    _

</llo_original>
